<compile_context>
chip_gen: v6e
topology: v6e:2x2x1
jax: 0.10.0
libtpu: 0.0.40
codegen_flags: <defaults>
</compile_context>

<pallas_src>
import jax
import jax.numpy as jnp
from jax.experimental import pallas as pl
from jax.experimental.pallas import tpu as pltpu

E_LAMBDA = 1e-4   # simam e_lambda
BN_EPS = 1e-5     # nn.BatchNorm2d default eps


# ------------------------------ kernel factory --------------------------------

def _make_kernel(c1, c2, c_, H, W, off, mrow):
    HW = H * W
    n_simam = float(HW - 1)
    f32 = jnp.float32

    def kernel(x_ref, wp_ref, mk_ref, o_ref):
        # x_ref : (1, c1, HW) VMEM  - one image, channels on sublanes, pixels on lanes
        # wp_ref: (c2, P)     VMEM  - packed weight / folded-BN column table
        # mk_ref: (NM, HW)    VMEM  - border masks for roll-based 'same' padding
        # o_ref : (1, c2, HW) VMEM

        def col(c, rows=c2):
            return wp_ref[0:rows, c:c + 1]                        # (rows, 1) column

        def shift(st, dy, dx):
            # st[:, p] holds value at (y, x); return value at (y+dy, x+dx),
            # zero outside the image (== zero 'same' padding).
            if dy == 0 and dx == 0:
                return st
            amt = (-(dy * W + dx)) % HW
            r = pltpu.roll(st, amt, axis=1)                       # XLU lane rotate
            mr = mrow[(dy, dx)]
            return r * mk_ref[mr:mr + 1, :]                       # (1, HW) mask

        def conv3x3(st, cin, cout, dil, w0):
            # dense 3x3 'same' conv (stride 1, dilation dil); weight-column FMAs
            acc = jnp.zeros((cout, HW), f32)
            for ky in range(3):
                for kx in range(3):
                    sh = shift(st, dil * (ky - 1), dil * (kx - 1))   # (cin, HW)
                    t = (ky * 3 + kx) * cin
                    for ci in range(cin):
                        acc = acc + col(w0 + t + ci, cout) * sh[ci:ci + 1, :]
            return acc

        def bn_act(acc, s0, b0, cout, act):
            v = acc * col(s0, cout) + col(b0, cout)
            if act == 'silu':
                return v * jax.nn.sigmoid(v)
            return jnp.maximum(v, 0.0)                            # relu

        def simam(st):
            # per-channel SimAM over the lane (H*W) axis, vectorized over channels
            mu = jnp.mean(st, axis=1, keepdims=True)              # (c, 1)
            d = (st - mu) ** 2
            inv = 1.0 / (4.0 * (jnp.sum(d, axis=1, keepdims=True) * (1.0 / n_simam)
                                + E_LAMBDA))                      # (c, 1) recip-mul
            return st * jax.nn.sigmoid(d * inv + 0.5)

        xs = x_ref[0]                                             # (c1, HW)

        # ----------------------- cv1 / cv2 (3x3 + BN + SiLU) --------------------
        y1 = bn_act(conv3x3(xs, c1, c_, 1, off['cv1_w']),
                    off['cv1_s'], off['cv1_b'], c_, 'silu')       # (c_, HW)
        y2 = bn_act(conv3x3(y1, c_, c2, 1, off['cv2_w']),
                    off['cv2_s'], off['cv2_b'], c2, 'silu')       # (c2, HW)

        # xcat = cat([xs, y2]); grouped conv group g reads channels (2g, 2g+1)
        def xrow(ch):
            return xs[ch:ch + 1, :] if ch < c1 else y2[ch - c1:ch - c1 + 1, :]

        # even/odd input stacks (row g = xcat[2g] / xcat[2g+1]) via one-hot FMAs
        even = jnp.zeros((c2, HW), f32)
        odd = jnp.zeros((c2, HW), f32)
        for g in range(c2):
            even = even + col(off['eye'] + g) * xrow(2 * g)
            odd = odd + col(off['eye'] + g) * xrow(2 * g + 1)

        # ------- grouped dilated branches + conv_4, folded into fuse on the fly --
        fuse_acc = jnp.zeros((c2, HW), f32)
        for bidx, dil in enumerate((1, 2, 3)):                    # conv_1 / conv_2 / conv_3
            w0 = off[f'g{bidx + 1}_w']
            gacc = jnp.zeros((c2, HW), f32)
            for ky in range(3):
                for kx in range(3):
                    dy, dx = dil * (ky - 1), dil * (kx - 1)
                    t = (ky * 3 + kx) * 2
                    gacc = (gacc
                            + col(w0 + t) * shift(even, dy, dx)
                            + col(w0 + t + 1) * shift(odd, dy, dx))
            gacc = gacc + col(off[f'g{bidx + 1}_b'])              # conv bias
            for g in range(c2):                                   # fuse 1x1 fold (branch bidx)
                fuse_acc = fuse_acc + col(off['fuse_w'] + bidx * c2 + g) * gacc[g:g + 1, :]

        c4 = jnp.zeros((c2, HW), f32)                             # conv_4: dense 1x1 + bias
        for ci in range(2 * c2):
            c4 = c4 + col(off['c4_w'] + ci) * xrow(ci)
        c4 = c4 + col(off['c4_b'])
        for g in range(c2):                                       # fuse 1x1 fold (branch 3)
            fuse_acc = fuse_acc + col(off['fuse_w'] + 3 * c2 + g) * c4[g:g + 1, :]

        # fuse: (conv bias + BN) folded affine + ReLU
        fuse = bn_act(fuse_acc, off['fuse_s'], off['fuse_b'], c2, 'relu')

        # ----------------------- BFAM SimAM mixing (factored) -------------------
        mix = simam(fuse) + xs + y2 + (simam(xs) + simam(y2)) * fuse

        # --------------- out conv 3x3 + BN + ReLU, final SimAM, store -----------
        z = bn_act(conv3x3(mix, c2, c2, 1, off['out_w']),
                   off['out_s'], off['out_b'], c2, 'relu')
        o_ref[0] = simam(z)                                       # lane-dense full-stack store

    return kernel


# ------------------------------ parameter packing ------------------------------

def _fold_bn(bn, conv_bias=None):
    gamma, beta, mean, var = bn
    scale = gamma / jnp.sqrt(var + BN_EPS)
    base = jnp.zeros_like(beta) if conv_bias is None else conv_bias
    return scale, (base - mean) * scale + beta


def _pack_params(p, c1, c2, c_):
    """Pack all weights / folded-BN affines into one (c2, P) f32 column table."""
    f32 = jnp.float32
    cols, off, pos = [], {}, 0

    def add(name, mat):
        nonlocal pos
        mat = jnp.asarray(mat, f32)
        if mat.ndim == 1:
            mat = mat[:, None]
        r, n = mat.shape
        if r < c2:                                   # pad rows to c2 (unused rows are zero)
            mat = jnp.concatenate([mat, jnp.zeros((c2 - r, n), f32)], axis=0)
        off[name] = pos
        cols.append(mat)
        pos += n

    def conv_cols(w):                                # (co,ci,3,3) -> (co, 9*ci), col=(ky*3+kx)*ci+c
        w = jnp.asarray(w, f32)
        co, ci = w.shape[0], w.shape[1]
        return jnp.transpose(w, (0, 2, 3, 1)).reshape(co, 9 * ci)

    s, b = _fold_bn(p['cv1_bn'])
    add('cv1_w', conv_cols(p['cv1_w'])); add('cv1_s', s); add('cv1_b', b)
    s, b = _fold_bn(p['cv2_bn'])
    add('cv2_w', conv_cols(p['cv2_w'])); add('cv2_s', s); add('cv2_b', b)
    for i in (1, 2, 3):                              # grouped dilated 3x3 convs + bias
        add(f'g{i}_w', conv_cols(p[f'g{i}_w'])); add(f'g{i}_b', p[f'g{i}_b'])
    add('c4_w', p['c4_w']); add('c4_b', p['c4_b'])
    s, b = _fold_bn(p['fuse_bn'], p['fuse_b'])
    add('fuse_w', p['fuse_w']); add('fuse_s', s); add('fuse_b', b)
    s, b = _fold_bn(p['out_bn'], p['out_b'])
    add('out_w', conv_cols(p['out_w'])); add('out_s', s); add('out_b', b)
    add('eye', jnp.eye(c2, dtype=f32))               # one-hot columns for row gathers
    return jnp.concatenate(cols, axis=1), off


def _build_masks(H, W):
    """Border masks (one (1,HW) row per distinct (dy,dx) shift) for 'same' padding."""
    HW = H * W
    idx = jnp.arange(HW, dtype=jnp.int32)
    yy, xx = idx // W, idx % W
    rows, mrow = [], {}
    for dil in (1, 2, 3):
        for ky in range(3):
            for kx in range(3):
                dy, dx = dil * (ky - 1), dil * (kx - 1)
                if (dy, dx) == (0, 0) or (dy, dx) in mrow:
                    continue
                m = ((yy + dy >= 0) & (yy + dy < H) & (xx + dx >= 0) & (xx + dx < W))
                mrow[(dy, dx)] = len(rows)
                rows.append(m.astype(jnp.float32))
    return jnp.stack(rows, axis=0), mrow


def init_params(key, c1, c2, e=0.5):
    c_ = int(c2 * e)
    keys = iter(jax.random.split(key, 64))

    def w(shape):
        return 0.1 * jax.random.normal(next(keys), shape, jnp.float32)

    def bn(c):
        gamma = 1.0 + 0.1 * jax.random.normal(next(keys), (c,), jnp.float32)
        beta = 0.1 * jax.random.normal(next(keys), (c,), jnp.float32)
        mean = 0.1 * jax.random.normal(next(keys), (c,), jnp.float32)
        var = 1.0 + 0.1 * jnp.abs(jax.random.normal(next(keys), (c,), jnp.float32))
        return gamma, beta, mean, var

    p = {}
    p['cv1_w'] = w((c_, c1, 3, 3)); p['cv1_bn'] = bn(c_)            # Conv(c1,c_,3): conv+BN+SiLU
    p['cv2_w'] = w((c2, c_, 3, 3)); p['cv2_bn'] = bn(c2)            # Conv(c_,c2,3): conv+BN+SiLU
    for i in (1, 2, 3):                                             # grouped dilated 3x3, bias
        p[f'g{i}_w'] = w((c2, 2, 3, 3)); p[f'g{i}_b'] = w((c2,))
    p['c4_w'] = w((c2, 2 * c2)); p['c4_b'] = w((c2,))               # conv_4: dense 1x1, bias
    p['fuse_w'] = w((c2, 4 * c2)); p['fuse_b'] = w((c2,)); p['fuse_bn'] = bn(c2)
    p['out_w'] = w((c2, c2, 3, 3)); p['out_b'] = w((c2,)); p['out_bn'] = bn(c2)
    return p


# ---------------------------------- forward ------------------------------------

def build_bfam_forward(params, c1, c2, H, W, e=0.5):
    """Pack params ONCE and return a jitted forward: (B, c1, H, W) -> (B, c2, H, W)."""
    assert c1 == c2, "shortcut/BFAM path requires c1 == c2"
    c_ = int(c2 * e)
    assert c_ >= 1
    HW = H * W
    wp, off = _pack_params(params, c1, c2, c_)
    masks, mrow = _build_masks(H, W)
    NM, P = int(masks.shape[0]), int(wp.shape[1])
    kernel = _make_kernel(c1, c2, c_, H, W, off, mrow)

    flops_per_img = 2 * HW * (9 * c1 * c_ + 9 * c_ * c2 + 3 * 9 * 2 * c2
                              + 2 * c2 * c2 + 4 * c2 * c2 + 9 * c2 * c2) + 12 * c2 * HW
    trans_per_img = 8 * c2 * HW

    def fwd(x):
        B = x.shape[0]
        xf = x.reshape(B, c1, HW).astype(jnp.float32)
        cost = pl.CostEstimate(
            flops=B * flops_per_img,
            transcendentals=B * trans_per_img,
            bytes_accessed=B * (c1 + c2) * HW * 4 + wp.size * 4 + masks.size * 4)
        out = pl.pallas_call(
            kernel,
            out_shape=jax.ShapeDtypeStruct((B, c2, HW), jnp.float32),
            grid=(B,),
            in_specs=[
                pl.BlockSpec((1, c1, HW), lambda b: (b, 0, 0)),   # one image per step
                pl.BlockSpec((c2, P), lambda b: (0, 0)),          # packed weight table
                pl.BlockSpec((NM, HW), lambda b: (0, 0)),         # border masks
            ],
            out_specs=pl.BlockSpec((1, c2, HW), lambda b: (b, 0, 0)),
            compiler_params=pltpu.CompilerParams(
                # TODO(synk): add a second parallel axis (channel/row tiles) so v7x's
                # 2 TensorCores stay busy when B == 1 or B is odd.
                dimension_semantics=("parallel",)),
            cost_estimate=cost,
        )(xf, wp, masks)
        return out.reshape(B, c2, H, W)

    return jax.jit(fwd)


# ------------------------------------ main --------------------------------------

if __name__ == "__main__":
    key = jax.random.PRNGKey(0)
    kx, kp = jax.random.split(key)
    B, C, H, W = 2, 4, 16, 16          # c1 = c2 = 4 -> shortcut/BFAM path
    x = jax.random.normal(kx, (B, C, H, W), jnp.float32)
    params = init_params(kp, C, C)

    fwd = build_bfam_forward(params, C, C, H, W)
    out = jax.block_until_ready(fwd(x))
    assert out.shape == (B, C, H, W), out.shape
    assert bool(jnp.all(jnp.isfinite(out)))
    print("KERNEL_OK")
</pallas_src>

<mosaic_0001>
module attributes {stable_mosaic.version = 11 : i64} {
  func.func @kernel(%arg0: i32, %arg1: memref<1x4x256xf32, #tpu.memory_space<vmem>>, %arg2: memref<4x184xf32, #tpu.memory_space<vmem>>, %arg3: memref<24x256xf32, #tpu.memory_space<vmem>>, %arg4: memref<1x4x256xf32, #tpu.memory_space<vmem>>) attributes {dimension_semantics = [#tpu.dimension_semantics<parallel>], iteration_bounds = array<i64: 2>, scalar_prefetch = 0 : i64, scratch_operands = 0 : i64, tpu.core_type = #tpu.core_type<tc>, window_params = [{transform_indices = @transform_0, window_bounds = array<i64: 1, 4, 256>}, {pipeline_mode = #tpu.pipeline_mode<synchronous>, transform_indices = @transform_1, window_bounds = array<i64: 4, 184>}, {pipeline_mode = #tpu.pipeline_mode<synchronous>, transform_indices = @transform_2, window_bounds = array<i64: 24, 256>}, {transform_indices = @transform_3, window_bounds = array<i64: 1, 4, 256>}]} {
    %c0 = arith.constant 0 : index
    %c0_0 = arith.constant 0 : index
    %c0_1 = arith.constant 0 : index
    %0 = vector.load %arg1[%c0, %c0_0, %c0_1] : memref<1x4x256xf32, #tpu.memory_space<vmem>>, vector<1x4x256xf32>
    %1 = vector.shape_cast %0 : vector<1x4x256xf32> to vector<4x256xf32>
    %cst = arith.constant 0.000000e+00 : f32
    %2 = vector.broadcast %cst : f32 to vector<2x256xf32>
    %c17_i32 = arith.constant 17 : i32
    %3 = tpu.dynamic_rotate %1 by %c17_i32 dim 1 : vector<4x256xf32>, i32 -> vector<4x256xf32>
    %c0_2 = arith.constant 0 : index
    %c0_3 = arith.constant 0 : index
    %4 = vector.load %arg3[%c0_2, %c0_3] : memref<24x256xf32, #tpu.memory_space<vmem>>, vector<1x256xf32>
    %5 = vector.broadcast %4 : vector<1x256xf32> to vector<4x256xf32>
    %6 = arith.mulf %3, %5 : vector<4x256xf32>
    %c0_4 = arith.constant 0 : index
    %c0_5 = arith.constant 0 : index
    %7 = vector.load %arg2[%c0_4, %c0_5] : memref<4x184xf32, #tpu.memory_space<vmem>>, vector<2x1xf32>
    %8 = vector.extract_strided_slice %6 {offsets = [0, 0], sizes = [1, 256], strides = [1, 1]} : vector<4x256xf32> to vector<1x256xf32>
    %9 = vector.broadcast %7 : vector<2x1xf32> to vector<2x256xf32>
    %10 = vector.broadcast %8 : vector<1x256xf32> to vector<2x256xf32>
    %11 = arith.mulf %9, %10 : vector<2x256xf32>
    %12 = arith.addf %2, %11 : vector<2x256xf32>
    %c0_6 = arith.constant 0 : index
    %c1 = arith.constant 1 : index
    %13 = vector.load %arg2[%c0_6, %c1] : memref<4x184xf32, #tpu.memory_space<vmem>>, vector<2x1xf32>
    %14 = vector.extract_strided_slice %6 {offsets = [1, 0], sizes = [1, 256], strides = [1, 1]} : vector<4x256xf32> to vector<1x256xf32>
    %15 = vector.broadcast %13 : vector<2x1xf32> to vector<2x256xf32>
    %16 = vector.broadcast %14 : vector<1x256xf32> to vector<2x256xf32>
    %17 = arith.mulf %15, %16 : vector<2x256xf32>
    %18 = arith.addf %12, %17 : vector<2x256xf32>
    %c0_7 = arith.constant 0 : index
    %c2 = arith.constant 2 : index
    %19 = vector.load %arg2[%c0_7, %c2] : memref<4x184xf32, #tpu.memory_space<vmem>>, vector<2x1xf32>
    %20 = vector.extract_strided_slice %6 {offsets = [2, 0], sizes = [1, 256], strides = [1, 1]} : vector<4x256xf32> to vector<1x256xf32>
    %21 = vector.broadcast %19 : vector<2x1xf32> to vector<2x256xf32>
    %22 = vector.broadcast %20 : vector<1x256xf32> to vector<2x256xf32>
    %23 = arith.mulf %21, %22 : vector<2x256xf32>
    %24 = arith.addf %18, %23 : vector<2x256xf32>
    %c0_8 = arith.constant 0 : index
    %c3 = arith.constant 3 : index
    %25 = vector.load %arg2[%c0_8, %c3] : memref<4x184xf32, #tpu.memory_space<vmem>>, vector<2x1xf32>
    %26 = vector.extract_strided_slice %6 {offsets = [3, 0], sizes = [1, 256], strides = [1, 1]} : vector<4x256xf32> to vector<1x256xf32>
    %27 = vector.broadcast %25 : vector<2x1xf32> to vector<2x256xf32>
    %28 = vector.broadcast %26 : vector<1x256xf32> to vector<2x256xf32>
    %29 = arith.mulf %27, %28 : vector<2x256xf32>
    %30 = arith.addf %24, %29 : vector<2x256xf32>
    %c16_i32 = arith.constant 16 : i32
    %31 = tpu.dynamic_rotate %1 by %c16_i32 dim 1 : vector<4x256xf32>, i32 -> vector<4x256xf32>
    %c1_9 = arith.constant 1 : index
    %c0_10 = arith.constant 0 : index
    %32 = vector.load %arg3[%c1_9, %c0_10] : memref<24x256xf32, #tpu.memory_space<vmem>>, vector<1x256xf32>
    %33 = vector.broadcast %32 : vector<1x256xf32> to vector<4x256xf32>
    %34 = arith.mulf %31, %33 : vector<4x256xf32>
    %c0_11 = arith.constant 0 : index
    %c4 = arith.constant 4 : index
    %35 = vector.load %arg2[%c0_11, %c4] : memref<4x184xf32, #tpu.memory_space<vmem>>, vector<2x1xf32>
    %36 = vector.extract_strided_slice %34 {offsets = [0, 0], sizes = [1, 256], strides = [1, 1]} : vector<4x256xf32> to vector<1x256xf32>
    %37 = vector.broadcast %35 : vector<2x1xf32> to vector<2x256xf32>
    %38 = vector.broadcast %36 : vector<1x256xf32> to vector<2x256xf32>
    %39 = arith.mulf %37, %38 : vector<2x256xf32>
    %40 = arith.addf %30, %39 : vector<2x256xf32>
    %c0_12 = arith.constant 0 : index
    %c5 = arith.constant 5 : index
    %41 = vector.load %arg2[%c0_12, %c5] : memref<4x184xf32, #tpu.memory_space<vmem>>, vector<2x1xf32>
    %42 = vector.extract_strided_slice %34 {offsets = [1, 0], sizes = [1, 256], strides = [1, 1]} : vector<4x256xf32> to vector<1x256xf32>
    %43 = vector.broadcast %41 : vector<2x1xf32> to vector<2x256xf32>
    %44 = vector.broadcast %42 : vector<1x256xf32> to vector<2x256xf32>
    %45 = arith.mulf %43, %44 : vector<2x256xf32>
    %46 = arith.addf %40, %45 : vector<2x256xf32>
    %c0_13 = arith.constant 0 : index
    %c6 = arith.constant 6 : index
    %47 = vector.load %arg2[%c0_13, %c6] : memref<4x184xf32, #tpu.memory_space<vmem>>, vector<2x1xf32>
    %48 = vector.extract_strided_slice %34 {offsets = [2, 0], sizes = [1, 256], strides = [1, 1]} : vector<4x256xf32> to vector<1x256xf32>
    %49 = vector.broadcast %47 : vector<2x1xf32> to vector<2x256xf32>
    %50 = vector.broadcast %48 : vector<1x256xf32> to vector<2x256xf32>
    %51 = arith.mulf %49, %50 : vector<2x256xf32>
    %52 = arith.addf %46, %51 : vector<2x256xf32>
    %c0_14 = arith.constant 0 : index
    %c7 = arith.constant 7 : index
    %53 = vector.load %arg2[%c0_14, %c7] : memref<4x184xf32, #tpu.memory_space<vmem>>, vector<2x1xf32>
    %54 = vector.extract_strided_slice %34 {offsets = [3, 0], sizes = [1, 256], strides = [1, 1]} : vector<4x256xf32> to vector<1x256xf32>
    %55 = vector.broadcast %53 : vector<2x1xf32> to vector<2x256xf32>
    %56 = vector.broadcast %54 : vector<1x256xf32> to vector<2x256xf32>
    %57 = arith.mulf %55, %56 : vector<2x256xf32>
    %58 = arith.addf %52, %57 : vector<2x256xf32>
    %c15_i32 = arith.constant 15 : i32
    %59 = tpu.dynamic_rotate %1 by %c15_i32 dim 1 : vector<4x256xf32>, i32 -> vector<4x256xf32>
    %c2_15 = arith.constant 2 : index
    %c0_16 = arith.constant 0 : index
    %60 = vector.load %arg3[%c2_15, %c0_16] : memref<24x256xf32, #tpu.memory_space<vmem>>, vector<1x256xf32>
    %61 = vector.broadcast %60 : vector<1x256xf32> to vector<4x256xf32>
    %62 = arith.mulf %59, %61 : vector<4x256xf32>
    %c0_17 = arith.constant 0 : index
    %c8 = arith.constant 8 : index
    %63 = vector.load %arg2[%c0_17, %c8] : memref<4x184xf32, #tpu.memory_space<vmem>>, vector<2x1xf32>
    %64 = vector.extract_strided_slice %62 {offsets = [0, 0], sizes = [1, 256], strides = [1, 1]} : vector<4x256xf32> to vector<1x256xf32>
    %65 = vector.broadcast %63 : vector<2x1xf32> to vector<2x256xf32>
    %66 = vector.broadcast %64 : vector<1x256xf32> to vector<2x256xf32>
    %67 = arith.mulf %65, %66 : vector<2x256xf32>
    %68 = arith.addf %58, %67 : vector<2x256xf32>
    %c0_18 = arith.constant 0 : index
    %c9 = arith.constant 9 : index
    %69 = vector.load %arg2[%c0_18, %c9] : memref<4x184xf32, #tpu.memory_space<vmem>>, vector<2x1xf32>
    %70 = vector.extract_strided_slice %62 {offsets = [1, 0], sizes = [1, 256], strides = [1, 1]} : vector<4x256xf32> to vector<1x256xf32>
    %71 = vector.broadcast %69 : vector<2x1xf32> to vector<2x256xf32>
    %72 = vector.broadcast %70 : vector<1x256xf32> to vector<2x256xf32>
    %73 = arith.mulf %71, %72 : vector<2x256xf32>
    %74 = arith.addf %68, %73 : vector<2x256xf32>
    %c0_19 = arith.constant 0 : index
    %c10 = arith.constant 10 : index
    %75 = vector.load %arg2[%c0_19, %c10] : memref<4x184xf32, #tpu.memory_space<vmem>>, vector<2x1xf32>
    %76 = vector.extract_strided_slice %62 {offsets = [2, 0], sizes = [1, 256], strides = [1, 1]} : vector<4x256xf32> to vector<1x256xf32>
    %77 = vector.broadcast %75 : vector<2x1xf32> to vector<2x256xf32>
    %78 = vector.broadcast %76 : vector<1x256xf32> to vector<2x256xf32>
    %79 = arith.mulf %77, %78 : vector<2x256xf32>
    %80 = arith.addf %74, %79 : vector<2x256xf32>
    %c0_20 = arith.constant 0 : index
    %c11 = arith.constant 11 : index
    %81 = vector.load %arg2[%c0_20, %c11] : memref<4x184xf32, #tpu.memory_space<vmem>>, vector<2x1xf32>
    %82 = vector.extract_strided_slice %62 {offsets = [3, 0], sizes = [1, 256], strides = [1, 1]} : vector<4x256xf32> to vector<1x256xf32>
    %83 = vector.broadcast %81 : vector<2x1xf32> to vector<2x256xf32>
    %84 = vector.broadcast %82 : vector<1x256xf32> to vector<2x256xf32>
    %85 = arith.mulf %83, %84 : vector<2x256xf32>
    %86 = arith.addf %80, %85 : vector<2x256xf32>
    %c1_i32 = arith.constant 1 : i32
    %87 = tpu.dynamic_rotate %1 by %c1_i32 dim 1 : vector<4x256xf32>, i32 -> vector<4x256xf32>
    %c3_21 = arith.constant 3 : index
    %c0_22 = arith.constant 0 : index
    %88 = vector.load %arg3[%c3_21, %c0_22] : memref<24x256xf32, #tpu.memory_space<vmem>>, vector<1x256xf32>
    %89 = vector.broadcast %88 : vector<1x256xf32> to vector<4x256xf32>
    %90 = arith.mulf %87, %89 : vector<4x256xf32>
    %c0_23 = arith.constant 0 : index
    %c12 = arith.constant 12 : index
    %91 = vector.load %arg2[%c0_23, %c12] : memref<4x184xf32, #tpu.memory_space<vmem>>, vector<2x1xf32>
    %92 = vector.extract_strided_slice %90 {offsets = [0, 0], sizes = [1, 256], strides = [1, 1]} : vector<4x256xf32> to vector<1x256xf32>
    %93 = vector.broadcast %91 : vector<2x1xf32> to vector<2x256xf32>
    %94 = vector.broadcast %92 : vector<1x256xf32> to vector<2x256xf32>
    %95 = arith.mulf %93, %94 : vector<2x256xf32>
    %96 = arith.addf %86, %95 : vector<2x256xf32>
    %c0_24 = arith.constant 0 : index
    %c13 = arith.constant 13 : index
    %97 = vector.load %arg2[%c0_24, %c13] : memref<4x184xf32, #tpu.memory_space<vmem>>, vector<2x1xf32>
    %98 = vector.extract_strided_slice %90 {offsets = [1, 0], sizes = [1, 256], strides = [1, 1]} : vector<4x256xf32> to vector<1x256xf32>
    %99 = vector.broadcast %97 : vector<2x1xf32> to vector<2x256xf32>
    %100 = vector.broadcast %98 : vector<1x256xf32> to vector<2x256xf32>
    %101 = arith.mulf %99, %100 : vector<2x256xf32>
    %102 = arith.addf %96, %101 : vector<2x256xf32>
    %c0_25 = arith.constant 0 : index
    %c14 = arith.constant 14 : index
    %103 = vector.load %arg2[%c0_25, %c14] : memref<4x184xf32, #tpu.memory_space<vmem>>, vector<2x1xf32>
    %104 = vector.extract_strided_slice %90 {offsets = [2, 0], sizes = [1, 256], strides = [1, 1]} : vector<4x256xf32> to vector<1x256xf32>
    %105 = vector.broadcast %103 : vector<2x1xf32> to vector<2x256xf32>
    %106 = vector.broadcast %104 : vector<1x256xf32> to vector<2x256xf32>
    %107 = arith.mulf %105, %106 : vector<2x256xf32>
    %108 = arith.addf %102, %107 : vector<2x256xf32>
    %c0_26 = arith.constant 0 : index
    %c15 = arith.constant 15 : index
    %109 = vector.load %arg2[%c0_26, %c15] : memref<4x184xf32, #tpu.memory_space<vmem>>, vector<2x1xf32>
    %110 = vector.extract_strided_slice %90 {offsets = [3, 0], sizes = [1, 256], strides = [1, 1]} : vector<4x256xf32> to vector<1x256xf32>
    %111 = vector.broadcast %109 : vector<2x1xf32> to vector<2x256xf32>
    %112 = vector.broadcast %110 : vector<1x256xf32> to vector<2x256xf32>
    %113 = arith.mulf %111, %112 : vector<2x256xf32>
    %114 = arith.addf %108, %113 : vector<2x256xf32>
    %c0_27 = arith.constant 0 : index
    %c16 = arith.constant 16 : index
    %115 = vector.load %arg2[%c0_27, %c16] : memref<4x184xf32, #tpu.memory_space<vmem>>, vector<2x1xf32>
    %116 = vector.extract_strided_slice %1 {offsets = [0, 0], sizes = [1, 256], strides = [1, 1]} : vector<4x256xf32> to vector<1x256xf32>
    %117 = vector.broadcast %115 : vector<2x1xf32> to vector<2x256xf32>
    %118 = vector.broadcast %116 : vector<1x256xf32> to vector<2x256xf32>
    %119 = arith.mulf %117, %118 : vector<2x256xf32>
    %120 = arith.addf %114, %119 : vector<2x256xf32>
    %c0_28 = arith.constant 0 : index
    %c17 = arith.constant 17 : index
    %121 = vector.load %arg2[%c0_28, %c17] : memref<4x184xf32, #tpu.memory_space<vmem>>, vector<2x1xf32>
    %122 = vector.extract_strided_slice %1 {offsets = [1, 0], sizes = [1, 256], strides = [1, 1]} : vector<4x256xf32> to vector<1x256xf32>
    %123 = vector.broadcast %121 : vector<2x1xf32> to vector<2x256xf32>
    %124 = vector.broadcast %122 : vector<1x256xf32> to vector<2x256xf32>
    %125 = arith.mulf %123, %124 : vector<2x256xf32>
    %126 = arith.addf %120, %125 : vector<2x256xf32>
    %c0_29 = arith.constant 0 : index
    %c18 = arith.constant 18 : index
    %127 = vector.load %arg2[%c0_29, %c18] : memref<4x184xf32, #tpu.memory_space<vmem>>, vector<2x1xf32>
    %128 = vector.extract_strided_slice %1 {offsets = [2, 0], sizes = [1, 256], strides = [1, 1]} : vector<4x256xf32> to vector<1x256xf32>
    %129 = vector.broadcast %127 : vector<2x1xf32> to vector<2x256xf32>
    %130 = vector.broadcast %128 : vector<1x256xf32> to vector<2x256xf32>
    %131 = arith.mulf %129, %130 : vector<2x256xf32>
    %132 = arith.addf %126, %131 : vector<2x256xf32>
    %c0_30 = arith.constant 0 : index
    %c19 = arith.constant 19 : index
    %133 = vector.load %arg2[%c0_30, %c19] : memref<4x184xf32, #tpu.memory_space<vmem>>, vector<2x1xf32>
    %134 = vector.extract_strided_slice %1 {offsets = [3, 0], sizes = [1, 256], strides = [1, 1]} : vector<4x256xf32> to vector<1x256xf32>
    %135 = vector.broadcast %133 : vector<2x1xf32> to vector<2x256xf32>
    %136 = vector.broadcast %134 : vector<1x256xf32> to vector<2x256xf32>
    %137 = arith.mulf %135, %136 : vector<2x256xf32>
    %138 = arith.addf %132, %137 : vector<2x256xf32>
    %c255_i32 = arith.constant 255 : i32
    %139 = tpu.dynamic_rotate %1 by %c255_i32 dim 1 : vector<4x256xf32>, i32 -> vector<4x256xf32>
    %c4_31 = arith.constant 4 : index
    %c0_32 = arith.constant 0 : index
    %140 = vector.load %arg3[%c4_31, %c0_32] : memref<24x256xf32, #tpu.memory_space<vmem>>, vector<1x256xf32>
    %141 = vector.broadcast %140 : vector<1x256xf32> to vector<4x256xf32>
    %142 = arith.mulf %139, %141 : vector<4x256xf32>
    %c0_33 = arith.constant 0 : index
    %c20 = arith.constant 20 : index
    %143 = vector.load %arg2[%c0_33, %c20] : memref<4x184xf32, #tpu.memory_space<vmem>>, vector<2x1xf32>
    %144 = vector.extract_strided_slice %142 {offsets = [0, 0], sizes = [1, 256], strides = [1, 1]} : vector<4x256xf32> to vector<1x256xf32>
    %145 = vector.broadcast %143 : vector<2x1xf32> to vector<2x256xf32>
    %146 = vector.broadcast %144 : vector<1x256xf32> to vector<2x256xf32>
    %147 = arith.mulf %145, %146 : vector<2x256xf32>
    %148 = arith.addf %138, %147 : vector<2x256xf32>
    %c0_34 = arith.constant 0 : index
    %c21 = arith.constant 21 : index
    %149 = vector.load %arg2[%c0_34, %c21] : memref<4x184xf32, #tpu.memory_space<vmem>>, vector<2x1xf32>
    %150 = vector.extract_strided_slice %142 {offsets = [1, 0], sizes = [1, 256], strides = [1, 1]} : vector<4x256xf32> to vector<1x256xf32>
    %151 = vector.broadcast %149 : vector<2x1xf32> to vector<2x256xf32>
    %152 = vector.broadcast %150 : vector<1x256xf32> to vector<2x256xf32>
    %153 = arith.mulf %151, %152 : vector<2x256xf32>
    %154 = arith.addf %148, %153 : vector<2x256xf32>
    %c0_35 = arith.constant 0 : index
    %c22 = arith.constant 22 : index
    %155 = vector.load %arg2[%c0_35, %c22] : memref<4x184xf32, #tpu.memory_space<vmem>>, vector<2x1xf32>
    %156 = vector.extract_strided_slice %142 {offsets = [2, 0], sizes = [1, 256], strides = [1, 1]} : vector<4x256xf32> to vector<1x256xf32>
    %157 = vector.broadcast %155 : vector<2x1xf32> to vector<2x256xf32>
    %158 = vector.broadcast %156 : vector<1x256xf32> to vector<2x256xf32>
    %159 = arith.mulf %157, %158 : vector<2x256xf32>
    %160 = arith.addf %154, %159 : vector<2x256xf32>
    %c0_36 = arith.constant 0 : index
    %c23 = arith.constant 23 : index
    %161 = vector.load %arg2[%c0_36, %c23] : memref<4x184xf32, #tpu.memory_space<vmem>>, vector<2x1xf32>
    %162 = vector.extract_strided_slice %142 {offsets = [3, 0], sizes = [1, 256], strides = [1, 1]} : vector<4x256xf32> to vector<1x256xf32>
    %163 = vector.broadcast %161 : vector<2x1xf32> to vector<2x256xf32>
    %164 = vector.broadcast %162 : vector<1x256xf32> to vector<2x256xf32>
    %165 = arith.mulf %163, %164 : vector<2x256xf32>
    %166 = arith.addf %160, %165 : vector<2x256xf32>
    %c241_i32 = arith.constant 241 : i32
    %167 = tpu.dynamic_rotate %1 by %c241_i32 dim 1 : vector<4x256xf32>, i32 -> vector<4x256xf32>
    %c5_37 = arith.constant 5 : index
    %c0_38 = arith.constant 0 : index
    %168 = vector.load %arg3[%c5_37, %c0_38] : memref<24x256xf32, #tpu.memory_space<vmem>>, vector<1x256xf32>
    %169 = vector.broadcast %168 : vector<1x256xf32> to vector<4x256xf32>
    %170 = arith.mulf %167, %169 : vector<4x256xf32>
    %c0_39 = arith.constant 0 : index
    %c24 = arith.constant 24 : index
    %171 = vector.load %arg2[%c0_39, %c24] : memref<4x184xf32, #tpu.memory_space<vmem>>, vector<2x1xf32>
    %172 = vector.extract_strided_slice %170 {offsets = [0, 0], sizes = [1, 256], strides = [1, 1]} : vector<4x256xf32> to vector<1x256xf32>
    %173 = vector.broadcast %171 : vector<2x1xf32> to vector<2x256xf32>
    %174 = vector.broadcast %172 : vector<1x256xf32> to vector<2x256xf32>
    %175 = arith.mulf %173, %174 : vector<2x256xf32>
    %176 = arith.addf %166, %175 : vector<2x256xf32>
    %c0_40 = arith.constant 0 : index
    %c25 = arith.constant 25 : index
    %177 = vector.load %arg2[%c0_40, %c25] : memref<4x184xf32, #tpu.memory_space<vmem>>, vector<2x1xf32>
    %178 = vector.extract_strided_slice %170 {offsets = [1, 0], sizes = [1, 256], strides = [1, 1]} : vector<4x256xf32> to vector<1x256xf32>
    %179 = vector.broadcast %177 : vector<2x1xf32> to vector<2x256xf32>
    %180 = vector.broadcast %178 : vector<1x256xf32> to vector<2x256xf32>
    %181 = arith.mulf %179, %180 : vector<2x256xf32>
    %182 = arith.addf %176, %181 : vector<2x256xf32>
    %c0_41 = arith.constant 0 : index
    %c26 = arith.constant 26 : index
    %183 = vector.load %arg2[%c0_41, %c26] : memref<4x184xf32, #tpu.memory_space<vmem>>, vector<2x1xf32>
    %184 = vector.extract_strided_slice %170 {offsets = [2, 0], sizes = [1, 256], strides = [1, 1]} : vector<4x256xf32> to vector<1x256xf32>
    %185 = vector.broadcast %183 : vector<2x1xf32> to vector<2x256xf32>
    %186 = vector.broadcast %184 : vector<1x256xf32> to vector<2x256xf32>
    %187 = arith.mulf %185, %186 : vector<2x256xf32>
    %188 = arith.addf %182, %187 : vector<2x256xf32>
    %c0_42 = arith.constant 0 : index
    %c27 = arith.constant 27 : index
    %189 = vector.load %arg2[%c0_42, %c27] : memref<4x184xf32, #tpu.memory_space<vmem>>, vector<2x1xf32>
    %190 = vector.extract_strided_slice %170 {offsets = [3, 0], sizes = [1, 256], strides = [1, 1]} : vector<4x256xf32> to vector<1x256xf32>
    %191 = vector.broadcast %189 : vector<2x1xf32> to vector<2x256xf32>
    %192 = vector.broadcast %190 : vector<1x256xf32> to vector<2x256xf32>
    %193 = arith.mulf %191, %192 : vector<2x256xf32>
    %194 = arith.addf %188, %193 : vector<2x256xf32>
    %c240_i32 = arith.constant 240 : i32
    %195 = tpu.dynamic_rotate %1 by %c240_i32 dim 1 : vector<4x256xf32>, i32 -> vector<4x256xf32>
    %c6_43 = arith.constant 6 : index
    %c0_44 = arith.constant 0 : index
    %196 = vector.load %arg3[%c6_43, %c0_44] : memref<24x256xf32, #tpu.memory_space<vmem>>, vector<1x256xf32>
    %197 = vector.broadcast %196 : vector<1x256xf32> to vector<4x256xf32>
    %198 = arith.mulf %195, %197 : vector<4x256xf32>
    %c0_45 = arith.constant 0 : index
    %c28 = arith.constant 28 : index
    %199 = vector.load %arg2[%c0_45, %c28] : memref<4x184xf32, #tpu.memory_space<vmem>>, vector<2x1xf32>
    %200 = vector.extract_strided_slice %198 {offsets = [0, 0], sizes = [1, 256], strides = [1, 1]} : vector<4x256xf32> to vector<1x256xf32>
    %201 = vector.broadcast %199 : vector<2x1xf32> to vector<2x256xf32>
    %202 = vector.broadcast %200 : vector<1x256xf32> to vector<2x256xf32>
    %203 = arith.mulf %201, %202 : vector<2x256xf32>
    %204 = arith.addf %194, %203 : vector<2x256xf32>
    %c0_46 = arith.constant 0 : index
    %c29 = arith.constant 29 : index
    %205 = vector.load %arg2[%c0_46, %c29] : memref<4x184xf32, #tpu.memory_space<vmem>>, vector<2x1xf32>
    %206 = vector.extract_strided_slice %198 {offsets = [1, 0], sizes = [1, 256], strides = [1, 1]} : vector<4x256xf32> to vector<1x256xf32>
    %207 = vector.broadcast %205 : vector<2x1xf32> to vector<2x256xf32>
    %208 = vector.broadcast %206 : vector<1x256xf32> to vector<2x256xf32>
    %209 = arith.mulf %207, %208 : vector<2x256xf32>
    %210 = arith.addf %204, %209 : vector<2x256xf32>
    %c0_47 = arith.constant 0 : index
    %c30 = arith.constant 30 : index
    %211 = vector.load %arg2[%c0_47, %c30] : memref<4x184xf32, #tpu.memory_space<vmem>>, vector<2x1xf32>
    %212 = vector.extract_strided_slice %198 {offsets = [2, 0], sizes = [1, 256], strides = [1, 1]} : vector<4x256xf32> to vector<1x256xf32>
    %213 = vector.broadcast %211 : vector<2x1xf32> to vector<2x256xf32>
    %214 = vector.broadcast %212 : vector<1x256xf32> to vector<2x256xf32>
    %215 = arith.mulf %213, %214 : vector<2x256xf32>
    %216 = arith.addf %210, %215 : vector<2x256xf32>
    %c0_48 = arith.constant 0 : index
    %c31 = arith.constant 31 : index
    %217 = vector.load %arg2[%c0_48, %c31] : memref<4x184xf32, #tpu.memory_space<vmem>>, vector<2x1xf32>
    %218 = vector.extract_strided_slice %198 {offsets = [3, 0], sizes = [1, 256], strides = [1, 1]} : vector<4x256xf32> to vector<1x256xf32>
    %219 = vector.broadcast %217 : vector<2x1xf32> to vector<2x256xf32>
    %220 = vector.broadcast %218 : vector<1x256xf32> to vector<2x256xf32>
    %221 = arith.mulf %219, %220 : vector<2x256xf32>
    %222 = arith.addf %216, %221 : vector<2x256xf32>
    %c239_i32 = arith.constant 239 : i32
    %223 = tpu.dynamic_rotate %1 by %c239_i32 dim 1 : vector<4x256xf32>, i32 -> vector<4x256xf32>
    %c7_49 = arith.constant 7 : index
    %c0_50 = arith.constant 0 : index
    %224 = vector.load %arg3[%c7_49, %c0_50] : memref<24x256xf32, #tpu.memory_space<vmem>>, vector<1x256xf32>
    %225 = vector.broadcast %224 : vector<1x256xf32> to vector<4x256xf32>
    %226 = arith.mulf %223, %225 : vector<4x256xf32>
    %c0_51 = arith.constant 0 : index
    %c32 = arith.constant 32 : index
    %227 = vector.load %arg2[%c0_51, %c32] : memref<4x184xf32, #tpu.memory_space<vmem>>, vector<2x1xf32>
    %228 = vector.extract_strided_slice %226 {offsets = [0, 0], sizes = [1, 256], strides = [1, 1]} : vector<4x256xf32> to vector<1x256xf32>
    %229 = vector.broadcast %227 : vector<2x1xf32> to vector<2x256xf32>
    %230 = vector.broadcast %228 : vector<1x256xf32> to vector<2x256xf32>
    %231 = arith.mulf %229, %230 : vector<2x256xf32>
    %232 = arith.addf %222, %231 : vector<2x256xf32>
    %c0_52 = arith.constant 0 : index
    %c33 = arith.constant 33 : index
    %233 = vector.load %arg2[%c0_52, %c33] : memref<4x184xf32, #tpu.memory_space<vmem>>, vector<2x1xf32>
    %234 = vector.extract_strided_slice %226 {offsets = [1, 0], sizes = [1, 256], strides = [1, 1]} : vector<4x256xf32> to vector<1x256xf32>
    %235 = vector.broadcast %233 : vector<2x1xf32> to vector<2x256xf32>
    %236 = vector.broadcast %234 : vector<1x256xf32> to vector<2x256xf32>
    %237 = arith.mulf %235, %236 : vector<2x256xf32>
    %238 = arith.addf %232, %237 : vector<2x256xf32>
    %c0_53 = arith.constant 0 : index
    %c34 = arith.constant 34 : index
    %239 = vector.load %arg2[%c0_53, %c34] : memref<4x184xf32, #tpu.memory_space<vmem>>, vector<2x1xf32>
    %240 = vector.extract_strided_slice %226 {offsets = [2, 0], sizes = [1, 256], strides = [1, 1]} : vector<4x256xf32> to vector<1x256xf32>
    %241 = vector.broadcast %239 : vector<2x1xf32> to vector<2x256xf32>
    %242 = vector.broadcast %240 : vector<1x256xf32> to vector<2x256xf32>
    %243 = arith.mulf %241, %242 : vector<2x256xf32>
    %244 = arith.addf %238, %243 : vector<2x256xf32>
    %c0_54 = arith.constant 0 : index
    %c35 = arith.constant 35 : index
    %245 = vector.load %arg2[%c0_54, %c35] : memref<4x184xf32, #tpu.memory_space<vmem>>, vector<2x1xf32>
    %246 = vector.extract_strided_slice %226 {offsets = [3, 0], sizes = [1, 256], strides = [1, 1]} : vector<4x256xf32> to vector<1x256xf32>
    %247 = vector.broadcast %245 : vector<2x1xf32> to vector<2x256xf32>
    %248 = vector.broadcast %246 : vector<1x256xf32> to vector<2x256xf32>
    %249 = arith.mulf %247, %248 : vector<2x256xf32>
    %250 = arith.addf %244, %249 : vector<2x256xf32>
    %c0_55 = arith.constant 0 : index
    %c36 = arith.constant 36 : index
    %251 = vector.load %arg2[%c0_55, %c36] : memref<4x184xf32, #tpu.memory_space<vmem>>, vector<2x1xf32>
    %252 = vector.broadcast %251 : vector<2x1xf32> to vector<2x256xf32>
    %253 = arith.mulf %250, %252 : vector<2x256xf32>
    %c0_56 = arith.constant 0 : index
    %c37 = arith.constant 37 : index
    %254 = vector.load %arg2[%c0_56, %c37] : memref<4x184xf32, #tpu.memory_space<vmem>>, vector<2x1xf32>
    %255 = vector.broadcast %254 : vector<2x1xf32> to vector<2x256xf32>
    %256 = arith.addf %253, %255 : vector<2x256xf32>
    %257 = arith.negf %256 : vector<2x256xf32>
    %258 = math.exp %257 : vector<2x256xf32>
    %cst_57 = arith.constant 1.000000e+00 : f32
    %259 = vector.broadcast %cst_57 : f32 to vector<2x256xf32>
    %260 = arith.addf %259, %258 : vector<2x256xf32>
    %261 = arith.divf %259, %260 : vector<2x256xf32>
    %262 = arith.mulf %256, %261 : vector<2x256xf32>
    %cst_58 = arith.constant 0.000000e+00 : f32
    %263 = vector.broadcast %cst_58 : f32 to vector<4x256xf32>
    %c17_i32_59 = arith.constant 17 : i32
    %264 = tpu.dynamic_rotate %262 by %c17_i32_59 dim 1 : vector<2x256xf32>, i32 -> vector<2x256xf32>
    %c0_60 = arith.constant 0 : index
    %c0_61 = arith.constant 0 : index
    %265 = vector.load %arg3[%c0_60, %c0_61] : memref<24x256xf32, #tpu.memory_space<vmem>>, vector<1x256xf32>
    %266 = vector.broadcast %265 : vector<1x256xf32> to vector<2x256xf32>
    %267 = arith.mulf %264, %266 : vector<2x256xf32>
    %c0_62 = arith.constant 0 : index
    %c38 = arith.constant 38 : index
    %268 = vector.load %arg2[%c0_62, %c38] : memref<4x184xf32, #tpu.memory_space<vmem>>, vector<4x1xf32>
    %269 = vector.extract_strided_slice %267 {offsets = [0, 0], sizes = [1, 256], strides = [1, 1]} : vector<2x256xf32> to vector<1x256xf32>
    %270 = vector.broadcast %268 : vector<4x1xf32> to vector<4x256xf32>
    %271 = vector.broadcast %269 : vector<1x256xf32> to vector<4x256xf32>
    %272 = arith.mulf %270, %271 : vector<4x256xf32>
    %273 = arith.addf %263, %272 : vector<4x256xf32>
    %c0_63 = arith.constant 0 : index
    %c39 = arith.constant 39 : index
    %274 = vector.load %arg2[%c0_63, %c39] : memref<4x184xf32, #tpu.memory_space<vmem>>, vector<4x1xf32>
    %275 = vector.extract_strided_slice %267 {offsets = [1, 0], sizes = [1, 256], strides = [1, 1]} : vector<2x256xf32> to vector<1x256xf32>
    %276 = vector.broadcast %274 : vector<4x1xf32> to vector<4x256xf32>
    %277 = vector.broadcast %275 : vector<1x256xf32> to vector<4x256xf32>
    %278 = arith.mulf %276, %277 : vector<4x256xf32>
    %279 = arith.addf %273, %278 : vector<4x256xf32>
    %c16_i32_64 = arith.constant 16 : i32
    %280 = tpu.dynamic_rotate %262 by %c16_i32_64 dim 1 : vector<2x256xf32>, i32 -> vector<2x256xf32>
    %c1_65 = arith.constant 1 : index
    %c0_66 = arith.constant 0 : index
    %281 = vector.load %arg3[%c1_65, %c0_66] : memref<24x256xf32, #tpu.memory_space<vmem>>, vector<1x256xf32>
    %282 = vector.broadcast %281 : vector<1x256xf32> to vector<2x256xf32>
    %283 = arith.mulf %280, %282 : vector<2x256xf32>
    %c0_67 = arith.constant 0 : index
    %c40 = arith.constant 40 : index
    %284 = vector.load %arg2[%c0_67, %c40] : memref<4x184xf32, #tpu.memory_space<vmem>>, vector<4x1xf32>
    %285 = vector.extract_strided_slice %283 {offsets = [0, 0], sizes = [1, 256], strides = [1, 1]} : vector<2x256xf32> to vector<1x256xf32>
    %286 = vector.broadcast %284 : vector<4x1xf32> to vector<4x256xf32>
    %287 = vector.broadcast %285 : vector<1x256xf32> to vector<4x256xf32>
    %288 = arith.mulf %286, %287 : vector<4x256xf32>
    %289 = arith.addf %279, %288 : vector<4x256xf32>
    %c0_68 = arith.constant 0 : index
    %c41 = arith.constant 41 : index
    %290 = vector.load %arg2[%c0_68, %c41] : memref<4x184xf32, #tpu.memory_space<vmem>>, vector<4x1xf32>
    %291 = vector.extract_strided_slice %283 {offsets = [1, 0], sizes = [1, 256], strides = [1, 1]} : vector<2x256xf32> to vector<1x256xf32>
    %292 = vector.broadcast %290 : vector<4x1xf32> to vector<4x256xf32>
    %293 = vector.broadcast %291 : vector<1x256xf32> to vector<4x256xf32>
    %294 = arith.mulf %292, %293 : vector<4x256xf32>
    %295 = arith.addf %289, %294 : vector<4x256xf32>
    %c15_i32_69 = arith.constant 15 : i32
    %296 = tpu.dynamic_rotate %262 by %c15_i32_69 dim 1 : vector<2x256xf32>, i32 -> vector<2x256xf32>
    %c2_70 = arith.constant 2 : index
    %c0_71 = arith.constant 0 : index
    %297 = vector.load %arg3[%c2_70, %c0_71] : memref<24x256xf32, #tpu.memory_space<vmem>>, vector<1x256xf32>
    %298 = vector.broadcast %297 : vector<1x256xf32> to vector<2x256xf32>
    %299 = arith.mulf %296, %298 : vector<2x256xf32>
    %c0_72 = arith.constant 0 : index
    %c42 = arith.constant 42 : index
    %300 = vector.load %arg2[%c0_72, %c42] : memref<4x184xf32, #tpu.memory_space<vmem>>, vector<4x1xf32>
    %301 = vector.extract_strided_slice %299 {offsets = [0, 0], sizes = [1, 256], strides = [1, 1]} : vector<2x256xf32> to vector<1x256xf32>
    %302 = vector.broadcast %300 : vector<4x1xf32> to vector<4x256xf32>
    %303 = vector.broadcast %301 : vector<1x256xf32> to vector<4x256xf32>
    %304 = arith.mulf %302, %303 : vector<4x256xf32>
    %305 = arith.addf %295, %304 : vector<4x256xf32>
    %c0_73 = arith.constant 0 : index
    %c43 = arith.constant 43 : index
    %306 = vector.load %arg2[%c0_73, %c43] : memref<4x184xf32, #tpu.memory_space<vmem>>, vector<4x1xf32>
    %307 = vector.extract_strided_slice %299 {offsets = [1, 0], sizes = [1, 256], strides = [1, 1]} : vector<2x256xf32> to vector<1x256xf32>
    %308 = vector.broadcast %306 : vector<4x1xf32> to vector<4x256xf32>
    %309 = vector.broadcast %307 : vector<1x256xf32> to vector<4x256xf32>
    %310 = arith.mulf %308, %309 : vector<4x256xf32>
    %311 = arith.addf %305, %310 : vector<4x256xf32>
    %c1_i32_74 = arith.constant 1 : i32
    %312 = tpu.dynamic_rotate %262 by %c1_i32_74 dim 1 : vector<2x256xf32>, i32 -> vector<2x256xf32>
    %c3_75 = arith.constant 3 : index
    %c0_76 = arith.constant 0 : index
    %313 = vector.load %arg3[%c3_75, %c0_76] : memref<24x256xf32, #tpu.memory_space<vmem>>, vector<1x256xf32>
    %314 = vector.broadcast %313 : vector<1x256xf32> to vector<2x256xf32>
    %315 = arith.mulf %312, %314 : vector<2x256xf32>
    %c0_77 = arith.constant 0 : index
    %c44 = arith.constant 44 : index
    %316 = vector.load %arg2[%c0_77, %c44] : memref<4x184xf32, #tpu.memory_space<vmem>>, vector<4x1xf32>
    %317 = vector.extract_strided_slice %315 {offsets = [0, 0], sizes = [1, 256], strides = [1, 1]} : vector<2x256xf32> to vector<1x256xf32>
    %318 = vector.broadcast %316 : vector<4x1xf32> to vector<4x256xf32>
    %319 = vector.broadcast %317 : vector<1x256xf32> to vector<4x256xf32>
    %320 = arith.mulf %318, %319 : vector<4x256xf32>
    %321 = arith.addf %311, %320 : vector<4x256xf32>
    %c0_78 = arith.constant 0 : index
    %c45 = arith.constant 45 : index
    %322 = vector.load %arg2[%c0_78, %c45] : memref<4x184xf32, #tpu.memory_space<vmem>>, vector<4x1xf32>
    %323 = vector.extract_strided_slice %315 {offsets = [1, 0], sizes = [1, 256], strides = [1, 1]} : vector<2x256xf32> to vector<1x256xf32>
    %324 = vector.broadcast %322 : vector<4x1xf32> to vector<4x256xf32>
    %325 = vector.broadcast %323 : vector<1x256xf32> to vector<4x256xf32>
    %326 = arith.mulf %324, %325 : vector<4x256xf32>
    %327 = arith.addf %321, %326 : vector<4x256xf32>
    %c0_79 = arith.constant 0 : index
    %c46 = arith.constant 46 : index
    %328 = vector.load %arg2[%c0_79, %c46] : memref<4x184xf32, #tpu.memory_space<vmem>>, vector<4x1xf32>
    %329 = vector.extract_strided_slice %262 {offsets = [0, 0], sizes = [1, 256], strides = [1, 1]} : vector<2x256xf32> to vector<1x256xf32>
    %330 = vector.broadcast %328 : vector<4x1xf32> to vector<4x256xf32>
    %331 = vector.broadcast %329 : vector<1x256xf32> to vector<4x256xf32>
    %332 = arith.mulf %330, %331 : vector<4x256xf32>
    %333 = arith.addf %327, %332 : vector<4x256xf32>
    %c0_80 = arith.constant 0 : index
    %c47 = arith.constant 47 : index
    %334 = vector.load %arg2[%c0_80, %c47] : memref<4x184xf32, #tpu.memory_space<vmem>>, vector<4x1xf32>
    %335 = vector.extract_strided_slice %262 {offsets = [1, 0], sizes = [1, 256], strides = [1, 1]} : vector<2x256xf32> to vector<1x256xf32>
    %336 = vector.broadcast %334 : vector<4x1xf32> to vector<4x256xf32>
    %337 = vector.broadcast %335 : vector<1x256xf32> to vector<4x256xf32>
    %338 = arith.mulf %336, %337 : vector<4x256xf32>
    %339 = arith.addf %333, %338 : vector<4x256xf32>
    %c255_i32_81 = arith.constant 255 : i32
    %340 = tpu.dynamic_rotate %262 by %c255_i32_81 dim 1 : vector<2x256xf32>, i32 -> vector<2x256xf32>
    %c4_82 = arith.constant 4 : index
    %c0_83 = arith.constant 0 : index
    %341 = vector.load %arg3[%c4_82, %c0_83] : memref<24x256xf32, #tpu.memory_space<vmem>>, vector<1x256xf32>
    %342 = vector.broadcast %341 : vector<1x256xf32> to vector<2x256xf32>
    %343 = arith.mulf %340, %342 : vector<2x256xf32>
    %c0_84 = arith.constant 0 : index
    %c48 = arith.constant 48 : index
    %344 = vector.load %arg2[%c0_84, %c48] : memref<4x184xf32, #tpu.memory_space<vmem>>, vector<4x1xf32>
    %345 = vector.extract_strided_slice %343 {offsets = [0, 0], sizes = [1, 256], strides = [1, 1]} : vector<2x256xf32> to vector<1x256xf32>
    %346 = vector.broadcast %344 : vector<4x1xf32> to vector<4x256xf32>
    %347 = vector.broadcast %345 : vector<1x256xf32> to vector<4x256xf32>
    %348 = arith.mulf %346, %347 : vector<4x256xf32>
    %349 = arith.addf %339, %348 : vector<4x256xf32>
    %c0_85 = arith.constant 0 : index
    %c49 = arith.constant 49 : index
    %350 = vector.load %arg2[%c0_85, %c49] : memref<4x184xf32, #tpu.memory_space<vmem>>, vector<4x1xf32>
    %351 = vector.extract_strided_slice %343 {offsets = [1, 0], sizes = [1, 256], strides = [1, 1]} : vector<2x256xf32> to vector<1x256xf32>
    %352 = vector.broadcast %350 : vector<4x1xf32> to vector<4x256xf32>
    %353 = vector.broadcast %351 : vector<1x256xf32> to vector<4x256xf32>
    %354 = arith.mulf %352, %353 : vector<4x256xf32>
    %355 = arith.addf %349, %354 : vector<4x256xf32>
    %c241_i32_86 = arith.constant 241 : i32
    %356 = tpu.dynamic_rotate %262 by %c241_i32_86 dim 1 : vector<2x256xf32>, i32 -> vector<2x256xf32>
    %c5_87 = arith.constant 5 : index
    %c0_88 = arith.constant 0 : index
    %357 = vector.load %arg3[%c5_87, %c0_88] : memref<24x256xf32, #tpu.memory_space<vmem>>, vector<1x256xf32>
    %358 = vector.broadcast %357 : vector<1x256xf32> to vector<2x256xf32>
    %359 = arith.mulf %356, %358 : vector<2x256xf32>
    %c0_89 = arith.constant 0 : index
    %c50 = arith.constant 50 : index
    %360 = vector.load %arg2[%c0_89, %c50] : memref<4x184xf32, #tpu.memory_space<vmem>>, vector<4x1xf32>
    %361 = vector.extract_strided_slice %359 {offsets = [0, 0], sizes = [1, 256], strides = [1, 1]} : vector<2x256xf32> to vector<1x256xf32>
    %362 = vector.broadcast %360 : vector<4x1xf32> to vector<4x256xf32>
    %363 = vector.broadcast %361 : vector<1x256xf32> to vector<4x256xf32>
    %364 = arith.mulf %362, %363 : vector<4x256xf32>
    %365 = arith.addf %355, %364 : vector<4x256xf32>
    %c0_90 = arith.constant 0 : index
    %c51 = arith.constant 51 : index
    %366 = vector.load %arg2[%c0_90, %c51] : memref<4x184xf32, #tpu.memory_space<vmem>>, vector<4x1xf32>
    %367 = vector.extract_strided_slice %359 {offsets = [1, 0], sizes = [1, 256], strides = [1, 1]} : vector<2x256xf32> to vector<1x256xf32>
    %368 = vector.broadcast %366 : vector<4x1xf32> to vector<4x256xf32>
    %369 = vector.broadcast %367 : vector<1x256xf32> to vector<4x256xf32>
    %370 = arith.mulf %368, %369 : vector<4x256xf32>
    %371 = arith.addf %365, %370 : vector<4x256xf32>
    %c240_i32_91 = arith.constant 240 : i32
    %372 = tpu.dynamic_rotate %262 by %c240_i32_91 dim 1 : vector<2x256xf32>, i32 -> vector<2x256xf32>
    %c6_92 = arith.constant 6 : index
    %c0_93 = arith.constant 0 : index
    %373 = vector.load %arg3[%c6_92, %c0_93] : memref<24x256xf32, #tpu.memory_space<vmem>>, vector<1x256xf32>
    %374 = vector.broadcast %373 : vector<1x256xf32> to vector<2x256xf32>
    %375 = arith.mulf %372, %374 : vector<2x256xf32>
    %c0_94 = arith.constant 0 : index
    %c52 = arith.constant 52 : index
    %376 = vector.load %arg2[%c0_94, %c52] : memref<4x184xf32, #tpu.memory_space<vmem>>, vector<4x1xf32>
    %377 = vector.extract_strided_slice %375 {offsets = [0, 0], sizes = [1, 256], strides = [1, 1]} : vector<2x256xf32> to vector<1x256xf32>
    %378 = vector.broadcast %376 : vector<4x1xf32> to vector<4x256xf32>
    %379 = vector.broadcast %377 : vector<1x256xf32> to vector<4x256xf32>
    %380 = arith.mulf %378, %379 : vector<4x256xf32>
    %381 = arith.addf %371, %380 : vector<4x256xf32>
    %c0_95 = arith.constant 0 : index
    %c53 = arith.constant 53 : index
    %382 = vector.load %arg2[%c0_95, %c53] : memref<4x184xf32, #tpu.memory_space<vmem>>, vector<4x1xf32>
    %383 = vector.extract_strided_slice %375 {offsets = [1, 0], sizes = [1, 256], strides = [1, 1]} : vector<2x256xf32> to vector<1x256xf32>
    %384 = vector.broadcast %382 : vector<4x1xf32> to vector<4x256xf32>
    %385 = vector.broadcast %383 : vector<1x256xf32> to vector<4x256xf32>
    %386 = arith.mulf %384, %385 : vector<4x256xf32>
    %387 = arith.addf %381, %386 : vector<4x256xf32>
    %c239_i32_96 = arith.constant 239 : i32
    %388 = tpu.dynamic_rotate %262 by %c239_i32_96 dim 1 : vector<2x256xf32>, i32 -> vector<2x256xf32>
    %c7_97 = arith.constant 7 : index
    %c0_98 = arith.constant 0 : index
    %389 = vector.load %arg3[%c7_97, %c0_98] : memref<24x256xf32, #tpu.memory_space<vmem>>, vector<1x256xf32>
    %390 = vector.broadcast %389 : vector<1x256xf32> to vector<2x256xf32>
    %391 = arith.mulf %388, %390 : vector<2x256xf32>
    %c0_99 = arith.constant 0 : index
    %c54 = arith.constant 54 : index
    %392 = vector.load %arg2[%c0_99, %c54] : memref<4x184xf32, #tpu.memory_space<vmem>>, vector<4x1xf32>
    %393 = vector.extract_strided_slice %391 {offsets = [0, 0], sizes = [1, 256], strides = [1, 1]} : vector<2x256xf32> to vector<1x256xf32>
    %394 = vector.broadcast %392 : vector<4x1xf32> to vector<4x256xf32>
    %395 = vector.broadcast %393 : vector<1x256xf32> to vector<4x256xf32>
    %396 = arith.mulf %394, %395 : vector<4x256xf32>
    %397 = arith.addf %387, %396 : vector<4x256xf32>
    %c0_100 = arith.constant 0 : index
    %c55 = arith.constant 55 : index
    %398 = vector.load %arg2[%c0_100, %c55] : memref<4x184xf32, #tpu.memory_space<vmem>>, vector<4x1xf32>
    %399 = vector.extract_strided_slice %391 {offsets = [1, 0], sizes = [1, 256], strides = [1, 1]} : vector<2x256xf32> to vector<1x256xf32>
    %400 = vector.broadcast %398 : vector<4x1xf32> to vector<4x256xf32>
    %401 = vector.broadcast %399 : vector<1x256xf32> to vector<4x256xf32>
    %402 = arith.mulf %400, %401 : vector<4x256xf32>
    %403 = arith.addf %397, %402 : vector<4x256xf32>
    %c0_101 = arith.constant 0 : index
    %c56 = arith.constant 56 : index
    %404 = vector.load %arg2[%c0_101, %c56] : memref<4x184xf32, #tpu.memory_space<vmem>>, vector<4x1xf32>
    %405 = vector.broadcast %404 : vector<4x1xf32> to vector<4x256xf32>
    %406 = arith.mulf %403, %405 : vector<4x256xf32>
    %c0_102 = arith.constant 0 : index
    %c57 = arith.constant 57 : index
    %407 = vector.load %arg2[%c0_102, %c57] : memref<4x184xf32, #tpu.memory_space<vmem>>, vector<4x1xf32>
    %408 = vector.broadcast %407 : vector<4x1xf32> to vector<4x256xf32>
    %409 = arith.addf %406, %408 : vector<4x256xf32>
    %410 = arith.negf %409 : vector<4x256xf32>
    %411 = math.exp %410 : vector<4x256xf32>
    %cst_103 = arith.constant 1.000000e+00 : f32
    %412 = vector.broadcast %cst_103 : f32 to vector<4x256xf32>
    %413 = arith.addf %412, %411 : vector<4x256xf32>
    %414 = arith.divf %412, %413 : vector<4x256xf32>
    %415 = arith.mulf %409, %414 : vector<4x256xf32>
    %cst_104 = arith.constant 0.000000e+00 : f32
    %416 = vector.broadcast %cst_104 : f32 to vector<4x256xf32>
    %cst_105 = arith.constant 0.000000e+00 : f32
    %417 = vector.broadcast %cst_105 : f32 to vector<4x256xf32>
    %c0_106 = arith.constant 0 : index
    %c180 = arith.constant 180 : index
    %418 = vector.load %arg2[%c0_106, %c180] : memref<4x184xf32, #tpu.memory_space<vmem>>, vector<4x1xf32>
    %419 = vector.extract_strided_slice %1 {offsets = [0, 0], sizes = [1, 256], strides = [1, 1]} : vector<4x256xf32> to vector<1x256xf32>
    %420 = vector.broadcast %418 : vector<4x1xf32> to vector<4x256xf32>
    %421 = vector.broadcast %419 : vector<1x256xf32> to vector<4x256xf32>
    %422 = arith.mulf %420, %421 : vector<4x256xf32>
    %423 = arith.addf %416, %422 : vector<4x256xf32>
    %c0_107 = arith.constant 0 : index
    %c180_108 = arith.constant 180 : index
    %424 = vector.load %arg2[%c0_107, %c180_108] : memref<4x184xf32, #tpu.memory_space<vmem>>, vector<4x1xf32>
    %425 = vector.extract_strided_slice %1 {offsets = [1, 0], sizes = [1, 256], strides = [1, 1]} : vector<4x256xf32> to vector<1x256xf32>
    %426 = vector.broadcast %424 : vector<4x1xf32> to vector<4x256xf32>
    %427 = vector.broadcast %425 : vector<1x256xf32> to vector<4x256xf32>
    %428 = arith.mulf %426, %427 : vector<4x256xf32>
    %429 = arith.addf %417, %428 : vector<4x256xf32>
    %c0_109 = arith.constant 0 : index
    %c181 = arith.constant 181 : index
    %430 = vector.load %arg2[%c0_109, %c181] : memref<4x184xf32, #tpu.memory_space<vmem>>, vector<4x1xf32>
    %431 = vector.extract_strided_slice %1 {offsets = [2, 0], sizes = [1, 256], strides = [1, 1]} : vector<4x256xf32> to vector<1x256xf32>
    %432 = vector.broadcast %430 : vector<4x1xf32> to vector<4x256xf32>
    %433 = vector.broadcast %431 : vector<1x256xf32> to vector<4x256xf32>
    %434 = arith.mulf %432, %433 : vector<4x256xf32>
    %435 = arith.addf %423, %434 : vector<4x256xf32>
    %c0_110 = arith.constant 0 : index
    %c181_111 = arith.constant 181 : index
    %436 = vector.load %arg2[%c0_110, %c181_111] : memref<4x184xf32, #tpu.memory_space<vmem>>, vector<4x1xf32>
    %437 = vector.extract_strided_slice %1 {offsets = [3, 0], sizes = [1, 256], strides = [1, 1]} : vector<4x256xf32> to vector<1x256xf32>
    %438 = vector.broadcast %436 : vector<4x1xf32> to vector<4x256xf32>
    %439 = vector.broadcast %437 : vector<1x256xf32> to vector<4x256xf32>
    %440 = arith.mulf %438, %439 : vector<4x256xf32>
    %441 = arith.addf %429, %440 : vector<4x256xf32>
    %c0_112 = arith.constant 0 : index
    %c182 = arith.constant 182 : index
    %442 = vector.load %arg2[%c0_112, %c182] : memref<4x184xf32, #tpu.memory_space<vmem>>, vector<4x1xf32>
    %443 = vector.extract_strided_slice %415 {offsets = [0, 0], sizes = [1, 256], strides = [1, 1]} : vector<4x256xf32> to vector<1x256xf32>
    %444 = vector.broadcast %442 : vector<4x1xf32> to vector<4x256xf32>
    %445 = vector.broadcast %443 : vector<1x256xf32> to vector<4x256xf32>
    %446 = arith.mulf %444, %445 : vector<4x256xf32>
    %447 = arith.addf %435, %446 : vector<4x256xf32>
    %c0_113 = arith.constant 0 : index
    %c182_114 = arith.constant 182 : index
    %448 = vector.load %arg2[%c0_113, %c182_114] : memref<4x184xf32, #tpu.memory_space<vmem>>, vector<4x1xf32>
    %449 = vector.extract_strided_slice %415 {offsets = [1, 0], sizes = [1, 256], strides = [1, 1]} : vector<4x256xf32> to vector<1x256xf32>
    %450 = vector.broadcast %448 : vector<4x1xf32> to vector<4x256xf32>
    %451 = vector.broadcast %449 : vector<1x256xf32> to vector<4x256xf32>
    %452 = arith.mulf %450, %451 : vector<4x256xf32>
    %453 = arith.addf %441, %452 : vector<4x256xf32>
    %c0_115 = arith.constant 0 : index
    %c183 = arith.constant 183 : index
    %454 = vector.load %arg2[%c0_115, %c183] : memref<4x184xf32, #tpu.memory_space<vmem>>, vector<4x1xf32>
    %455 = vector.extract_strided_slice %415 {offsets = [2, 0], sizes = [1, 256], strides = [1, 1]} : vector<4x256xf32> to vector<1x256xf32>
    %456 = vector.broadcast %454 : vector<4x1xf32> to vector<4x256xf32>
    %457 = vector.broadcast %455 : vector<1x256xf32> to vector<4x256xf32>
    %458 = arith.mulf %456, %457 : vector<4x256xf32>
    %459 = arith.addf %447, %458 : vector<4x256xf32>
    %c0_116 = arith.constant 0 : index
    %c183_117 = arith.constant 183 : index
    %460 = vector.load %arg2[%c0_116, %c183_117] : memref<4x184xf32, #tpu.memory_space<vmem>>, vector<4x1xf32>
    %461 = vector.extract_strided_slice %415 {offsets = [3, 0], sizes = [1, 256], strides = [1, 1]} : vector<4x256xf32> to vector<1x256xf32>
    %462 = vector.broadcast %460 : vector<4x1xf32> to vector<4x256xf32>
    %463 = vector.broadcast %461 : vector<1x256xf32> to vector<4x256xf32>
    %464 = arith.mulf %462, %463 : vector<4x256xf32>
    %465 = arith.addf %453, %464 : vector<4x256xf32>
    %cst_118 = arith.constant 0.000000e+00 : f32
    %466 = vector.broadcast %cst_118 : f32 to vector<4x256xf32>
    %cst_119 = arith.constant 0.000000e+00 : f32
    %467 = vector.broadcast %cst_119 : f32 to vector<4x256xf32>
    %c0_120 = arith.constant 0 : index
    %c58 = arith.constant 58 : index
    %468 = vector.load %arg2[%c0_120, %c58] : memref<4x184xf32, #tpu.memory_space<vmem>>, vector<4x1xf32>
    %c17_i32_121 = arith.constant 17 : i32
    %469 = tpu.dynamic_rotate %459 by %c17_i32_121 dim 1 : vector<4x256xf32>, i32 -> vector<4x256xf32>
    %c0_122 = arith.constant 0 : index
    %c0_123 = arith.constant 0 : index
    %470 = vector.load %arg3[%c0_122, %c0_123] : memref<24x256xf32, #tpu.memory_space<vmem>>, vector<1x256xf32>
    %471 = vector.broadcast %470 : vector<1x256xf32> to vector<4x256xf32>
    %472 = arith.mulf %469, %471 : vector<4x256xf32>
    %473 = vector.broadcast %468 : vector<4x1xf32> to vector<4x256xf32>
    %474 = arith.mulf %473, %472 : vector<4x256xf32>
    %475 = arith.addf %467, %474 : vector<4x256xf32>
    %c0_124 = arith.constant 0 : index
    %c59 = arith.constant 59 : index
    %476 = vector.load %arg2[%c0_124, %c59] : memref<4x184xf32, #tpu.memory_space<vmem>>, vector<4x1xf32>
    %c17_i32_125 = arith.constant 17 : i32
    %477 = tpu.dynamic_rotate %465 by %c17_i32_125 dim 1 : vector<4x256xf32>, i32 -> vector<4x256xf32>
    %c0_126 = arith.constant 0 : index
    %c0_127 = arith.constant 0 : index
    %478 = vector.load %arg3[%c0_126, %c0_127] : memref<24x256xf32, #tpu.memory_space<vmem>>, vector<1x256xf32>
    %479 = vector.broadcast %478 : vector<1x256xf32> to vector<4x256xf32>
    %480 = arith.mulf %477, %479 : vector<4x256xf32>
    %481 = vector.broadcast %476 : vector<4x1xf32> to vector<4x256xf32>
    %482 = arith.mulf %481, %480 : vector<4x256xf32>
    %483 = arith.addf %475, %482 : vector<4x256xf32>
    %c0_128 = arith.constant 0 : index
    %c60 = arith.constant 60 : index
    %484 = vector.load %arg2[%c0_128, %c60] : memref<4x184xf32, #tpu.memory_space<vmem>>, vector<4x1xf32>
    %c16_i32_129 = arith.constant 16 : i32
    %485 = tpu.dynamic_rotate %459 by %c16_i32_129 dim 1 : vector<4x256xf32>, i32 -> vector<4x256xf32>
    %c1_130 = arith.constant 1 : index
    %c0_131 = arith.constant 0 : index
    %486 = vector.load %arg3[%c1_130, %c0_131] : memref<24x256xf32, #tpu.memory_space<vmem>>, vector<1x256xf32>
    %487 = vector.broadcast %486 : vector<1x256xf32> to vector<4x256xf32>
    %488 = arith.mulf %485, %487 : vector<4x256xf32>
    %489 = vector.broadcast %484 : vector<4x1xf32> to vector<4x256xf32>
    %490 = arith.mulf %489, %488 : vector<4x256xf32>
    %491 = arith.addf %483, %490 : vector<4x256xf32>
    %c0_132 = arith.constant 0 : index
    %c61 = arith.constant 61 : index
    %492 = vector.load %arg2[%c0_132, %c61] : memref<4x184xf32, #tpu.memory_space<vmem>>, vector<4x1xf32>
    %c16_i32_133 = arith.constant 16 : i32
    %493 = tpu.dynamic_rotate %465 by %c16_i32_133 dim 1 : vector<4x256xf32>, i32 -> vector<4x256xf32>
    %c1_134 = arith.constant 1 : index
    %c0_135 = arith.constant 0 : index
    %494 = vector.load %arg3[%c1_134, %c0_135] : memref<24x256xf32, #tpu.memory_space<vmem>>, vector<1x256xf32>
    %495 = vector.broadcast %494 : vector<1x256xf32> to vector<4x256xf32>
    %496 = arith.mulf %493, %495 : vector<4x256xf32>
    %497 = vector.broadcast %492 : vector<4x1xf32> to vector<4x256xf32>
    %498 = arith.mulf %497, %496 : vector<4x256xf32>
    %499 = arith.addf %491, %498 : vector<4x256xf32>
    %c0_136 = arith.constant 0 : index
    %c62 = arith.constant 62 : index
    %500 = vector.load %arg2[%c0_136, %c62] : memref<4x184xf32, #tpu.memory_space<vmem>>, vector<4x1xf32>
    %c15_i32_137 = arith.constant 15 : i32
    %501 = tpu.dynamic_rotate %459 by %c15_i32_137 dim 1 : vector<4x256xf32>, i32 -> vector<4x256xf32>
    %c2_138 = arith.constant 2 : index
    %c0_139 = arith.constant 0 : index
    %502 = vector.load %arg3[%c2_138, %c0_139] : memref<24x256xf32, #tpu.memory_space<vmem>>, vector<1x256xf32>
    %503 = vector.broadcast %502 : vector<1x256xf32> to vector<4x256xf32>
    %504 = arith.mulf %501, %503 : vector<4x256xf32>
    %505 = vector.broadcast %500 : vector<4x1xf32> to vector<4x256xf32>
    %506 = arith.mulf %505, %504 : vector<4x256xf32>
    %507 = arith.addf %499, %506 : vector<4x256xf32>
    %c0_140 = arith.constant 0 : index
    %c63 = arith.constant 63 : index
    %508 = vector.load %arg2[%c0_140, %c63] : memref<4x184xf32, #tpu.memory_space<vmem>>, vector<4x1xf32>
    %c15_i32_141 = arith.constant 15 : i32
    %509 = tpu.dynamic_rotate %465 by %c15_i32_141 dim 1 : vector<4x256xf32>, i32 -> vector<4x256xf32>
    %c2_142 = arith.constant 2 : index
    %c0_143 = arith.constant 0 : index
    %510 = vector.load %arg3[%c2_142, %c0_143] : memref<24x256xf32, #tpu.memory_space<vmem>>, vector<1x256xf32>
    %511 = vector.broadcast %510 : vector<1x256xf32> to vector<4x256xf32>
    %512 = arith.mulf %509, %511 : vector<4x256xf32>
    %513 = vector.broadcast %508 : vector<4x1xf32> to vector<4x256xf32>
    %514 = arith.mulf %513, %512 : vector<4x256xf32>
    %515 = arith.addf %507, %514 : vector<4x256xf32>
    %c0_144 = arith.constant 0 : index
    %c64 = arith.constant 64 : index
    %516 = vector.load %arg2[%c0_144, %c64] : memref<4x184xf32, #tpu.memory_space<vmem>>, vector<4x1xf32>
    %c1_i32_145 = arith.constant 1 : i32
    %517 = tpu.dynamic_rotate %459 by %c1_i32_145 dim 1 : vector<4x256xf32>, i32 -> vector<4x256xf32>
    %c3_146 = arith.constant 3 : index
    %c0_147 = arith.constant 0 : index
    %518 = vector.load %arg3[%c3_146, %c0_147] : memref<24x256xf32, #tpu.memory_space<vmem>>, vector<1x256xf32>
    %519 = vector.broadcast %518 : vector<1x256xf32> to vector<4x256xf32>
    %520 = arith.mulf %517, %519 : vector<4x256xf32>
    %521 = vector.broadcast %516 : vector<4x1xf32> to vector<4x256xf32>
    %522 = arith.mulf %521, %520 : vector<4x256xf32>
    %523 = arith.addf %515, %522 : vector<4x256xf32>
    %c0_148 = arith.constant 0 : index
    %c65 = arith.constant 65 : index
    %524 = vector.load %arg2[%c0_148, %c65] : memref<4x184xf32, #tpu.memory_space<vmem>>, vector<4x1xf32>
    %c1_i32_149 = arith.constant 1 : i32
    %525 = tpu.dynamic_rotate %465 by %c1_i32_149 dim 1 : vector<4x256xf32>, i32 -> vector<4x256xf32>
    %c3_150 = arith.constant 3 : index
    %c0_151 = arith.constant 0 : index
    %526 = vector.load %arg3[%c3_150, %c0_151] : memref<24x256xf32, #tpu.memory_space<vmem>>, vector<1x256xf32>
    %527 = vector.broadcast %526 : vector<1x256xf32> to vector<4x256xf32>
    %528 = arith.mulf %525, %527 : vector<4x256xf32>
    %529 = vector.broadcast %524 : vector<4x1xf32> to vector<4x256xf32>
    %530 = arith.mulf %529, %528 : vector<4x256xf32>
    %531 = arith.addf %523, %530 : vector<4x256xf32>
    %c0_152 = arith.constant 0 : index
    %c66 = arith.constant 66 : index
    %532 = vector.load %arg2[%c0_152, %c66] : memref<4x184xf32, #tpu.memory_space<vmem>>, vector<4x1xf32>
    %533 = vector.broadcast %532 : vector<4x1xf32> to vector<4x256xf32>
    %534 = arith.mulf %533, %459 : vector<4x256xf32>
    %535 = arith.addf %531, %534 : vector<4x256xf32>
    %c0_153 = arith.constant 0 : index
    %c67 = arith.constant 67 : index
    %536 = vector.load %arg2[%c0_153, %c67] : memref<4x184xf32, #tpu.memory_space<vmem>>, vector<4x1xf32>
    %537 = vector.broadcast %536 : vector<4x1xf32> to vector<4x256xf32>
    %538 = arith.mulf %537, %465 : vector<4x256xf32>
    %539 = arith.addf %535, %538 : vector<4x256xf32>
    %c0_154 = arith.constant 0 : index
    %c68 = arith.constant 68 : index
    %540 = vector.load %arg2[%c0_154, %c68] : memref<4x184xf32, #tpu.memory_space<vmem>>, vector<4x1xf32>
    %c255_i32_155 = arith.constant 255 : i32
    %541 = tpu.dynamic_rotate %459 by %c255_i32_155 dim 1 : vector<4x256xf32>, i32 -> vector<4x256xf32>
    %c4_156 = arith.constant 4 : index
    %c0_157 = arith.constant 0 : index
    %542 = vector.load %arg3[%c4_156, %c0_157] : memref<24x256xf32, #tpu.memory_space<vmem>>, vector<1x256xf32>
    %543 = vector.broadcast %542 : vector<1x256xf32> to vector<4x256xf32>
    %544 = arith.mulf %541, %543 : vector<4x256xf32>
    %545 = vector.broadcast %540 : vector<4x1xf32> to vector<4x256xf32>
    %546 = arith.mulf %545, %544 : vector<4x256xf32>
    %547 = arith.addf %539, %546 : vector<4x256xf32>
    %c0_158 = arith.constant 0 : index
    %c69 = arith.constant 69 : index
    %548 = vector.load %arg2[%c0_158, %c69] : memref<4x184xf32, #tpu.memory_space<vmem>>, vector<4x1xf32>
    %c255_i32_159 = arith.constant 255 : i32
    %549 = tpu.dynamic_rotate %465 by %c255_i32_159 dim 1 : vector<4x256xf32>, i32 -> vector<4x256xf32>
    %c4_160 = arith.constant 4 : index
    %c0_161 = arith.constant 0 : index
    %550 = vector.load %arg3[%c4_160, %c0_161] : memref<24x256xf32, #tpu.memory_space<vmem>>, vector<1x256xf32>
    %551 = vector.broadcast %550 : vector<1x256xf32> to vector<4x256xf32>
    %552 = arith.mulf %549, %551 : vector<4x256xf32>
    %553 = vector.broadcast %548 : vector<4x1xf32> to vector<4x256xf32>
    %554 = arith.mulf %553, %552 : vector<4x256xf32>
    %555 = arith.addf %547, %554 : vector<4x256xf32>
    %c0_162 = arith.constant 0 : index
    %c70 = arith.constant 70 : index
    %556 = vector.load %arg2[%c0_162, %c70] : memref<4x184xf32, #tpu.memory_space<vmem>>, vector<4x1xf32>
    %c241_i32_163 = arith.constant 241 : i32
    %557 = tpu.dynamic_rotate %459 by %c241_i32_163 dim 1 : vector<4x256xf32>, i32 -> vector<4x256xf32>
    %c5_164 = arith.constant 5 : index
    %c0_165 = arith.constant 0 : index
    %558 = vector.load %arg3[%c5_164, %c0_165] : memref<24x256xf32, #tpu.memory_space<vmem>>, vector<1x256xf32>
    %559 = vector.broadcast %558 : vector<1x256xf32> to vector<4x256xf32>
    %560 = arith.mulf %557, %559 : vector<4x256xf32>
    %561 = vector.broadcast %556 : vector<4x1xf32> to vector<4x256xf32>
    %562 = arith.mulf %561, %560 : vector<4x256xf32>
    %563 = arith.addf %555, %562 : vector<4x256xf32>
    %c0_166 = arith.constant 0 : index
    %c71 = arith.constant 71 : index
    %564 = vector.load %arg2[%c0_166, %c71] : memref<4x184xf32, #tpu.memory_space<vmem>>, vector<4x1xf32>
    %c241_i32_167 = arith.constant 241 : i32
    %565 = tpu.dynamic_rotate %465 by %c241_i32_167 dim 1 : vector<4x256xf32>, i32 -> vector<4x256xf32>
    %c5_168 = arith.constant 5 : index
    %c0_169 = arith.constant 0 : index
    %566 = vector.load %arg3[%c5_168, %c0_169] : memref<24x256xf32, #tpu.memory_space<vmem>>, vector<1x256xf32>
    %567 = vector.broadcast %566 : vector<1x256xf32> to vector<4x256xf32>
    %568 = arith.mulf %565, %567 : vector<4x256xf32>
    %569 = vector.broadcast %564 : vector<4x1xf32> to vector<4x256xf32>
    %570 = arith.mulf %569, %568 : vector<4x256xf32>
    %571 = arith.addf %563, %570 : vector<4x256xf32>
    %c0_170 = arith.constant 0 : index
    %c72 = arith.constant 72 : index
    %572 = vector.load %arg2[%c0_170, %c72] : memref<4x184xf32, #tpu.memory_space<vmem>>, vector<4x1xf32>
    %c240_i32_171 = arith.constant 240 : i32
    %573 = tpu.dynamic_rotate %459 by %c240_i32_171 dim 1 : vector<4x256xf32>, i32 -> vector<4x256xf32>
    %c6_172 = arith.constant 6 : index
    %c0_173 = arith.constant 0 : index
    %574 = vector.load %arg3[%c6_172, %c0_173] : memref<24x256xf32, #tpu.memory_space<vmem>>, vector<1x256xf32>
    %575 = vector.broadcast %574 : vector<1x256xf32> to vector<4x256xf32>
    %576 = arith.mulf %573, %575 : vector<4x256xf32>
    %577 = vector.broadcast %572 : vector<4x1xf32> to vector<4x256xf32>
    %578 = arith.mulf %577, %576 : vector<4x256xf32>
    %579 = arith.addf %571, %578 : vector<4x256xf32>
    %c0_174 = arith.constant 0 : index
    %c73 = arith.constant 73 : index
    %580 = vector.load %arg2[%c0_174, %c73] : memref<4x184xf32, #tpu.memory_space<vmem>>, vector<4x1xf32>
    %c240_i32_175 = arith.constant 240 : i32
    %581 = tpu.dynamic_rotate %465 by %c240_i32_175 dim 1 : vector<4x256xf32>, i32 -> vector<4x256xf32>
    %c6_176 = arith.constant 6 : index
    %c0_177 = arith.constant 0 : index
    %582 = vector.load %arg3[%c6_176, %c0_177] : memref<24x256xf32, #tpu.memory_space<vmem>>, vector<1x256xf32>
    %583 = vector.broadcast %582 : vector<1x256xf32> to vector<4x256xf32>
    %584 = arith.mulf %581, %583 : vector<4x256xf32>
    %585 = vector.broadcast %580 : vector<4x1xf32> to vector<4x256xf32>
    %586 = arith.mulf %585, %584 : vector<4x256xf32>
    %587 = arith.addf %579, %586 : vector<4x256xf32>
    %c0_178 = arith.constant 0 : index
    %c74 = arith.constant 74 : index
    %588 = vector.load %arg2[%c0_178, %c74] : memref<4x184xf32, #tpu.memory_space<vmem>>, vector<4x1xf32>
    %c239_i32_179 = arith.constant 239 : i32
    %589 = tpu.dynamic_rotate %459 by %c239_i32_179 dim 1 : vector<4x256xf32>, i32 -> vector<4x256xf32>
    %c7_180 = arith.constant 7 : index
    %c0_181 = arith.constant 0 : index
    %590 = vector.load %arg3[%c7_180, %c0_181] : memref<24x256xf32, #tpu.memory_space<vmem>>, vector<1x256xf32>
    %591 = vector.broadcast %590 : vector<1x256xf32> to vector<4x256xf32>
    %592 = arith.mulf %589, %591 : vector<4x256xf32>
    %593 = vector.broadcast %588 : vector<4x1xf32> to vector<4x256xf32>
    %594 = arith.mulf %593, %592 : vector<4x256xf32>
    %595 = arith.addf %587, %594 : vector<4x256xf32>
    %c0_182 = arith.constant 0 : index
    %c75 = arith.constant 75 : index
    %596 = vector.load %arg2[%c0_182, %c75] : memref<4x184xf32, #tpu.memory_space<vmem>>, vector<4x1xf32>
    %c239_i32_183 = arith.constant 239 : i32
    %597 = tpu.dynamic_rotate %465 by %c239_i32_183 dim 1 : vector<4x256xf32>, i32 -> vector<4x256xf32>
    %c7_184 = arith.constant 7 : index
    %c0_185 = arith.constant 0 : index
    %598 = vector.load %arg3[%c7_184, %c0_185] : memref<24x256xf32, #tpu.memory_space<vmem>>, vector<1x256xf32>
    %599 = vector.broadcast %598 : vector<1x256xf32> to vector<4x256xf32>
    %600 = arith.mulf %597, %599 : vector<4x256xf32>
    %601 = vector.broadcast %596 : vector<4x1xf32> to vector<4x256xf32>
    %602 = arith.mulf %601, %600 : vector<4x256xf32>
    %603 = arith.addf %595, %602 : vector<4x256xf32>
    %c0_186 = arith.constant 0 : index
    %c76 = arith.constant 76 : index
    %604 = vector.load %arg2[%c0_186, %c76] : memref<4x184xf32, #tpu.memory_space<vmem>>, vector<4x1xf32>
    %605 = vector.broadcast %604 : vector<4x1xf32> to vector<4x256xf32>
    %606 = arith.addf %603, %605 : vector<4x256xf32>
    %c0_187 = arith.constant 0 : index
    %c124 = arith.constant 124 : index
    %607 = vector.load %arg2[%c0_187, %c124] : memref<4x184xf32, #tpu.memory_space<vmem>>, vector<4x1xf32>
    %608 = vector.extract_strided_slice %606 {offsets = [0, 0], sizes = [1, 256], strides = [1, 1]} : vector<4x256xf32> to vector<1x256xf32>
    %609 = vector.broadcast %607 : vector<4x1xf32> to vector<4x256xf32>
    %610 = vector.broadcast %608 : vector<1x256xf32> to vector<4x256xf32>
    %611 = arith.mulf %609, %610 : vector<4x256xf32>
    %612 = arith.addf %466, %611 : vector<4x256xf32>
    %c0_188 = arith.constant 0 : index
    %c125 = arith.constant 125 : index
    %613 = vector.load %arg2[%c0_188, %c125] : memref<4x184xf32, #tpu.memory_space<vmem>>, vector<4x1xf32>
    %614 = vector.extract_strided_slice %606 {offsets = [1, 0], sizes = [1, 256], strides = [1, 1]} : vector<4x256xf32> to vector<1x256xf32>
    %615 = vector.broadcast %613 : vector<4x1xf32> to vector<4x256xf32>
    %616 = vector.broadcast %614 : vector<1x256xf32> to vector<4x256xf32>
    %617 = arith.mulf %615, %616 : vector<4x256xf32>
    %618 = arith.addf %612, %617 : vector<4x256xf32>
    %c0_189 = arith.constant 0 : index
    %c126 = arith.constant 126 : index
    %619 = vector.load %arg2[%c0_189, %c126] : memref<4x184xf32, #tpu.memory_space<vmem>>, vector<4x1xf32>
    %620 = vector.extract_strided_slice %606 {offsets = [2, 0], sizes = [1, 256], strides = [1, 1]} : vector<4x256xf32> to vector<1x256xf32>
    %621 = vector.broadcast %619 : vector<4x1xf32> to vector<4x256xf32>
    %622 = vector.broadcast %620 : vector<1x256xf32> to vector<4x256xf32>
    %623 = arith.mulf %621, %622 : vector<4x256xf32>
    %624 = arith.addf %618, %623 : vector<4x256xf32>
    %c0_190 = arith.constant 0 : index
    %c127 = arith.constant 127 : index
    %625 = vector.load %arg2[%c0_190, %c127] : memref<4x184xf32, #tpu.memory_space<vmem>>, vector<4x1xf32>
    %626 = vector.extract_strided_slice %606 {offsets = [3, 0], sizes = [1, 256], strides = [1, 1]} : vector<4x256xf32> to vector<1x256xf32>
    %627 = vector.broadcast %625 : vector<4x1xf32> to vector<4x256xf32>
    %628 = vector.broadcast %626 : vector<1x256xf32> to vector<4x256xf32>
    %629 = arith.mulf %627, %628 : vector<4x256xf32>
    %630 = arith.addf %624, %629 : vector<4x256xf32>
    %cst_191 = arith.constant 0.000000e+00 : f32
    %631 = vector.broadcast %cst_191 : f32 to vector<4x256xf32>
    %c0_192 = arith.constant 0 : index
    %c77 = arith.constant 77 : index
    %632 = vector.load %arg2[%c0_192, %c77] : memref<4x184xf32, #tpu.memory_space<vmem>>, vector<4x1xf32>
    %c34_i32 = arith.constant 34 : i32
    %633 = tpu.dynamic_rotate %459 by %c34_i32 dim 1 : vector<4x256xf32>, i32 -> vector<4x256xf32>
    %c8_193 = arith.constant 8 : index
    %c0_194 = arith.constant 0 : index
    %634 = vector.load %arg3[%c8_193, %c0_194] : memref<24x256xf32, #tpu.memory_space<vmem>>, vector<1x256xf32>
    %635 = vector.broadcast %634 : vector<1x256xf32> to vector<4x256xf32>
    %636 = arith.mulf %633, %635 : vector<4x256xf32>
    %637 = vector.broadcast %632 : vector<4x1xf32> to vector<4x256xf32>
    %638 = arith.mulf %637, %636 : vector<4x256xf32>
    %639 = arith.addf %631, %638 : vector<4x256xf32>
    %c0_195 = arith.constant 0 : index
    %c78 = arith.constant 78 : index
    %640 = vector.load %arg2[%c0_195, %c78] : memref<4x184xf32, #tpu.memory_space<vmem>>, vector<4x1xf32>
    %c34_i32_196 = arith.constant 34 : i32
    %641 = tpu.dynamic_rotate %465 by %c34_i32_196 dim 1 : vector<4x256xf32>, i32 -> vector<4x256xf32>
    %c8_197 = arith.constant 8 : index
    %c0_198 = arith.constant 0 : index
    %642 = vector.load %arg3[%c8_197, %c0_198] : memref<24x256xf32, #tpu.memory_space<vmem>>, vector<1x256xf32>
    %643 = vector.broadcast %642 : vector<1x256xf32> to vector<4x256xf32>
    %644 = arith.mulf %641, %643 : vector<4x256xf32>
    %645 = vector.broadcast %640 : vector<4x1xf32> to vector<4x256xf32>
    %646 = arith.mulf %645, %644 : vector<4x256xf32>
    %647 = arith.addf %639, %646 : vector<4x256xf32>
    %c0_199 = arith.constant 0 : index
    %c79 = arith.constant 79 : index
    %648 = vector.load %arg2[%c0_199, %c79] : memref<4x184xf32, #tpu.memory_space<vmem>>, vector<4x1xf32>
    %c32_i32 = arith.constant 32 : i32
    %649 = tpu.dynamic_rotate %459 by %c32_i32 dim 1 : vector<4x256xf32>, i32 -> vector<4x256xf32>
    %c9_200 = arith.constant 9 : index
    %c0_201 = arith.constant 0 : index
    %650 = vector.load %arg3[%c9_200, %c0_201] : memref<24x256xf32, #tpu.memory_space<vmem>>, vector<1x256xf32>
    %651 = vector.broadcast %650 : vector<1x256xf32> to vector<4x256xf32>
    %652 = arith.mulf %649, %651 : vector<4x256xf32>
    %653 = vector.broadcast %648 : vector<4x1xf32> to vector<4x256xf32>
    %654 = arith.mulf %653, %652 : vector<4x256xf32>
    %655 = arith.addf %647, %654 : vector<4x256xf32>
    %c0_202 = arith.constant 0 : index
    %c80 = arith.constant 80 : index
    %656 = vector.load %arg2[%c0_202, %c80] : memref<4x184xf32, #tpu.memory_space<vmem>>, vector<4x1xf32>
    %c32_i32_203 = arith.constant 32 : i32
    %657 = tpu.dynamic_rotate %465 by %c32_i32_203 dim 1 : vector<4x256xf32>, i32 -> vector<4x256xf32>
    %c9_204 = arith.constant 9 : index
    %c0_205 = arith.constant 0 : index
    %658 = vector.load %arg3[%c9_204, %c0_205] : memref<24x256xf32, #tpu.memory_space<vmem>>, vector<1x256xf32>
    %659 = vector.broadcast %658 : vector<1x256xf32> to vector<4x256xf32>
    %660 = arith.mulf %657, %659 : vector<4x256xf32>
    %661 = vector.broadcast %656 : vector<4x1xf32> to vector<4x256xf32>
    %662 = arith.mulf %661, %660 : vector<4x256xf32>
    %663 = arith.addf %655, %662 : vector<4x256xf32>
    %c0_206 = arith.constant 0 : index
    %c81 = arith.constant 81 : index
    %664 = vector.load %arg2[%c0_206, %c81] : memref<4x184xf32, #tpu.memory_space<vmem>>, vector<4x1xf32>
    %c30_i32 = arith.constant 30 : i32
    %665 = tpu.dynamic_rotate %459 by %c30_i32 dim 1 : vector<4x256xf32>, i32 -> vector<4x256xf32>
    %c10_207 = arith.constant 10 : index
    %c0_208 = arith.constant 0 : index
    %666 = vector.load %arg3[%c10_207, %c0_208] : memref<24x256xf32, #tpu.memory_space<vmem>>, vector<1x256xf32>
    %667 = vector.broadcast %666 : vector<1x256xf32> to vector<4x256xf32>
    %668 = arith.mulf %665, %667 : vector<4x256xf32>
    %669 = vector.broadcast %664 : vector<4x1xf32> to vector<4x256xf32>
    %670 = arith.mulf %669, %668 : vector<4x256xf32>
    %671 = arith.addf %663, %670 : vector<4x256xf32>
    %c0_209 = arith.constant 0 : index
    %c82 = arith.constant 82 : index
    %672 = vector.load %arg2[%c0_209, %c82] : memref<4x184xf32, #tpu.memory_space<vmem>>, vector<4x1xf32>
    %c30_i32_210 = arith.constant 30 : i32
    %673 = tpu.dynamic_rotate %465 by %c30_i32_210 dim 1 : vector<4x256xf32>, i32 -> vector<4x256xf32>
    %c10_211 = arith.constant 10 : index
    %c0_212 = arith.constant 0 : index
    %674 = vector.load %arg3[%c10_211, %c0_212] : memref<24x256xf32, #tpu.memory_space<vmem>>, vector<1x256xf32>
    %675 = vector.broadcast %674 : vector<1x256xf32> to vector<4x256xf32>
    %676 = arith.mulf %673, %675 : vector<4x256xf32>
    %677 = vector.broadcast %672 : vector<4x1xf32> to vector<4x256xf32>
    %678 = arith.mulf %677, %676 : vector<4x256xf32>
    %679 = arith.addf %671, %678 : vector<4x256xf32>
    %c0_213 = arith.constant 0 : index
    %c83 = arith.constant 83 : index
    %680 = vector.load %arg2[%c0_213, %c83] : memref<4x184xf32, #tpu.memory_space<vmem>>, vector<4x1xf32>
    %c2_i32 = arith.constant 2 : i32
    %681 = tpu.dynamic_rotate %459 by %c2_i32 dim 1 : vector<4x256xf32>, i32 -> vector<4x256xf32>
    %c11_214 = arith.constant 11 : index
    %c0_215 = arith.constant 0 : index
    %682 = vector.load %arg3[%c11_214, %c0_215] : memref<24x256xf32, #tpu.memory_space<vmem>>, vector<1x256xf32>
    %683 = vector.broadcast %682 : vector<1x256xf32> to vector<4x256xf32>
    %684 = arith.mulf %681, %683 : vector<4x256xf32>
    %685 = vector.broadcast %680 : vector<4x1xf32> to vector<4x256xf32>
    %686 = arith.mulf %685, %684 : vector<4x256xf32>
    %687 = arith.addf %679, %686 : vector<4x256xf32>
    %c0_216 = arith.constant 0 : index
    %c84 = arith.constant 84 : index
    %688 = vector.load %arg2[%c0_216, %c84] : memref<4x184xf32, #tpu.memory_space<vmem>>, vector<4x1xf32>
    %c2_i32_217 = arith.constant 2 : i32
    %689 = tpu.dynamic_rotate %465 by %c2_i32_217 dim 1 : vector<4x256xf32>, i32 -> vector<4x256xf32>
    %c11_218 = arith.constant 11 : index
    %c0_219 = arith.constant 0 : index
    %690 = vector.load %arg3[%c11_218, %c0_219] : memref<24x256xf32, #tpu.memory_space<vmem>>, vector<1x256xf32>
    %691 = vector.broadcast %690 : vector<1x256xf32> to vector<4x256xf32>
    %692 = arith.mulf %689, %691 : vector<4x256xf32>
    %693 = vector.broadcast %688 : vector<4x1xf32> to vector<4x256xf32>
    %694 = arith.mulf %693, %692 : vector<4x256xf32>
    %695 = arith.addf %687, %694 : vector<4x256xf32>
    %c0_220 = arith.constant 0 : index
    %c85 = arith.constant 85 : index
    %696 = vector.load %arg2[%c0_220, %c85] : memref<4x184xf32, #tpu.memory_space<vmem>>, vector<4x1xf32>
    %697 = vector.broadcast %696 : vector<4x1xf32> to vector<4x256xf32>
    %698 = arith.mulf %697, %459 : vector<4x256xf32>
    %699 = arith.addf %695, %698 : vector<4x256xf32>
    %c0_221 = arith.constant 0 : index
    %c86 = arith.constant 86 : index
    %700 = vector.load %arg2[%c0_221, %c86] : memref<4x184xf32, #tpu.memory_space<vmem>>, vector<4x1xf32>
    %701 = vector.broadcast %700 : vector<4x1xf32> to vector<4x256xf32>
    %702 = arith.mulf %701, %465 : vector<4x256xf32>
    %703 = arith.addf %699, %702 : vector<4x256xf32>
    %c0_222 = arith.constant 0 : index
    %c87 = arith.constant 87 : index
    %704 = vector.load %arg2[%c0_222, %c87] : memref<4x184xf32, #tpu.memory_space<vmem>>, vector<4x1xf32>
    %c254_i32 = arith.constant 254 : i32
    %705 = tpu.dynamic_rotate %459 by %c254_i32 dim 1 : vector<4x256xf32>, i32 -> vector<4x256xf32>
    %c12_223 = arith.constant 12 : index
    %c0_224 = arith.constant 0 : index
    %706 = vector.load %arg3[%c12_223, %c0_224] : memref<24x256xf32, #tpu.memory_space<vmem>>, vector<1x256xf32>
    %707 = vector.broadcast %706 : vector<1x256xf32> to vector<4x256xf32>
    %708 = arith.mulf %705, %707 : vector<4x256xf32>
    %709 = vector.broadcast %704 : vector<4x1xf32> to vector<4x256xf32>
    %710 = arith.mulf %709, %708 : vector<4x256xf32>
    %711 = arith.addf %703, %710 : vector<4x256xf32>
    %c0_225 = arith.constant 0 : index
    %c88 = arith.constant 88 : index
    %712 = vector.load %arg2[%c0_225, %c88] : memref<4x184xf32, #tpu.memory_space<vmem>>, vector<4x1xf32>
    %c254_i32_226 = arith.constant 254 : i32
    %713 = tpu.dynamic_rotate %465 by %c254_i32_226 dim 1 : vector<4x256xf32>, i32 -> vector<4x256xf32>
    %c12_227 = arith.constant 12 : index
    %c0_228 = arith.constant 0 : index
    %714 = vector.load %arg3[%c12_227, %c0_228] : memref<24x256xf32, #tpu.memory_space<vmem>>, vector<1x256xf32>
    %715 = vector.broadcast %714 : vector<1x256xf32> to vector<4x256xf32>
    %716 = arith.mulf %713, %715 : vector<4x256xf32>
    %717 = vector.broadcast %712 : vector<4x1xf32> to vector<4x256xf32>
    %718 = arith.mulf %717, %716 : vector<4x256xf32>
    %719 = arith.addf %711, %718 : vector<4x256xf32>
    %c0_229 = arith.constant 0 : index
    %c89 = arith.constant 89 : index
    %720 = vector.load %arg2[%c0_229, %c89] : memref<4x184xf32, #tpu.memory_space<vmem>>, vector<4x1xf32>
    %c226_i32 = arith.constant 226 : i32
    %721 = tpu.dynamic_rotate %459 by %c226_i32 dim 1 : vector<4x256xf32>, i32 -> vector<4x256xf32>
    %c13_230 = arith.constant 13 : index
    %c0_231 = arith.constant 0 : index
    %722 = vector.load %arg3[%c13_230, %c0_231] : memref<24x256xf32, #tpu.memory_space<vmem>>, vector<1x256xf32>
    %723 = vector.broadcast %722 : vector<1x256xf32> to vector<4x256xf32>
    %724 = arith.mulf %721, %723 : vector<4x256xf32>
    %725 = vector.broadcast %720 : vector<4x1xf32> to vector<4x256xf32>
    %726 = arith.mulf %725, %724 : vector<4x256xf32>
    %727 = arith.addf %719, %726 : vector<4x256xf32>
    %c0_232 = arith.constant 0 : index
    %c90 = arith.constant 90 : index
    %728 = vector.load %arg2[%c0_232, %c90] : memref<4x184xf32, #tpu.memory_space<vmem>>, vector<4x1xf32>
    %c226_i32_233 = arith.constant 226 : i32
    %729 = tpu.dynamic_rotate %465 by %c226_i32_233 dim 1 : vector<4x256xf32>, i32 -> vector<4x256xf32>
    %c13_234 = arith.constant 13 : index
    %c0_235 = arith.constant 0 : index
    %730 = vector.load %arg3[%c13_234, %c0_235] : memref<24x256xf32, #tpu.memory_space<vmem>>, vector<1x256xf32>
    %731 = vector.broadcast %730 : vector<1x256xf32> to vector<4x256xf32>
    %732 = arith.mulf %729, %731 : vector<4x256xf32>
    %733 = vector.broadcast %728 : vector<4x1xf32> to vector<4x256xf32>
    %734 = arith.mulf %733, %732 : vector<4x256xf32>
    %735 = arith.addf %727, %734 : vector<4x256xf32>
    %c0_236 = arith.constant 0 : index
    %c91 = arith.constant 91 : index
    %736 = vector.load %arg2[%c0_236, %c91] : memref<4x184xf32, #tpu.memory_space<vmem>>, vector<4x1xf32>
    %c224_i32 = arith.constant 224 : i32
    %737 = tpu.dynamic_rotate %459 by %c224_i32 dim 1 : vector<4x256xf32>, i32 -> vector<4x256xf32>
    %c14_237 = arith.constant 14 : index
    %c0_238 = arith.constant 0 : index
    %738 = vector.load %arg3[%c14_237, %c0_238] : memref<24x256xf32, #tpu.memory_space<vmem>>, vector<1x256xf32>
    %739 = vector.broadcast %738 : vector<1x256xf32> to vector<4x256xf32>
    %740 = arith.mulf %737, %739 : vector<4x256xf32>
    %741 = vector.broadcast %736 : vector<4x1xf32> to vector<4x256xf32>
    %742 = arith.mulf %741, %740 : vector<4x256xf32>
    %743 = arith.addf %735, %742 : vector<4x256xf32>
    %c0_239 = arith.constant 0 : index
    %c92 = arith.constant 92 : index
    %744 = vector.load %arg2[%c0_239, %c92] : memref<4x184xf32, #tpu.memory_space<vmem>>, vector<4x1xf32>
    %c224_i32_240 = arith.constant 224 : i32
    %745 = tpu.dynamic_rotate %465 by %c224_i32_240 dim 1 : vector<4x256xf32>, i32 -> vector<4x256xf32>
    %c14_241 = arith.constant 14 : index
    %c0_242 = arith.constant 0 : index
    %746 = vector.load %arg3[%c14_241, %c0_242] : memref<24x256xf32, #tpu.memory_space<vmem>>, vector<1x256xf32>
    %747 = vector.broadcast %746 : vector<1x256xf32> to vector<4x256xf32>
    %748 = arith.mulf %745, %747 : vector<4x256xf32>
    %749 = vector.broadcast %744 : vector<4x1xf32> to vector<4x256xf32>
    %750 = arith.mulf %749, %748 : vector<4x256xf32>
    %751 = arith.addf %743, %750 : vector<4x256xf32>
    %c0_243 = arith.constant 0 : index
    %c93 = arith.constant 93 : index
    %752 = vector.load %arg2[%c0_243, %c93] : memref<4x184xf32, #tpu.memory_space<vmem>>, vector<4x1xf32>
    %c222_i32 = arith.constant 222 : i32
    %753 = tpu.dynamic_rotate %459 by %c222_i32 dim 1 : vector<4x256xf32>, i32 -> vector<4x256xf32>
    %c15_244 = arith.constant 15 : index
    %c0_245 = arith.constant 0 : index
    %754 = vector.load %arg3[%c15_244, %c0_245] : memref<24x256xf32, #tpu.memory_space<vmem>>, vector<1x256xf32>
    %755 = vector.broadcast %754 : vector<1x256xf32> to vector<4x256xf32>
    %756 = arith.mulf %753, %755 : vector<4x256xf32>
    %757 = vector.broadcast %752 : vector<4x1xf32> to vector<4x256xf32>
    %758 = arith.mulf %757, %756 : vector<4x256xf32>
    %759 = arith.addf %751, %758 : vector<4x256xf32>
    %c0_246 = arith.constant 0 : index
    %c94 = arith.constant 94 : index
    %760 = vector.load %arg2[%c0_246, %c94] : memref<4x184xf32, #tpu.memory_space<vmem>>, vector<4x1xf32>
    %c222_i32_247 = arith.constant 222 : i32
    %761 = tpu.dynamic_rotate %465 by %c222_i32_247 dim 1 : vector<4x256xf32>, i32 -> vector<4x256xf32>
    %c15_248 = arith.constant 15 : index
    %c0_249 = arith.constant 0 : index
    %762 = vector.load %arg3[%c15_248, %c0_249] : memref<24x256xf32, #tpu.memory_space<vmem>>, vector<1x256xf32>
    %763 = vector.broadcast %762 : vector<1x256xf32> to vector<4x256xf32>
    %764 = arith.mulf %761, %763 : vector<4x256xf32>
    %765 = vector.broadcast %760 : vector<4x1xf32> to vector<4x256xf32>
    %766 = arith.mulf %765, %764 : vector<4x256xf32>
    %767 = arith.addf %759, %766 : vector<4x256xf32>
    %c0_250 = arith.constant 0 : index
    %c95 = arith.constant 95 : index
    %768 = vector.load %arg2[%c0_250, %c95] : memref<4x184xf32, #tpu.memory_space<vmem>>, vector<4x1xf32>
    %769 = vector.broadcast %768 : vector<4x1xf32> to vector<4x256xf32>
    %770 = arith.addf %767, %769 : vector<4x256xf32>
    %c0_251 = arith.constant 0 : index
    %c128 = arith.constant 128 : index
    %771 = vector.load %arg2[%c0_251, %c128] : memref<4x184xf32, #tpu.memory_space<vmem>>, vector<4x1xf32>
    %772 = vector.extract_strided_slice %770 {offsets = [0, 0], sizes = [1, 256], strides = [1, 1]} : vector<4x256xf32> to vector<1x256xf32>
    %773 = vector.broadcast %771 : vector<4x1xf32> to vector<4x256xf32>
    %774 = vector.broadcast %772 : vector<1x256xf32> to vector<4x256xf32>
    %775 = arith.mulf %773, %774 : vector<4x256xf32>
    %776 = arith.addf %630, %775 : vector<4x256xf32>
    %c0_252 = arith.constant 0 : index
    %c129 = arith.constant 129 : index
    %777 = vector.load %arg2[%c0_252, %c129] : memref<4x184xf32, #tpu.memory_space<vmem>>, vector<4x1xf32>
    %778 = vector.extract_strided_slice %770 {offsets = [1, 0], sizes = [1, 256], strides = [1, 1]} : vector<4x256xf32> to vector<1x256xf32>
    %779 = vector.broadcast %777 : vector<4x1xf32> to vector<4x256xf32>
    %780 = vector.broadcast %778 : vector<1x256xf32> to vector<4x256xf32>
    %781 = arith.mulf %779, %780 : vector<4x256xf32>
    %782 = arith.addf %776, %781 : vector<4x256xf32>
    %c0_253 = arith.constant 0 : index
    %c130 = arith.constant 130 : index
    %783 = vector.load %arg2[%c0_253, %c130] : memref<4x184xf32, #tpu.memory_space<vmem>>, vector<4x1xf32>
    %784 = vector.extract_strided_slice %770 {offsets = [2, 0], sizes = [1, 256], strides = [1, 1]} : vector<4x256xf32> to vector<1x256xf32>
    %785 = vector.broadcast %783 : vector<4x1xf32> to vector<4x256xf32>
    %786 = vector.broadcast %784 : vector<1x256xf32> to vector<4x256xf32>
    %787 = arith.mulf %785, %786 : vector<4x256xf32>
    %788 = arith.addf %782, %787 : vector<4x256xf32>
    %c0_254 = arith.constant 0 : index
    %c131 = arith.constant 131 : index
    %789 = vector.load %arg2[%c0_254, %c131] : memref<4x184xf32, #tpu.memory_space<vmem>>, vector<4x1xf32>
    %790 = vector.extract_strided_slice %770 {offsets = [3, 0], sizes = [1, 256], strides = [1, 1]} : vector<4x256xf32> to vector<1x256xf32>
    %791 = vector.broadcast %789 : vector<4x1xf32> to vector<4x256xf32>
    %792 = vector.broadcast %790 : vector<1x256xf32> to vector<4x256xf32>
    %793 = arith.mulf %791, %792 : vector<4x256xf32>
    %794 = arith.addf %788, %793 : vector<4x256xf32>
    %cst_255 = arith.constant 0.000000e+00 : f32
    %795 = vector.broadcast %cst_255 : f32 to vector<4x256xf32>
    %c0_256 = arith.constant 0 : index
    %c96 = arith.constant 96 : index
    %796 = vector.load %arg2[%c0_256, %c96] : memref<4x184xf32, #tpu.memory_space<vmem>>, vector<4x1xf32>
    %c51_i32 = arith.constant 51 : i32
    %797 = tpu.dynamic_rotate %459 by %c51_i32 dim 1 : vector<4x256xf32>, i32 -> vector<4x256xf32>
    %c16_257 = arith.constant 16 : index
    %c0_258 = arith.constant 0 : index
    %798 = vector.load %arg3[%c16_257, %c0_258] : memref<24x256xf32, #tpu.memory_space<vmem>>, vector<1x256xf32>
    %799 = vector.broadcast %798 : vector<1x256xf32> to vector<4x256xf32>
    %800 = arith.mulf %797, %799 : vector<4x256xf32>
    %801 = vector.broadcast %796 : vector<4x1xf32> to vector<4x256xf32>
    %802 = arith.mulf %801, %800 : vector<4x256xf32>
    %803 = arith.addf %795, %802 : vector<4x256xf32>
    %c0_259 = arith.constant 0 : index
    %c97 = arith.constant 97 : index
    %804 = vector.load %arg2[%c0_259, %c97] : memref<4x184xf32, #tpu.memory_space<vmem>>, vector<4x1xf32>
    %c51_i32_260 = arith.constant 51 : i32
    %805 = tpu.dynamic_rotate %465 by %c51_i32_260 dim 1 : vector<4x256xf32>, i32 -> vector<4x256xf32>
    %c16_261 = arith.constant 16 : index
    %c0_262 = arith.constant 0 : index
    %806 = vector.load %arg3[%c16_261, %c0_262] : memref<24x256xf32, #tpu.memory_space<vmem>>, vector<1x256xf32>
    %807 = vector.broadcast %806 : vector<1x256xf32> to vector<4x256xf32>
    %808 = arith.mulf %805, %807 : vector<4x256xf32>
    %809 = vector.broadcast %804 : vector<4x1xf32> to vector<4x256xf32>
    %810 = arith.mulf %809, %808 : vector<4x256xf32>
    %811 = arith.addf %803, %810 : vector<4x256xf32>
    %c0_263 = arith.constant 0 : index
    %c98 = arith.constant 98 : index
    %812 = vector.load %arg2[%c0_263, %c98] : memref<4x184xf32, #tpu.memory_space<vmem>>, vector<4x1xf32>
    %c48_i32 = arith.constant 48 : i32
    %813 = tpu.dynamic_rotate %459 by %c48_i32 dim 1 : vector<4x256xf32>, i32 -> vector<4x256xf32>
    %c17_264 = arith.constant 17 : index
    %c0_265 = arith.constant 0 : index
    %814 = vector.load %arg3[%c17_264, %c0_265] : memref<24x256xf32, #tpu.memory_space<vmem>>, vector<1x256xf32>
    %815 = vector.broadcast %814 : vector<1x256xf32> to vector<4x256xf32>
    %816 = arith.mulf %813, %815 : vector<4x256xf32>
    %817 = vector.broadcast %812 : vector<4x1xf32> to vector<4x256xf32>
    %818 = arith.mulf %817, %816 : vector<4x256xf32>
    %819 = arith.addf %811, %818 : vector<4x256xf32>
    %c0_266 = arith.constant 0 : index
    %c99 = arith.constant 99 : index
    %820 = vector.load %arg2[%c0_266, %c99] : memref<4x184xf32, #tpu.memory_space<vmem>>, vector<4x1xf32>
    %c48_i32_267 = arith.constant 48 : i32
    %821 = tpu.dynamic_rotate %465 by %c48_i32_267 dim 1 : vector<4x256xf32>, i32 -> vector<4x256xf32>
    %c17_268 = arith.constant 17 : index
    %c0_269 = arith.constant 0 : index
    %822 = vector.load %arg3[%c17_268, %c0_269] : memref<24x256xf32, #tpu.memory_space<vmem>>, vector<1x256xf32>
    %823 = vector.broadcast %822 : vector<1x256xf32> to vector<4x256xf32>
    %824 = arith.mulf %821, %823 : vector<4x256xf32>
    %825 = vector.broadcast %820 : vector<4x1xf32> to vector<4x256xf32>
    %826 = arith.mulf %825, %824 : vector<4x256xf32>
    %827 = arith.addf %819, %826 : vector<4x256xf32>
    %c0_270 = arith.constant 0 : index
    %c100 = arith.constant 100 : index
    %828 = vector.load %arg2[%c0_270, %c100] : memref<4x184xf32, #tpu.memory_space<vmem>>, vector<4x1xf32>
    %c45_i32 = arith.constant 45 : i32
    %829 = tpu.dynamic_rotate %459 by %c45_i32 dim 1 : vector<4x256xf32>, i32 -> vector<4x256xf32>
    %c18_271 = arith.constant 18 : index
    %c0_272 = arith.constant 0 : index
    %830 = vector.load %arg3[%c18_271, %c0_272] : memref<24x256xf32, #tpu.memory_space<vmem>>, vector<1x256xf32>
    %831 = vector.broadcast %830 : vector<1x256xf32> to vector<4x256xf32>
    %832 = arith.mulf %829, %831 : vector<4x256xf32>
    %833 = vector.broadcast %828 : vector<4x1xf32> to vector<4x256xf32>
    %834 = arith.mulf %833, %832 : vector<4x256xf32>
    %835 = arith.addf %827, %834 : vector<4x256xf32>
    %c0_273 = arith.constant 0 : index
    %c101 = arith.constant 101 : index
    %836 = vector.load %arg2[%c0_273, %c101] : memref<4x184xf32, #tpu.memory_space<vmem>>, vector<4x1xf32>
    %c45_i32_274 = arith.constant 45 : i32
    %837 = tpu.dynamic_rotate %465 by %c45_i32_274 dim 1 : vector<4x256xf32>, i32 -> vector<4x256xf32>
    %c18_275 = arith.constant 18 : index
    %c0_276 = arith.constant 0 : index
    %838 = vector.load %arg3[%c18_275, %c0_276] : memref<24x256xf32, #tpu.memory_space<vmem>>, vector<1x256xf32>
    %839 = vector.broadcast %838 : vector<1x256xf32> to vector<4x256xf32>
    %840 = arith.mulf %837, %839 : vector<4x256xf32>
    %841 = vector.broadcast %836 : vector<4x1xf32> to vector<4x256xf32>
    %842 = arith.mulf %841, %840 : vector<4x256xf32>
    %843 = arith.addf %835, %842 : vector<4x256xf32>
    %c0_277 = arith.constant 0 : index
    %c102 = arith.constant 102 : index
    %844 = vector.load %arg2[%c0_277, %c102] : memref<4x184xf32, #tpu.memory_space<vmem>>, vector<4x1xf32>
    %c3_i32 = arith.constant 3 : i32
    %845 = tpu.dynamic_rotate %459 by %c3_i32 dim 1 : vector<4x256xf32>, i32 -> vector<4x256xf32>
    %c19_278 = arith.constant 19 : index
    %c0_279 = arith.constant 0 : index
    %846 = vector.load %arg3[%c19_278, %c0_279] : memref<24x256xf32, #tpu.memory_space<vmem>>, vector<1x256xf32>
    %847 = vector.broadcast %846 : vector<1x256xf32> to vector<4x256xf32>
    %848 = arith.mulf %845, %847 : vector<4x256xf32>
    %849 = vector.broadcast %844 : vector<4x1xf32> to vector<4x256xf32>
    %850 = arith.mulf %849, %848 : vector<4x256xf32>
    %851 = arith.addf %843, %850 : vector<4x256xf32>
    %c0_280 = arith.constant 0 : index
    %c103 = arith.constant 103 : index
    %852 = vector.load %arg2[%c0_280, %c103] : memref<4x184xf32, #tpu.memory_space<vmem>>, vector<4x1xf32>
    %c3_i32_281 = arith.constant 3 : i32
    %853 = tpu.dynamic_rotate %465 by %c3_i32_281 dim 1 : vector<4x256xf32>, i32 -> vector<4x256xf32>
    %c19_282 = arith.constant 19 : index
    %c0_283 = arith.constant 0 : index
    %854 = vector.load %arg3[%c19_282, %c0_283] : memref<24x256xf32, #tpu.memory_space<vmem>>, vector<1x256xf32>
    %855 = vector.broadcast %854 : vector<1x256xf32> to vector<4x256xf32>
    %856 = arith.mulf %853, %855 : vector<4x256xf32>
    %857 = vector.broadcast %852 : vector<4x1xf32> to vector<4x256xf32>
    %858 = arith.mulf %857, %856 : vector<4x256xf32>
    %859 = arith.addf %851, %858 : vector<4x256xf32>
    %c0_284 = arith.constant 0 : index
    %c104 = arith.constant 104 : index
    %860 = vector.load %arg2[%c0_284, %c104] : memref<4x184xf32, #tpu.memory_space<vmem>>, vector<4x1xf32>
    %861 = vector.broadcast %860 : vector<4x1xf32> to vector<4x256xf32>
    %862 = arith.mulf %861, %459 : vector<4x256xf32>
    %863 = arith.addf %859, %862 : vector<4x256xf32>
    %c0_285 = arith.constant 0 : index
    %c105 = arith.constant 105 : index
    %864 = vector.load %arg2[%c0_285, %c105] : memref<4x184xf32, #tpu.memory_space<vmem>>, vector<4x1xf32>
    %865 = vector.broadcast %864 : vector<4x1xf32> to vector<4x256xf32>
    %866 = arith.mulf %865, %465 : vector<4x256xf32>
    %867 = arith.addf %863, %866 : vector<4x256xf32>
    %c0_286 = arith.constant 0 : index
    %c106 = arith.constant 106 : index
    %868 = vector.load %arg2[%c0_286, %c106] : memref<4x184xf32, #tpu.memory_space<vmem>>, vector<4x1xf32>
    %c253_i32 = arith.constant 253 : i32
    %869 = tpu.dynamic_rotate %459 by %c253_i32 dim 1 : vector<4x256xf32>, i32 -> vector<4x256xf32>
    %c20_287 = arith.constant 20 : index
    %c0_288 = arith.constant 0 : index
    %870 = vector.load %arg3[%c20_287, %c0_288] : memref<24x256xf32, #tpu.memory_space<vmem>>, vector<1x256xf32>
    %871 = vector.broadcast %870 : vector<1x256xf32> to vector<4x256xf32>
    %872 = arith.mulf %869, %871 : vector<4x256xf32>
    %873 = vector.broadcast %868 : vector<4x1xf32> to vector<4x256xf32>
    %874 = arith.mulf %873, %872 : vector<4x256xf32>
    %875 = arith.addf %867, %874 : vector<4x256xf32>
    %c0_289 = arith.constant 0 : index
    %c107 = arith.constant 107 : index
    %876 = vector.load %arg2[%c0_289, %c107] : memref<4x184xf32, #tpu.memory_space<vmem>>, vector<4x1xf32>
    %c253_i32_290 = arith.constant 253 : i32
    %877 = tpu.dynamic_rotate %465 by %c253_i32_290 dim 1 : vector<4x256xf32>, i32 -> vector<4x256xf32>
    %c20_291 = arith.constant 20 : index
    %c0_292 = arith.constant 0 : index
    %878 = vector.load %arg3[%c20_291, %c0_292] : memref<24x256xf32, #tpu.memory_space<vmem>>, vector<1x256xf32>
    %879 = vector.broadcast %878 : vector<1x256xf32> to vector<4x256xf32>
    %880 = arith.mulf %877, %879 : vector<4x256xf32>
    %881 = vector.broadcast %876 : vector<4x1xf32> to vector<4x256xf32>
    %882 = arith.mulf %881, %880 : vector<4x256xf32>
    %883 = arith.addf %875, %882 : vector<4x256xf32>
    %c0_293 = arith.constant 0 : index
    %c108 = arith.constant 108 : index
    %884 = vector.load %arg2[%c0_293, %c108] : memref<4x184xf32, #tpu.memory_space<vmem>>, vector<4x1xf32>
    %c211_i32 = arith.constant 211 : i32
    %885 = tpu.dynamic_rotate %459 by %c211_i32 dim 1 : vector<4x256xf32>, i32 -> vector<4x256xf32>
    %c21_294 = arith.constant 21 : index
    %c0_295 = arith.constant 0 : index
    %886 = vector.load %arg3[%c21_294, %c0_295] : memref<24x256xf32, #tpu.memory_space<vmem>>, vector<1x256xf32>
    %887 = vector.broadcast %886 : vector<1x256xf32> to vector<4x256xf32>
    %888 = arith.mulf %885, %887 : vector<4x256xf32>
    %889 = vector.broadcast %884 : vector<4x1xf32> to vector<4x256xf32>
    %890 = arith.mulf %889, %888 : vector<4x256xf32>
    %891 = arith.addf %883, %890 : vector<4x256xf32>
    %c0_296 = arith.constant 0 : index
    %c109 = arith.constant 109 : index
    %892 = vector.load %arg2[%c0_296, %c109] : memref<4x184xf32, #tpu.memory_space<vmem>>, vector<4x1xf32>
    %c211_i32_297 = arith.constant 211 : i32
    %893 = tpu.dynamic_rotate %465 by %c211_i32_297 dim 1 : vector<4x256xf32>, i32 -> vector<4x256xf32>
    %c21_298 = arith.constant 21 : index
    %c0_299 = arith.constant 0 : index
    %894 = vector.load %arg3[%c21_298, %c0_299] : memref<24x256xf32, #tpu.memory_space<vmem>>, vector<1x256xf32>
    %895 = vector.broadcast %894 : vector<1x256xf32> to vector<4x256xf32>
    %896 = arith.mulf %893, %895 : vector<4x256xf32>
    %897 = vector.broadcast %892 : vector<4x1xf32> to vector<4x256xf32>
    %898 = arith.mulf %897, %896 : vector<4x256xf32>
    %899 = arith.addf %891, %898 : vector<4x256xf32>
    %c0_300 = arith.constant 0 : index
    %c110 = arith.constant 110 : index
    %900 = vector.load %arg2[%c0_300, %c110] : memref<4x184xf32, #tpu.memory_space<vmem>>, vector<4x1xf32>
    %c208_i32 = arith.constant 208 : i32
    %901 = tpu.dynamic_rotate %459 by %c208_i32 dim 1 : vector<4x256xf32>, i32 -> vector<4x256xf32>
    %c22_301 = arith.constant 22 : index
    %c0_302 = arith.constant 0 : index
    %902 = vector.load %arg3[%c22_301, %c0_302] : memref<24x256xf32, #tpu.memory_space<vmem>>, vector<1x256xf32>
    %903 = vector.broadcast %902 : vector<1x256xf32> to vector<4x256xf32>
    %904 = arith.mulf %901, %903 : vector<4x256xf32>
    %905 = vector.broadcast %900 : vector<4x1xf32> to vector<4x256xf32>
    %906 = arith.mulf %905, %904 : vector<4x256xf32>
    %907 = arith.addf %899, %906 : vector<4x256xf32>
    %c0_303 = arith.constant 0 : index
    %c111 = arith.constant 111 : index
    %908 = vector.load %arg2[%c0_303, %c111] : memref<4x184xf32, #tpu.memory_space<vmem>>, vector<4x1xf32>
    %c208_i32_304 = arith.constant 208 : i32
    %909 = tpu.dynamic_rotate %465 by %c208_i32_304 dim 1 : vector<4x256xf32>, i32 -> vector<4x256xf32>
    %c22_305 = arith.constant 22 : index
    %c0_306 = arith.constant 0 : index
    %910 = vector.load %arg3[%c22_305, %c0_306] : memref<24x256xf32, #tpu.memory_space<vmem>>, vector<1x256xf32>
    %911 = vector.broadcast %910 : vector<1x256xf32> to vector<4x256xf32>
    %912 = arith.mulf %909, %911 : vector<4x256xf32>
    %913 = vector.broadcast %908 : vector<4x1xf32> to vector<4x256xf32>
    %914 = arith.mulf %913, %912 : vector<4x256xf32>
    %915 = arith.addf %907, %914 : vector<4x256xf32>
    %c0_307 = arith.constant 0 : index
    %c112 = arith.constant 112 : index
    %916 = vector.load %arg2[%c0_307, %c112] : memref<4x184xf32, #tpu.memory_space<vmem>>, vector<4x1xf32>
    %c205_i32 = arith.constant 205 : i32
    %917 = tpu.dynamic_rotate %459 by %c205_i32 dim 1 : vector<4x256xf32>, i32 -> vector<4x256xf32>
    %c23_308 = arith.constant 23 : index
    %c0_309 = arith.constant 0 : index
    %918 = vector.load %arg3[%c23_308, %c0_309] : memref<24x256xf32, #tpu.memory_space<vmem>>, vector<1x256xf32>
    %919 = vector.broadcast %918 : vector<1x256xf32> to vector<4x256xf32>
    %920 = arith.mulf %917, %919 : vector<4x256xf32>
    %921 = vector.broadcast %916 : vector<4x1xf32> to vector<4x256xf32>
    %922 = arith.mulf %921, %920 : vector<4x256xf32>
    %923 = arith.addf %915, %922 : vector<4x256xf32>
    %c0_310 = arith.constant 0 : index
    %c113 = arith.constant 113 : index
    %924 = vector.load %arg2[%c0_310, %c113] : memref<4x184xf32, #tpu.memory_space<vmem>>, vector<4x1xf32>
    %c205_i32_311 = arith.constant 205 : i32
    %925 = tpu.dynamic_rotate %465 by %c205_i32_311 dim 1 : vector<4x256xf32>, i32 -> vector<4x256xf32>
    %c23_312 = arith.constant 23 : index
    %c0_313 = arith.constant 0 : index
    %926 = vector.load %arg3[%c23_312, %c0_313] : memref<24x256xf32, #tpu.memory_space<vmem>>, vector<1x256xf32>
    %927 = vector.broadcast %926 : vector<1x256xf32> to vector<4x256xf32>
    %928 = arith.mulf %925, %927 : vector<4x256xf32>
    %929 = vector.broadcast %924 : vector<4x1xf32> to vector<4x256xf32>
    %930 = arith.mulf %929, %928 : vector<4x256xf32>
    %931 = arith.addf %923, %930 : vector<4x256xf32>
    %c0_314 = arith.constant 0 : index
    %c114 = arith.constant 114 : index
    %932 = vector.load %arg2[%c0_314, %c114] : memref<4x184xf32, #tpu.memory_space<vmem>>, vector<4x1xf32>
    %933 = vector.broadcast %932 : vector<4x1xf32> to vector<4x256xf32>
    %934 = arith.addf %931, %933 : vector<4x256xf32>
    %c0_315 = arith.constant 0 : index
    %c132 = arith.constant 132 : index
    %935 = vector.load %arg2[%c0_315, %c132] : memref<4x184xf32, #tpu.memory_space<vmem>>, vector<4x1xf32>
    %936 = vector.extract_strided_slice %934 {offsets = [0, 0], sizes = [1, 256], strides = [1, 1]} : vector<4x256xf32> to vector<1x256xf32>
    %937 = vector.broadcast %935 : vector<4x1xf32> to vector<4x256xf32>
    %938 = vector.broadcast %936 : vector<1x256xf32> to vector<4x256xf32>
    %939 = arith.mulf %937, %938 : vector<4x256xf32>
    %940 = arith.addf %794, %939 : vector<4x256xf32>
    %c0_316 = arith.constant 0 : index
    %c133 = arith.constant 133 : index
    %941 = vector.load %arg2[%c0_316, %c133] : memref<4x184xf32, #tpu.memory_space<vmem>>, vector<4x1xf32>
    %942 = vector.extract_strided_slice %934 {offsets = [1, 0], sizes = [1, 256], strides = [1, 1]} : vector<4x256xf32> to vector<1x256xf32>
    %943 = vector.broadcast %941 : vector<4x1xf32> to vector<4x256xf32>
    %944 = vector.broadcast %942 : vector<1x256xf32> to vector<4x256xf32>
    %945 = arith.mulf %943, %944 : vector<4x256xf32>
    %946 = arith.addf %940, %945 : vector<4x256xf32>
    %c0_317 = arith.constant 0 : index
    %c134 = arith.constant 134 : index
    %947 = vector.load %arg2[%c0_317, %c134] : memref<4x184xf32, #tpu.memory_space<vmem>>, vector<4x1xf32>
    %948 = vector.extract_strided_slice %934 {offsets = [2, 0], sizes = [1, 256], strides = [1, 1]} : vector<4x256xf32> to vector<1x256xf32>
    %949 = vector.broadcast %947 : vector<4x1xf32> to vector<4x256xf32>
    %950 = vector.broadcast %948 : vector<1x256xf32> to vector<4x256xf32>
    %951 = arith.mulf %949, %950 : vector<4x256xf32>
    %952 = arith.addf %946, %951 : vector<4x256xf32>
    %c0_318 = arith.constant 0 : index
    %c135 = arith.constant 135 : index
    %953 = vector.load %arg2[%c0_318, %c135] : memref<4x184xf32, #tpu.memory_space<vmem>>, vector<4x1xf32>
    %954 = vector.extract_strided_slice %934 {offsets = [3, 0], sizes = [1, 256], strides = [1, 1]} : vector<4x256xf32> to vector<1x256xf32>
    %955 = vector.broadcast %953 : vector<4x1xf32> to vector<4x256xf32>
    %956 = vector.broadcast %954 : vector<1x256xf32> to vector<4x256xf32>
    %957 = arith.mulf %955, %956 : vector<4x256xf32>
    %958 = arith.addf %952, %957 : vector<4x256xf32>
    %cst_319 = arith.constant 0.000000e+00 : f32
    %959 = vector.broadcast %cst_319 : f32 to vector<4x256xf32>
    %c0_320 = arith.constant 0 : index
    %c115 = arith.constant 115 : index
    %960 = vector.load %arg2[%c0_320, %c115] : memref<4x184xf32, #tpu.memory_space<vmem>>, vector<4x1xf32>
    %961 = vector.extract_strided_slice %1 {offsets = [0, 0], sizes = [1, 256], strides = [1, 1]} : vector<4x256xf32> to vector<1x256xf32>
    %962 = vector.broadcast %960 : vector<4x1xf32> to vector<4x256xf32>
    %963 = vector.broadcast %961 : vector<1x256xf32> to vector<4x256xf32>
    %964 = arith.mulf %962, %963 : vector<4x256xf32>
    %965 = arith.addf %959, %964 : vector<4x256xf32>
    %c0_321 = arith.constant 0 : index
    %c116 = arith.constant 116 : index
    %966 = vector.load %arg2[%c0_321, %c116] : memref<4x184xf32, #tpu.memory_space<vmem>>, vector<4x1xf32>
    %967 = vector.extract_strided_slice %1 {offsets = [1, 0], sizes = [1, 256], strides = [1, 1]} : vector<4x256xf32> to vector<1x256xf32>
    %968 = vector.broadcast %966 : vector<4x1xf32> to vector<4x256xf32>
    %969 = vector.broadcast %967 : vector<1x256xf32> to vector<4x256xf32>
    %970 = arith.mulf %968, %969 : vector<4x256xf32>
    %971 = arith.addf %965, %970 : vector<4x256xf32>
    %c0_322 = arith.constant 0 : index
    %c117 = arith.constant 117 : index
    %972 = vector.load %arg2[%c0_322, %c117] : memref<4x184xf32, #tpu.memory_space<vmem>>, vector<4x1xf32>
    %973 = vector.extract_strided_slice %1 {offsets = [2, 0], sizes = [1, 256], strides = [1, 1]} : vector<4x256xf32> to vector<1x256xf32>
    %974 = vector.broadcast %972 : vector<4x1xf32> to vector<4x256xf32>
    %975 = vector.broadcast %973 : vector<1x256xf32> to vector<4x256xf32>
    %976 = arith.mulf %974, %975 : vector<4x256xf32>
    %977 = arith.addf %971, %976 : vector<4x256xf32>
    %c0_323 = arith.constant 0 : index
    %c118 = arith.constant 118 : index
    %978 = vector.load %arg2[%c0_323, %c118] : memref<4x184xf32, #tpu.memory_space<vmem>>, vector<4x1xf32>
    %979 = vector.extract_strided_slice %1 {offsets = [3, 0], sizes = [1, 256], strides = [1, 1]} : vector<4x256xf32> to vector<1x256xf32>
    %980 = vector.broadcast %978 : vector<4x1xf32> to vector<4x256xf32>
    %981 = vector.broadcast %979 : vector<1x256xf32> to vector<4x256xf32>
    %982 = arith.mulf %980, %981 : vector<4x256xf32>
    %983 = arith.addf %977, %982 : vector<4x256xf32>
    %c0_324 = arith.constant 0 : index
    %c119 = arith.constant 119 : index
    %984 = vector.load %arg2[%c0_324, %c119] : memref<4x184xf32, #tpu.memory_space<vmem>>, vector<4x1xf32>
    %985 = vector.extract_strided_slice %415 {offsets = [0, 0], sizes = [1, 256], strides = [1, 1]} : vector<4x256xf32> to vector<1x256xf32>
    %986 = vector.broadcast %984 : vector<4x1xf32> to vector<4x256xf32>
    %987 = vector.broadcast %985 : vector<1x256xf32> to vector<4x256xf32>
    %988 = arith.mulf %986, %987 : vector<4x256xf32>
    %989 = arith.addf %983, %988 : vector<4x256xf32>
    %c0_325 = arith.constant 0 : index
    %c120 = arith.constant 120 : index
    %990 = vector.load %arg2[%c0_325, %c120] : memref<4x184xf32, #tpu.memory_space<vmem>>, vector<4x1xf32>
    %991 = vector.extract_strided_slice %415 {offsets = [1, 0], sizes = [1, 256], strides = [1, 1]} : vector<4x256xf32> to vector<1x256xf32>
    %992 = vector.broadcast %990 : vector<4x1xf32> to vector<4x256xf32>
    %993 = vector.broadcast %991 : vector<1x256xf32> to vector<4x256xf32>
    %994 = arith.mulf %992, %993 : vector<4x256xf32>
    %995 = arith.addf %989, %994 : vector<4x256xf32>
    %c0_326 = arith.constant 0 : index
    %c121 = arith.constant 121 : index
    %996 = vector.load %arg2[%c0_326, %c121] : memref<4x184xf32, #tpu.memory_space<vmem>>, vector<4x1xf32>
    %997 = vector.extract_strided_slice %415 {offsets = [2, 0], sizes = [1, 256], strides = [1, 1]} : vector<4x256xf32> to vector<1x256xf32>
    %998 = vector.broadcast %996 : vector<4x1xf32> to vector<4x256xf32>
    %999 = vector.broadcast %997 : vector<1x256xf32> to vector<4x256xf32>
    %1000 = arith.mulf %998, %999 : vector<4x256xf32>
    %1001 = arith.addf %995, %1000 : vector<4x256xf32>
    %c0_327 = arith.constant 0 : index
    %c122 = arith.constant 122 : index
    %1002 = vector.load %arg2[%c0_327, %c122] : memref<4x184xf32, #tpu.memory_space<vmem>>, vector<4x1xf32>
    %1003 = vector.extract_strided_slice %415 {offsets = [3, 0], sizes = [1, 256], strides = [1, 1]} : vector<4x256xf32> to vector<1x256xf32>
    %1004 = vector.broadcast %1002 : vector<4x1xf32> to vector<4x256xf32>
    %1005 = vector.broadcast %1003 : vector<1x256xf32> to vector<4x256xf32>
    %1006 = arith.mulf %1004, %1005 : vector<4x256xf32>
    %1007 = arith.addf %1001, %1006 : vector<4x256xf32>
    %c0_328 = arith.constant 0 : index
    %c123 = arith.constant 123 : index
    %1008 = vector.load %arg2[%c0_328, %c123] : memref<4x184xf32, #tpu.memory_space<vmem>>, vector<4x1xf32>
    %1009 = vector.broadcast %1008 : vector<4x1xf32> to vector<4x256xf32>
    %1010 = arith.addf %1007, %1009 : vector<4x256xf32>
    %c0_329 = arith.constant 0 : index
    %c136 = arith.constant 136 : index
    %1011 = vector.load %arg2[%c0_329, %c136] : memref<4x184xf32, #tpu.memory_space<vmem>>, vector<4x1xf32>
    %1012 = vector.extract_strided_slice %1010 {offsets = [0, 0], sizes = [1, 256], strides = [1, 1]} : vector<4x256xf32> to vector<1x256xf32>
    %1013 = vector.broadcast %1011 : vector<4x1xf32> to vector<4x256xf32>
    %1014 = vector.broadcast %1012 : vector<1x256xf32> to vector<4x256xf32>
    %1015 = arith.mulf %1013, %1014 : vector<4x256xf32>
    %1016 = arith.addf %958, %1015 : vector<4x256xf32>
    %c0_330 = arith.constant 0 : index
    %c137 = arith.constant 137 : index
    %1017 = vector.load %arg2[%c0_330, %c137] : memref<4x184xf32, #tpu.memory_space<vmem>>, vector<4x1xf32>
    %1018 = vector.extract_strided_slice %1010 {offsets = [1, 0], sizes = [1, 256], strides = [1, 1]} : vector<4x256xf32> to vector<1x256xf32>
    %1019 = vector.broadcast %1017 : vector<4x1xf32> to vector<4x256xf32>
    %1020 = vector.broadcast %1018 : vector<1x256xf32> to vector<4x256xf32>
    %1021 = arith.mulf %1019, %1020 : vector<4x256xf32>
    %1022 = arith.addf %1016, %1021 : vector<4x256xf32>
    %c0_331 = arith.constant 0 : index
    %c138 = arith.constant 138 : index
    %1023 = vector.load %arg2[%c0_331, %c138] : memref<4x184xf32, #tpu.memory_space<vmem>>, vector<4x1xf32>
    %1024 = vector.extract_strided_slice %1010 {offsets = [2, 0], sizes = [1, 256], strides = [1, 1]} : vector<4x256xf32> to vector<1x256xf32>
    %1025 = vector.broadcast %1023 : vector<4x1xf32> to vector<4x256xf32>
    %1026 = vector.broadcast %1024 : vector<1x256xf32> to vector<4x256xf32>
    %1027 = arith.mulf %1025, %1026 : vector<4x256xf32>
    %1028 = arith.addf %1022, %1027 : vector<4x256xf32>
    %c0_332 = arith.constant 0 : index
    %c139 = arith.constant 139 : index
    %1029 = vector.load %arg2[%c0_332, %c139] : memref<4x184xf32, #tpu.memory_space<vmem>>, vector<4x1xf32>
    %1030 = vector.extract_strided_slice %1010 {offsets = [3, 0], sizes = [1, 256], strides = [1, 1]} : vector<4x256xf32> to vector<1x256xf32>
    %1031 = vector.broadcast %1029 : vector<4x1xf32> to vector<4x256xf32>
    %1032 = vector.broadcast %1030 : vector<1x256xf32> to vector<4x256xf32>
    %1033 = arith.mulf %1031, %1032 : vector<4x256xf32>
    %1034 = arith.addf %1028, %1033 : vector<4x256xf32>
    %c0_333 = arith.constant 0 : index
    %c140 = arith.constant 140 : index
    %1035 = vector.load %arg2[%c0_333, %c140] : memref<4x184xf32, #tpu.memory_space<vmem>>, vector<4x1xf32>
    %1036 = vector.broadcast %1035 : vector<4x1xf32> to vector<4x256xf32>
    %1037 = arith.mulf %1034, %1036 : vector<4x256xf32>
    %c0_334 = arith.constant 0 : index
    %c141 = arith.constant 141 : index
    %1038 = vector.load %arg2[%c0_334, %c141] : memref<4x184xf32, #tpu.memory_space<vmem>>, vector<4x1xf32>
    %1039 = vector.broadcast %1038 : vector<4x1xf32> to vector<4x256xf32>
    %1040 = arith.addf %1037, %1039 : vector<4x256xf32>
    %cst_335 = arith.constant 0.000000e+00 : f32
    %1041 = vector.broadcast %cst_335 : f32 to vector<4x256xf32>
    %1042 = arith.maximumf %1040, %1041 : vector<4x256xf32>
    %cst_336 = arith.constant dense<0.000000e+00> : vector<4xf32>
    %1043 = vector.multi_reduction <add>, %1042, %cst_336 [1] : vector<4x256xf32> to vector<4xf32>
    %1044 = vector.shape_cast %1043 : vector<4xf32> to vector<4x1xf32>
    %cst_337 = arith.constant 2.560000e+02 : f32
    %1045 = vector.broadcast %cst_337 : f32 to vector<4x1xf32>
    %1046 = arith.divf %1044, %1045 : vector<4x1xf32>
    %1047 = vector.broadcast %1046 : vector<4x1xf32> to vector<4x256xf32>
    %1048 = arith.subf %1042, %1047 : vector<4x256xf32>
    %1049 = arith.mulf %1048, %1048 : vector<4x256xf32>
    %cst_338 = arith.constant dense<0.000000e+00> : vector<4xf32>
    %1050 = vector.multi_reduction <add>, %1049, %cst_338 [1] : vector<4x256xf32> to vector<4xf32>
    %1051 = vector.shape_cast %1050 : vector<4xf32> to vector<4x1xf32>
    %cst_339 = arith.constant 0.00392156886 : f32
    %1052 = vector.broadcast %cst_339 : f32 to vector<4x1xf32>
    %1053 = arith.mulf %1051, %1052 : vector<4x1xf32>
    %cst_340 = arith.constant 9.99999974E-5 : f32
    %1054 = vector.broadcast %cst_340 : f32 to vector<4x1xf32>
    %1055 = arith.addf %1053, %1054 : vector<4x1xf32>
    %cst_341 = arith.constant 4.000000e+00 : f32
    %1056 = vector.broadcast %cst_341 : f32 to vector<4x1xf32>
    %1057 = arith.mulf %1056, %1055 : vector<4x1xf32>
    %cst_342 = arith.constant 1.000000e+00 : f32
    %1058 = vector.broadcast %cst_342 : f32 to vector<4x1xf32>
    %1059 = arith.divf %1058, %1057 : vector<4x1xf32>
    %1060 = vector.broadcast %1059 : vector<4x1xf32> to vector<4x256xf32>
    %1061 = arith.mulf %1049, %1060 : vector<4x256xf32>
    %cst_343 = arith.constant 5.000000e-01 : f32
    %1062 = vector.broadcast %cst_343 : f32 to vector<4x256xf32>
    %1063 = arith.addf %1061, %1062 : vector<4x256xf32>
    %1064 = arith.negf %1063 : vector<4x256xf32>
    %1065 = math.exp %1064 : vector<4x256xf32>
    %cst_344 = arith.constant 1.000000e+00 : f32
    %1066 = vector.broadcast %cst_344 : f32 to vector<4x256xf32>
    %1067 = arith.addf %1066, %1065 : vector<4x256xf32>
    %1068 = arith.divf %1066, %1067 : vector<4x256xf32>
    %1069 = arith.mulf %1042, %1068 : vector<4x256xf32>
    %1070 = arith.addf %1069, %1 : vector<4x256xf32>
    %1071 = arith.addf %1070, %415 : vector<4x256xf32>
    %cst_345 = arith.constant dense<0.000000e+00> : vector<4xf32>
    %1072 = vector.multi_reduction <add>, %1, %cst_345 [1] : vector<4x256xf32> to vector<4xf32>
    %1073 = vector.shape_cast %1072 : vector<4xf32> to vector<4x1xf32>
    %cst_346 = arith.constant 2.560000e+02 : f32
    %1074 = vector.broadcast %cst_346 : f32 to vector<4x1xf32>
    %1075 = arith.divf %1073, %1074 : vector<4x1xf32>
    %1076 = vector.broadcast %1075 : vector<4x1xf32> to vector<4x256xf32>
    %1077 = arith.subf %1, %1076 : vector<4x256xf32>
    %1078 = arith.mulf %1077, %1077 : vector<4x256xf32>
    %cst_347 = arith.constant dense<0.000000e+00> : vector<4xf32>
    %1079 = vector.multi_reduction <add>, %1078, %cst_347 [1] : vector<4x256xf32> to vector<4xf32>
    %1080 = vector.shape_cast %1079 : vector<4xf32> to vector<4x1xf32>
    %cst_348 = arith.constant 0.00392156886 : f32
    %1081 = vector.broadcast %cst_348 : f32 to vector<4x1xf32>
    %1082 = arith.mulf %1080, %1081 : vector<4x1xf32>
    %cst_349 = arith.constant 9.99999974E-5 : f32
    %1083 = vector.broadcast %cst_349 : f32 to vector<4x1xf32>
    %1084 = arith.addf %1082, %1083 : vector<4x1xf32>
    %cst_350 = arith.constant 4.000000e+00 : f32
    %1085 = vector.broadcast %cst_350 : f32 to vector<4x1xf32>
    %1086 = arith.mulf %1085, %1084 : vector<4x1xf32>
    %cst_351 = arith.constant 1.000000e+00 : f32
    %1087 = vector.broadcast %cst_351 : f32 to vector<4x1xf32>
    %1088 = arith.divf %1087, %1086 : vector<4x1xf32>
    %1089 = vector.broadcast %1088 : vector<4x1xf32> to vector<4x256xf32>
    %1090 = arith.mulf %1078, %1089 : vector<4x256xf32>
    %cst_352 = arith.constant 5.000000e-01 : f32
    %1091 = vector.broadcast %cst_352 : f32 to vector<4x256xf32>
    %1092 = arith.addf %1090, %1091 : vector<4x256xf32>
    %1093 = arith.negf %1092 : vector<4x256xf32>
    %1094 = math.exp %1093 : vector<4x256xf32>
    %cst_353 = arith.constant 1.000000e+00 : f32
    %1095 = vector.broadcast %cst_353 : f32 to vector<4x256xf32>
    %1096 = arith.addf %1095, %1094 : vector<4x256xf32>
    %1097 = arith.divf %1095, %1096 : vector<4x256xf32>
    %1098 = arith.mulf %1, %1097 : vector<4x256xf32>
    %cst_354 = arith.constant dense<0.000000e+00> : vector<4xf32>
    %1099 = vector.multi_reduction <add>, %415, %cst_354 [1] : vector<4x256xf32> to vector<4xf32>
    %1100 = vector.shape_cast %1099 : vector<4xf32> to vector<4x1xf32>
    %cst_355 = arith.constant 2.560000e+02 : f32
    %1101 = vector.broadcast %cst_355 : f32 to vector<4x1xf32>
    %1102 = arith.divf %1100, %1101 : vector<4x1xf32>
    %1103 = vector.broadcast %1102 : vector<4x1xf32> to vector<4x256xf32>
    %1104 = arith.subf %415, %1103 : vector<4x256xf32>
    %1105 = arith.mulf %1104, %1104 : vector<4x256xf32>
    %cst_356 = arith.constant dense<0.000000e+00> : vector<4xf32>
    %1106 = vector.multi_reduction <add>, %1105, %cst_356 [1] : vector<4x256xf32> to vector<4xf32>
    %1107 = vector.shape_cast %1106 : vector<4xf32> to vector<4x1xf32>
    %cst_357 = arith.constant 0.00392156886 : f32
    %1108 = vector.broadcast %cst_357 : f32 to vector<4x1xf32>
    %1109 = arith.mulf %1107, %1108 : vector<4x1xf32>
    %cst_358 = arith.constant 9.99999974E-5 : f32
    %1110 = vector.broadcast %cst_358 : f32 to vector<4x1xf32>
    %1111 = arith.addf %1109, %1110 : vector<4x1xf32>
    %cst_359 = arith.constant 4.000000e+00 : f32
    %1112 = vector.broadcast %cst_359 : f32 to vector<4x1xf32>
    %1113 = arith.mulf %1112, %1111 : vector<4x1xf32>
    %cst_360 = arith.constant 1.000000e+00 : f32
    %1114 = vector.broadcast %cst_360 : f32 to vector<4x1xf32>
    %1115 = arith.divf %1114, %1113 : vector<4x1xf32>
    %1116 = vector.broadcast %1115 : vector<4x1xf32> to vector<4x256xf32>
    %1117 = arith.mulf %1105, %1116 : vector<4x256xf32>
    %cst_361 = arith.constant 5.000000e-01 : f32
    %1118 = vector.broadcast %cst_361 : f32 to vector<4x256xf32>
    %1119 = arith.addf %1117, %1118 : vector<4x256xf32>
    %1120 = arith.negf %1119 : vector<4x256xf32>
    %1121 = math.exp %1120 : vector<4x256xf32>
    %cst_362 = arith.constant 1.000000e+00 : f32
    %1122 = vector.broadcast %cst_362 : f32 to vector<4x256xf32>
    %1123 = arith.addf %1122, %1121 : vector<4x256xf32>
    %1124 = arith.divf %1122, %1123 : vector<4x256xf32>
    %1125 = arith.mulf %415, %1124 : vector<4x256xf32>
    %1126 = arith.addf %1098, %1125 : vector<4x256xf32>
    %1127 = arith.mulf %1126, %1042 : vector<4x256xf32>
    %1128 = arith.addf %1071, %1127 : vector<4x256xf32>
    %cst_363 = arith.constant 0.000000e+00 : f32
    %1129 = vector.broadcast %cst_363 : f32 to vector<4x256xf32>
    %c17_i32_364 = arith.constant 17 : i32
    %1130 = tpu.dynamic_rotate %1128 by %c17_i32_364 dim 1 : vector<4x256xf32>, i32 -> vector<4x256xf32>
    %c0_365 = arith.constant 0 : index
    %c0_366 = arith.constant 0 : index
    %1131 = vector.load %arg3[%c0_365, %c0_366] : memref<24x256xf32, #tpu.memory_space<vmem>>, vector<1x256xf32>
    %1132 = vector.broadcast %1131 : vector<1x256xf32> to vector<4x256xf32>
    %1133 = arith.mulf %1130, %1132 : vector<4x256xf32>
    %c0_367 = arith.constant 0 : index
    %c142 = arith.constant 142 : index
    %1134 = vector.load %arg2[%c0_367, %c142] : memref<4x184xf32, #tpu.memory_space<vmem>>, vector<4x1xf32>
    %1135 = vector.extract_strided_slice %1133 {offsets = [0, 0], sizes = [1, 256], strides = [1, 1]} : vector<4x256xf32> to vector<1x256xf32>
    %1136 = vector.broadcast %1134 : vector<4x1xf32> to vector<4x256xf32>
    %1137 = vector.broadcast %1135 : vector<1x256xf32> to vector<4x256xf32>
    %1138 = arith.mulf %1136, %1137 : vector<4x256xf32>
    %1139 = arith.addf %1129, %1138 : vector<4x256xf32>
    %c0_368 = arith.constant 0 : index
    %c143 = arith.constant 143 : index
    %1140 = vector.load %arg2[%c0_368, %c143] : memref<4x184xf32, #tpu.memory_space<vmem>>, vector<4x1xf32>
    %1141 = vector.extract_strided_slice %1133 {offsets = [1, 0], sizes = [1, 256], strides = [1, 1]} : vector<4x256xf32> to vector<1x256xf32>
    %1142 = vector.broadcast %1140 : vector<4x1xf32> to vector<4x256xf32>
    %1143 = vector.broadcast %1141 : vector<1x256xf32> to vector<4x256xf32>
    %1144 = arith.mulf %1142, %1143 : vector<4x256xf32>
    %1145 = arith.addf %1139, %1144 : vector<4x256xf32>
    %c0_369 = arith.constant 0 : index
    %c144 = arith.constant 144 : index
    %1146 = vector.load %arg2[%c0_369, %c144] : memref<4x184xf32, #tpu.memory_space<vmem>>, vector<4x1xf32>
    %1147 = vector.extract_strided_slice %1133 {offsets = [2, 0], sizes = [1, 256], strides = [1, 1]} : vector<4x256xf32> to vector<1x256xf32>
    %1148 = vector.broadcast %1146 : vector<4x1xf32> to vector<4x256xf32>
    %1149 = vector.broadcast %1147 : vector<1x256xf32> to vector<4x256xf32>
    %1150 = arith.mulf %1148, %1149 : vector<4x256xf32>
    %1151 = arith.addf %1145, %1150 : vector<4x256xf32>
    %c0_370 = arith.constant 0 : index
    %c145 = arith.constant 145 : index
    %1152 = vector.load %arg2[%c0_370, %c145] : memref<4x184xf32, #tpu.memory_space<vmem>>, vector<4x1xf32>
    %1153 = vector.extract_strided_slice %1133 {offsets = [3, 0], sizes = [1, 256], strides = [1, 1]} : vector<4x256xf32> to vector<1x256xf32>
    %1154 = vector.broadcast %1152 : vector<4x1xf32> to vector<4x256xf32>
    %1155 = vector.broadcast %1153 : vector<1x256xf32> to vector<4x256xf32>
    %1156 = arith.mulf %1154, %1155 : vector<4x256xf32>
    %1157 = arith.addf %1151, %1156 : vector<4x256xf32>
    %c16_i32_371 = arith.constant 16 : i32
    %1158 = tpu.dynamic_rotate %1128 by %c16_i32_371 dim 1 : vector<4x256xf32>, i32 -> vector<4x256xf32>
    %c1_372 = arith.constant 1 : index
    %c0_373 = arith.constant 0 : index
    %1159 = vector.load %arg3[%c1_372, %c0_373] : memref<24x256xf32, #tpu.memory_space<vmem>>, vector<1x256xf32>
    %1160 = vector.broadcast %1159 : vector<1x256xf32> to vector<4x256xf32>
    %1161 = arith.mulf %1158, %1160 : vector<4x256xf32>
    %c0_374 = arith.constant 0 : index
    %c146 = arith.constant 146 : index
    %1162 = vector.load %arg2[%c0_374, %c146] : memref<4x184xf32, #tpu.memory_space<vmem>>, vector<4x1xf32>
    %1163 = vector.extract_strided_slice %1161 {offsets = [0, 0], sizes = [1, 256], strides = [1, 1]} : vector<4x256xf32> to vector<1x256xf32>
    %1164 = vector.broadcast %1162 : vector<4x1xf32> to vector<4x256xf32>
    %1165 = vector.broadcast %1163 : vector<1x256xf32> to vector<4x256xf32>
    %1166 = arith.mulf %1164, %1165 : vector<4x256xf32>
    %1167 = arith.addf %1157, %1166 : vector<4x256xf32>
    %c0_375 = arith.constant 0 : index
    %c147 = arith.constant 147 : index
    %1168 = vector.load %arg2[%c0_375, %c147] : memref<4x184xf32, #tpu.memory_space<vmem>>, vector<4x1xf32>
    %1169 = vector.extract_strided_slice %1161 {offsets = [1, 0], sizes = [1, 256], strides = [1, 1]} : vector<4x256xf32> to vector<1x256xf32>
    %1170 = vector.broadcast %1168 : vector<4x1xf32> to vector<4x256xf32>
    %1171 = vector.broadcast %1169 : vector<1x256xf32> to vector<4x256xf32>
    %1172 = arith.mulf %1170, %1171 : vector<4x256xf32>
    %1173 = arith.addf %1167, %1172 : vector<4x256xf32>
    %c0_376 = arith.constant 0 : index
    %c148 = arith.constant 148 : index
    %1174 = vector.load %arg2[%c0_376, %c148] : memref<4x184xf32, #tpu.memory_space<vmem>>, vector<4x1xf32>
    %1175 = vector.extract_strided_slice %1161 {offsets = [2, 0], sizes = [1, 256], strides = [1, 1]} : vector<4x256xf32> to vector<1x256xf32>
    %1176 = vector.broadcast %1174 : vector<4x1xf32> to vector<4x256xf32>
    %1177 = vector.broadcast %1175 : vector<1x256xf32> to vector<4x256xf32>
    %1178 = arith.mulf %1176, %1177 : vector<4x256xf32>
    %1179 = arith.addf %1173, %1178 : vector<4x256xf32>
    %c0_377 = arith.constant 0 : index
    %c149 = arith.constant 149 : index
    %1180 = vector.load %arg2[%c0_377, %c149] : memref<4x184xf32, #tpu.memory_space<vmem>>, vector<4x1xf32>
    %1181 = vector.extract_strided_slice %1161 {offsets = [3, 0], sizes = [1, 256], strides = [1, 1]} : vector<4x256xf32> to vector<1x256xf32>
    %1182 = vector.broadcast %1180 : vector<4x1xf32> to vector<4x256xf32>
    %1183 = vector.broadcast %1181 : vector<1x256xf32> to vector<4x256xf32>
    %1184 = arith.mulf %1182, %1183 : vector<4x256xf32>
    %1185 = arith.addf %1179, %1184 : vector<4x256xf32>
    %c15_i32_378 = arith.constant 15 : i32
    %1186 = tpu.dynamic_rotate %1128 by %c15_i32_378 dim 1 : vector<4x256xf32>, i32 -> vector<4x256xf32>
    %c2_379 = arith.constant 2 : index
    %c0_380 = arith.constant 0 : index
    %1187 = vector.load %arg3[%c2_379, %c0_380] : memref<24x256xf32, #tpu.memory_space<vmem>>, vector<1x256xf32>
    %1188 = vector.broadcast %1187 : vector<1x256xf32> to vector<4x256xf32>
    %1189 = arith.mulf %1186, %1188 : vector<4x256xf32>
    %c0_381 = arith.constant 0 : index
    %c150 = arith.constant 150 : index
    %1190 = vector.load %arg2[%c0_381, %c150] : memref<4x184xf32, #tpu.memory_space<vmem>>, vector<4x1xf32>
    %1191 = vector.extract_strided_slice %1189 {offsets = [0, 0], sizes = [1, 256], strides = [1, 1]} : vector<4x256xf32> to vector<1x256xf32>
    %1192 = vector.broadcast %1190 : vector<4x1xf32> to vector<4x256xf32>
    %1193 = vector.broadcast %1191 : vector<1x256xf32> to vector<4x256xf32>
    %1194 = arith.mulf %1192, %1193 : vector<4x256xf32>
    %1195 = arith.addf %1185, %1194 : vector<4x256xf32>
    %c0_382 = arith.constant 0 : index
    %c151 = arith.constant 151 : index
    %1196 = vector.load %arg2[%c0_382, %c151] : memref<4x184xf32, #tpu.memory_space<vmem>>, vector<4x1xf32>
    %1197 = vector.extract_strided_slice %1189 {offsets = [1, 0], sizes = [1, 256], strides = [1, 1]} : vector<4x256xf32> to vector<1x256xf32>
    %1198 = vector.broadcast %1196 : vector<4x1xf32> to vector<4x256xf32>
    %1199 = vector.broadcast %1197 : vector<1x256xf32> to vector<4x256xf32>
    %1200 = arith.mulf %1198, %1199 : vector<4x256xf32>
    %1201 = arith.addf %1195, %1200 : vector<4x256xf32>
    %c0_383 = arith.constant 0 : index
    %c152 = arith.constant 152 : index
    %1202 = vector.load %arg2[%c0_383, %c152] : memref<4x184xf32, #tpu.memory_space<vmem>>, vector<4x1xf32>
    %1203 = vector.extract_strided_slice %1189 {offsets = [2, 0], sizes = [1, 256], strides = [1, 1]} : vector<4x256xf32> to vector<1x256xf32>
    %1204 = vector.broadcast %1202 : vector<4x1xf32> to vector<4x256xf32>
    %1205 = vector.broadcast %1203 : vector<1x256xf32> to vector<4x256xf32>
    %1206 = arith.mulf %1204, %1205 : vector<4x256xf32>
    %1207 = arith.addf %1201, %1206 : vector<4x256xf32>
    %c0_384 = arith.constant 0 : index
    %c153 = arith.constant 153 : index
    %1208 = vector.load %arg2[%c0_384, %c153] : memref<4x184xf32, #tpu.memory_space<vmem>>, vector<4x1xf32>
    %1209 = vector.extract_strided_slice %1189 {offsets = [3, 0], sizes = [1, 256], strides = [1, 1]} : vector<4x256xf32> to vector<1x256xf32>
    %1210 = vector.broadcast %1208 : vector<4x1xf32> to vector<4x256xf32>
    %1211 = vector.broadcast %1209 : vector<1x256xf32> to vector<4x256xf32>
    %1212 = arith.mulf %1210, %1211 : vector<4x256xf32>
    %1213 = arith.addf %1207, %1212 : vector<4x256xf32>
    %c1_i32_385 = arith.constant 1 : i32
    %1214 = tpu.dynamic_rotate %1128 by %c1_i32_385 dim 1 : vector<4x256xf32>, i32 -> vector<4x256xf32>
    %c3_386 = arith.constant 3 : index
    %c0_387 = arith.constant 0 : index
    %1215 = vector.load %arg3[%c3_386, %c0_387] : memref<24x256xf32, #tpu.memory_space<vmem>>, vector<1x256xf32>
    %1216 = vector.broadcast %1215 : vector<1x256xf32> to vector<4x256xf32>
    %1217 = arith.mulf %1214, %1216 : vector<4x256xf32>
    %c0_388 = arith.constant 0 : index
    %c154 = arith.constant 154 : index
    %1218 = vector.load %arg2[%c0_388, %c154] : memref<4x184xf32, #tpu.memory_space<vmem>>, vector<4x1xf32>
    %1219 = vector.extract_strided_slice %1217 {offsets = [0, 0], sizes = [1, 256], strides = [1, 1]} : vector<4x256xf32> to vector<1x256xf32>
    %1220 = vector.broadcast %1218 : vector<4x1xf32> to vector<4x256xf32>
    %1221 = vector.broadcast %1219 : vector<1x256xf32> to vector<4x256xf32>
    %1222 = arith.mulf %1220, %1221 : vector<4x256xf32>
    %1223 = arith.addf %1213, %1222 : vector<4x256xf32>
    %c0_389 = arith.constant 0 : index
    %c155 = arith.constant 155 : index
    %1224 = vector.load %arg2[%c0_389, %c155] : memref<4x184xf32, #tpu.memory_space<vmem>>, vector<4x1xf32>
    %1225 = vector.extract_strided_slice %1217 {offsets = [1, 0], sizes = [1, 256], strides = [1, 1]} : vector<4x256xf32> to vector<1x256xf32>
    %1226 = vector.broadcast %1224 : vector<4x1xf32> to vector<4x256xf32>
    %1227 = vector.broadcast %1225 : vector<1x256xf32> to vector<4x256xf32>
    %1228 = arith.mulf %1226, %1227 : vector<4x256xf32>
    %1229 = arith.addf %1223, %1228 : vector<4x256xf32>
    %c0_390 = arith.constant 0 : index
    %c156 = arith.constant 156 : index
    %1230 = vector.load %arg2[%c0_390, %c156] : memref<4x184xf32, #tpu.memory_space<vmem>>, vector<4x1xf32>
    %1231 = vector.extract_strided_slice %1217 {offsets = [2, 0], sizes = [1, 256], strides = [1, 1]} : vector<4x256xf32> to vector<1x256xf32>
    %1232 = vector.broadcast %1230 : vector<4x1xf32> to vector<4x256xf32>
    %1233 = vector.broadcast %1231 : vector<1x256xf32> to vector<4x256xf32>
    %1234 = arith.mulf %1232, %1233 : vector<4x256xf32>
    %1235 = arith.addf %1229, %1234 : vector<4x256xf32>
    %c0_391 = arith.constant 0 : index
    %c157 = arith.constant 157 : index
    %1236 = vector.load %arg2[%c0_391, %c157] : memref<4x184xf32, #tpu.memory_space<vmem>>, vector<4x1xf32>
    %1237 = vector.extract_strided_slice %1217 {offsets = [3, 0], sizes = [1, 256], strides = [1, 1]} : vector<4x256xf32> to vector<1x256xf32>
    %1238 = vector.broadcast %1236 : vector<4x1xf32> to vector<4x256xf32>
    %1239 = vector.broadcast %1237 : vector<1x256xf32> to vector<4x256xf32>
    %1240 = arith.mulf %1238, %1239 : vector<4x256xf32>
    %1241 = arith.addf %1235, %1240 : vector<4x256xf32>
    %c0_392 = arith.constant 0 : index
    %c158 = arith.constant 158 : index
    %1242 = vector.load %arg2[%c0_392, %c158] : memref<4x184xf32, #tpu.memory_space<vmem>>, vector<4x1xf32>
    %1243 = vector.extract_strided_slice %1128 {offsets = [0, 0], sizes = [1, 256], strides = [1, 1]} : vector<4x256xf32> to vector<1x256xf32>
    %1244 = vector.broadcast %1242 : vector<4x1xf32> to vector<4x256xf32>
    %1245 = vector.broadcast %1243 : vector<1x256xf32> to vector<4x256xf32>
    %1246 = arith.mulf %1244, %1245 : vector<4x256xf32>
    %1247 = arith.addf %1241, %1246 : vector<4x256xf32>
    %c0_393 = arith.constant 0 : index
    %c159 = arith.constant 159 : index
    %1248 = vector.load %arg2[%c0_393, %c159] : memref<4x184xf32, #tpu.memory_space<vmem>>, vector<4x1xf32>
    %1249 = vector.extract_strided_slice %1128 {offsets = [1, 0], sizes = [1, 256], strides = [1, 1]} : vector<4x256xf32> to vector<1x256xf32>
    %1250 = vector.broadcast %1248 : vector<4x1xf32> to vector<4x256xf32>
    %1251 = vector.broadcast %1249 : vector<1x256xf32> to vector<4x256xf32>
    %1252 = arith.mulf %1250, %1251 : vector<4x256xf32>
    %1253 = arith.addf %1247, %1252 : vector<4x256xf32>
    %c0_394 = arith.constant 0 : index
    %c160 = arith.constant 160 : index
    %1254 = vector.load %arg2[%c0_394, %c160] : memref<4x184xf32, #tpu.memory_space<vmem>>, vector<4x1xf32>
    %1255 = vector.extract_strided_slice %1128 {offsets = [2, 0], sizes = [1, 256], strides = [1, 1]} : vector<4x256xf32> to vector<1x256xf32>
    %1256 = vector.broadcast %1254 : vector<4x1xf32> to vector<4x256xf32>
    %1257 = vector.broadcast %1255 : vector<1x256xf32> to vector<4x256xf32>
    %1258 = arith.mulf %1256, %1257 : vector<4x256xf32>
    %1259 = arith.addf %1253, %1258 : vector<4x256xf32>
    %c0_395 = arith.constant 0 : index
    %c161 = arith.constant 161 : index
    %1260 = vector.load %arg2[%c0_395, %c161] : memref<4x184xf32, #tpu.memory_space<vmem>>, vector<4x1xf32>
    %1261 = vector.extract_strided_slice %1128 {offsets = [3, 0], sizes = [1, 256], strides = [1, 1]} : vector<4x256xf32> to vector<1x256xf32>
    %1262 = vector.broadcast %1260 : vector<4x1xf32> to vector<4x256xf32>
    %1263 = vector.broadcast %1261 : vector<1x256xf32> to vector<4x256xf32>
    %1264 = arith.mulf %1262, %1263 : vector<4x256xf32>
    %1265 = arith.addf %1259, %1264 : vector<4x256xf32>
    %c255_i32_396 = arith.constant 255 : i32
    %1266 = tpu.dynamic_rotate %1128 by %c255_i32_396 dim 1 : vector<4x256xf32>, i32 -> vector<4x256xf32>
    %c4_397 = arith.constant 4 : index
    %c0_398 = arith.constant 0 : index
    %1267 = vector.load %arg3[%c4_397, %c0_398] : memref<24x256xf32, #tpu.memory_space<vmem>>, vector<1x256xf32>
    %1268 = vector.broadcast %1267 : vector<1x256xf32> to vector<4x256xf32>
    %1269 = arith.mulf %1266, %1268 : vector<4x256xf32>
    %c0_399 = arith.constant 0 : index
    %c162 = arith.constant 162 : index
    %1270 = vector.load %arg2[%c0_399, %c162] : memref<4x184xf32, #tpu.memory_space<vmem>>, vector<4x1xf32>
    %1271 = vector.extract_strided_slice %1269 {offsets = [0, 0], sizes = [1, 256], strides = [1, 1]} : vector<4x256xf32> to vector<1x256xf32>
    %1272 = vector.broadcast %1270 : vector<4x1xf32> to vector<4x256xf32>
    %1273 = vector.broadcast %1271 : vector<1x256xf32> to vector<4x256xf32>
    %1274 = arith.mulf %1272, %1273 : vector<4x256xf32>
    %1275 = arith.addf %1265, %1274 : vector<4x256xf32>
    %c0_400 = arith.constant 0 : index
    %c163 = arith.constant 163 : index
    %1276 = vector.load %arg2[%c0_400, %c163] : memref<4x184xf32, #tpu.memory_space<vmem>>, vector<4x1xf32>
    %1277 = vector.extract_strided_slice %1269 {offsets = [1, 0], sizes = [1, 256], strides = [1, 1]} : vector<4x256xf32> to vector<1x256xf32>
    %1278 = vector.broadcast %1276 : vector<4x1xf32> to vector<4x256xf32>
    %1279 = vector.broadcast %1277 : vector<1x256xf32> to vector<4x256xf32>
    %1280 = arith.mulf %1278, %1279 : vector<4x256xf32>
    %1281 = arith.addf %1275, %1280 : vector<4x256xf32>
    %c0_401 = arith.constant 0 : index
    %c164 = arith.constant 164 : index
    %1282 = vector.load %arg2[%c0_401, %c164] : memref<4x184xf32, #tpu.memory_space<vmem>>, vector<4x1xf32>
    %1283 = vector.extract_strided_slice %1269 {offsets = [2, 0], sizes = [1, 256], strides = [1, 1]} : vector<4x256xf32> to vector<1x256xf32>
    %1284 = vector.broadcast %1282 : vector<4x1xf32> to vector<4x256xf32>
    %1285 = vector.broadcast %1283 : vector<1x256xf32> to vector<4x256xf32>
    %1286 = arith.mulf %1284, %1285 : vector<4x256xf32>
    %1287 = arith.addf %1281, %1286 : vector<4x256xf32>
    %c0_402 = arith.constant 0 : index
    %c165 = arith.constant 165 : index
    %1288 = vector.load %arg2[%c0_402, %c165] : memref<4x184xf32, #tpu.memory_space<vmem>>, vector<4x1xf32>
    %1289 = vector.extract_strided_slice %1269 {offsets = [3, 0], sizes = [1, 256], strides = [1, 1]} : vector<4x256xf32> to vector<1x256xf32>
    %1290 = vector.broadcast %1288 : vector<4x1xf32> to vector<4x256xf32>
    %1291 = vector.broadcast %1289 : vector<1x256xf32> to vector<4x256xf32>
    %1292 = arith.mulf %1290, %1291 : vector<4x256xf32>
    %1293 = arith.addf %1287, %1292 : vector<4x256xf32>
    %c241_i32_403 = arith.constant 241 : i32
    %1294 = tpu.dynamic_rotate %1128 by %c241_i32_403 dim 1 : vector<4x256xf32>, i32 -> vector<4x256xf32>
    %c5_404 = arith.constant 5 : index
    %c0_405 = arith.constant 0 : index
    %1295 = vector.load %arg3[%c5_404, %c0_405] : memref<24x256xf32, #tpu.memory_space<vmem>>, vector<1x256xf32>
    %1296 = vector.broadcast %1295 : vector<1x256xf32> to vector<4x256xf32>
    %1297 = arith.mulf %1294, %1296 : vector<4x256xf32>
    %c0_406 = arith.constant 0 : index
    %c166 = arith.constant 166 : index
    %1298 = vector.load %arg2[%c0_406, %c166] : memref<4x184xf32, #tpu.memory_space<vmem>>, vector<4x1xf32>
    %1299 = vector.extract_strided_slice %1297 {offsets = [0, 0], sizes = [1, 256], strides = [1, 1]} : vector<4x256xf32> to vector<1x256xf32>
    %1300 = vector.broadcast %1298 : vector<4x1xf32> to vector<4x256xf32>
    %1301 = vector.broadcast %1299 : vector<1x256xf32> to vector<4x256xf32>
    %1302 = arith.mulf %1300, %1301 : vector<4x256xf32>
    %1303 = arith.addf %1293, %1302 : vector<4x256xf32>
    %c0_407 = arith.constant 0 : index
    %c167 = arith.constant 167 : index
    %1304 = vector.load %arg2[%c0_407, %c167] : memref<4x184xf32, #tpu.memory_space<vmem>>, vector<4x1xf32>
    %1305 = vector.extract_strided_slice %1297 {offsets = [1, 0], sizes = [1, 256], strides = [1, 1]} : vector<4x256xf32> to vector<1x256xf32>
    %1306 = vector.broadcast %1304 : vector<4x1xf32> to vector<4x256xf32>
    %1307 = vector.broadcast %1305 : vector<1x256xf32> to vector<4x256xf32>
    %1308 = arith.mulf %1306, %1307 : vector<4x256xf32>
    %1309 = arith.addf %1303, %1308 : vector<4x256xf32>
    %c0_408 = arith.constant 0 : index
    %c168 = arith.constant 168 : index
    %1310 = vector.load %arg2[%c0_408, %c168] : memref<4x184xf32, #tpu.memory_space<vmem>>, vector<4x1xf32>
    %1311 = vector.extract_strided_slice %1297 {offsets = [2, 0], sizes = [1, 256], strides = [1, 1]} : vector<4x256xf32> to vector<1x256xf32>
    %1312 = vector.broadcast %1310 : vector<4x1xf32> to vector<4x256xf32>
    %1313 = vector.broadcast %1311 : vector<1x256xf32> to vector<4x256xf32>
    %1314 = arith.mulf %1312, %1313 : vector<4x256xf32>
    %1315 = arith.addf %1309, %1314 : vector<4x256xf32>
    %c0_409 = arith.constant 0 : index
    %c169 = arith.constant 169 : index
    %1316 = vector.load %arg2[%c0_409, %c169] : memref<4x184xf32, #tpu.memory_space<vmem>>, vector<4x1xf32>
    %1317 = vector.extract_strided_slice %1297 {offsets = [3, 0], sizes = [1, 256], strides = [1, 1]} : vector<4x256xf32> to vector<1x256xf32>
    %1318 = vector.broadcast %1316 : vector<4x1xf32> to vector<4x256xf32>
    %1319 = vector.broadcast %1317 : vector<1x256xf32> to vector<4x256xf32>
    %1320 = arith.mulf %1318, %1319 : vector<4x256xf32>
    %1321 = arith.addf %1315, %1320 : vector<4x256xf32>
    %c240_i32_410 = arith.constant 240 : i32
    %1322 = tpu.dynamic_rotate %1128 by %c240_i32_410 dim 1 : vector<4x256xf32>, i32 -> vector<4x256xf32>
    %c6_411 = arith.constant 6 : index
    %c0_412 = arith.constant 0 : index
    %1323 = vector.load %arg3[%c6_411, %c0_412] : memref<24x256xf32, #tpu.memory_space<vmem>>, vector<1x256xf32>
    %1324 = vector.broadcast %1323 : vector<1x256xf32> to vector<4x256xf32>
    %1325 = arith.mulf %1322, %1324 : vector<4x256xf32>
    %c0_413 = arith.constant 0 : index
    %c170 = arith.constant 170 : index
    %1326 = vector.load %arg2[%c0_413, %c170] : memref<4x184xf32, #tpu.memory_space<vmem>>, vector<4x1xf32>
    %1327 = vector.extract_strided_slice %1325 {offsets = [0, 0], sizes = [1, 256], strides = [1, 1]} : vector<4x256xf32> to vector<1x256xf32>
    %1328 = vector.broadcast %1326 : vector<4x1xf32> to vector<4x256xf32>
    %1329 = vector.broadcast %1327 : vector<1x256xf32> to vector<4x256xf32>
    %1330 = arith.mulf %1328, %1329 : vector<4x256xf32>
    %1331 = arith.addf %1321, %1330 : vector<4x256xf32>
    %c0_414 = arith.constant 0 : index
    %c171 = arith.constant 171 : index
    %1332 = vector.load %arg2[%c0_414, %c171] : memref<4x184xf32, #tpu.memory_space<vmem>>, vector<4x1xf32>
    %1333 = vector.extract_strided_slice %1325 {offsets = [1, 0], sizes = [1, 256], strides = [1, 1]} : vector<4x256xf32> to vector<1x256xf32>
    %1334 = vector.broadcast %1332 : vector<4x1xf32> to vector<4x256xf32>
    %1335 = vector.broadcast %1333 : vector<1x256xf32> to vector<4x256xf32>
    %1336 = arith.mulf %1334, %1335 : vector<4x256xf32>
    %1337 = arith.addf %1331, %1336 : vector<4x256xf32>
    %c0_415 = arith.constant 0 : index
    %c172 = arith.constant 172 : index
    %1338 = vector.load %arg2[%c0_415, %c172] : memref<4x184xf32, #tpu.memory_space<vmem>>, vector<4x1xf32>
    %1339 = vector.extract_strided_slice %1325 {offsets = [2, 0], sizes = [1, 256], strides = [1, 1]} : vector<4x256xf32> to vector<1x256xf32>
    %1340 = vector.broadcast %1338 : vector<4x1xf32> to vector<4x256xf32>
    %1341 = vector.broadcast %1339 : vector<1x256xf32> to vector<4x256xf32>
    %1342 = arith.mulf %1340, %1341 : vector<4x256xf32>
    %1343 = arith.addf %1337, %1342 : vector<4x256xf32>
    %c0_416 = arith.constant 0 : index
    %c173 = arith.constant 173 : index
    %1344 = vector.load %arg2[%c0_416, %c173] : memref<4x184xf32, #tpu.memory_space<vmem>>, vector<4x1xf32>
    %1345 = vector.extract_strided_slice %1325 {offsets = [3, 0], sizes = [1, 256], strides = [1, 1]} : vector<4x256xf32> to vector<1x256xf32>
    %1346 = vector.broadcast %1344 : vector<4x1xf32> to vector<4x256xf32>
    %1347 = vector.broadcast %1345 : vector<1x256xf32> to vector<4x256xf32>
    %1348 = arith.mulf %1346, %1347 : vector<4x256xf32>
    %1349 = arith.addf %1343, %1348 : vector<4x256xf32>
    %c239_i32_417 = arith.constant 239 : i32
    %1350 = tpu.dynamic_rotate %1128 by %c239_i32_417 dim 1 : vector<4x256xf32>, i32 -> vector<4x256xf32>
    %c7_418 = arith.constant 7 : index
    %c0_419 = arith.constant 0 : index
    %1351 = vector.load %arg3[%c7_418, %c0_419] : memref<24x256xf32, #tpu.memory_space<vmem>>, vector<1x256xf32>
    %1352 = vector.broadcast %1351 : vector<1x256xf32> to vector<4x256xf32>
    %1353 = arith.mulf %1350, %1352 : vector<4x256xf32>
    %c0_420 = arith.constant 0 : index
    %c174 = arith.constant 174 : index
    %1354 = vector.load %arg2[%c0_420, %c174] : memref<4x184xf32, #tpu.memory_space<vmem>>, vector<4x1xf32>
    %1355 = vector.extract_strided_slice %1353 {offsets = [0, 0], sizes = [1, 256], strides = [1, 1]} : vector<4x256xf32> to vector<1x256xf32>
    %1356 = vector.broadcast %1354 : vector<4x1xf32> to vector<4x256xf32>
    %1357 = vector.broadcast %1355 : vector<1x256xf32> to vector<4x256xf32>
    %1358 = arith.mulf %1356, %1357 : vector<4x256xf32>
    %1359 = arith.addf %1349, %1358 : vector<4x256xf32>
    %c0_421 = arith.constant 0 : index
    %c175 = arith.constant 175 : index
    %1360 = vector.load %arg2[%c0_421, %c175] : memref<4x184xf32, #tpu.memory_space<vmem>>, vector<4x1xf32>
    %1361 = vector.extract_strided_slice %1353 {offsets = [1, 0], sizes = [1, 256], strides = [1, 1]} : vector<4x256xf32> to vector<1x256xf32>
    %1362 = vector.broadcast %1360 : vector<4x1xf32> to vector<4x256xf32>
    %1363 = vector.broadcast %1361 : vector<1x256xf32> to vector<4x256xf32>
    %1364 = arith.mulf %1362, %1363 : vector<4x256xf32>
    %1365 = arith.addf %1359, %1364 : vector<4x256xf32>
    %c0_422 = arith.constant 0 : index
    %c176 = arith.constant 176 : index
    %1366 = vector.load %arg2[%c0_422, %c176] : memref<4x184xf32, #tpu.memory_space<vmem>>, vector<4x1xf32>
    %1367 = vector.extract_strided_slice %1353 {offsets = [2, 0], sizes = [1, 256], strides = [1, 1]} : vector<4x256xf32> to vector<1x256xf32>
    %1368 = vector.broadcast %1366 : vector<4x1xf32> to vector<4x256xf32>
    %1369 = vector.broadcast %1367 : vector<1x256xf32> to vector<4x256xf32>
    %1370 = arith.mulf %1368, %1369 : vector<4x256xf32>
    %1371 = arith.addf %1365, %1370 : vector<4x256xf32>
    %c0_423 = arith.constant 0 : index
    %c177 = arith.constant 177 : index
    %1372 = vector.load %arg2[%c0_423, %c177] : memref<4x184xf32, #tpu.memory_space<vmem>>, vector<4x1xf32>
    %1373 = vector.extract_strided_slice %1353 {offsets = [3, 0], sizes = [1, 256], strides = [1, 1]} : vector<4x256xf32> to vector<1x256xf32>
    %1374 = vector.broadcast %1372 : vector<4x1xf32> to vector<4x256xf32>
    %1375 = vector.broadcast %1373 : vector<1x256xf32> to vector<4x256xf32>
    %1376 = arith.mulf %1374, %1375 : vector<4x256xf32>
    %1377 = arith.addf %1371, %1376 : vector<4x256xf32>
    %c0_424 = arith.constant 0 : index
    %c178 = arith.constant 178 : index
    %1378 = vector.load %arg2[%c0_424, %c178] : memref<4x184xf32, #tpu.memory_space<vmem>>, vector<4x1xf32>
    %1379 = vector.broadcast %1378 : vector<4x1xf32> to vector<4x256xf32>
    %1380 = arith.mulf %1377, %1379 : vector<4x256xf32>
    %c0_425 = arith.constant 0 : index
    %c179 = arith.constant 179 : index
    %1381 = vector.load %arg2[%c0_425, %c179] : memref<4x184xf32, #tpu.memory_space<vmem>>, vector<4x1xf32>
    %1382 = vector.broadcast %1381 : vector<4x1xf32> to vector<4x256xf32>
    %1383 = arith.addf %1380, %1382 : vector<4x256xf32>
    %cst_426 = arith.constant 0.000000e+00 : f32
    %1384 = vector.broadcast %cst_426 : f32 to vector<4x256xf32>
    %1385 = arith.maximumf %1383, %1384 : vector<4x256xf32>
    %cst_427 = arith.constant dense<0.000000e+00> : vector<4xf32>
    %1386 = vector.multi_reduction <add>, %1385, %cst_427 [1] : vector<4x256xf32> to vector<4xf32>
    %1387 = vector.shape_cast %1386 : vector<4xf32> to vector<4x1xf32>
    %cst_428 = arith.constant 2.560000e+02 : f32
    %1388 = vector.broadcast %cst_428 : f32 to vector<4x1xf32>
    %1389 = arith.divf %1387, %1388 : vector<4x1xf32>
    %1390 = vector.broadcast %1389 : vector<4x1xf32> to vector<4x256xf32>
    %1391 = arith.subf %1385, %1390 : vector<4x256xf32>
    %1392 = arith.mulf %1391, %1391 : vector<4x256xf32>
    %cst_429 = arith.constant dense<0.000000e+00> : vector<4xf32>
    %1393 = vector.multi_reduction <add>, %1392, %cst_429 [1] : vector<4x256xf32> to vector<4xf32>
    %1394 = vector.shape_cast %1393 : vector<4xf32> to vector<4x1xf32>
    %cst_430 = arith.constant 0.00392156886 : f32
    %1395 = vector.broadcast %cst_430 : f32 to vector<4x1xf32>
    %1396 = arith.mulf %1394, %1395 : vector<4x1xf32>
    %cst_431 = arith.constant 9.99999974E-5 : f32
    %1397 = vector.broadcast %cst_431 : f32 to vector<4x1xf32>
    %1398 = arith.addf %1396, %1397 : vector<4x1xf32>
    %cst_432 = arith.constant 4.000000e+00 : f32
    %1399 = vector.broadcast %cst_432 : f32 to vector<4x1xf32>
    %1400 = arith.mulf %1399, %1398 : vector<4x1xf32>
    %cst_433 = arith.constant 1.000000e+00 : f32
    %1401 = vector.broadcast %cst_433 : f32 to vector<4x1xf32>
    %1402 = arith.divf %1401, %1400 : vector<4x1xf32>
    %1403 = vector.broadcast %1402 : vector<4x1xf32> to vector<4x256xf32>
    %1404 = arith.mulf %1392, %1403 : vector<4x256xf32>
    %cst_434 = arith.constant 5.000000e-01 : f32
    %1405 = vector.broadcast %cst_434 : f32 to vector<4x256xf32>
    %1406 = arith.addf %1404, %1405 : vector<4x256xf32>
    %1407 = arith.negf %1406 : vector<4x256xf32>
    %1408 = math.exp %1407 : vector<4x256xf32>
    %cst_435 = arith.constant 1.000000e+00 : f32
    %1409 = vector.broadcast %cst_435 : f32 to vector<4x256xf32>
    %1410 = arith.addf %1409, %1408 : vector<4x256xf32>
    %1411 = arith.divf %1409, %1410 : vector<4x256xf32>
    %1412 = arith.mulf %1385, %1411 : vector<4x256xf32>
    %c0_436 = arith.constant 0 : index
    %c0_437 = arith.constant 0 : index
    %c0_438 = arith.constant 0 : index
    %1413 = vector.load %arg4[%c0_436, %c0_437, %c0_438] : memref<1x4x256xf32, #tpu.memory_space<vmem>>, vector<1x4x256xf32>
    %1414 = vector.shape_cast %1413 : vector<1x4x256xf32> to vector<4x256xf32>
    %1415 = vector.shape_cast %1412 : vector<4x256xf32> to vector<1x4x256xf32>
    tpu.vector_store %arg4[%c0_436, %c0_437, %c0_438], %1415 {strides = array<i32>} : memref<1x4x256xf32, #tpu.memory_space<vmem>>, vector<1x4x256xf32>,
    return
  }
  func.func @transform_0(%arg0: i32) -> (i32, i32, i32) {
    %c0_i32 = arith.constant 0 : i32
    %c0_i32_0 = arith.constant 0 : i32
    %c0_i32_1 = arith.constant 0 : i32
    return %arg0, %c0_i32, %c0_i32_0 : i32, i32, i32
  }
  func.func @transform_1(%arg0: i32) -> (i32, i32) {
    %c0_i32 = arith.constant 0 : i32
    %c0_i32_0 = arith.constant 0 : i32
    %c0_i32_1 = arith.constant 0 : i32
    return %c0_i32, %c0_i32_0 : i32, i32
  }
  func.func @transform_2(%arg0: i32) -> (i32, i32) {
    %c0_i32 = arith.constant 0 : i32
    %c0_i32_0 = arith.constant 0 : i32
    %c0_i32_1 = arith.constant 0 : i32
    return %c0_i32, %c0_i32_0 : i32, i32
  }
  func.func @transform_3(%arg0: i32) -> (i32, i32, i32) {
    %c0_i32 = arith.constant 0 : i32
    %c0_i32_0 = arith.constant 0 : i32
    %c0_i32_1 = arith.constant 0 : i32
    return %arg0, %c0_i32, %c0_i32_0 : i32, i32, i32
  }
}

</mosaic_0001>

<llo_original>
// kernel: fwd.1
$region0: #{fwd.1}
  #allocation0 [shape = 'u32[]', space=smem, size = 0x4, offset = 0x4, fixed_abs, tag = 'smem constant byte address 0x4 - core index']
  #allocation1 [shape = 'u32[144,128]{1,0:T(1,128)}', space=vmem, size = 0x12000, scoped, tag = 'internal scratch']
  %s0 = inlined_call_operand.vmem [shape: f32[2,4,256], index: 0, kind: input, shape index: {}]
  %s1 = inlined_call_operand.vmem [shape: f32[4,184], index: 1, kind: input, shape index: {}]
  %s2 = inlined_call_operand.vmem [shape: f32[24,256], index: 2, kind: input, shape index: {}]
  %s3 = inlined_call_operand.vmem [shape: f32[2,4,256], index: 3, kind: output, shape index: {}]
  %s4 = sld [smem:[#allocation0]]
  $region45: #{fwd.1} parent=0
    _
  %s6 = ssub.s32 1, %s4
  %s7 = scalar_select 0, %s6, %s4
  loop: start=0, step=1, limit=4
  $region2: #{fwd.1} parent=0 // loop_pre_header
    _
  $region3: #{fwd.1} parent=0 // loop_header
    %s9 = sphi 0, %s13
    %p10 = scmp.ge.s32.totalorder %s9, 4
    %s19 = sphi 0, %s21
    %s22 = sphi 0, %s19
    %s23 = sphi 0, %s22
    %s39 = sphi 0, %s23
    %s43 = sphi 0, %s43
    %s45 = sphi 0, %s43
    %s46 = sphi 0, %s45
    %s60 = sphi 0, %s46
    %s64 = sphi 0, %s64
    %s66 = sphi 0, %s64
    %s67 = sphi 0, %s66
    %s81 = sphi 0, %s67
    %s87 = sphi 0, %s89
    %s90 = sphi 0, %s87
    %s91 = sphi 0, %s90
    %s107 = sphi 0, %s91
  $region4: #{fwd.1} parent=0 // loop_header_branch
    %12 = sbr.rel (%p10) target = $region8
  $region5: #{fwd.1} parent=0 // loop_body
    %s14 = ssub.s32 %s9, 1
    %s15 = ssub.s32 %s9, 2
    %s16 = sadd.s32 %s9, 1
    %s17 = ssub.s32 %s9, %s16
    %p18 = scmp.eq.s32.totalorder %s17, 0
    %s20 = sadd.s32 %s19, 1
    %s21 = scalar_select %p18, %s19, %s20
    %p24 = pneg %p18
    %p25 = scmp.eq.s32.totalorder %s9, 1
    %p26 = por %p24, %p25
    %p27 = scmp.ne.s32.totalorder %s19, %s22
    %p28 = scmp.eq.s32.totalorder %s9, 0
    %p29 = por %p27, %p28
    %p30 = scmp.ne.s32.totalorder %s19, %s22
    %p31 = scmp.eq.s32.totalorder %s14, 1
    %p32 = por %p30, %p31
    %p33 = scmp.ne.s32.totalorder %s22, %s23
    %p34 = scmp.eq.s32.totalorder %s14, 0
    %p35 = por %p33, %p34
    %p36 = scmp.ne.s32.totalorder %s22, %s23
    %p37 = scmp.eq.s32.totalorder %s15, 1
    %p38 = por %p36, %p37
    %p40 = scmp.ne.s32.totalorder %s23, %s39
    %p41 = scmp.eq.s32.totalorder %s15, 0
    %p42 = por %p40, %p41
    %s44 = sadd.s32 %s43, 1
    %p47 = scmp.eq.s32.totalorder %s9, 1
    %p48 = scmp.ne.s32.totalorder %s43, %s45
    %p49 = scmp.eq.s32.totalorder %s9, 0
    %p50 = por %p48, %p49
    %p51 = scmp.ne.s32.totalorder %s43, %s45
    %p52 = scmp.eq.s32.totalorder %s14, 1
    %p53 = por %p51, %p52
    %p54 = scmp.ne.s32.totalorder %s45, %s46
    %p55 = scmp.eq.s32.totalorder %s14, 0
    %p56 = por %p54, %p55
    %p57 = scmp.ne.s32.totalorder %s45, %s46
    %p58 = scmp.eq.s32.totalorder %s15, 1
    %p59 = por %p57, %p58
    %p61 = scmp.ne.s32.totalorder %s46, %s60
    %p62 = scmp.eq.s32.totalorder %s15, 0
    %p63 = por %p61, %p62
    %s65 = sadd.s32 %s64, 1
    %p68 = scmp.eq.s32.totalorder %s9, 1
    %p69 = scmp.ne.s32.totalorder %s64, %s66
    %p70 = scmp.eq.s32.totalorder %s9, 0
    %p71 = por %p69, %p70
    %p72 = scmp.ne.s32.totalorder %s64, %s66
    %p73 = scmp.eq.s32.totalorder %s14, 1
    %p74 = por %p72, %p73
    %p75 = scmp.ne.s32.totalorder %s66, %s67
    %p76 = scmp.eq.s32.totalorder %s14, 0
    %p77 = por %p75, %p76
    %p78 = scmp.ne.s32.totalorder %s66, %s67
    %p79 = scmp.eq.s32.totalorder %s15, 1
    %p80 = por %p78, %p79
    %p82 = scmp.ne.s32.totalorder %s67, %s81
    %p83 = scmp.eq.s32.totalorder %s15, 0
    %p84 = por %p82, %p83
    %s85 = ssub.s32 %s9, %s16
    %p86 = scmp.eq.s32.totalorder %s85, 0
    %s88 = sadd.s32 %s87, 1
    %s89 = scalar_select %p86, %s87, %s88
    %p92 = pneg %p86
    %p93 = scmp.eq.s32.totalorder %s9, 1
    %p94 = por %p92, %p93
    %p95 = scmp.ne.s32.totalorder %s87, %s90
    %p96 = scmp.eq.s32.totalorder %s9, 0
    %p97 = por %p95, %p96
    %p98 = scmp.ne.s32.totalorder %s87, %s90
    %p99 = scmp.eq.s32.totalorder %s14, 1
    %p100 = por %p98, %p99
    %p101 = scmp.ne.s32.totalorder %s90, %s91
    %p102 = scmp.eq.s32.totalorder %s14, 0
    %p103 = por %p101, %p102
    %p104 = scmp.ne.s32.totalorder %s90, %s91
    %p105 = scmp.eq.s32.totalorder %s15, 1
    %p106 = por %p104, %p105
    %p108 = scmp.ne.s32.totalorder %s91, %s107
    %p109 = scmp.eq.s32.totalorder %s15, 0
    %p110 = por %p108, %p109
    %p111 = scmp.le.s32.totalorder 1, %s9
    %p112 = scmp.lt.s32.totalorder %s9, 3
    %p113 = pnand %p111, %p112
    %p114 = pneg %p113
    // Predicated region
    $region9: #{fwd.1} parent=5 // pred_check
      _
    $region10: #{fwd.1} parent=5 // pred_check_branch
      %116 = sbr.rel (%p113) target = $region12
    $region11: #{fwd.1} parent=5 // pred_region
      %s117 = ssub.s32 %s9, 1
      // Predicated region
      $region13: #{fwd.1} parent=11 // pred_check
        %p118 = pneg %p56
      $region14: #{fwd.1} parent=11 // pred_check_branch
        %120 = sbr.rel (%p118) target = $region16
      $region15: #{fwd.1} parent=11 // pred_region
        _
      $region16: #{fwd.1} parent=11 // pred_fallthru
        _
      // Predicated region
      $region17: #{fwd.1} parent=11 // pred_check
        %p121 = pneg %p77
      $region18: #{fwd.1} parent=11 // pred_check_branch
        %123 = sbr.rel (%p121) target = $region20
      $region19: #{fwd.1} parent=11 // pred_region
        _
      $region20: #{fwd.1} parent=11 // pred_fallthru
        _
    $region12: #{fwd.1} parent=5 // pred_fallthru
      _
    %p124 = scmp.lt.s32.totalorder %s9, 2
    // Predicated region
    $region21: #{fwd.1} parent=5 // pred_check
      %p125 = pneg %p124
    $region22: #{fwd.1} parent=5 // pred_check_branch
      %127 = sbr.rel (%p125) target = $region24
    $region23: #{fwd.1} parent=5 // pred_region
      // Predicated region
      $region25: #{fwd.1} parent=23 // pred_check
        %p128 = pneg %p29
      $region26: #{fwd.1} parent=23 // pred_check_branch
        %130 = sbr.rel (%p128) target = $region28
      $region27: #{fwd.1} parent=23 // pred_region
        %p131 = scmp.lt.s32.totalorder %s9, 1
        %s132 = scalar_select %p131, %s9, 1
        %s133 = smul.addr %s132, 2
        %s134 = smul.addr %s133, 4
        %s135 = scalar_lea.vmem %s0, %s134
      $region28: #{fwd.1} parent=23 // pred_fallthru
        _
    $region24: #{fwd.1} parent=5 // pred_fallthru
      _
    %p136 = scmp.le.s32.totalorder 1, %s9
    %p137 = scmp.lt.s32.totalorder %s9, 3
    %p138 = pnand %p136, %p137
    %p139 = pneg %p138
    // Predicated region
    $region29: #{fwd.1} parent=5 // pred_check
      _
    $region30: #{fwd.1} parent=5 // pred_check_branch
      %141 = sbr.rel (%p138) target = $region32
    $region31: #{fwd.1} parent=5 // pred_region
      %s142 = ssub.s32 %s9, 1
      %p143 = scmp.lt.s32.totalorder %s14, 1
      %s144 = scalar_select %p143, %s14, 1
      %s145 = smul.addr %s144, 2
      %s146 = smul.addr %s145, 4
      %s147 = scalar_lea.vmem %s0, %s146
      %p148 = pneg %p35
      %p149 = pneg %p32
      %p150 = pneg %p56
      %p151 = pneg %p53
      %p152 = pneg %p77
      %p153 = pneg %p74
      %p154 = pneg %p103
      %p155 = pneg %p100
      %p156 = scmp.lt.s32.totalorder %s14, 1
      %s157 = scalar_select %p156, %s14, 1
      %s158 = smul.addr %s157, 2
      %s159 = smul.addr %s158, 4
      %s160 = scalar_lea.vmem %s3, %s159
      %p161 = scmp.lt.s32.totalorder %s14, 1
      %s162 = scalar_select %p161, %s14, 1
      %s163 = smul.addr %s162, 2
      %s164 = smul.addr %s163, 4
      %s165 = scalar_lea.vmem %s0, %s164
      %p166 = scmp.lt.s32.totalorder %s14, 1
      %s167 = scalar_select %p166, %s14, 1
      %s168 = smul.addr %s167, 2
      %s169 = smul.addr %s168, 4
      %s170 = scalar_lea.vmem %s3, %s169
      %v171 = vld [vmem:[%s165] sm:$0xff]
      %v173 = vcombine.high %v171, %v171
      %175 = vrot.lane.b32.xlu0 %v171, 17
      %v176 = vpop.permute.xlu0 %175
      %177 = vrot.lane.b32.xlu0 %v173, 17
      %v178 = vpop.permute.xlu0 %177
      %v179 = vlaneseq
      %v180 = vand.u32 %v179, 127
      %vm181 = vcmp.lt.s32.totalorder %v180, 17
      %v182 = vsel %vm181, %v176, %v178
      %v183 = vsel %vm181, %v178, %v176
      %v184 = vld [vmem:[%s2] ss:$8 sm:$0x3]
      %v186 = vlaneseq
      %v187 = vshrl.u32 %v186, 7
      %v188 = vsub.s32 0, %v187
      %v189 = vrot.slane %v184, %v188
      %v190 = vlaneseq
      %v191 = vshrl.u32 %v190, 7
      %v192 = vsub.s32 1, %v191
      %v193 = vrot.slane %v184, %v192
      %v196 = vmul.f32 %v183, %v189
      %v197 = vmul.f32 %v182, %v193
      %v198 = vld [vmem:[%s1] sm:$0x3]
      %200 = vset.pattern.permute.xlu0 0
      %201 = vperm.xlu0 %200, %v198
      %v202 = vpop.permute.xlu0 %201
      %v205 = vunpack.c.l.s4 839922192
      %v206 = vunpack.c.0.s8 %v205
      %v207 = vlaneseq
      %v208 = vshrl.u32 %v207, 7
      %v209 = vsub.s32 %v206, %v208
      %v210 = vrot.slane %v202, %v209
      %v211 = vlaneseq
      %v212 = vshrl.u32 %v211, 7
      %v213 = vsub.s32 0, %v212
      %v214 = vrot.slane %v196, %v213
      %v215 = vlaneseq
      %v216 = vshrl.u32 %v215, 7
      %v217 = vsub.s32 0, %v216
      %v218 = vrot.slane %v197, %v217
      %v221 = vcombine.low %v214, %v218
      %v223 = vmul.f32 %v210, %v221
      %v224 = vadd.f32 %v223, 0.0
      %v225 = vld [vmem:[%s1] sm:$0x3]
      %227 = vset.pattern.permute.xlu0 1
      %228 = vperm.xlu0 %227, %v225
      %v229 = vpop.permute.xlu0 %228
      %v232 = vunpack.c.l.s4 839922192
      %v233 = vunpack.c.0.s8 %v232
      %v234 = vlaneseq
      %v235 = vshrl.u32 %v234, 7
      %v236 = vsub.s32 %v233, %v235
      %v237 = vrot.slane %v229, %v236
      %v238 = vlaneseq
      %v239 = vshrl.u32 %v238, 7
      %v240 = vsub.s32 1, %v239
      %v241 = vrot.slane %v196, %v240
      %v242 = vlaneseq
      %v243 = vshrl.u32 %v242, 7
      %v244 = vsub.s32 1, %v243
      %v245 = vrot.slane %v197, %v244
      %v248 = vcombine.low %v241, %v245
      %v250 = vmul.f32 %v237, %v248
      %v251 = vadd.f32 %v224, %v250
      %v252 = vld [vmem:[%s1] sm:$0x3]
      %254 = vset.pattern.permute.xlu0 2
      %255 = vperm.xlu0 %254, %v252
      %v256 = vpop.permute.xlu0 %255
      %v259 = vunpack.c.l.s4 839922192
      %v260 = vunpack.c.0.s8 %v259
      %v261 = vlaneseq
      %v262 = vshrl.u32 %v261, 7
      %v263 = vsub.s32 %v260, %v262
      %v264 = vrot.slane %v256, %v263
      %v265 = vlaneseq
      %v266 = vshrl.u32 %v265, 7
      %v267 = vsub.s32 2, %v266
      %v268 = vrot.slane %v196, %v267
      %v269 = vlaneseq
      %v270 = vshrl.u32 %v269, 7
      %v271 = vsub.s32 2, %v270
      %v272 = vrot.slane %v197, %v271
      %v275 = vcombine.low %v268, %v272
      %v277 = vmul.f32 %v264, %v275
      %v278 = vadd.f32 %v251, %v277
      %v279 = vld [vmem:[%s1] sm:$0x3]
      %281 = vset.pattern.permute.xlu0 3
      %282 = vperm.xlu0 %281, %v279
      %v283 = vpop.permute.xlu0 %282
      %v286 = vunpack.c.l.s4 839922192
      %v287 = vunpack.c.0.s8 %v286
      %v288 = vlaneseq
      %v289 = vshrl.u32 %v288, 7
      %v290 = vsub.s32 %v287, %v289
      %v291 = vrot.slane %v283, %v290
      %v292 = vlaneseq
      %v293 = vshrl.u32 %v292, 7
      %v294 = vsub.s32 3, %v293
      %v295 = vrot.slane %v196, %v294
      %v296 = vlaneseq
      %v297 = vshrl.u32 %v296, 7
      %v298 = vsub.s32 3, %v297
      %v299 = vrot.slane %v197, %v298
      %v302 = vcombine.low %v295, %v299
      %v304 = vmul.f32 %v291, %v302
      %v305 = vadd.f32 %v278, %v304
      %306 = vrot.lane.b32.xlu0 %v171, 16
      %v307 = vpop.permute.xlu0 %306
      %308 = vrot.lane.b32.xlu0 %v173, 16
      %v309 = vpop.permute.xlu0 %308
      %vm310 = vcmp.lt.s32.totalorder %v180, 16
      %v311 = vsel %vm310, %v307, %v309
      %v312 = vsel %vm310, %v309, %v307
      %s313 = scalar_lea.vmem %s2, 1
      %v314 = vld [vmem:[%s313] ss:$8 sm:$0x3]
      %v316 = vlaneseq
      %v317 = vshrl.u32 %v316, 7
      %v318 = vsub.s32 0, %v317
      %v319 = vrot.slane %v314, %v318
      %v320 = vlaneseq
      %v321 = vshrl.u32 %v320, 7
      %v322 = vsub.s32 1, %v321
      %v323 = vrot.slane %v314, %v322
      %v326 = vmul.f32 %v312, %v319
      %v327 = vmul.f32 %v311, %v323
      %v328 = vld [vmem:[%s1] sm:$0x3]
      %330 = vset.pattern.permute.xlu0 4
      %331 = vperm.xlu0 %330, %v328
      %v332 = vpop.permute.xlu0 %331
      %v335 = vunpack.c.l.s4 839922192
      %v336 = vunpack.c.0.s8 %v335
      %v337 = vlaneseq
      %v338 = vshrl.u32 %v337, 7
      %v339 = vsub.s32 %v336, %v338
      %v340 = vrot.slane %v332, %v339
      %v341 = vlaneseq
      %v342 = vshrl.u32 %v341, 7
      %v343 = vsub.s32 0, %v342
      %v344 = vrot.slane %v326, %v343
      %v345 = vlaneseq
      %v346 = vshrl.u32 %v345, 7
      %v347 = vsub.s32 0, %v346
      %v348 = vrot.slane %v327, %v347
      %v351 = vcombine.low %v344, %v348
      %v353 = vmul.f32 %v340, %v351
      %v354 = vadd.f32 %v305, %v353
      %v355 = vld [vmem:[%s1] sm:$0x3]
      %357 = vset.pattern.permute.xlu0 5
      %358 = vperm.xlu0 %357, %v355
      %v359 = vpop.permute.xlu0 %358
      %v362 = vunpack.c.l.s4 839922192
      %v363 = vunpack.c.0.s8 %v362
      %v364 = vlaneseq
      %v365 = vshrl.u32 %v364, 7
      %v366 = vsub.s32 %v363, %v365
      %v367 = vrot.slane %v359, %v366
      %v368 = vlaneseq
      %v369 = vshrl.u32 %v368, 7
      %v370 = vsub.s32 1, %v369
      %v371 = vrot.slane %v326, %v370
      %v372 = vlaneseq
      %v373 = vshrl.u32 %v372, 7
      %v374 = vsub.s32 1, %v373
      %v375 = vrot.slane %v327, %v374
      %v378 = vcombine.low %v371, %v375
      %v380 = vmul.f32 %v367, %v378
      %v381 = vadd.f32 %v354, %v380
      %v382 = vld [vmem:[%s1] sm:$0x3]
      %384 = vset.pattern.permute.xlu0 6
      %385 = vperm.xlu0 %384, %v382
      %v386 = vpop.permute.xlu0 %385
      %v389 = vunpack.c.l.s4 839922192
      %v390 = vunpack.c.0.s8 %v389
      %v391 = vlaneseq
      %v392 = vshrl.u32 %v391, 7
      %v393 = vsub.s32 %v390, %v392
      %v394 = vrot.slane %v386, %v393
      %v395 = vlaneseq
      %v396 = vshrl.u32 %v395, 7
      %v397 = vsub.s32 2, %v396
      %v398 = vrot.slane %v326, %v397
      %v399 = vlaneseq
      %v400 = vshrl.u32 %v399, 7
      %v401 = vsub.s32 2, %v400
      %v402 = vrot.slane %v327, %v401
      %v405 = vcombine.low %v398, %v402
      %v407 = vmul.f32 %v394, %v405
      %v408 = vadd.f32 %v381, %v407
      %v409 = vld [vmem:[%s1] sm:$0x3]
      %411 = vset.pattern.permute.xlu0 7
      %412 = vperm.xlu0 %411, %v409
      %v413 = vpop.permute.xlu0 %412
      %v416 = vunpack.c.l.s4 839922192
      %v417 = vunpack.c.0.s8 %v416
      %v418 = vlaneseq
      %v419 = vshrl.u32 %v418, 7
      %v420 = vsub.s32 %v417, %v419
      %v421 = vrot.slane %v413, %v420
      %v422 = vlaneseq
      %v423 = vshrl.u32 %v422, 7
      %v424 = vsub.s32 3, %v423
      %v425 = vrot.slane %v326, %v424
      %v426 = vlaneseq
      %v427 = vshrl.u32 %v426, 7
      %v428 = vsub.s32 3, %v427
      %v429 = vrot.slane %v327, %v428
      %v432 = vcombine.low %v425, %v429
      %v434 = vmul.f32 %v421, %v432
      %v435 = vadd.f32 %v408, %v434
      %436 = vrot.lane.b32.xlu0 %v171, 15
      %v437 = vpop.permute.xlu0 %436
      %438 = vrot.lane.b32.xlu0 %v173, 15
      %v439 = vpop.permute.xlu0 %438
      %vm440 = vcmp.lt.s32.totalorder %v180, 15
      %v441 = vsel %vm440, %v437, %v439
      %v442 = vsel %vm440, %v439, %v437
      %s443 = scalar_lea.vmem %s2, 2
      %v444 = vld [vmem:[%s443] ss:$8 sm:$0x3]
      %v446 = vlaneseq
      %v447 = vshrl.u32 %v446, 7
      %v448 = vsub.s32 0, %v447
      %v449 = vrot.slane %v444, %v448
      %v450 = vlaneseq
      %v451 = vshrl.u32 %v450, 7
      %v452 = vsub.s32 1, %v451
      %v453 = vrot.slane %v444, %v452
      %v456 = vmul.f32 %v442, %v449
      %v457 = vmul.f32 %v441, %v453
      %v458 = vld [vmem:[%s1] sm:$0x3]
      %460 = vset.pattern.permute.xlu0 8
      %461 = vperm.xlu0 %460, %v458
      %v462 = vpop.permute.xlu0 %461
      %v465 = vunpack.c.l.s4 839922192
      %v466 = vunpack.c.0.s8 %v465
      %v467 = vlaneseq
      %v468 = vshrl.u32 %v467, 7
      %v469 = vsub.s32 %v466, %v468
      %v470 = vrot.slane %v462, %v469
      %v471 = vlaneseq
      %v472 = vshrl.u32 %v471, 7
      %v473 = vsub.s32 0, %v472
      %v474 = vrot.slane %v456, %v473
      %v475 = vlaneseq
      %v476 = vshrl.u32 %v475, 7
      %v477 = vsub.s32 0, %v476
      %v478 = vrot.slane %v457, %v477
      %v481 = vcombine.low %v474, %v478
      %v483 = vmul.f32 %v470, %v481
      %v484 = vadd.f32 %v435, %v483
      %v485 = vld [vmem:[%s1] sm:$0x3]
      %487 = vset.pattern.permute.xlu0 9
      %488 = vperm.xlu0 %487, %v485
      %v489 = vpop.permute.xlu0 %488
      %v492 = vunpack.c.l.s4 839922192
      %v493 = vunpack.c.0.s8 %v492
      %v494 = vlaneseq
      %v495 = vshrl.u32 %v494, 7
      %v496 = vsub.s32 %v493, %v495
      %v497 = vrot.slane %v489, %v496
      %v498 = vlaneseq
      %v499 = vshrl.u32 %v498, 7
      %v500 = vsub.s32 1, %v499
      %v501 = vrot.slane %v456, %v500
      %v502 = vlaneseq
      %v503 = vshrl.u32 %v502, 7
      %v504 = vsub.s32 1, %v503
      %v505 = vrot.slane %v457, %v504
      %v508 = vcombine.low %v501, %v505
      %v510 = vmul.f32 %v497, %v508
      %v511 = vadd.f32 %v484, %v510
      %v512 = vld [vmem:[%s1] sm:$0x3]
      %514 = vset.pattern.permute.xlu0 10
      %515 = vperm.xlu0 %514, %v512
      %v516 = vpop.permute.xlu0 %515
      %v519 = vunpack.c.l.s4 839922192
      %v520 = vunpack.c.0.s8 %v519
      %v521 = vlaneseq
      %v522 = vshrl.u32 %v521, 7
      %v523 = vsub.s32 %v520, %v522
      %v524 = vrot.slane %v516, %v523
      %v525 = vlaneseq
      %v526 = vshrl.u32 %v525, 7
      %v527 = vsub.s32 2, %v526
      %v528 = vrot.slane %v456, %v527
      %v529 = vlaneseq
      %v530 = vshrl.u32 %v529, 7
      %v531 = vsub.s32 2, %v530
      %v532 = vrot.slane %v457, %v531
      %v535 = vcombine.low %v528, %v532
      %v537 = vmul.f32 %v524, %v535
      %v538 = vadd.f32 %v511, %v537
      %v539 = vld [vmem:[%s1] sm:$0x3]
      %541 = vset.pattern.permute.xlu0 11
      %542 = vperm.xlu0 %541, %v539
      %v543 = vpop.permute.xlu0 %542
      %v546 = vunpack.c.l.s4 839922192
      %v547 = vunpack.c.0.s8 %v546
      %v548 = vlaneseq
      %v549 = vshrl.u32 %v548, 7
      %v550 = vsub.s32 %v547, %v549
      %v551 = vrot.slane %v543, %v550
      %v552 = vlaneseq
      %v553 = vshrl.u32 %v552, 7
      %v554 = vsub.s32 3, %v553
      %v555 = vrot.slane %v456, %v554
      %v556 = vlaneseq
      %v557 = vshrl.u32 %v556, 7
      %v558 = vsub.s32 3, %v557
      %v559 = vrot.slane %v457, %v558
      %v562 = vcombine.low %v555, %v559
      %v564 = vmul.f32 %v551, %v562
      %v565 = vadd.f32 %v538, %v564
      %566 = vrot.lane.b32.xlu0 %v171, 1
      %v567 = vpop.permute.xlu0 %566
      %568 = vrot.lane.b32.xlu0 %v173, 1
      %v569 = vpop.permute.xlu0 %568
      %vm570 = vcmp.lt.s32.totalorder %v180, 1
      %v571 = vsel %vm570, %v567, %v569
      %v572 = vsel %vm570, %v569, %v567
      %s573 = scalar_lea.vmem %s2, 3
      %v574 = vld [vmem:[%s573] ss:$8 sm:$0x3]
      %v576 = vlaneseq
      %v577 = vshrl.u32 %v576, 7
      %v578 = vsub.s32 0, %v577
      %v579 = vrot.slane %v574, %v578
      %v580 = vlaneseq
      %v581 = vshrl.u32 %v580, 7
      %v582 = vsub.s32 1, %v581
      %v583 = vrot.slane %v574, %v582
      %v586 = vmul.f32 %v572, %v579
      %v587 = vmul.f32 %v571, %v583
      %v588 = vld [vmem:[%s1] sm:$0x3]
      %590 = vset.pattern.permute.xlu0 12
      %591 = vperm.xlu0 %590, %v588
      %v592 = vpop.permute.xlu0 %591
      %v595 = vunpack.c.l.s4 839922192
      %v596 = vunpack.c.0.s8 %v595
      %v597 = vlaneseq
      %v598 = vshrl.u32 %v597, 7
      %v599 = vsub.s32 %v596, %v598
      %v600 = vrot.slane %v592, %v599
      %v601 = vlaneseq
      %v602 = vshrl.u32 %v601, 7
      %v603 = vsub.s32 0, %v602
      %v604 = vrot.slane %v586, %v603
      %v605 = vlaneseq
      %v606 = vshrl.u32 %v605, 7
      %v607 = vsub.s32 0, %v606
      %v608 = vrot.slane %v587, %v607
      %v611 = vcombine.low %v604, %v608
      %v613 = vmul.f32 %v600, %v611
      %v614 = vadd.f32 %v565, %v613
      %v615 = vld [vmem:[%s1] sm:$0x3]
      %617 = vset.pattern.permute.xlu0 13
      %618 = vperm.xlu0 %617, %v615
      %v619 = vpop.permute.xlu0 %618
      %v622 = vunpack.c.l.s4 839922192
      %v623 = vunpack.c.0.s8 %v622
      %v624 = vlaneseq
      %v625 = vshrl.u32 %v624, 7
      %v626 = vsub.s32 %v623, %v625
      %v627 = vrot.slane %v619, %v626
      %v628 = vlaneseq
      %v629 = vshrl.u32 %v628, 7
      %v630 = vsub.s32 1, %v629
      %v631 = vrot.slane %v586, %v630
      %v632 = vlaneseq
      %v633 = vshrl.u32 %v632, 7
      %v634 = vsub.s32 1, %v633
      %v635 = vrot.slane %v587, %v634
      %v638 = vcombine.low %v631, %v635
      %v640 = vmul.f32 %v627, %v638
      %v641 = vadd.f32 %v614, %v640
      %v642 = vld [vmem:[%s1] sm:$0x3]
      %644 = vset.pattern.permute.xlu0 14
      %645 = vperm.xlu0 %644, %v642
      %v646 = vpop.permute.xlu0 %645
      %v649 = vunpack.c.l.s4 839922192
      %v650 = vunpack.c.0.s8 %v649
      %v651 = vlaneseq
      %v652 = vshrl.u32 %v651, 7
      %v653 = vsub.s32 %v650, %v652
      %v654 = vrot.slane %v646, %v653
      %v655 = vlaneseq
      %v656 = vshrl.u32 %v655, 7
      %v657 = vsub.s32 2, %v656
      %v658 = vrot.slane %v586, %v657
      %v659 = vlaneseq
      %v660 = vshrl.u32 %v659, 7
      %v661 = vsub.s32 2, %v660
      %v662 = vrot.slane %v587, %v661
      %v665 = vcombine.low %v658, %v662
      %v667 = vmul.f32 %v654, %v665
      %v668 = vadd.f32 %v641, %v667
      %v669 = vld [vmem:[%s1] sm:$0x3]
      %671 = vset.pattern.permute.xlu0 15
      %672 = vperm.xlu0 %671, %v669
      %v673 = vpop.permute.xlu0 %672
      %v676 = vunpack.c.l.s4 839922192
      %v677 = vunpack.c.0.s8 %v676
      %v678 = vlaneseq
      %v679 = vshrl.u32 %v678, 7
      %v680 = vsub.s32 %v677, %v679
      %v681 = vrot.slane %v673, %v680
      %v682 = vlaneseq
      %v683 = vshrl.u32 %v682, 7
      %v684 = vsub.s32 3, %v683
      %v685 = vrot.slane %v586, %v684
      %v686 = vlaneseq
      %v687 = vshrl.u32 %v686, 7
      %v688 = vsub.s32 3, %v687
      %v689 = vrot.slane %v587, %v688
      %v692 = vcombine.low %v685, %v689
      %v694 = vmul.f32 %v681, %v692
      %v695 = vadd.f32 %v668, %v694
      %v696 = vld [vmem:[%s1] sm:$0x3]
      %698 = vset.pattern.permute.xlu0 16
      %699 = vperm.xlu0 %698, %v696
      %v700 = vpop.permute.xlu0 %699
      %v703 = vunpack.c.l.s4 839922192
      %v704 = vunpack.c.0.s8 %v703
      %v705 = vlaneseq
      %v706 = vshrl.u32 %v705, 7
      %v707 = vsub.s32 %v704, %v706
      %v708 = vrot.slane %v700, %v707
      %v709 = vlaneseq
      %v710 = vshrl.u32 %v709, 7
      %v711 = vsub.s32 0, %v710
      %v712 = vrot.slane %v171, %v711
      %v713 = vlaneseq
      %v714 = vshrl.u32 %v713, 7
      %v715 = vsub.s32 4, %v714
      %v716 = vrot.slane %v171, %v715
      %v719 = vlaneseq
      %v720 = vshrl.u32 %v719, 7
      %v721 = vsub.s32 0, %v720
      %v722 = vrot.slane %v712, %v721
      %v723 = vlaneseq
      %v724 = vshrl.u32 %v723, 7
      %v725 = vsub.s32 0, %v724
      %v726 = vrot.slane %v716, %v725
      %v729 = vcombine.low %v722, %v726
      %v731 = vmul.f32 %v708, %v729
      %v732 = vadd.f32 %v695, %v731
      %v733 = vld [vmem:[%s1] sm:$0x3]
      %735 = vset.pattern.permute.xlu0 17
      %736 = vperm.xlu0 %735, %v733
      %v737 = vpop.permute.xlu0 %736
      %v740 = vunpack.c.l.s4 839922192
      %v741 = vunpack.c.0.s8 %v740
      %v742 = vlaneseq
      %v743 = vshrl.u32 %v742, 7
      %v744 = vsub.s32 %v741, %v743
      %v745 = vrot.slane %v737, %v744
      %v746 = vlaneseq
      %v747 = vshrl.u32 %v746, 7
      %v748 = vsub.s32 1, %v747
      %v749 = vrot.slane %v171, %v748
      %v750 = vlaneseq
      %v751 = vshrl.u32 %v750, 7
      %v752 = vsub.s32 5, %v751
      %v753 = vrot.slane %v171, %v752
      %v756 = vlaneseq
      %v757 = vshrl.u32 %v756, 7
      %v758 = vsub.s32 1, %v757
      %v759 = vrot.slane %v749, %v758
      %v760 = vlaneseq
      %v761 = vshrl.u32 %v760, 7
      %v762 = vsub.s32 1, %v761
      %v763 = vrot.slane %v753, %v762
      %v766 = vcombine.low %v759, %v763
      %v768 = vmul.f32 %v745, %v766
      %v769 = vadd.f32 %v732, %v768
      %v770 = vld [vmem:[%s1] sm:$0x3]
      %772 = vset.pattern.permute.xlu0 18
      %773 = vperm.xlu0 %772, %v770
      %v774 = vpop.permute.xlu0 %773
      %v777 = vunpack.c.l.s4 839922192
      %v778 = vunpack.c.0.s8 %v777
      %v779 = vlaneseq
      %v780 = vshrl.u32 %v779, 7
      %v781 = vsub.s32 %v778, %v780
      %v782 = vrot.slane %v774, %v781
      %v783 = vlaneseq
      %v784 = vshrl.u32 %v783, 7
      %v785 = vsub.s32 2, %v784
      %v786 = vrot.slane %v171, %v785
      %v787 = vlaneseq
      %v788 = vshrl.u32 %v787, 7
      %v789 = vsub.s32 6, %v788
      %v790 = vrot.slane %v171, %v789
      %v793 = vlaneseq
      %v794 = vshrl.u32 %v793, 7
      %v795 = vsub.s32 2, %v794
      %v796 = vrot.slane %v786, %v795
      %v797 = vlaneseq
      %v798 = vshrl.u32 %v797, 7
      %v799 = vsub.s32 2, %v798
      %v800 = vrot.slane %v790, %v799
      %v803 = vcombine.low %v796, %v800
      %v805 = vmul.f32 %v782, %v803
      %v806 = vadd.f32 %v769, %v805
      %v807 = vld [vmem:[%s1] sm:$0x3]
      %809 = vset.pattern.permute.xlu0 19
      %810 = vperm.xlu0 %809, %v807
      %v811 = vpop.permute.xlu0 %810
      %v814 = vunpack.c.l.s4 839922192
      %v815 = vunpack.c.0.s8 %v814
      %v816 = vlaneseq
      %v817 = vshrl.u32 %v816, 7
      %v818 = vsub.s32 %v815, %v817
      %v819 = vrot.slane %v811, %v818
      %v820 = vlaneseq
      %v821 = vshrl.u32 %v820, 7
      %v822 = vsub.s32 3, %v821
      %v823 = vrot.slane %v171, %v822
      %v824 = vlaneseq
      %v825 = vshrl.u32 %v824, 7
      %v826 = vsub.s32 7, %v825
      %v827 = vrot.slane %v171, %v826
      %v830 = vlaneseq
      %v831 = vshrl.u32 %v830, 7
      %v832 = vsub.s32 3, %v831
      %v833 = vrot.slane %v823, %v832
      %v834 = vlaneseq
      %v835 = vshrl.u32 %v834, 7
      %v836 = vsub.s32 3, %v835
      %v837 = vrot.slane %v827, %v836
      %v840 = vcombine.low %v833, %v837
      %v842 = vmul.f32 %v819, %v840
      %v843 = vadd.f32 %v806, %v842
      %844 = vrot.lane.b32.xlu0 %v171, 127
      %v845 = vpop.permute.xlu0 %844
      %846 = vrot.lane.b32.xlu0 %v173, 127
      %v847 = vpop.permute.xlu0 %846
      %vm848 = vcmp.lt.s32.totalorder %v180, 127
      %v849 = vsel %vm848, %v845, %v847
      %v850 = vsel %vm848, %v847, %v845
      %s851 = scalar_lea.vmem %s2, 4
      %v852 = vld [vmem:[%s851] ss:$8 sm:$0x3]
      %v854 = vlaneseq
      %v855 = vshrl.u32 %v854, 7
      %v856 = vsub.s32 0, %v855
      %v857 = vrot.slane %v852, %v856
      %v858 = vlaneseq
      %v859 = vshrl.u32 %v858, 7
      %v860 = vsub.s32 1, %v859
      %v861 = vrot.slane %v852, %v860
      %v864 = vmul.f32 %v849, %v857
      %v865 = vmul.f32 %v850, %v861
      %v866 = vld [vmem:[%s1] sm:$0x3]
      %868 = vset.pattern.permute.xlu0 20
      %869 = vperm.xlu0 %868, %v866
      %v870 = vpop.permute.xlu0 %869
      %v873 = vunpack.c.l.s4 839922192
      %v874 = vunpack.c.0.s8 %v873
      %v875 = vlaneseq
      %v876 = vshrl.u32 %v875, 7
      %v877 = vsub.s32 %v874, %v876
      %v878 = vrot.slane %v870, %v877
      %v879 = vlaneseq
      %v880 = vshrl.u32 %v879, 7
      %v881 = vsub.s32 0, %v880
      %v882 = vrot.slane %v864, %v881
      %v883 = vlaneseq
      %v884 = vshrl.u32 %v883, 7
      %v885 = vsub.s32 0, %v884
      %v886 = vrot.slane %v865, %v885
      %v889 = vcombine.low %v882, %v886
      %v891 = vmul.f32 %v878, %v889
      %v892 = vadd.f32 %v843, %v891
      %v893 = vld [vmem:[%s1] sm:$0x3]
      %895 = vset.pattern.permute.xlu0 21
      %896 = vperm.xlu0 %895, %v893
      %v897 = vpop.permute.xlu0 %896
      %v900 = vunpack.c.l.s4 839922192
      %v901 = vunpack.c.0.s8 %v900
      %v902 = vlaneseq
      %v903 = vshrl.u32 %v902, 7
      %v904 = vsub.s32 %v901, %v903
      %v905 = vrot.slane %v897, %v904
      %v906 = vlaneseq
      %v907 = vshrl.u32 %v906, 7
      %v908 = vsub.s32 1, %v907
      %v909 = vrot.slane %v864, %v908
      %v910 = vlaneseq
      %v911 = vshrl.u32 %v910, 7
      %v912 = vsub.s32 1, %v911
      %v913 = vrot.slane %v865, %v912
      %v916 = vcombine.low %v909, %v913
      %v918 = vmul.f32 %v905, %v916
      %v919 = vadd.f32 %v892, %v918
      %v920 = vld [vmem:[%s1] sm:$0x3]
      %922 = vset.pattern.permute.xlu0 22
      %923 = vperm.xlu0 %922, %v920
      %v924 = vpop.permute.xlu0 %923
      %v927 = vunpack.c.l.s4 839922192
      %v928 = vunpack.c.0.s8 %v927
      %v929 = vlaneseq
      %v930 = vshrl.u32 %v929, 7
      %v931 = vsub.s32 %v928, %v930
      %v932 = vrot.slane %v924, %v931
      %v933 = vlaneseq
      %v934 = vshrl.u32 %v933, 7
      %v935 = vsub.s32 2, %v934
      %v936 = vrot.slane %v864, %v935
      %v937 = vlaneseq
      %v938 = vshrl.u32 %v937, 7
      %v939 = vsub.s32 2, %v938
      %v940 = vrot.slane %v865, %v939
      %v943 = vcombine.low %v936, %v940
      %v945 = vmul.f32 %v932, %v943
      %v946 = vadd.f32 %v919, %v945
      %v947 = vld [vmem:[%s1] sm:$0x3]
      %949 = vset.pattern.permute.xlu0 23
      %950 = vperm.xlu0 %949, %v947
      %v951 = vpop.permute.xlu0 %950
      %v954 = vunpack.c.l.s4 839922192
      %v955 = vunpack.c.0.s8 %v954
      %v956 = vlaneseq
      %v957 = vshrl.u32 %v956, 7
      %v958 = vsub.s32 %v955, %v957
      %v959 = vrot.slane %v951, %v958
      %v960 = vlaneseq
      %v961 = vshrl.u32 %v960, 7
      %v962 = vsub.s32 3, %v961
      %v963 = vrot.slane %v864, %v962
      %v964 = vlaneseq
      %v965 = vshrl.u32 %v964, 7
      %v966 = vsub.s32 3, %v965
      %v967 = vrot.slane %v865, %v966
      %v970 = vcombine.low %v963, %v967
      %v972 = vmul.f32 %v959, %v970
      %v973 = vadd.f32 %v946, %v972
      %974 = vrot.lane.b32.xlu0 %v171, 113
      %v975 = vpop.permute.xlu0 %974
      %976 = vrot.lane.b32.xlu0 %v173, 113
      %v977 = vpop.permute.xlu0 %976
      %vm978 = vcmp.lt.s32.totalorder %v180, 113
      %v979 = vsel %vm978, %v975, %v977
      %v980 = vsel %vm978, %v977, %v975
      %s981 = scalar_lea.vmem %s2, 5
      %v982 = vld [vmem:[%s981] ss:$8 sm:$0x3]
      %v984 = vlaneseq
      %v985 = vshrl.u32 %v984, 7
      %v986 = vsub.s32 0, %v985
      %v987 = vrot.slane %v982, %v986
      %v988 = vlaneseq
      %v989 = vshrl.u32 %v988, 7
      %v990 = vsub.s32 1, %v989
      %v991 = vrot.slane %v982, %v990
      %v994 = vmul.f32 %v979, %v987
      %v995 = vmul.f32 %v980, %v991
      %v996 = vld [vmem:[%s1] sm:$0x3]
      %998 = vset.pattern.permute.xlu0 24
      %999 = vperm.xlu0 %998, %v996
      %v1000 = vpop.permute.xlu0 %999
      %v1003 = vunpack.c.l.s4 839922192
      %v1004 = vunpack.c.0.s8 %v1003
      %v1005 = vlaneseq
      %v1006 = vshrl.u32 %v1005, 7
      %v1007 = vsub.s32 %v1004, %v1006
      %v1008 = vrot.slane %v1000, %v1007
      %v1009 = vlaneseq
      %v1010 = vshrl.u32 %v1009, 7
      %v1011 = vsub.s32 0, %v1010
      %v1012 = vrot.slane %v994, %v1011
      %v1013 = vlaneseq
      %v1014 = vshrl.u32 %v1013, 7
      %v1015 = vsub.s32 0, %v1014
      %v1016 = vrot.slane %v995, %v1015
      %v1019 = vcombine.low %v1012, %v1016
      %v1021 = vmul.f32 %v1008, %v1019
      %v1022 = vadd.f32 %v973, %v1021
      %v1023 = vld [vmem:[%s1] sm:$0x3]
      %1025 = vset.pattern.permute.xlu0 25
      %1026 = vperm.xlu0 %1025, %v1023
      %v1027 = vpop.permute.xlu0 %1026
      %v1030 = vunpack.c.l.s4 839922192
      %v1031 = vunpack.c.0.s8 %v1030
      %v1032 = vlaneseq
      %v1033 = vshrl.u32 %v1032, 7
      %v1034 = vsub.s32 %v1031, %v1033
      %v1035 = vrot.slane %v1027, %v1034
      %v1036 = vlaneseq
      %v1037 = vshrl.u32 %v1036, 7
      %v1038 = vsub.s32 1, %v1037
      %v1039 = vrot.slane %v994, %v1038
      %v1040 = vlaneseq
      %v1041 = vshrl.u32 %v1040, 7
      %v1042 = vsub.s32 1, %v1041
      %v1043 = vrot.slane %v995, %v1042
      %v1046 = vcombine.low %v1039, %v1043
      %v1048 = vmul.f32 %v1035, %v1046
      %v1049 = vadd.f32 %v1022, %v1048
      %v1050 = vld [vmem:[%s1] sm:$0x3]
      %1052 = vset.pattern.permute.xlu0 26
      %1053 = vperm.xlu0 %1052, %v1050
      %v1054 = vpop.permute.xlu0 %1053
      %v1057 = vunpack.c.l.s4 839922192
      %v1058 = vunpack.c.0.s8 %v1057
      %v1059 = vlaneseq
      %v1060 = vshrl.u32 %v1059, 7
      %v1061 = vsub.s32 %v1058, %v1060
      %v1062 = vrot.slane %v1054, %v1061
      %v1063 = vlaneseq
      %v1064 = vshrl.u32 %v1063, 7
      %v1065 = vsub.s32 2, %v1064
      %v1066 = vrot.slane %v994, %v1065
      %v1067 = vlaneseq
      %v1068 = vshrl.u32 %v1067, 7
      %v1069 = vsub.s32 2, %v1068
      %v1070 = vrot.slane %v995, %v1069
      %v1073 = vcombine.low %v1066, %v1070
      %v1075 = vmul.f32 %v1062, %v1073
      %v1076 = vadd.f32 %v1049, %v1075
      %v1077 = vld [vmem:[%s1] sm:$0x3]
      %1079 = vset.pattern.permute.xlu0 27
      %1080 = vperm.xlu0 %1079, %v1077
      %v1081 = vpop.permute.xlu0 %1080
      %v1084 = vunpack.c.l.s4 839922192
      %v1085 = vunpack.c.0.s8 %v1084
      %v1086 = vlaneseq
      %v1087 = vshrl.u32 %v1086, 7
      %v1088 = vsub.s32 %v1085, %v1087
      %v1089 = vrot.slane %v1081, %v1088
      %v1090 = vlaneseq
      %v1091 = vshrl.u32 %v1090, 7
      %v1092 = vsub.s32 3, %v1091
      %v1093 = vrot.slane %v994, %v1092
      %v1094 = vlaneseq
      %v1095 = vshrl.u32 %v1094, 7
      %v1096 = vsub.s32 3, %v1095
      %v1097 = vrot.slane %v995, %v1096
      %v1100 = vcombine.low %v1093, %v1097
      %v1102 = vmul.f32 %v1089, %v1100
      %v1103 = vadd.f32 %v1076, %v1102
      %1104 = vrot.lane.b32.xlu0 %v171, 112
      %v1105 = vpop.permute.xlu0 %1104
      %1106 = vrot.lane.b32.xlu0 %v173, 112
      %v1107 = vpop.permute.xlu0 %1106
      %vm1108 = vcmp.lt.s32.totalorder %v180, 112
      %v1109 = vsel %vm1108, %v1105, %v1107
      %v1110 = vsel %vm1108, %v1107, %v1105
      %s1111 = scalar_lea.vmem %s2, 6
      %v1112 = vld [vmem:[%s1111] ss:$8 sm:$0x3]
      %v1114 = vlaneseq
      %v1115 = vshrl.u32 %v1114, 7
      %v1116 = vsub.s32 0, %v1115
      %v1117 = vrot.slane %v1112, %v1116
      %v1118 = vlaneseq
      %v1119 = vshrl.u32 %v1118, 7
      %v1120 = vsub.s32 1, %v1119
      %v1121 = vrot.slane %v1112, %v1120
      %v1124 = vmul.f32 %v1109, %v1117
      %v1125 = vmul.f32 %v1110, %v1121
      %v1126 = vld [vmem:[%s1] sm:$0x3]
      %1128 = vset.pattern.permute.xlu0 28
      %1129 = vperm.xlu0 %1128, %v1126
      %v1130 = vpop.permute.xlu0 %1129
      %v1133 = vunpack.c.l.s4 839922192
      %v1134 = vunpack.c.0.s8 %v1133
      %v1135 = vlaneseq
      %v1136 = vshrl.u32 %v1135, 7
      %v1137 = vsub.s32 %v1134, %v1136
      %v1138 = vrot.slane %v1130, %v1137
      %v1139 = vlaneseq
      %v1140 = vshrl.u32 %v1139, 7
      %v1141 = vsub.s32 0, %v1140
      %v1142 = vrot.slane %v1124, %v1141
      %v1143 = vlaneseq
      %v1144 = vshrl.u32 %v1143, 7
      %v1145 = vsub.s32 0, %v1144
      %v1146 = vrot.slane %v1125, %v1145
      %v1149 = vcombine.low %v1142, %v1146
      %v1151 = vmul.f32 %v1138, %v1149
      %v1152 = vadd.f32 %v1103, %v1151
      %v1153 = vld [vmem:[%s1] sm:$0x3]
      %1155 = vset.pattern.permute.xlu0 29
      %1156 = vperm.xlu0 %1155, %v1153
      %v1157 = vpop.permute.xlu0 %1156
      %v1160 = vunpack.c.l.s4 839922192
      %v1161 = vunpack.c.0.s8 %v1160
      %v1162 = vlaneseq
      %v1163 = vshrl.u32 %v1162, 7
      %v1164 = vsub.s32 %v1161, %v1163
      %v1165 = vrot.slane %v1157, %v1164
      %v1166 = vlaneseq
      %v1167 = vshrl.u32 %v1166, 7
      %v1168 = vsub.s32 1, %v1167
      %v1169 = vrot.slane %v1124, %v1168
      %v1170 = vlaneseq
      %v1171 = vshrl.u32 %v1170, 7
      %v1172 = vsub.s32 1, %v1171
      %v1173 = vrot.slane %v1125, %v1172
      %v1176 = vcombine.low %v1169, %v1173
      %v1178 = vmul.f32 %v1165, %v1176
      %v1179 = vadd.f32 %v1152, %v1178
      %v1180 = vld [vmem:[%s1] sm:$0x3]
      %1182 = vset.pattern.permute.xlu0 30
      %1183 = vperm.xlu0 %1182, %v1180
      %v1184 = vpop.permute.xlu0 %1183
      %v1187 = vunpack.c.l.s4 839922192
      %v1188 = vunpack.c.0.s8 %v1187
      %v1189 = vlaneseq
      %v1190 = vshrl.u32 %v1189, 7
      %v1191 = vsub.s32 %v1188, %v1190
      %v1192 = vrot.slane %v1184, %v1191
      %v1193 = vlaneseq
      %v1194 = vshrl.u32 %v1193, 7
      %v1195 = vsub.s32 2, %v1194
      %v1196 = vrot.slane %v1124, %v1195
      %v1197 = vlaneseq
      %v1198 = vshrl.u32 %v1197, 7
      %v1199 = vsub.s32 2, %v1198
      %v1200 = vrot.slane %v1125, %v1199
      %v1203 = vcombine.low %v1196, %v1200
      %v1205 = vmul.f32 %v1192, %v1203
      %v1206 = vadd.f32 %v1179, %v1205
      %v1207 = vld [vmem:[%s1] sm:$0x3]
      %1209 = vset.pattern.permute.xlu0 31
      %1210 = vperm.xlu0 %1209, %v1207
      %v1211 = vpop.permute.xlu0 %1210
      %v1214 = vunpack.c.l.s4 839922192
      %v1215 = vunpack.c.0.s8 %v1214
      %v1216 = vlaneseq
      %v1217 = vshrl.u32 %v1216, 7
      %v1218 = vsub.s32 %v1215, %v1217
      %v1219 = vrot.slane %v1211, %v1218
      %v1220 = vlaneseq
      %v1221 = vshrl.u32 %v1220, 7
      %v1222 = vsub.s32 3, %v1221
      %v1223 = vrot.slane %v1124, %v1222
      %v1224 = vlaneseq
      %v1225 = vshrl.u32 %v1224, 7
      %v1226 = vsub.s32 3, %v1225
      %v1227 = vrot.slane %v1125, %v1226
      %v1230 = vcombine.low %v1223, %v1227
      %v1232 = vmul.f32 %v1219, %v1230
      %v1233 = vadd.f32 %v1206, %v1232
      %1234 = vrot.lane.b32.xlu0 %v171, 111
      %v1235 = vpop.permute.xlu0 %1234
      %1236 = vrot.lane.b32.xlu0 %v173, 111
      %v1237 = vpop.permute.xlu0 %1236
      %vm1238 = vcmp.lt.s32.totalorder %v180, 111
      %v1239 = vsel %vm1238, %v1235, %v1237
      %v1240 = vsel %vm1238, %v1237, %v1235
      %s1241 = scalar_lea.vmem %s2, 7
      %v1242 = vld [vmem:[%s1241] ss:$8 sm:$0x3]
      %v1244 = vlaneseq
      %v1245 = vshrl.u32 %v1244, 7
      %v1246 = vsub.s32 0, %v1245
      %v1247 = vrot.slane %v1242, %v1246
      %v1248 = vlaneseq
      %v1249 = vshrl.u32 %v1248, 7
      %v1250 = vsub.s32 1, %v1249
      %v1251 = vrot.slane %v1242, %v1250
      %v1254 = vmul.f32 %v1239, %v1247
      %v1255 = vmul.f32 %v1240, %v1251
      %v1256 = vld [vmem:[%s1] sm:$0x3]
      %1258 = vset.pattern.permute.xlu0 32
      %1259 = vperm.xlu0 %1258, %v1256
      %v1260 = vpop.permute.xlu0 %1259
      %v1263 = vunpack.c.l.s4 839922192
      %v1264 = vunpack.c.0.s8 %v1263
      %v1265 = vlaneseq
      %v1266 = vshrl.u32 %v1265, 7
      %v1267 = vsub.s32 %v1264, %v1266
      %v1268 = vrot.slane %v1260, %v1267
      %v1269 = vlaneseq
      %v1270 = vshrl.u32 %v1269, 7
      %v1271 = vsub.s32 0, %v1270
      %v1272 = vrot.slane %v1254, %v1271
      %v1273 = vlaneseq
      %v1274 = vshrl.u32 %v1273, 7
      %v1275 = vsub.s32 0, %v1274
      %v1276 = vrot.slane %v1255, %v1275
      %v1279 = vcombine.low %v1272, %v1276
      %v1281 = vmul.f32 %v1268, %v1279
      %v1282 = vadd.f32 %v1233, %v1281
      %v1283 = vld [vmem:[%s1] sm:$0x3]
      %1285 = vset.pattern.permute.xlu0 33
      %1286 = vperm.xlu0 %1285, %v1283
      %v1287 = vpop.permute.xlu0 %1286
      %v1290 = vunpack.c.l.s4 839922192
      %v1291 = vunpack.c.0.s8 %v1290
      %v1292 = vlaneseq
      %v1293 = vshrl.u32 %v1292, 7
      %v1294 = vsub.s32 %v1291, %v1293
      %v1295 = vrot.slane %v1287, %v1294
      %v1296 = vlaneseq
      %v1297 = vshrl.u32 %v1296, 7
      %v1298 = vsub.s32 1, %v1297
      %v1299 = vrot.slane %v1254, %v1298
      %v1300 = vlaneseq
      %v1301 = vshrl.u32 %v1300, 7
      %v1302 = vsub.s32 1, %v1301
      %v1303 = vrot.slane %v1255, %v1302
      %v1306 = vcombine.low %v1299, %v1303
      %v1308 = vmul.f32 %v1295, %v1306
      %v1309 = vadd.f32 %v1282, %v1308
      %v1310 = vld [vmem:[%s1] sm:$0x3]
      %1312 = vset.pattern.permute.xlu0 34
      %1313 = vperm.xlu0 %1312, %v1310
      %v1314 = vpop.permute.xlu0 %1313
      %v1317 = vunpack.c.l.s4 839922192
      %v1318 = vunpack.c.0.s8 %v1317
      %v1319 = vlaneseq
      %v1320 = vshrl.u32 %v1319, 7
      %v1321 = vsub.s32 %v1318, %v1320
      %v1322 = vrot.slane %v1314, %v1321
      %v1323 = vlaneseq
      %v1324 = vshrl.u32 %v1323, 7
      %v1325 = vsub.s32 2, %v1324
      %v1326 = vrot.slane %v1254, %v1325
      %v1327 = vlaneseq
      %v1328 = vshrl.u32 %v1327, 7
      %v1329 = vsub.s32 2, %v1328
      %v1330 = vrot.slane %v1255, %v1329
      %v1333 = vcombine.low %v1326, %v1330
      %v1335 = vmul.f32 %v1322, %v1333
      %v1336 = vadd.f32 %v1309, %v1335
      %v1337 = vld [vmem:[%s1] sm:$0x3]
      %1339 = vset.pattern.permute.xlu0 35
      %1340 = vperm.xlu0 %1339, %v1337
      %v1341 = vpop.permute.xlu0 %1340
      %v1344 = vunpack.c.l.s4 839922192
      %v1345 = vunpack.c.0.s8 %v1344
      %v1346 = vlaneseq
      %v1347 = vshrl.u32 %v1346, 7
      %v1348 = vsub.s32 %v1345, %v1347
      %v1349 = vrot.slane %v1341, %v1348
      %v1350 = vlaneseq
      %v1351 = vshrl.u32 %v1350, 7
      %v1352 = vsub.s32 3, %v1351
      %v1353 = vrot.slane %v1254, %v1352
      %v1354 = vlaneseq
      %v1355 = vshrl.u32 %v1354, 7
      %v1356 = vsub.s32 3, %v1355
      %v1357 = vrot.slane %v1255, %v1356
      %v1360 = vcombine.low %v1353, %v1357
      %v1362 = vmul.f32 %v1349, %v1360
      %v1363 = vadd.f32 %v1336, %v1362
      %v1364 = vld [vmem:[%s1] sm:$0x3]
      %1366 = vset.pattern.permute.xlu0 36
      %1367 = vperm.xlu0 %1366, %v1364
      %v1368 = vpop.permute.xlu0 %1367
      %v1371 = vunpack.c.l.s4 839922192
      %v1372 = vunpack.c.0.s8 %v1371
      %v1373 = vlaneseq
      %v1374 = vshrl.u32 %v1373, 7
      %v1375 = vsub.s32 %v1372, %v1374
      %v1376 = vrot.slane %v1368, %v1375
      %v1377 = vmul.f32 %v1363, %v1376
      %1378 = vset.pattern.permute.xlu0 37
      %1379 = vperm.xlu0 %1378, %v1364
      %v1380 = vpop.permute.xlu0 %1379
      %v1383 = vunpack.c.l.s4 839922192
      %v1384 = vunpack.c.0.s8 %v1383
      %v1385 = vlaneseq
      %v1386 = vshrl.u32 %v1385, 7
      %v1387 = vsub.s32 %v1384, %v1386
      %v1388 = vrot.slane %v1380, %v1387
      %v1389 = vadd.f32 %v1377, %v1388
      %v1390 = vxor.u32 %v1389, 2147483648
      %v1391 = vmul.f32 %v1390, 1.442695
      %v1392 = vpow.pop %v1391
      %v1393 = vadd.f32 %v1392, 1.0
      %v1394 = vrcp.pop %v1393
      %v1395 = vmul.f32 1.0, %v1394
      %v1396 = vmul.f32 %v1389, %v1395
      %v1398 = vcombine.high %v1396, %v1396
      %1400 = vrot.lane.b32.xlu0 %v1396, 17
      %v1401 = vpop.permute.xlu0 %1400
      %1402 = vrot.lane.b32.xlu0 %v1398, 17
      %v1403 = vpop.permute.xlu0 %1402
      %v1404 = vsel %vm181, %v1401, %v1403
      %v1405 = vsel %vm181, %v1403, %v1401
      %v1406 = vmul.f32 %v1405, %v189
      %v1407 = vmul.f32 %v1404, %v193
      %v1408 = vld [vmem:[%s1] sm:$0xf]
      %1410 = vset.pattern.permute.xlu0 38
      %1411 = vperm.xlu0 %1410, %v1408
      %v1412 = vpop.permute.xlu0 %1411
      %v1415 = vunpack.c.l.s4 839922192
      %v1416 = vunpack.c.0.s8 %v1415
      %v1417 = vlaneseq
      %v1418 = vshrl.u32 %v1417, 7
      %v1419 = vsub.s32 %v1416, %v1418
      %v1420 = vrot.slane %v1412, %v1419
      %v1421 = vlaneseq
      %v1422 = vshrl.u32 %v1421, 7
      %v1423 = vsub.s32 0, %v1422
      %v1424 = vrot.slane %v1406, %v1423
      %v1425 = vlaneseq
      %v1426 = vshrl.u32 %v1425, 7
      %v1427 = vsub.s32 0, %v1426
      %v1428 = vrot.slane %v1407, %v1427
      %v1431 = vcombine.low %v1424, %v1428
      %v1433 = vmul.f32 %v1420, %v1431
      %v1434 = vadd.f32 %v1433, 0.0
      %v1435 = vld [vmem:[%s1] sm:$0xf]
      %1437 = vset.pattern.permute.xlu0 39
      %1438 = vperm.xlu0 %1437, %v1435
      %v1439 = vpop.permute.xlu0 %1438
      %v1442 = vunpack.c.l.s4 839922192
      %v1443 = vunpack.c.0.s8 %v1442
      %v1444 = vlaneseq
      %v1445 = vshrl.u32 %v1444, 7
      %v1446 = vsub.s32 %v1443, %v1445
      %v1447 = vrot.slane %v1439, %v1446
      %v1448 = vlaneseq
      %v1449 = vshrl.u32 %v1448, 7
      %v1450 = vsub.s32 1, %v1449
      %v1451 = vrot.slane %v1406, %v1450
      %v1452 = vlaneseq
      %v1453 = vshrl.u32 %v1452, 7
      %v1454 = vsub.s32 1, %v1453
      %v1455 = vrot.slane %v1407, %v1454
      %v1458 = vcombine.low %v1451, %v1455
      %v1460 = vmul.f32 %v1447, %v1458
      %v1461 = vadd.f32 %v1434, %v1460
      %1462 = vrot.lane.b32.xlu0 %v1396, 16
      %v1463 = vpop.permute.xlu0 %1462
      %1464 = vrot.lane.b32.xlu0 %v1398, 16
      %v1465 = vpop.permute.xlu0 %1464
      %v1466 = vsel %vm310, %v1463, %v1465
      %v1467 = vsel %vm310, %v1465, %v1463
      %v1468 = vmul.f32 %v1467, %v319
      %v1469 = vmul.f32 %v1466, %v323
      %v1470 = vld [vmem:[%s1] sm:$0xf]
      %1472 = vset.pattern.permute.xlu0 40
      %1473 = vperm.xlu0 %1472, %v1470
      %v1474 = vpop.permute.xlu0 %1473
      %v1477 = vunpack.c.l.s4 839922192
      %v1478 = vunpack.c.0.s8 %v1477
      %v1479 = vlaneseq
      %v1480 = vshrl.u32 %v1479, 7
      %v1481 = vsub.s32 %v1478, %v1480
      %v1482 = vrot.slane %v1474, %v1481
      %v1483 = vlaneseq
      %v1484 = vshrl.u32 %v1483, 7
      %v1485 = vsub.s32 0, %v1484
      %v1486 = vrot.slane %v1468, %v1485
      %v1487 = vlaneseq
      %v1488 = vshrl.u32 %v1487, 7
      %v1489 = vsub.s32 0, %v1488
      %v1490 = vrot.slane %v1469, %v1489
      %v1493 = vcombine.low %v1486, %v1490
      %v1495 = vmul.f32 %v1482, %v1493
      %v1496 = vadd.f32 %v1461, %v1495
      %v1497 = vld [vmem:[%s1] sm:$0xf]
      %1499 = vset.pattern.permute.xlu0 41
      %1500 = vperm.xlu0 %1499, %v1497
      %v1501 = vpop.permute.xlu0 %1500
      %v1504 = vunpack.c.l.s4 839922192
      %v1505 = vunpack.c.0.s8 %v1504
      %v1506 = vlaneseq
      %v1507 = vshrl.u32 %v1506, 7
      %v1508 = vsub.s32 %v1505, %v1507
      %v1509 = vrot.slane %v1501, %v1508
      %v1510 = vlaneseq
      %v1511 = vshrl.u32 %v1510, 7
      %v1512 = vsub.s32 1, %v1511
      %v1513 = vrot.slane %v1468, %v1512
      %v1514 = vlaneseq
      %v1515 = vshrl.u32 %v1514, 7
      %v1516 = vsub.s32 1, %v1515
      %v1517 = vrot.slane %v1469, %v1516
      %v1520 = vcombine.low %v1513, %v1517
      %v1522 = vmul.f32 %v1509, %v1520
      %v1523 = vadd.f32 %v1496, %v1522
      %1524 = vrot.lane.b32.xlu0 %v1396, 15
      %v1525 = vpop.permute.xlu0 %1524
      %1526 = vrot.lane.b32.xlu0 %v1398, 15
      %v1527 = vpop.permute.xlu0 %1526
      %v1528 = vsel %vm440, %v1525, %v1527
      %v1529 = vsel %vm440, %v1527, %v1525
      %v1530 = vmul.f32 %v1529, %v449
      %v1531 = vmul.f32 %v1528, %v453
      %v1532 = vld [vmem:[%s1] sm:$0xf]
      %1534 = vset.pattern.permute.xlu0 42
      %1535 = vperm.xlu0 %1534, %v1532
      %v1536 = vpop.permute.xlu0 %1535
      %v1539 = vunpack.c.l.s4 839922192
      %v1540 = vunpack.c.0.s8 %v1539
      %v1541 = vlaneseq
      %v1542 = vshrl.u32 %v1541, 7
      %v1543 = vsub.s32 %v1540, %v1542
      %v1544 = vrot.slane %v1536, %v1543
      %v1545 = vlaneseq
      %v1546 = vshrl.u32 %v1545, 7
      %v1547 = vsub.s32 0, %v1546
      %v1548 = vrot.slane %v1530, %v1547
      %v1549 = vlaneseq
      %v1550 = vshrl.u32 %v1549, 7
      %v1551 = vsub.s32 0, %v1550
      %v1552 = vrot.slane %v1531, %v1551
      %v1555 = vcombine.low %v1548, %v1552
      %v1557 = vmul.f32 %v1544, %v1555
      %v1558 = vadd.f32 %v1523, %v1557
      %v1559 = vld [vmem:[%s1] sm:$0xf]
      %1561 = vset.pattern.permute.xlu0 43
      %1562 = vperm.xlu0 %1561, %v1559
      %v1563 = vpop.permute.xlu0 %1562
      %v1566 = vunpack.c.l.s4 839922192
      %v1567 = vunpack.c.0.s8 %v1566
      %v1568 = vlaneseq
      %v1569 = vshrl.u32 %v1568, 7
      %v1570 = vsub.s32 %v1567, %v1569
      %v1571 = vrot.slane %v1563, %v1570
      %v1572 = vlaneseq
      %v1573 = vshrl.u32 %v1572, 7
      %v1574 = vsub.s32 1, %v1573
      %v1575 = vrot.slane %v1530, %v1574
      %v1576 = vlaneseq
      %v1577 = vshrl.u32 %v1576, 7
      %v1578 = vsub.s32 1, %v1577
      %v1579 = vrot.slane %v1531, %v1578
      %v1582 = vcombine.low %v1575, %v1579
      %v1584 = vmul.f32 %v1571, %v1582
      %v1585 = vadd.f32 %v1558, %v1584
      %1586 = vrot.lane.b32.xlu0 %v1396, 1
      %v1587 = vpop.permute.xlu0 %1586
      %1588 = vrot.lane.b32.xlu0 %v1398, 1
      %v1589 = vpop.permute.xlu0 %1588
      %v1590 = vsel %vm570, %v1587, %v1589
      %v1591 = vsel %vm570, %v1589, %v1587
      %v1592 = vmul.f32 %v1591, %v579
      %v1593 = vmul.f32 %v1590, %v583
      %v1594 = vld [vmem:[%s1] sm:$0xf]
      %1596 = vset.pattern.permute.xlu0 44
      %1597 = vperm.xlu0 %1596, %v1594
      %v1598 = vpop.permute.xlu0 %1597
      %v1601 = vunpack.c.l.s4 839922192
      %v1602 = vunpack.c.0.s8 %v1601
      %v1603 = vlaneseq
      %v1604 = vshrl.u32 %v1603, 7
      %v1605 = vsub.s32 %v1602, %v1604
      %v1606 = vrot.slane %v1598, %v1605
      %v1607 = vlaneseq
      %v1608 = vshrl.u32 %v1607, 7
      %v1609 = vsub.s32 0, %v1608
      %v1610 = vrot.slane %v1592, %v1609
      %v1611 = vlaneseq
      %v1612 = vshrl.u32 %v1611, 7
      %v1613 = vsub.s32 0, %v1612
      %v1614 = vrot.slane %v1593, %v1613
      %v1617 = vcombine.low %v1610, %v1614
      %v1619 = vmul.f32 %v1606, %v1617
      %v1620 = vadd.f32 %v1585, %v1619
      %v1621 = vld [vmem:[%s1] sm:$0xf]
      %1623 = vset.pattern.permute.xlu0 45
      %1624 = vperm.xlu0 %1623, %v1621
      %v1625 = vpop.permute.xlu0 %1624
      %v1628 = vunpack.c.l.s4 839922192
      %v1629 = vunpack.c.0.s8 %v1628
      %v1630 = vlaneseq
      %v1631 = vshrl.u32 %v1630, 7
      %v1632 = vsub.s32 %v1629, %v1631
      %v1633 = vrot.slane %v1625, %v1632
      %v1634 = vlaneseq
      %v1635 = vshrl.u32 %v1634, 7
      %v1636 = vsub.s32 1, %v1635
      %v1637 = vrot.slane %v1592, %v1636
      %v1638 = vlaneseq
      %v1639 = vshrl.u32 %v1638, 7
      %v1640 = vsub.s32 1, %v1639
      %v1641 = vrot.slane %v1593, %v1640
      %v1644 = vcombine.low %v1637, %v1641
      %v1646 = vmul.f32 %v1633, %v1644
      %v1647 = vadd.f32 %v1620, %v1646
      %v1648 = vld [vmem:[%s1] sm:$0xf]
      %1650 = vset.pattern.permute.xlu0 46
      %1651 = vperm.xlu0 %1650, %v1648
      %v1652 = vpop.permute.xlu0 %1651
      %v1655 = vunpack.c.l.s4 839922192
      %v1656 = vunpack.c.0.s8 %v1655
      %v1657 = vlaneseq
      %v1658 = vshrl.u32 %v1657, 7
      %v1659 = vsub.s32 %v1656, %v1658
      %v1660 = vrot.slane %v1652, %v1659
      %v1661 = vlaneseq
      %v1662 = vshrl.u32 %v1661, 7
      %v1663 = vsub.s32 0, %v1662
      %v1664 = vrot.slane %v1396, %v1663
      %v1665 = vlaneseq
      %v1666 = vshrl.u32 %v1665, 7
      %v1667 = vsub.s32 4, %v1666
      %v1668 = vrot.slane %v1396, %v1667
      %v1671 = vlaneseq
      %v1672 = vshrl.u32 %v1671, 7
      %v1673 = vsub.s32 0, %v1672
      %v1674 = vrot.slane %v1664, %v1673
      %v1675 = vlaneseq
      %v1676 = vshrl.u32 %v1675, 7
      %v1677 = vsub.s32 0, %v1676
      %v1678 = vrot.slane %v1668, %v1677
      %v1681 = vcombine.low %v1674, %v1678
      %v1683 = vmul.f32 %v1660, %v1681
      %v1684 = vadd.f32 %v1647, %v1683
      %v1685 = vld [vmem:[%s1] sm:$0xf]
      %1687 = vset.pattern.permute.xlu0 47
      %1688 = vperm.xlu0 %1687, %v1685
      %v1689 = vpop.permute.xlu0 %1688
      %v1692 = vunpack.c.l.s4 839922192
      %v1693 = vunpack.c.0.s8 %v1692
      %v1694 = vlaneseq
      %v1695 = vshrl.u32 %v1694, 7
      %v1696 = vsub.s32 %v1693, %v1695
      %v1697 = vrot.slane %v1689, %v1696
      %v1698 = vlaneseq
      %v1699 = vshrl.u32 %v1698, 7
      %v1700 = vsub.s32 1, %v1699
      %v1701 = vrot.slane %v1396, %v1700
      %v1702 = vlaneseq
      %v1703 = vshrl.u32 %v1702, 7
      %v1704 = vsub.s32 5, %v1703
      %v1705 = vrot.slane %v1396, %v1704
      %v1708 = vlaneseq
      %v1709 = vshrl.u32 %v1708, 7
      %v1710 = vsub.s32 1, %v1709
      %v1711 = vrot.slane %v1701, %v1710
      %v1712 = vlaneseq
      %v1713 = vshrl.u32 %v1712, 7
      %v1714 = vsub.s32 1, %v1713
      %v1715 = vrot.slane %v1705, %v1714
      %v1718 = vcombine.low %v1711, %v1715
      %v1720 = vmul.f32 %v1697, %v1718
      %v1721 = vadd.f32 %v1684, %v1720
      %1722 = vrot.lane.b32.xlu0 %v1396, 127
      %v1723 = vpop.permute.xlu0 %1722
      %1724 = vrot.lane.b32.xlu0 %v1398, 127
      %v1725 = vpop.permute.xlu0 %1724
      %v1726 = vsel %vm848, %v1723, %v1725
      %v1727 = vsel %vm848, %v1725, %v1723
      %v1728 = vmul.f32 %v1726, %v857
      %v1729 = vmul.f32 %v1727, %v861
      %v1730 = vld [vmem:[%s1] sm:$0xf]
      %1732 = vset.pattern.permute.xlu0 48
      %1733 = vperm.xlu0 %1732, %v1730
      %v1734 = vpop.permute.xlu0 %1733
      %v1737 = vunpack.c.l.s4 839922192
      %v1738 = vunpack.c.0.s8 %v1737
      %v1739 = vlaneseq
      %v1740 = vshrl.u32 %v1739, 7
      %v1741 = vsub.s32 %v1738, %v1740
      %v1742 = vrot.slane %v1734, %v1741
      %v1743 = vlaneseq
      %v1744 = vshrl.u32 %v1743, 7
      %v1745 = vsub.s32 0, %v1744
      %v1746 = vrot.slane %v1728, %v1745
      %v1747 = vlaneseq
      %v1748 = vshrl.u32 %v1747, 7
      %v1749 = vsub.s32 0, %v1748
      %v1750 = vrot.slane %v1729, %v1749
      %v1753 = vcombine.low %v1746, %v1750
      %v1755 = vmul.f32 %v1742, %v1753
      %v1756 = vadd.f32 %v1721, %v1755
      %v1757 = vld [vmem:[%s1] sm:$0xf]
      %1759 = vset.pattern.permute.xlu0 49
      %1760 = vperm.xlu0 %1759, %v1757
      %v1761 = vpop.permute.xlu0 %1760
      %v1764 = vunpack.c.l.s4 839922192
      %v1765 = vunpack.c.0.s8 %v1764
      %v1766 = vlaneseq
      %v1767 = vshrl.u32 %v1766, 7
      %v1768 = vsub.s32 %v1765, %v1767
      %v1769 = vrot.slane %v1761, %v1768
      %v1770 = vlaneseq
      %v1771 = vshrl.u32 %v1770, 7
      %v1772 = vsub.s32 1, %v1771
      %v1773 = vrot.slane %v1728, %v1772
      %v1774 = vlaneseq
      %v1775 = vshrl.u32 %v1774, 7
      %v1776 = vsub.s32 1, %v1775
      %v1777 = vrot.slane %v1729, %v1776
      %v1780 = vcombine.low %v1773, %v1777
      %v1782 = vmul.f32 %v1769, %v1780
      %v1783 = vadd.f32 %v1756, %v1782
      %1784 = vrot.lane.b32.xlu0 %v1396, 113
      %v1785 = vpop.permute.xlu0 %1784
      %1786 = vrot.lane.b32.xlu0 %v1398, 113
      %v1787 = vpop.permute.xlu0 %1786
      %v1788 = vsel %vm978, %v1785, %v1787
      %v1789 = vsel %vm978, %v1787, %v1785
      %v1790 = vmul.f32 %v1788, %v987
      %v1791 = vmul.f32 %v1789, %v991
      %v1792 = vld [vmem:[%s1] sm:$0xf]
      %1794 = vset.pattern.permute.xlu0 50
      %1795 = vperm.xlu0 %1794, %v1792
      %v1796 = vpop.permute.xlu0 %1795
      %v1799 = vunpack.c.l.s4 839922192
      %v1800 = vunpack.c.0.s8 %v1799
      %v1801 = vlaneseq
      %v1802 = vshrl.u32 %v1801, 7
      %v1803 = vsub.s32 %v1800, %v1802
      %v1804 = vrot.slane %v1796, %v1803
      %v1805 = vlaneseq
      %v1806 = vshrl.u32 %v1805, 7
      %v1807 = vsub.s32 0, %v1806
      %v1808 = vrot.slane %v1790, %v1807
      %v1809 = vlaneseq
      %v1810 = vshrl.u32 %v1809, 7
      %v1811 = vsub.s32 0, %v1810
      %v1812 = vrot.slane %v1791, %v1811
      %v1815 = vcombine.low %v1808, %v1812
      %v1817 = vmul.f32 %v1804, %v1815
      %v1818 = vadd.f32 %v1783, %v1817
      %v1819 = vld [vmem:[%s1] sm:$0xf]
      %1821 = vset.pattern.permute.xlu0 51
      %1822 = vperm.xlu0 %1821, %v1819
      %v1823 = vpop.permute.xlu0 %1822
      %v1826 = vunpack.c.l.s4 839922192
      %v1827 = vunpack.c.0.s8 %v1826
      %v1828 = vlaneseq
      %v1829 = vshrl.u32 %v1828, 7
      %v1830 = vsub.s32 %v1827, %v1829
      %v1831 = vrot.slane %v1823, %v1830
      %v1832 = vlaneseq
      %v1833 = vshrl.u32 %v1832, 7
      %v1834 = vsub.s32 1, %v1833
      %v1835 = vrot.slane %v1790, %v1834
      %v1836 = vlaneseq
      %v1837 = vshrl.u32 %v1836, 7
      %v1838 = vsub.s32 1, %v1837
      %v1839 = vrot.slane %v1791, %v1838
      %v1842 = vcombine.low %v1835, %v1839
      %v1844 = vmul.f32 %v1831, %v1842
      %v1845 = vadd.f32 %v1818, %v1844
      %1846 = vrot.lane.b32.xlu0 %v1396, 112
      %v1847 = vpop.permute.xlu0 %1846
      %1848 = vrot.lane.b32.xlu0 %v1398, 112
      %v1849 = vpop.permute.xlu0 %1848
      %v1850 = vsel %vm1108, %v1847, %v1849
      %v1851 = vsel %vm1108, %v1849, %v1847
      %v1852 = vmul.f32 %v1850, %v1117
      %v1853 = vmul.f32 %v1851, %v1121
      %v1854 = vld [vmem:[%s1] sm:$0xf]
      %1856 = vset.pattern.permute.xlu0 52
      %1857 = vperm.xlu0 %1856, %v1854
      %v1858 = vpop.permute.xlu0 %1857
      %v1861 = vunpack.c.l.s4 839922192
      %v1862 = vunpack.c.0.s8 %v1861
      %v1863 = vlaneseq
      %v1864 = vshrl.u32 %v1863, 7
      %v1865 = vsub.s32 %v1862, %v1864
      %v1866 = vrot.slane %v1858, %v1865
      %v1867 = vlaneseq
      %v1868 = vshrl.u32 %v1867, 7
      %v1869 = vsub.s32 0, %v1868
      %v1870 = vrot.slane %v1852, %v1869
      %v1871 = vlaneseq
      %v1872 = vshrl.u32 %v1871, 7
      %v1873 = vsub.s32 0, %v1872
      %v1874 = vrot.slane %v1853, %v1873
      %v1877 = vcombine.low %v1870, %v1874
      %v1879 = vmul.f32 %v1866, %v1877
      %v1880 = vadd.f32 %v1845, %v1879
      %v1881 = vld [vmem:[%s1] sm:$0xf]
      %1883 = vset.pattern.permute.xlu0 53
      %1884 = vperm.xlu0 %1883, %v1881
      %v1885 = vpop.permute.xlu0 %1884
      %v1888 = vunpack.c.l.s4 839922192
      %v1889 = vunpack.c.0.s8 %v1888
      %v1890 = vlaneseq
      %v1891 = vshrl.u32 %v1890, 7
      %v1892 = vsub.s32 %v1889, %v1891
      %v1893 = vrot.slane %v1885, %v1892
      %v1894 = vlaneseq
      %v1895 = vshrl.u32 %v1894, 7
      %v1896 = vsub.s32 1, %v1895
      %v1897 = vrot.slane %v1852, %v1896
      %v1898 = vlaneseq
      %v1899 = vshrl.u32 %v1898, 7
      %v1900 = vsub.s32 1, %v1899
      %v1901 = vrot.slane %v1853, %v1900
      %v1904 = vcombine.low %v1897, %v1901
      %v1906 = vmul.f32 %v1893, %v1904
      %v1907 = vadd.f32 %v1880, %v1906
      %1908 = vrot.lane.b32.xlu0 %v1396, 111
      %v1909 = vpop.permute.xlu0 %1908
      %1910 = vrot.lane.b32.xlu0 %v1398, 111
      %v1911 = vpop.permute.xlu0 %1910
      %v1912 = vsel %vm1238, %v1909, %v1911
      %v1913 = vsel %vm1238, %v1911, %v1909
      %v1914 = vmul.f32 %v1912, %v1247
      %v1915 = vmul.f32 %v1913, %v1251
      %v1916 = vld [vmem:[%s1] sm:$0xf]
      %1918 = vset.pattern.permute.xlu0 54
      %1919 = vperm.xlu0 %1918, %v1916
      %v1920 = vpop.permute.xlu0 %1919
      %v1923 = vunpack.c.l.s4 839922192
      %v1924 = vunpack.c.0.s8 %v1923
      %v1925 = vlaneseq
      %v1926 = vshrl.u32 %v1925, 7
      %v1927 = vsub.s32 %v1924, %v1926
      %v1928 = vrot.slane %v1920, %v1927
      %v1929 = vlaneseq
      %v1930 = vshrl.u32 %v1929, 7
      %v1931 = vsub.s32 0, %v1930
      %v1932 = vrot.slane %v1914, %v1931
      %v1933 = vlaneseq
      %v1934 = vshrl.u32 %v1933, 7
      %v1935 = vsub.s32 0, %v1934
      %v1936 = vrot.slane %v1915, %v1935
      %v1939 = vcombine.low %v1932, %v1936
      %v1941 = vmul.f32 %v1928, %v1939
      %v1942 = vadd.f32 %v1907, %v1941
      %v1943 = vld [vmem:[%s1] sm:$0xf]
      %1945 = vset.pattern.permute.xlu0 55
      %1946 = vperm.xlu0 %1945, %v1943
      %v1947 = vpop.permute.xlu0 %1946
      %v1950 = vunpack.c.l.s4 839922192
      %v1951 = vunpack.c.0.s8 %v1950
      %v1952 = vlaneseq
      %v1953 = vshrl.u32 %v1952, 7
      %v1954 = vsub.s32 %v1951, %v1953
      %v1955 = vrot.slane %v1947, %v1954
      %v1956 = vlaneseq
      %v1957 = vshrl.u32 %v1956, 7
      %v1958 = vsub.s32 1, %v1957
      %v1959 = vrot.slane %v1914, %v1958
      %v1960 = vlaneseq
      %v1961 = vshrl.u32 %v1960, 7
      %v1962 = vsub.s32 1, %v1961
      %v1963 = vrot.slane %v1915, %v1962
      %v1966 = vcombine.low %v1959, %v1963
      %v1968 = vmul.f32 %v1955, %v1966
      %v1969 = vadd.f32 %v1942, %v1968
      %v1970 = vld [vmem:[%s1] sm:$0xf]
      %1972 = vset.pattern.permute.xlu0 56
      %1973 = vperm.xlu0 %1972, %v1970
      %v1974 = vpop.permute.xlu0 %1973
      %v1977 = vunpack.c.l.s4 839922192
      %v1978 = vunpack.c.0.s8 %v1977
      %v1979 = vlaneseq
      %v1980 = vshrl.u32 %v1979, 7
      %v1981 = vsub.s32 %v1978, %v1980
      %v1982 = vrot.slane %v1974, %v1981
      %v1983 = vmul.f32 %v1969, %v1982
      %1984 = vset.pattern.permute.xlu0 57
      %1985 = vperm.xlu0 %1984, %v1970
      %v1986 = vpop.permute.xlu0 %1985
      %v1989 = vunpack.c.l.s4 839922192
      %v1990 = vunpack.c.0.s8 %v1989
      %v1991 = vlaneseq
      %v1992 = vshrl.u32 %v1991, 7
      %v1993 = vsub.s32 %v1990, %v1992
      %v1994 = vrot.slane %v1986, %v1993
      %v1995 = vadd.f32 %v1983, %v1994
      %v1996 = vxor.u32 %v1995, 2147483648
      %v1997 = vmul.f32 %v1996, 1.442695
      %v1998 = vpow.pop %v1997
      %v1999 = vadd.f32 %v1998, 1.0
      %v2000 = vrcp.pop %v1999
      %v2001 = vmul.f32 1.0, %v2000
      %v2002 = vmul.f32 %v1995, %v2001
      %v2003 = vld [vmem:[%s1 + $0x4] sm:$0xf]
      %2005 = vset.pattern.permute.xlu0 52
      %2006 = vperm.xlu0 %2005, %v2003
      %v2007 = vpop.permute.xlu0 %2006
      %v2010 = vunpack.c.l.s4 839922192
      %v2011 = vunpack.c.0.s8 %v2010
      %v2012 = vlaneseq
      %v2013 = vshrl.u32 %v2012, 7
      %v2014 = vsub.s32 %v2011, %v2013
      %v2015 = vrot.slane %v2007, %v2014
      %v2016 = vmul.f32 %v2015, %v729
      %v2017 = vadd.f32 %v2016, 0.0
      %v2018 = vmul.f32 %v2015, %v766
      %v2019 = vadd.f32 %v2018, 0.0
      %v2020 = vld [vmem:[%s1 + $0x4] sm:$0xf]
      %2022 = vset.pattern.permute.xlu0 53
      %2023 = vperm.xlu0 %2022, %v2020
      %v2024 = vpop.permute.xlu0 %2023
      %v2027 = vunpack.c.l.s4 839922192
      %v2028 = vunpack.c.0.s8 %v2027
      %v2029 = vlaneseq
      %v2030 = vshrl.u32 %v2029, 7
      %v2031 = vsub.s32 %v2028, %v2030
      %v2032 = vrot.slane %v2024, %v2031
      %v2033 = vmul.f32 %v2032, %v803
      %v2034 = vadd.f32 %v2017, %v2033
      %v2035 = vmul.f32 %v2032, %v840
      %v2036 = vadd.f32 %v2019, %v2035
      %v2037 = vld [vmem:[%s1 + $0x4] sm:$0xf]
      %2039 = vset.pattern.permute.xlu0 54
      %2040 = vperm.xlu0 %2039, %v2037
      %v2041 = vpop.permute.xlu0 %2040
      %v2044 = vunpack.c.l.s4 839922192
      %v2045 = vunpack.c.0.s8 %v2044
      %v2046 = vlaneseq
      %v2047 = vshrl.u32 %v2046, 7
      %v2048 = vsub.s32 %v2045, %v2047
      %v2049 = vrot.slane %v2041, %v2048
      %v2051 = vlaneseq
      %v2052 = vshrl.u32 %v2051, 7
      %v2053 = vsub.s32 0, %v2052
      %v2054 = vrot.slane %v2002, %v2053
      %v2055 = vlaneseq
      %v2056 = vshrl.u32 %v2055, 7
      %v2057 = vsub.s32 4, %v2056
      %v2058 = vrot.slane %v2002, %v2057
      %v2061 = vlaneseq
      %v2062 = vshrl.u32 %v2061, 7
      %v2063 = vsub.s32 0, %v2062
      %v2064 = vrot.slane %v2054, %v2063
      %v2065 = vlaneseq
      %v2066 = vshrl.u32 %v2065, 7
      %v2067 = vsub.s32 0, %v2066
      %v2068 = vrot.slane %v2058, %v2067
      %v2071 = vcombine.low %v2064, %v2068
      %v2073 = vmul.f32 %v2049, %v2071
      %v2074 = vadd.f32 %v2034, %v2073
      %v2075 = vlaneseq
      %v2076 = vshrl.u32 %v2075, 7
      %v2077 = vsub.s32 1, %v2076
      %v2078 = vrot.slane %v2002, %v2077
      %v2079 = vlaneseq
      %v2080 = vshrl.u32 %v2079, 7
      %v2081 = vsub.s32 5, %v2080
      %v2082 = vrot.slane %v2002, %v2081
      %v2085 = vlaneseq
      %v2086 = vshrl.u32 %v2085, 7
      %v2087 = vsub.s32 1, %v2086
      %v2088 = vrot.slane %v2078, %v2087
      %v2089 = vlaneseq
      %v2090 = vshrl.u32 %v2089, 7
      %v2091 = vsub.s32 1, %v2090
      %v2092 = vrot.slane %v2082, %v2091
      %v2095 = vcombine.low %v2088, %v2092
      %v2097 = vmul.f32 %v2049, %v2095
      %v2098 = vadd.f32 %v2036, %v2097
      %v2099 = vld [vmem:[%s1 + $0x4] sm:$0xf]
      %2101 = vset.pattern.permute.xlu0 55
      %2102 = vperm.xlu0 %2101, %v2099
      %v2103 = vpop.permute.xlu0 %2102
      %v2106 = vunpack.c.l.s4 839922192
      %v2107 = vunpack.c.0.s8 %v2106
      %v2108 = vlaneseq
      %v2109 = vshrl.u32 %v2108, 7
      %v2110 = vsub.s32 %v2107, %v2109
      %v2111 = vrot.slane %v2103, %v2110
      %v2112 = vlaneseq
      %v2113 = vshrl.u32 %v2112, 7
      %v2114 = vsub.s32 2, %v2113
      %v2115 = vrot.slane %v2002, %v2114
      %v2116 = vlaneseq
      %v2117 = vshrl.u32 %v2116, 7
      %v2118 = vsub.s32 6, %v2117
      %v2119 = vrot.slane %v2002, %v2118
      %v2122 = vlaneseq
      %v2123 = vshrl.u32 %v2122, 7
      %v2124 = vsub.s32 2, %v2123
      %v2125 = vrot.slane %v2115, %v2124
      %v2126 = vlaneseq
      %v2127 = vshrl.u32 %v2126, 7
      %v2128 = vsub.s32 2, %v2127
      %v2129 = vrot.slane %v2119, %v2128
      %v2132 = vcombine.low %v2125, %v2129
      %v2134 = vmul.f32 %v2111, %v2132
      %v2135 = vadd.f32 %v2074, %v2134
      %v2136 = vlaneseq
      %v2137 = vshrl.u32 %v2136, 7
      %v2138 = vsub.s32 3, %v2137
      %v2139 = vrot.slane %v2002, %v2138
      %v2140 = vlaneseq
      %v2141 = vshrl.u32 %v2140, 7
      %v2142 = vsub.s32 7, %v2141
      %v2143 = vrot.slane %v2002, %v2142
      %v2146 = vlaneseq
      %v2147 = vshrl.u32 %v2146, 7
      %v2148 = vsub.s32 3, %v2147
      %v2149 = vrot.slane %v2139, %v2148
      %v2150 = vlaneseq
      %v2151 = vshrl.u32 %v2150, 7
      %v2152 = vsub.s32 3, %v2151
      %v2153 = vrot.slane %v2143, %v2152
      %v2156 = vcombine.low %v2149, %v2153
      %v2158 = vmul.f32 %v2111, %v2156
      %v2159 = vadd.f32 %v2098, %v2158
      %v2160 = vld [vmem:[%s1] sm:$0xf]
      %v2162 = vcombine.high %v2135, %v2135
      %2164 = vrot.lane.b32.xlu0 %v2135, 17
      %v2165 = vpop.permute.xlu0 %2164
      %2166 = vrot.lane.b32.xlu0 %v2162, 17
      %v2167 = vpop.permute.xlu0 %2166
      %v2168 = vsel %vm181, %v2165, %v2167
      %v2169 = vsel %vm181, %v2167, %v2165
      %v2170 = vmul.f32 %v2169, %v189
      %v2171 = vmul.f32 %v2168, %v193
      %2173 = vset.pattern.permute.xlu0 58
      %2174 = vperm.xlu0 %2173, %v2160
      %v2175 = vpop.permute.xlu0 %2174
      %v2178 = vunpack.c.l.s4 839922192
      %v2179 = vunpack.c.0.s8 %v2178
      %v2180 = vlaneseq
      %v2181 = vshrl.u32 %v2180, 7
      %v2182 = vsub.s32 %v2179, %v2181
      %v2183 = vrot.slane %v2175, %v2182
      %v2186 = vcombine.low %v2170, %v2171
      %v2188 = vmul.f32 %v2183, %v2186
      %v2189 = vadd.f32 %v2188, 0.0
      %v2190 = vld [vmem:[%s1] sm:$0xf]
      %v2192 = vcombine.high %v2159, %v2159
      %2194 = vrot.lane.b32.xlu0 %v2159, 17
      %v2195 = vpop.permute.xlu0 %2194
      %2196 = vrot.lane.b32.xlu0 %v2192, 17
      %v2197 = vpop.permute.xlu0 %2196
      %v2198 = vsel %vm181, %v2195, %v2197
      %v2199 = vsel %vm181, %v2197, %v2195
      %v2200 = vmul.f32 %v2199, %v189
      %v2201 = vmul.f32 %v2198, %v193
      %2203 = vset.pattern.permute.xlu0 59
      %2204 = vperm.xlu0 %2203, %v2190
      %v2205 = vpop.permute.xlu0 %2204
      %v2208 = vunpack.c.l.s4 839922192
      %v2209 = vunpack.c.0.s8 %v2208
      %v2210 = vlaneseq
      %v2211 = vshrl.u32 %v2210, 7
      %v2212 = vsub.s32 %v2209, %v2211
      %v2213 = vrot.slane %v2205, %v2212
      %v2216 = vcombine.low %v2200, %v2201
      %v2218 = vmul.f32 %v2213, %v2216
      %v2219 = vadd.f32 %v2189, %v2218
      %v2220 = vld [vmem:[%s1] sm:$0xf]
      %2221 = vrot.lane.b32.xlu0 %v2135, 16
      %v2222 = vpop.permute.xlu0 %2221
      %2223 = vrot.lane.b32.xlu0 %v2162, 16
      %v2224 = vpop.permute.xlu0 %2223
      %v2225 = vsel %vm310, %v2222, %v2224
      %v2226 = vsel %vm310, %v2224, %v2222
      %v2227 = vmul.f32 %v2226, %v319
      %v2228 = vmul.f32 %v2225, %v323
      %2230 = vset.pattern.permute.xlu0 60
      %2231 = vperm.xlu0 %2230, %v2220
      %v2232 = vpop.permute.xlu0 %2231
      %v2235 = vunpack.c.l.s4 839922192
      %v2236 = vunpack.c.0.s8 %v2235
      %v2237 = vlaneseq
      %v2238 = vshrl.u32 %v2237, 7
      %v2239 = vsub.s32 %v2236, %v2238
      %v2240 = vrot.slane %v2232, %v2239
      %v2243 = vcombine.low %v2227, %v2228
      %v2245 = vmul.f32 %v2240, %v2243
      %v2246 = vadd.f32 %v2219, %v2245
      %v2247 = vld [vmem:[%s1] sm:$0xf]
      %2248 = vrot.lane.b32.xlu0 %v2159, 16
      %v2249 = vpop.permute.xlu0 %2248
      %2250 = vrot.lane.b32.xlu0 %v2192, 16
      %v2251 = vpop.permute.xlu0 %2250
      %v2252 = vsel %vm310, %v2249, %v2251
      %v2253 = vsel %vm310, %v2251, %v2249
      %v2254 = vmul.f32 %v2253, %v319
      %v2255 = vmul.f32 %v2252, %v323
      %2257 = vset.pattern.permute.xlu0 61
      %2258 = vperm.xlu0 %2257, %v2247
      %v2259 = vpop.permute.xlu0 %2258
      %v2262 = vunpack.c.l.s4 839922192
      %v2263 = vunpack.c.0.s8 %v2262
      %v2264 = vlaneseq
      %v2265 = vshrl.u32 %v2264, 7
      %v2266 = vsub.s32 %v2263, %v2265
      %v2267 = vrot.slane %v2259, %v2266
      %v2270 = vcombine.low %v2254, %v2255
      %v2272 = vmul.f32 %v2267, %v2270
      %v2273 = vadd.f32 %v2246, %v2272
      %v2274 = vld [vmem:[%s1] sm:$0xf]
      %2275 = vrot.lane.b32.xlu0 %v2135, 15
      %v2276 = vpop.permute.xlu0 %2275
      %2277 = vrot.lane.b32.xlu0 %v2162, 15
      %v2278 = vpop.permute.xlu0 %2277
      %v2279 = vsel %vm440, %v2276, %v2278
      %v2280 = vsel %vm440, %v2278, %v2276
      %v2281 = vmul.f32 %v2280, %v449
      %v2282 = vmul.f32 %v2279, %v453
      %2284 = vset.pattern.permute.xlu0 62
      %2285 = vperm.xlu0 %2284, %v2274
      %v2286 = vpop.permute.xlu0 %2285
      %v2289 = vunpack.c.l.s4 839922192
      %v2290 = vunpack.c.0.s8 %v2289
      %v2291 = vlaneseq
      %v2292 = vshrl.u32 %v2291, 7
      %v2293 = vsub.s32 %v2290, %v2292
      %v2294 = vrot.slane %v2286, %v2293
      %v2297 = vcombine.low %v2281, %v2282
      %v2299 = vmul.f32 %v2294, %v2297
      %v2300 = vadd.f32 %v2273, %v2299
      %v2301 = vld [vmem:[%s1] sm:$0xf]
      %2302 = vrot.lane.b32.xlu0 %v2159, 15
      %v2303 = vpop.permute.xlu0 %2302
      %2304 = vrot.lane.b32.xlu0 %v2192, 15
      %v2305 = vpop.permute.xlu0 %2304
      %v2306 = vsel %vm440, %v2303, %v2305
      %v2307 = vsel %vm440, %v2305, %v2303
      %v2308 = vmul.f32 %v2307, %v449
      %v2309 = vmul.f32 %v2306, %v453
      %2311 = vset.pattern.permute.xlu0 63
      %2312 = vperm.xlu0 %2311, %v2301
      %v2313 = vpop.permute.xlu0 %2312
      %v2316 = vunpack.c.l.s4 839922192
      %v2317 = vunpack.c.0.s8 %v2316
      %v2318 = vlaneseq
      %v2319 = vshrl.u32 %v2318, 7
      %v2320 = vsub.s32 %v2317, %v2319
      %v2321 = vrot.slane %v2313, %v2320
      %v2324 = vcombine.low %v2308, %v2309
      %v2326 = vmul.f32 %v2321, %v2324
      %v2327 = vadd.f32 %v2300, %v2326
      %v2328 = vld [vmem:[%s1] sm:$0xf]
      %2329 = vrot.lane.b32.xlu0 %v2135, 1
      %v2330 = vpop.permute.xlu0 %2329
      %2331 = vrot.lane.b32.xlu0 %v2162, 1
      %v2332 = vpop.permute.xlu0 %2331
      %v2333 = vsel %vm570, %v2330, %v2332
      %v2334 = vsel %vm570, %v2332, %v2330
      %v2335 = vmul.f32 %v2334, %v579
      %v2336 = vmul.f32 %v2333, %v583
      %2338 = vset.pattern.permute.xlu0 64
      %2339 = vperm.xlu0 %2338, %v2328
      %v2340 = vpop.permute.xlu0 %2339
      %v2343 = vunpack.c.l.s4 839922192
      %v2344 = vunpack.c.0.s8 %v2343
      %v2345 = vlaneseq
      %v2346 = vshrl.u32 %v2345, 7
      %v2347 = vsub.s32 %v2344, %v2346
      %v2348 = vrot.slane %v2340, %v2347
      %v2351 = vcombine.low %v2335, %v2336
      %v2353 = vmul.f32 %v2348, %v2351
      %v2354 = vadd.f32 %v2327, %v2353
      %v2355 = vld [vmem:[%s1] sm:$0xf]
      %2356 = vrot.lane.b32.xlu0 %v2159, 1
      %v2357 = vpop.permute.xlu0 %2356
      %2358 = vrot.lane.b32.xlu0 %v2192, 1
      %v2359 = vpop.permute.xlu0 %2358
      %v2360 = vsel %vm570, %v2357, %v2359
      %v2361 = vsel %vm570, %v2359, %v2357
      %v2362 = vmul.f32 %v2361, %v579
      %v2363 = vmul.f32 %v2360, %v583
      %2365 = vset.pattern.permute.xlu0 65
      %2366 = vperm.xlu0 %2365, %v2355
      %v2367 = vpop.permute.xlu0 %2366
      %v2370 = vunpack.c.l.s4 839922192
      %v2371 = vunpack.c.0.s8 %v2370
      %v2372 = vlaneseq
      %v2373 = vshrl.u32 %v2372, 7
      %v2374 = vsub.s32 %v2371, %v2373
      %v2375 = vrot.slane %v2367, %v2374
      %v2378 = vcombine.low %v2362, %v2363
      %v2380 = vmul.f32 %v2375, %v2378
      %v2381 = vadd.f32 %v2354, %v2380
      %v2382 = vld [vmem:[%s1] sm:$0xf]
      %2384 = vset.pattern.permute.xlu0 66
      %2385 = vperm.xlu0 %2384, %v2382
      %v2386 = vpop.permute.xlu0 %2385
      %v2389 = vunpack.c.l.s4 839922192
      %v2390 = vunpack.c.0.s8 %v2389
      %v2391 = vlaneseq
      %v2392 = vshrl.u32 %v2391, 7
      %v2393 = vsub.s32 %v2390, %v2392
      %v2394 = vrot.slane %v2386, %v2393
      %v2395 = vmul.f32 %v2394, %v2135
      %v2396 = vadd.f32 %v2381, %v2395
      %2397 = vset.pattern.permute.xlu0 67
      %2398 = vperm.xlu0 %2397, %v2382
      %v2399 = vpop.permute.xlu0 %2398
      %v2402 = vunpack.c.l.s4 839922192
      %v2403 = vunpack.c.0.s8 %v2402
      %v2404 = vlaneseq
      %v2405 = vshrl.u32 %v2404, 7
      %v2406 = vsub.s32 %v2403, %v2405
      %v2407 = vrot.slane %v2399, %v2406
      %v2408 = vmul.f32 %v2407, %v2159
      %v2409 = vadd.f32 %v2396, %v2408
      %2410 = vrot.lane.b32.xlu0 %v2135, 127
      %v2411 = vpop.permute.xlu0 %2410
      %2412 = vrot.lane.b32.xlu0 %v2162, 127
      %v2413 = vpop.permute.xlu0 %2412
      %v2414 = vsel %vm848, %v2411, %v2413
      %v2415 = vsel %vm848, %v2413, %v2411
      %v2416 = vmul.f32 %v2414, %v857
      %v2417 = vmul.f32 %v2415, %v861
      %2418 = vset.pattern.permute.xlu0 68
      %2419 = vperm.xlu0 %2418, %v2382
      %v2420 = vpop.permute.xlu0 %2419
      %v2423 = vunpack.c.l.s4 839922192
      %v2424 = vunpack.c.0.s8 %v2423
      %v2425 = vlaneseq
      %v2426 = vshrl.u32 %v2425, 7
      %v2427 = vsub.s32 %v2424, %v2426
      %v2428 = vrot.slane %v2420, %v2427
      %v2431 = vcombine.low %v2416, %v2417
      %v2433 = vmul.f32 %v2428, %v2431
      %v2434 = vadd.f32 %v2409, %v2433
      %v2435 = vld [vmem:[%s1] sm:$0xf]
      %2436 = vrot.lane.b32.xlu0 %v2159, 127
      %v2437 = vpop.permute.xlu0 %2436
      %2438 = vrot.lane.b32.xlu0 %v2192, 127
      %v2439 = vpop.permute.xlu0 %2438
      %v2440 = vsel %vm848, %v2437, %v2439
      %v2441 = vsel %vm848, %v2439, %v2437
      %v2442 = vmul.f32 %v2440, %v857
      %v2443 = vmul.f32 %v2441, %v861
      %2445 = vset.pattern.permute.xlu0 69
      %2446 = vperm.xlu0 %2445, %v2435
      %v2447 = vpop.permute.xlu0 %2446
      %v2450 = vunpack.c.l.s4 839922192
      %v2451 = vunpack.c.0.s8 %v2450
      %v2452 = vlaneseq
      %v2453 = vshrl.u32 %v2452, 7
      %v2454 = vsub.s32 %v2451, %v2453
      %v2455 = vrot.slane %v2447, %v2454
      %v2458 = vcombine.low %v2442, %v2443
      %v2460 = vmul.f32 %v2455, %v2458
      %v2461 = vadd.f32 %v2434, %v2460
      %v2462 = vld [vmem:[%s1] sm:$0xf]
      %2463 = vrot.lane.b32.xlu0 %v2135, 113
      %v2464 = vpop.permute.xlu0 %2463
      %2465 = vrot.lane.b32.xlu0 %v2162, 113
      %v2466 = vpop.permute.xlu0 %2465
      %v2467 = vsel %vm978, %v2464, %v2466
      %v2468 = vsel %vm978, %v2466, %v2464
      %v2469 = vmul.f32 %v2467, %v987
      %v2470 = vmul.f32 %v2468, %v991
      %2472 = vset.pattern.permute.xlu0 70
      %2473 = vperm.xlu0 %2472, %v2462
      %v2474 = vpop.permute.xlu0 %2473
      %v2477 = vunpack.c.l.s4 839922192
      %v2478 = vunpack.c.0.s8 %v2477
      %v2479 = vlaneseq
      %v2480 = vshrl.u32 %v2479, 7
      %v2481 = vsub.s32 %v2478, %v2480
      %v2482 = vrot.slane %v2474, %v2481
      %v2485 = vcombine.low %v2469, %v2470
      %v2487 = vmul.f32 %v2482, %v2485
      %v2488 = vadd.f32 %v2461, %v2487
      %v2489 = vld [vmem:[%s1] sm:$0xf]
      %2490 = vrot.lane.b32.xlu0 %v2159, 113
      %v2491 = vpop.permute.xlu0 %2490
      %2492 = vrot.lane.b32.xlu0 %v2192, 113
      %v2493 = vpop.permute.xlu0 %2492
      %v2494 = vsel %vm978, %v2491, %v2493
      %v2495 = vsel %vm978, %v2493, %v2491
      %v2496 = vmul.f32 %v2494, %v987
      %v2497 = vmul.f32 %v2495, %v991
      %2499 = vset.pattern.permute.xlu0 71
      %2500 = vperm.xlu0 %2499, %v2489
      %v2501 = vpop.permute.xlu0 %2500
      %v2504 = vunpack.c.l.s4 839922192
      %v2505 = vunpack.c.0.s8 %v2504
      %v2506 = vlaneseq
      %v2507 = vshrl.u32 %v2506, 7
      %v2508 = vsub.s32 %v2505, %v2507
      %v2509 = vrot.slane %v2501, %v2508
      %v2512 = vcombine.low %v2496, %v2497
      %v2514 = vmul.f32 %v2509, %v2512
      %v2515 = vadd.f32 %v2488, %v2514
      %v2516 = vld [vmem:[%s1] sm:$0xf]
      %2517 = vrot.lane.b32.xlu0 %v2135, 112
      %v2518 = vpop.permute.xlu0 %2517
      %2519 = vrot.lane.b32.xlu0 %v2162, 112
      %v2520 = vpop.permute.xlu0 %2519
      %v2521 = vsel %vm1108, %v2518, %v2520
      %v2522 = vsel %vm1108, %v2520, %v2518
      %v2523 = vmul.f32 %v2521, %v1117
      %v2524 = vmul.f32 %v2522, %v1121
      %2526 = vset.pattern.permute.xlu0 72
      %2527 = vperm.xlu0 %2526, %v2516
      %v2528 = vpop.permute.xlu0 %2527
      %v2531 = vunpack.c.l.s4 839922192
      %v2532 = vunpack.c.0.s8 %v2531
      %v2533 = vlaneseq
      %v2534 = vshrl.u32 %v2533, 7
      %v2535 = vsub.s32 %v2532, %v2534
      %v2536 = vrot.slane %v2528, %v2535
      %v2539 = vcombine.low %v2523, %v2524
      %v2541 = vmul.f32 %v2536, %v2539
      %v2542 = vadd.f32 %v2515, %v2541
      %v2543 = vld [vmem:[%s1] sm:$0xf]
      %2544 = vrot.lane.b32.xlu0 %v2159, 112
      %v2545 = vpop.permute.xlu0 %2544
      %2546 = vrot.lane.b32.xlu0 %v2192, 112
      %v2547 = vpop.permute.xlu0 %2546
      %v2548 = vsel %vm1108, %v2545, %v2547
      %v2549 = vsel %vm1108, %v2547, %v2545
      %v2550 = vmul.f32 %v2548, %v1117
      %v2551 = vmul.f32 %v2549, %v1121
      %2553 = vset.pattern.permute.xlu0 73
      %2554 = vperm.xlu0 %2553, %v2543
      %v2555 = vpop.permute.xlu0 %2554
      %v2558 = vunpack.c.l.s4 839922192
      %v2559 = vunpack.c.0.s8 %v2558
      %v2560 = vlaneseq
      %v2561 = vshrl.u32 %v2560, 7
      %v2562 = vsub.s32 %v2559, %v2561
      %v2563 = vrot.slane %v2555, %v2562
      %v2566 = vcombine.low %v2550, %v2551
      %v2568 = vmul.f32 %v2563, %v2566
      %v2569 = vadd.f32 %v2542, %v2568
      %v2570 = vld [vmem:[%s1] sm:$0xf]
      %2571 = vrot.lane.b32.xlu0 %v2135, 111
      %v2572 = vpop.permute.xlu0 %2571
      %2573 = vrot.lane.b32.xlu0 %v2162, 111
      %v2574 = vpop.permute.xlu0 %2573
      %v2575 = vsel %vm1238, %v2572, %v2574
      %v2576 = vsel %vm1238, %v2574, %v2572
      %v2577 = vmul.f32 %v2575, %v1247
      %v2578 = vmul.f32 %v2576, %v1251
      %2580 = vset.pattern.permute.xlu0 74
      %2581 = vperm.xlu0 %2580, %v2570
      %v2582 = vpop.permute.xlu0 %2581
      %v2585 = vunpack.c.l.s4 839922192
      %v2586 = vunpack.c.0.s8 %v2585
      %v2587 = vlaneseq
      %v2588 = vshrl.u32 %v2587, 7
      %v2589 = vsub.s32 %v2586, %v2588
      %v2590 = vrot.slane %v2582, %v2589
      %v2593 = vcombine.low %v2577, %v2578
      %v2595 = vmul.f32 %v2590, %v2593
      %v2596 = vadd.f32 %v2569, %v2595
      %v2597 = vld [vmem:[%s1] sm:$0xf]
      %2598 = vrot.lane.b32.xlu0 %v2159, 111
      %v2599 = vpop.permute.xlu0 %2598
      %2600 = vrot.lane.b32.xlu0 %v2192, 111
      %v2601 = vpop.permute.xlu0 %2600
      %v2602 = vsel %vm1238, %v2599, %v2601
      %v2603 = vsel %vm1238, %v2601, %v2599
      %v2604 = vmul.f32 %v2602, %v1247
      %v2605 = vmul.f32 %v2603, %v1251
      %2607 = vset.pattern.permute.xlu0 75
      %2608 = vperm.xlu0 %2607, %v2597
      %v2609 = vpop.permute.xlu0 %2608
      %v2612 = vunpack.c.l.s4 839922192
      %v2613 = vunpack.c.0.s8 %v2612
      %v2614 = vlaneseq
      %v2615 = vshrl.u32 %v2614, 7
      %v2616 = vsub.s32 %v2613, %v2615
      %v2617 = vrot.slane %v2609, %v2616
      %v2620 = vcombine.low %v2604, %v2605
      %v2622 = vmul.f32 %v2617, %v2620
      %v2623 = vadd.f32 %v2596, %v2622
      %v2624 = vld [vmem:[%s1] sm:$0xf]
      %2626 = vset.pattern.permute.xlu0 76
      %2627 = vperm.xlu0 %2626, %v2624
      %v2628 = vpop.permute.xlu0 %2627
      %v2631 = vunpack.c.l.s4 839922192
      %v2632 = vunpack.c.0.s8 %v2631
      %v2633 = vlaneseq
      %v2634 = vshrl.u32 %v2633, 7
      %v2635 = vsub.s32 %v2632, %v2634
      %v2636 = vrot.slane %v2628, %v2635
      %v2637 = vadd.f32 %v2623, %v2636
      %2638 = vset.pattern.permute.xlu0 124
      %2639 = vperm.xlu0 %2638, %v2624
      %v2640 = vpop.permute.xlu0 %2639
      %v2643 = vunpack.c.l.s4 839922192
      %v2644 = vunpack.c.0.s8 %v2643
      %v2645 = vlaneseq
      %v2646 = vshrl.u32 %v2645, 7
      %v2647 = vsub.s32 %v2644, %v2646
      %v2648 = vrot.slane %v2640, %v2647
      %v2650 = vlaneseq
      %v2651 = vshrl.u32 %v2650, 7
      %v2652 = vsub.s32 0, %v2651
      %v2653 = vrot.slane %v2637, %v2652
      %v2654 = vlaneseq
      %v2655 = vshrl.u32 %v2654, 7
      %v2656 = vsub.s32 4, %v2655
      %v2657 = vrot.slane %v2637, %v2656
      %v2660 = vlaneseq
      %v2661 = vshrl.u32 %v2660, 7
      %v2662 = vsub.s32 0, %v2661
      %v2663 = vrot.slane %v2653, %v2662
      %v2664 = vlaneseq
      %v2665 = vshrl.u32 %v2664, 7
      %v2666 = vsub.s32 0, %v2665
      %v2667 = vrot.slane %v2657, %v2666
      %v2670 = vcombine.low %v2663, %v2667
      %v2672 = vmul.f32 %v2648, %v2670
      %v2673 = vadd.f32 %v2672, 0.0
      %v2674 = vld [vmem:[%s1] sm:$0xf]
      %2676 = vset.pattern.permute.xlu0 125
      %2677 = vperm.xlu0 %2676, %v2674
      %v2678 = vpop.permute.xlu0 %2677
      %v2681 = vunpack.c.l.s4 839922192
      %v2682 = vunpack.c.0.s8 %v2681
      %v2683 = vlaneseq
      %v2684 = vshrl.u32 %v2683, 7
      %v2685 = vsub.s32 %v2682, %v2684
      %v2686 = vrot.slane %v2678, %v2685
      %v2687 = vlaneseq
      %v2688 = vshrl.u32 %v2687, 7
      %v2689 = vsub.s32 1, %v2688
      %v2690 = vrot.slane %v2637, %v2689
      %v2691 = vlaneseq
      %v2692 = vshrl.u32 %v2691, 7
      %v2693 = vsub.s32 5, %v2692
      %v2694 = vrot.slane %v2637, %v2693
      %v2697 = vlaneseq
      %v2698 = vshrl.u32 %v2697, 7
      %v2699 = vsub.s32 1, %v2698
      %v2700 = vrot.slane %v2690, %v2699
      %v2701 = vlaneseq
      %v2702 = vshrl.u32 %v2701, 7
      %v2703 = vsub.s32 1, %v2702
      %v2704 = vrot.slane %v2694, %v2703
      %v2707 = vcombine.low %v2700, %v2704
      %v2709 = vmul.f32 %v2686, %v2707
      %v2710 = vadd.f32 %v2673, %v2709
      %v2711 = vld [vmem:[%s1] sm:$0xf]
      %2713 = vset.pattern.permute.xlu0 126
      %2714 = vperm.xlu0 %2713, %v2711
      %v2715 = vpop.permute.xlu0 %2714
      %v2718 = vunpack.c.l.s4 839922192
      %v2719 = vunpack.c.0.s8 %v2718
      %v2720 = vlaneseq
      %v2721 = vshrl.u32 %v2720, 7
      %v2722 = vsub.s32 %v2719, %v2721
      %v2723 = vrot.slane %v2715, %v2722
      %v2724 = vlaneseq
      %v2725 = vshrl.u32 %v2724, 7
      %v2726 = vsub.s32 2, %v2725
      %v2727 = vrot.slane %v2637, %v2726
      %v2728 = vlaneseq
      %v2729 = vshrl.u32 %v2728, 7
      %v2730 = vsub.s32 6, %v2729
      %v2731 = vrot.slane %v2637, %v2730
      %v2734 = vlaneseq
      %v2735 = vshrl.u32 %v2734, 7
      %v2736 = vsub.s32 2, %v2735
      %v2737 = vrot.slane %v2727, %v2736
      %v2738 = vlaneseq
      %v2739 = vshrl.u32 %v2738, 7
      %v2740 = vsub.s32 2, %v2739
      %v2741 = vrot.slane %v2731, %v2740
      %v2744 = vcombine.low %v2737, %v2741
      %v2746 = vmul.f32 %v2723, %v2744
      %v2747 = vadd.f32 %v2710, %v2746
      %v2748 = vld [vmem:[%s1] sm:$0xf]
      %2750 = vset.pattern.permute.xlu0 127
      %2751 = vperm.xlu0 %2750, %v2748
      %v2752 = vpop.permute.xlu0 %2751
      %v2755 = vunpack.c.l.s4 839922192
      %v2756 = vunpack.c.0.s8 %v2755
      %v2757 = vlaneseq
      %v2758 = vshrl.u32 %v2757, 7
      %v2759 = vsub.s32 %v2756, %v2758
      %v2760 = vrot.slane %v2752, %v2759
      %v2761 = vlaneseq
      %v2762 = vshrl.u32 %v2761, 7
      %v2763 = vsub.s32 3, %v2762
      %v2764 = vrot.slane %v2637, %v2763
      %v2765 = vlaneseq
      %v2766 = vshrl.u32 %v2765, 7
      %v2767 = vsub.s32 7, %v2766
      %v2768 = vrot.slane %v2637, %v2767
      %v2771 = vlaneseq
      %v2772 = vshrl.u32 %v2771, 7
      %v2773 = vsub.s32 3, %v2772
      %v2774 = vrot.slane %v2764, %v2773
      %v2775 = vlaneseq
      %v2776 = vshrl.u32 %v2775, 7
      %v2777 = vsub.s32 3, %v2776
      %v2778 = vrot.slane %v2768, %v2777
      %v2781 = vcombine.low %v2774, %v2778
      %v2783 = vmul.f32 %v2760, %v2781
      %v2784 = vadd.f32 %v2747, %v2783
      %v2785 = vld [vmem:[%s1] sm:$0xf]
      %2786 = vrot.lane.b32.xlu0 %v2135, 34
      %v2787 = vpop.permute.xlu0 %2786
      %2788 = vrot.lane.b32.xlu0 %v2162, 34
      %v2789 = vpop.permute.xlu0 %2788
      %vm2790 = vcmp.lt.s32.totalorder %v180, 34
      %v2791 = vsel %vm2790, %v2787, %v2789
      %v2792 = vsel %vm2790, %v2789, %v2787
      %s2793 = scalar_lea.vmem %s2, 16
      %v2794 = vld [vmem:[%s2793] ss:$8 sm:$0x3]
      %v2796 = vlaneseq
      %v2797 = vshrl.u32 %v2796, 7
      %v2798 = vsub.s32 0, %v2797
      %v2799 = vrot.slane %v2794, %v2798
      %v2800 = vlaneseq
      %v2801 = vshrl.u32 %v2800, 7
      %v2802 = vsub.s32 1, %v2801
      %v2803 = vrot.slane %v2794, %v2802
      %v2806 = vmul.f32 %v2792, %v2799
      %v2807 = vmul.f32 %v2791, %v2803
      %2809 = vset.pattern.permute.xlu0 77
      %2810 = vperm.xlu0 %2809, %v2785
      %v2811 = vpop.permute.xlu0 %2810
      %v2814 = vunpack.c.l.s4 839922192
      %v2815 = vunpack.c.0.s8 %v2814
      %v2816 = vlaneseq
      %v2817 = vshrl.u32 %v2816, 7
      %v2818 = vsub.s32 %v2815, %v2817
      %v2819 = vrot.slane %v2811, %v2818
      %v2822 = vcombine.low %v2806, %v2807
      %v2824 = vmul.f32 %v2819, %v2822
      %v2825 = vadd.f32 %v2824, 0.0
      %v2826 = vld [vmem:[%s1] sm:$0xf]
      %2827 = vrot.lane.b32.xlu0 %v2159, 34
      %v2828 = vpop.permute.xlu0 %2827
      %2829 = vrot.lane.b32.xlu0 %v2192, 34
      %v2830 = vpop.permute.xlu0 %2829
      %v2831 = vsel %vm2790, %v2828, %v2830
      %v2832 = vsel %vm2790, %v2830, %v2828
      %v2833 = vmul.f32 %v2832, %v2799
      %v2834 = vmul.f32 %v2831, %v2803
      %2836 = vset.pattern.permute.xlu0 78
      %2837 = vperm.xlu0 %2836, %v2826
      %v2838 = vpop.permute.xlu0 %2837
      %v2841 = vunpack.c.l.s4 839922192
      %v2842 = vunpack.c.0.s8 %v2841
      %v2843 = vlaneseq
      %v2844 = vshrl.u32 %v2843, 7
      %v2845 = vsub.s32 %v2842, %v2844
      %v2846 = vrot.slane %v2838, %v2845
      %v2849 = vcombine.low %v2833, %v2834
      %v2851 = vmul.f32 %v2846, %v2849
      %v2852 = vadd.f32 %v2825, %v2851
      %v2853 = vld [vmem:[%s1] sm:$0xf]
      %2854 = vrot.lane.b32.xlu0 %v2135, 32
      %v2855 = vpop.permute.xlu0 %2854
      %2856 = vrot.lane.b32.xlu0 %v2162, 32
      %v2857 = vpop.permute.xlu0 %2856
      %vm2858 = vcmp.lt.s32.totalorder %v180, 32
      %v2859 = vsel %vm2858, %v2855, %v2857
      %v2860 = vsel %vm2858, %v2857, %v2855
      %s2861 = scalar_lea.vmem %s2, 17
      %v2862 = vld [vmem:[%s2861] ss:$8 sm:$0x3]
      %v2864 = vlaneseq
      %v2865 = vshrl.u32 %v2864, 7
      %v2866 = vsub.s32 0, %v2865
      %v2867 = vrot.slane %v2862, %v2866
      %v2868 = vlaneseq
      %v2869 = vshrl.u32 %v2868, 7
      %v2870 = vsub.s32 1, %v2869
      %v2871 = vrot.slane %v2862, %v2870
      %v2874 = vmul.f32 %v2860, %v2867
      %v2875 = vmul.f32 %v2859, %v2871
      %2877 = vset.pattern.permute.xlu0 79
      %2878 = vperm.xlu0 %2877, %v2853
      %v2879 = vpop.permute.xlu0 %2878
      %v2882 = vunpack.c.l.s4 839922192
      %v2883 = vunpack.c.0.s8 %v2882
      %v2884 = vlaneseq
      %v2885 = vshrl.u32 %v2884, 7
      %v2886 = vsub.s32 %v2883, %v2885
      %v2887 = vrot.slane %v2879, %v2886
      %v2890 = vcombine.low %v2874, %v2875
      %v2892 = vmul.f32 %v2887, %v2890
      %v2893 = vadd.f32 %v2852, %v2892
      %v2894 = vld [vmem:[%s1] sm:$0xf]
      %2895 = vrot.lane.b32.xlu0 %v2159, 32
      %v2896 = vpop.permute.xlu0 %2895
      %2897 = vrot.lane.b32.xlu0 %v2192, 32
      %v2898 = vpop.permute.xlu0 %2897
      %v2899 = vsel %vm2858, %v2896, %v2898
      %v2900 = vsel %vm2858, %v2898, %v2896
      %v2901 = vmul.f32 %v2900, %v2867
      %v2902 = vmul.f32 %v2899, %v2871
      %2904 = vset.pattern.permute.xlu0 80
      %2905 = vperm.xlu0 %2904, %v2894
      %v2906 = vpop.permute.xlu0 %2905
      %v2909 = vunpack.c.l.s4 839922192
      %v2910 = vunpack.c.0.s8 %v2909
      %v2911 = vlaneseq
      %v2912 = vshrl.u32 %v2911, 7
      %v2913 = vsub.s32 %v2910, %v2912
      %v2914 = vrot.slane %v2906, %v2913
      %v2917 = vcombine.low %v2901, %v2902
      %v2919 = vmul.f32 %v2914, %v2917
      %v2920 = vadd.f32 %v2893, %v2919
      %v2921 = vld [vmem:[%s1] sm:$0xf]
      %2922 = vrot.lane.b32.xlu0 %v2135, 30
      %v2923 = vpop.permute.xlu0 %2922
      %2924 = vrot.lane.b32.xlu0 %v2162, 30
      %v2925 = vpop.permute.xlu0 %2924
      %vm2926 = vcmp.lt.s32.totalorder %v180, 30
      %v2927 = vsel %vm2926, %v2923, %v2925
      %v2928 = vsel %vm2926, %v2925, %v2923
      %s2929 = scalar_lea.vmem %s2, 18
      %v2930 = vld [vmem:[%s2929] ss:$8 sm:$0x3]
      %v2932 = vlaneseq
      %v2933 = vshrl.u32 %v2932, 7
      %v2934 = vsub.s32 0, %v2933
      %v2935 = vrot.slane %v2930, %v2934
      %v2936 = vlaneseq
      %v2937 = vshrl.u32 %v2936, 7
      %v2938 = vsub.s32 1, %v2937
      %v2939 = vrot.slane %v2930, %v2938
      %v2942 = vmul.f32 %v2928, %v2935
      %v2943 = vmul.f32 %v2927, %v2939
      %2945 = vset.pattern.permute.xlu0 81
      %2946 = vperm.xlu0 %2945, %v2921
      %v2947 = vpop.permute.xlu0 %2946
      %v2950 = vunpack.c.l.s4 839922192
      %v2951 = vunpack.c.0.s8 %v2950
      %v2952 = vlaneseq
      %v2953 = vshrl.u32 %v2952, 7
      %v2954 = vsub.s32 %v2951, %v2953
      %v2955 = vrot.slane %v2947, %v2954
      %v2958 = vcombine.low %v2942, %v2943
      %v2960 = vmul.f32 %v2955, %v2958
      %v2961 = vadd.f32 %v2920, %v2960
      %v2962 = vld [vmem:[%s1] sm:$0xf]
      %2963 = vrot.lane.b32.xlu0 %v2159, 30
      %v2964 = vpop.permute.xlu0 %2963
      %2965 = vrot.lane.b32.xlu0 %v2192, 30
      %v2966 = vpop.permute.xlu0 %2965
      %v2967 = vsel %vm2926, %v2964, %v2966
      %v2968 = vsel %vm2926, %v2966, %v2964
      %v2969 = vmul.f32 %v2968, %v2935
      %v2970 = vmul.f32 %v2967, %v2939
      %2972 = vset.pattern.permute.xlu0 82
      %2973 = vperm.xlu0 %2972, %v2962
      %v2974 = vpop.permute.xlu0 %2973
      %v2977 = vunpack.c.l.s4 839922192
      %v2978 = vunpack.c.0.s8 %v2977
      %v2979 = vlaneseq
      %v2980 = vshrl.u32 %v2979, 7
      %v2981 = vsub.s32 %v2978, %v2980
      %v2982 = vrot.slane %v2974, %v2981
      %v2985 = vcombine.low %v2969, %v2970
      %v2987 = vmul.f32 %v2982, %v2985
      %v2988 = vadd.f32 %v2961, %v2987
      %v2989 = vld [vmem:[%s1] sm:$0xf]
      %2990 = vrot.lane.b32.xlu0 %v2135, 2
      %v2991 = vpop.permute.xlu0 %2990
      %2992 = vrot.lane.b32.xlu0 %v2162, 2
      %v2993 = vpop.permute.xlu0 %2992
      %vm2994 = vcmp.lt.s32.totalorder %v180, 2
      %v2995 = vsel %vm2994, %v2991, %v2993
      %v2996 = vsel %vm2994, %v2993, %v2991
      %s2997 = scalar_lea.vmem %s2, 19
      %v2998 = vld [vmem:[%s2997] ss:$8 sm:$0x3]
      %v3000 = vlaneseq
      %v3001 = vshrl.u32 %v3000, 7
      %v3002 = vsub.s32 0, %v3001
      %v3003 = vrot.slane %v2998, %v3002
      %v3004 = vlaneseq
      %v3005 = vshrl.u32 %v3004, 7
      %v3006 = vsub.s32 1, %v3005
      %v3007 = vrot.slane %v2998, %v3006
      %v3010 = vmul.f32 %v2996, %v3003
      %v3011 = vmul.f32 %v2995, %v3007
      %3013 = vset.pattern.permute.xlu0 83
      %3014 = vperm.xlu0 %3013, %v2989
      %v3015 = vpop.permute.xlu0 %3014
      %v3018 = vunpack.c.l.s4 839922192
      %v3019 = vunpack.c.0.s8 %v3018
      %v3020 = vlaneseq
      %v3021 = vshrl.u32 %v3020, 7
      %v3022 = vsub.s32 %v3019, %v3021
      %v3023 = vrot.slane %v3015, %v3022
      %v3026 = vcombine.low %v3010, %v3011
      %v3028 = vmul.f32 %v3023, %v3026
      %v3029 = vadd.f32 %v2988, %v3028
      %v3030 = vld [vmem:[%s1] sm:$0xf]
      %3031 = vrot.lane.b32.xlu0 %v2159, 2
      %v3032 = vpop.permute.xlu0 %3031
      %3033 = vrot.lane.b32.xlu0 %v2192, 2
      %v3034 = vpop.permute.xlu0 %3033
      %v3035 = vsel %vm2994, %v3032, %v3034
      %v3036 = vsel %vm2994, %v3034, %v3032
      %v3037 = vmul.f32 %v3036, %v3003
      %v3038 = vmul.f32 %v3035, %v3007
      %3040 = vset.pattern.permute.xlu0 84
      %3041 = vperm.xlu0 %3040, %v3030
      %v3042 = vpop.permute.xlu0 %3041
      %v3045 = vunpack.c.l.s4 839922192
      %v3046 = vunpack.c.0.s8 %v3045
      %v3047 = vlaneseq
      %v3048 = vshrl.u32 %v3047, 7
      %v3049 = vsub.s32 %v3046, %v3048
      %v3050 = vrot.slane %v3042, %v3049
      %v3053 = vcombine.low %v3037, %v3038
      %v3055 = vmul.f32 %v3050, %v3053
      %v3056 = vadd.f32 %v3029, %v3055
      %v3057 = vld [vmem:[%s1] sm:$0xf]
      %3059 = vset.pattern.permute.xlu0 85
      %3060 = vperm.xlu0 %3059, %v3057
      %v3061 = vpop.permute.xlu0 %3060
      %v3064 = vunpack.c.l.s4 839922192
      %v3065 = vunpack.c.0.s8 %v3064
      %v3066 = vlaneseq
      %v3067 = vshrl.u32 %v3066, 7
      %v3068 = vsub.s32 %v3065, %v3067
      %v3069 = vrot.slane %v3061, %v3068
      %v3070 = vmul.f32 %v3069, %v2135
      %v3071 = vadd.f32 %v3056, %v3070
      %3072 = vset.pattern.permute.xlu0 86
      %3073 = vperm.xlu0 %3072, %v3057
      %v3074 = vpop.permute.xlu0 %3073
      %v3077 = vunpack.c.l.s4 839922192
      %v3078 = vunpack.c.0.s8 %v3077
      %v3079 = vlaneseq
      %v3080 = vshrl.u32 %v3079, 7
      %v3081 = vsub.s32 %v3078, %v3080
      %v3082 = vrot.slane %v3074, %v3081
      %v3083 = vmul.f32 %v3082, %v2159
      %v3084 = vadd.f32 %v3071, %v3083
      %3085 = vrot.lane.b32.xlu0 %v2135, 126
      %v3086 = vpop.permute.xlu0 %3085
      %3087 = vrot.lane.b32.xlu0 %v2162, 126
      %v3088 = vpop.permute.xlu0 %3087
      %vm3089 = vcmp.lt.s32.totalorder %v180, 126
      %v3090 = vsel %vm3089, %v3086, %v3088
      %v3091 = vsel %vm3089, %v3088, %v3086
      %s3092 = scalar_lea.vmem %s2, 20
      %v3093 = vld [vmem:[%s3092] ss:$8 sm:$0x3]
      %v3095 = vlaneseq
      %v3096 = vshrl.u32 %v3095, 7
      %v3097 = vsub.s32 0, %v3096
      %v3098 = vrot.slane %v3093, %v3097
      %v3099 = vlaneseq
      %v3100 = vshrl.u32 %v3099, 7
      %v3101 = vsub.s32 1, %v3100
      %v3102 = vrot.slane %v3093, %v3101
      %v3105 = vmul.f32 %v3090, %v3098
      %v3106 = vmul.f32 %v3091, %v3102
      %3107 = vset.pattern.permute.xlu0 87
      %3108 = vperm.xlu0 %3107, %v3057
      %v3109 = vpop.permute.xlu0 %3108
      %v3112 = vunpack.c.l.s4 839922192
      %v3113 = vunpack.c.0.s8 %v3112
      %v3114 = vlaneseq
      %v3115 = vshrl.u32 %v3114, 7
      %v3116 = vsub.s32 %v3113, %v3115
      %v3117 = vrot.slane %v3109, %v3116
      %v3120 = vcombine.low %v3105, %v3106
      %v3122 = vmul.f32 %v3117, %v3120
      %v3123 = vadd.f32 %v3084, %v3122
      %v3124 = vld [vmem:[%s1] sm:$0xf]
      %3125 = vrot.lane.b32.xlu0 %v2159, 126
      %v3126 = vpop.permute.xlu0 %3125
      %3127 = vrot.lane.b32.xlu0 %v2192, 126
      %v3128 = vpop.permute.xlu0 %3127
      %v3129 = vsel %vm3089, %v3126, %v3128
      %v3130 = vsel %vm3089, %v3128, %v3126
      %v3131 = vmul.f32 %v3129, %v3098
      %v3132 = vmul.f32 %v3130, %v3102
      %3134 = vset.pattern.permute.xlu0 88
      %3135 = vperm.xlu0 %3134, %v3124
      %v3136 = vpop.permute.xlu0 %3135
      %v3139 = vunpack.c.l.s4 839922192
      %v3140 = vunpack.c.0.s8 %v3139
      %v3141 = vlaneseq
      %v3142 = vshrl.u32 %v3141, 7
      %v3143 = vsub.s32 %v3140, %v3142
      %v3144 = vrot.slane %v3136, %v3143
      %v3147 = vcombine.low %v3131, %v3132
      %v3149 = vmul.f32 %v3144, %v3147
      %v3150 = vadd.f32 %v3123, %v3149
      %v3151 = vld [vmem:[%s1] sm:$0xf]
      %3152 = vrot.lane.b32.xlu0 %v2135, 98
      %v3153 = vpop.permute.xlu0 %3152
      %3154 = vrot.lane.b32.xlu0 %v2162, 98
      %v3155 = vpop.permute.xlu0 %3154
      %vm3156 = vcmp.lt.s32.totalorder %v180, 98
      %v3157 = vsel %vm3156, %v3153, %v3155
      %v3158 = vsel %vm3156, %v3155, %v3153
      %s3159 = scalar_lea.vmem %s2, 21
      %v3160 = vld [vmem:[%s3159] ss:$8 sm:$0x3]
      %v3162 = vlaneseq
      %v3163 = vshrl.u32 %v3162, 7
      %v3164 = vsub.s32 0, %v3163
      %v3165 = vrot.slane %v3160, %v3164
      %v3166 = vlaneseq
      %v3167 = vshrl.u32 %v3166, 7
      %v3168 = vsub.s32 1, %v3167
      %v3169 = vrot.slane %v3160, %v3168
      %v3172 = vmul.f32 %v3157, %v3165
      %v3173 = vmul.f32 %v3158, %v3169
      %3175 = vset.pattern.permute.xlu0 89
      %3176 = vperm.xlu0 %3175, %v3151
      %v3177 = vpop.permute.xlu0 %3176
      %v3180 = vunpack.c.l.s4 839922192
      %v3181 = vunpack.c.0.s8 %v3180
      %v3182 = vlaneseq
      %v3183 = vshrl.u32 %v3182, 7
      %v3184 = vsub.s32 %v3181, %v3183
      %v3185 = vrot.slane %v3177, %v3184
      %v3188 = vcombine.low %v3172, %v3173
      %v3190 = vmul.f32 %v3185, %v3188
      %v3191 = vadd.f32 %v3150, %v3190
      %v3192 = vld [vmem:[%s1] sm:$0xf]
      %3193 = vrot.lane.b32.xlu0 %v2159, 98
      %v3194 = vpop.permute.xlu0 %3193
      %3195 = vrot.lane.b32.xlu0 %v2192, 98
      %v3196 = vpop.permute.xlu0 %3195
      %v3197 = vsel %vm3156, %v3194, %v3196
      %v3198 = vsel %vm3156, %v3196, %v3194
      %v3199 = vmul.f32 %v3197, %v3165
      %v3200 = vmul.f32 %v3198, %v3169
      %3202 = vset.pattern.permute.xlu0 90
      %3203 = vperm.xlu0 %3202, %v3192
      %v3204 = vpop.permute.xlu0 %3203
      %v3207 = vunpack.c.l.s4 839922192
      %v3208 = vunpack.c.0.s8 %v3207
      %v3209 = vlaneseq
      %v3210 = vshrl.u32 %v3209, 7
      %v3211 = vsub.s32 %v3208, %v3210
      %v3212 = vrot.slane %v3204, %v3211
      %v3215 = vcombine.low %v3199, %v3200
      %v3217 = vmul.f32 %v3212, %v3215
      %v3218 = vadd.f32 %v3191, %v3217
      %v3219 = vld [vmem:[%s1] sm:$0xf]
      %3220 = vrot.lane.b32.xlu0 %v2135, 96
      %v3221 = vpop.permute.xlu0 %3220
      %3222 = vrot.lane.b32.xlu0 %v2162, 96
      %v3223 = vpop.permute.xlu0 %3222
      %vm3224 = vcmp.lt.s32.totalorder %v180, 96
      %v3225 = vsel %vm3224, %v3221, %v3223
      %v3226 = vsel %vm3224, %v3223, %v3221
      %s3227 = scalar_lea.vmem %s2, 22
      %v3228 = vld [vmem:[%s3227] ss:$8 sm:$0x3]
      %v3230 = vlaneseq
      %v3231 = vshrl.u32 %v3230, 7
      %v3232 = vsub.s32 0, %v3231
      %v3233 = vrot.slane %v3228, %v3232
      %v3234 = vlaneseq
      %v3235 = vshrl.u32 %v3234, 7
      %v3236 = vsub.s32 1, %v3235
      %v3237 = vrot.slane %v3228, %v3236
      %v3240 = vmul.f32 %v3225, %v3233
      %v3241 = vmul.f32 %v3226, %v3237
      %3243 = vset.pattern.permute.xlu0 91
      %3244 = vperm.xlu0 %3243, %v3219
      %v3245 = vpop.permute.xlu0 %3244
      %v3248 = vunpack.c.l.s4 839922192
      %v3249 = vunpack.c.0.s8 %v3248
      %v3250 = vlaneseq
      %v3251 = vshrl.u32 %v3250, 7
      %v3252 = vsub.s32 %v3249, %v3251
      %v3253 = vrot.slane %v3245, %v3252
      %v3256 = vcombine.low %v3240, %v3241
      %v3258 = vmul.f32 %v3253, %v3256
      %v3259 = vadd.f32 %v3218, %v3258
      %v3260 = vld [vmem:[%s1] sm:$0xf]
      %3261 = vrot.lane.b32.xlu0 %v2159, 96
      %v3262 = vpop.permute.xlu0 %3261
      %3263 = vrot.lane.b32.xlu0 %v2192, 96
      %v3264 = vpop.permute.xlu0 %3263
      %v3265 = vsel %vm3224, %v3262, %v3264
      %v3266 = vsel %vm3224, %v3264, %v3262
      %v3267 = vmul.f32 %v3265, %v3233
      %v3268 = vmul.f32 %v3266, %v3237
      %3270 = vset.pattern.permute.xlu0 92
      %3271 = vperm.xlu0 %3270, %v3260
      %v3272 = vpop.permute.xlu0 %3271
      %v3275 = vunpack.c.l.s4 839922192
      %v3276 = vunpack.c.0.s8 %v3275
      %v3277 = vlaneseq
      %v3278 = vshrl.u32 %v3277, 7
      %v3279 = vsub.s32 %v3276, %v3278
      %v3280 = vrot.slane %v3272, %v3279
      %v3283 = vcombine.low %v3267, %v3268
      %v3285 = vmul.f32 %v3280, %v3283
      %v3286 = vadd.f32 %v3259, %v3285
      %v3287 = vld [vmem:[%s1] sm:$0xf]
      %3288 = vrot.lane.b32.xlu0 %v2135, 94
      %v3289 = vpop.permute.xlu0 %3288
      %3290 = vrot.lane.b32.xlu0 %v2162, 94
      %v3291 = vpop.permute.xlu0 %3290
      %vm3292 = vcmp.lt.s32.totalorder %v180, 94
      %v3293 = vsel %vm3292, %v3289, %v3291
      %v3294 = vsel %vm3292, %v3291, %v3289
      %s3295 = scalar_lea.vmem %s2, 23
      %v3296 = vld [vmem:[%s3295] ss:$8 sm:$0x3]
      %v3298 = vlaneseq
      %v3299 = vshrl.u32 %v3298, 7
      %v3300 = vsub.s32 0, %v3299
      %v3301 = vrot.slane %v3296, %v3300
      %v3302 = vlaneseq
      %v3303 = vshrl.u32 %v3302, 7
      %v3304 = vsub.s32 1, %v3303
      %v3305 = vrot.slane %v3296, %v3304
      %v3308 = vmul.f32 %v3293, %v3301
      %v3309 = vmul.f32 %v3294, %v3305
      %3311 = vset.pattern.permute.xlu0 93
      %3312 = vperm.xlu0 %3311, %v3287
      %v3313 = vpop.permute.xlu0 %3312
      %v3316 = vunpack.c.l.s4 839922192
      %v3317 = vunpack.c.0.s8 %v3316
      %v3318 = vlaneseq
      %v3319 = vshrl.u32 %v3318, 7
      %v3320 = vsub.s32 %v3317, %v3319
      %v3321 = vrot.slane %v3313, %v3320
      %v3324 = vcombine.low %v3308, %v3309
      %v3326 = vmul.f32 %v3321, %v3324
      %v3327 = vadd.f32 %v3286, %v3326
      %v3328 = vld [vmem:[%s1] sm:$0xf]
      %3329 = vrot.lane.b32.xlu0 %v2159, 94
      %v3330 = vpop.permute.xlu0 %3329
      %3331 = vrot.lane.b32.xlu0 %v2192, 94
      %v3332 = vpop.permute.xlu0 %3331
      %v3333 = vsel %vm3292, %v3330, %v3332
      %v3334 = vsel %vm3292, %v3332, %v3330
      %v3335 = vmul.f32 %v3333, %v3301
      %v3336 = vmul.f32 %v3334, %v3305
      %3338 = vset.pattern.permute.xlu0 94
      %3339 = vperm.xlu0 %3338, %v3328
      %v3340 = vpop.permute.xlu0 %3339
      %v3343 = vunpack.c.l.s4 839922192
      %v3344 = vunpack.c.0.s8 %v3343
      %v3345 = vlaneseq
      %v3346 = vshrl.u32 %v3345, 7
      %v3347 = vsub.s32 %v3344, %v3346
      %v3348 = vrot.slane %v3340, %v3347
      %v3351 = vcombine.low %v3335, %v3336
      %v3353 = vmul.f32 %v3348, %v3351
      %v3354 = vadd.f32 %v3327, %v3353
      %v3355 = vld [vmem:[%s1] sm:$0xf]
      %3357 = vset.pattern.permute.xlu0 95
      %3358 = vperm.xlu0 %3357, %v3355
      %v3359 = vpop.permute.xlu0 %3358
      %v3362 = vunpack.c.l.s4 839922192
      %v3363 = vunpack.c.0.s8 %v3362
      %v3364 = vlaneseq
      %v3365 = vshrl.u32 %v3364, 7
      %v3366 = vsub.s32 %v3363, %v3365
      %v3367 = vrot.slane %v3359, %v3366
      %v3368 = vadd.f32 %v3354, %v3367
      %v3369 = vld [vmem:[%s1 + $0x4] sm:$0xf]
      %3371 = vset.pattern.permute.xlu0 0
      %3372 = vperm.xlu0 %3371, %v3369
      %v3373 = vpop.permute.xlu0 %3372
      %v3376 = vunpack.c.l.s4 839922192
      %v3377 = vunpack.c.0.s8 %v3376
      %v3378 = vlaneseq
      %v3379 = vshrl.u32 %v3378, 7
      %v3380 = vsub.s32 %v3377, %v3379
      %v3381 = vrot.slane %v3373, %v3380
      %v3383 = vlaneseq
      %v3384 = vshrl.u32 %v3383, 7
      %v3385 = vsub.s32 0, %v3384
      %v3386 = vrot.slane %v3368, %v3385
      %v3387 = vlaneseq
      %v3388 = vshrl.u32 %v3387, 7
      %v3389 = vsub.s32 4, %v3388
      %v3390 = vrot.slane %v3368, %v3389
      %v3393 = vlaneseq
      %v3394 = vshrl.u32 %v3393, 7
      %v3395 = vsub.s32 0, %v3394
      %v3396 = vrot.slane %v3386, %v3395
      %v3397 = vlaneseq
      %v3398 = vshrl.u32 %v3397, 7
      %v3399 = vsub.s32 0, %v3398
      %v3400 = vrot.slane %v3390, %v3399
      %v3403 = vcombine.low %v3396, %v3400
      %v3405 = vmul.f32 %v3381, %v3403
      %v3406 = vadd.f32 %v2784, %v3405
      %v3407 = vld [vmem:[%s1 + $0x4] sm:$0xf]
      %3409 = vset.pattern.permute.xlu0 1
      %3410 = vperm.xlu0 %3409, %v3407
      %v3411 = vpop.permute.xlu0 %3410
      %v3414 = vunpack.c.l.s4 839922192
      %v3415 = vunpack.c.0.s8 %v3414
      %v3416 = vlaneseq
      %v3417 = vshrl.u32 %v3416, 7
      %v3418 = vsub.s32 %v3415, %v3417
      %v3419 = vrot.slane %v3411, %v3418
      %v3420 = vlaneseq
      %v3421 = vshrl.u32 %v3420, 7
      %v3422 = vsub.s32 1, %v3421
      %v3423 = vrot.slane %v3368, %v3422
      %v3424 = vlaneseq
      %v3425 = vshrl.u32 %v3424, 7
      %v3426 = vsub.s32 5, %v3425
      %v3427 = vrot.slane %v3368, %v3426
      %v3430 = vlaneseq
      %v3431 = vshrl.u32 %v3430, 7
      %v3432 = vsub.s32 1, %v3431
      %v3433 = vrot.slane %v3423, %v3432
      %v3434 = vlaneseq
      %v3435 = vshrl.u32 %v3434, 7
      %v3436 = vsub.s32 1, %v3435
      %v3437 = vrot.slane %v3427, %v3436
      %v3440 = vcombine.low %v3433, %v3437
      %v3442 = vmul.f32 %v3419, %v3440
      %v3443 = vadd.f32 %v3406, %v3442
      %v3444 = vld [vmem:[%s1 + $0x4] sm:$0xf]
      %3446 = vset.pattern.permute.xlu0 2
      %3447 = vperm.xlu0 %3446, %v3444
      %v3448 = vpop.permute.xlu0 %3447
      %v3451 = vunpack.c.l.s4 839922192
      %v3452 = vunpack.c.0.s8 %v3451
      %v3453 = vlaneseq
      %v3454 = vshrl.u32 %v3453, 7
      %v3455 = vsub.s32 %v3452, %v3454
      %v3456 = vrot.slane %v3448, %v3455
      %v3457 = vlaneseq
      %v3458 = vshrl.u32 %v3457, 7
      %v3459 = vsub.s32 2, %v3458
      %v3460 = vrot.slane %v3368, %v3459
      %v3461 = vlaneseq
      %v3462 = vshrl.u32 %v3461, 7
      %v3463 = vsub.s32 6, %v3462
      %v3464 = vrot.slane %v3368, %v3463
      %v3467 = vlaneseq
      %v3468 = vshrl.u32 %v3467, 7
      %v3469 = vsub.s32 2, %v3468
      %v3470 = vrot.slane %v3460, %v3469
      %v3471 = vlaneseq
      %v3472 = vshrl.u32 %v3471, 7
      %v3473 = vsub.s32 2, %v3472
      %v3474 = vrot.slane %v3464, %v3473
      %v3477 = vcombine.low %v3470, %v3474
      %v3479 = vmul.f32 %v3456, %v3477
      %v3480 = vadd.f32 %v3443, %v3479
      %v3481 = vld [vmem:[%s1 + $0x4] sm:$0xf]
      %3483 = vset.pattern.permute.xlu0 3
      %3484 = vperm.xlu0 %3483, %v3481
      %v3485 = vpop.permute.xlu0 %3484
      %v3488 = vunpack.c.l.s4 839922192
      %v3489 = vunpack.c.0.s8 %v3488
      %v3490 = vlaneseq
      %v3491 = vshrl.u32 %v3490, 7
      %v3492 = vsub.s32 %v3489, %v3491
      %v3493 = vrot.slane %v3485, %v3492
      %v3494 = vlaneseq
      %v3495 = vshrl.u32 %v3494, 7
      %v3496 = vsub.s32 3, %v3495
      %v3497 = vrot.slane %v3368, %v3496
      %v3498 = vlaneseq
      %v3499 = vshrl.u32 %v3498, 7
      %v3500 = vsub.s32 7, %v3499
      %v3501 = vrot.slane %v3368, %v3500
      %v3504 = vlaneseq
      %v3505 = vshrl.u32 %v3504, 7
      %v3506 = vsub.s32 3, %v3505
      %v3507 = vrot.slane %v3497, %v3506
      %v3508 = vlaneseq
      %v3509 = vshrl.u32 %v3508, 7
      %v3510 = vsub.s32 3, %v3509
      %v3511 = vrot.slane %v3501, %v3510
      %v3514 = vcombine.low %v3507, %v3511
      %v3516 = vmul.f32 %v3493, %v3514
      %v3517 = vadd.f32 %v3480, %v3516
      %v3518 = vld [vmem:[%s1] sm:$0xf]
      %3519 = vrot.lane.b32.xlu0 %v2135, 51
      %v3520 = vpop.permute.xlu0 %3519
      %3521 = vrot.lane.b32.xlu0 %v2162, 51
      %v3522 = vpop.permute.xlu0 %3521
      %vm3523 = vcmp.lt.s32.totalorder %v180, 51
      %v3524 = vsel %vm3523, %v3520, %v3522
      %v3525 = vsel %vm3523, %v3522, %v3520
      %s3526 = scalar_lea.vmem %s2, 32
      %v3527 = vld [vmem:[%s3526] ss:$8 sm:$0x3]
      %v3529 = vlaneseq
      %v3530 = vshrl.u32 %v3529, 7
      %v3531 = vsub.s32 0, %v3530
      %v3532 = vrot.slane %v3527, %v3531
      %v3533 = vlaneseq
      %v3534 = vshrl.u32 %v3533, 7
      %v3535 = vsub.s32 1, %v3534
      %v3536 = vrot.slane %v3527, %v3535
      %v3539 = vmul.f32 %v3525, %v3532
      %v3540 = vmul.f32 %v3524, %v3536
      %3542 = vset.pattern.permute.xlu0 96
      %3543 = vperm.xlu0 %3542, %v3518
      %v3544 = vpop.permute.xlu0 %3543
      %v3547 = vunpack.c.l.s4 839922192
      %v3548 = vunpack.c.0.s8 %v3547
      %v3549 = vlaneseq
      %v3550 = vshrl.u32 %v3549, 7
      %v3551 = vsub.s32 %v3548, %v3550
      %v3552 = vrot.slane %v3544, %v3551
      %v3555 = vcombine.low %v3539, %v3540
      %v3557 = vmul.f32 %v3552, %v3555
      %v3558 = vadd.f32 %v3557, 0.0
      %v3559 = vld [vmem:[%s1] sm:$0xf]
      %3560 = vrot.lane.b32.xlu0 %v2159, 51
      %v3561 = vpop.permute.xlu0 %3560
      %3562 = vrot.lane.b32.xlu0 %v2192, 51
      %v3563 = vpop.permute.xlu0 %3562
      %v3564 = vsel %vm3523, %v3561, %v3563
      %v3565 = vsel %vm3523, %v3563, %v3561
      %v3566 = vmul.f32 %v3565, %v3532
      %v3567 = vmul.f32 %v3564, %v3536
      %3569 = vset.pattern.permute.xlu0 97
      %3570 = vperm.xlu0 %3569, %v3559
      %v3571 = vpop.permute.xlu0 %3570
      %v3574 = vunpack.c.l.s4 839922192
      %v3575 = vunpack.c.0.s8 %v3574
      %v3576 = vlaneseq
      %v3577 = vshrl.u32 %v3576, 7
      %v3578 = vsub.s32 %v3575, %v3577
      %v3579 = vrot.slane %v3571, %v3578
      %v3582 = vcombine.low %v3566, %v3567
      %v3584 = vmul.f32 %v3579, %v3582
      %v3585 = vadd.f32 %v3558, %v3584
      %v3586 = vld [vmem:[%s1] sm:$0xf]
      %3587 = vrot.lane.b32.xlu0 %v2135, 48
      %v3588 = vpop.permute.xlu0 %3587
      %3589 = vrot.lane.b32.xlu0 %v2162, 48
      %v3590 = vpop.permute.xlu0 %3589
      %vm3591 = vcmp.lt.s32.totalorder %v180, 48
      %v3592 = vsel %vm3591, %v3588, %v3590
      %v3593 = vsel %vm3591, %v3590, %v3588
      %s3594 = scalar_lea.vmem %s2, 33
      %v3595 = vld [vmem:[%s3594] ss:$8 sm:$0x3]
      %v3597 = vlaneseq
      %v3598 = vshrl.u32 %v3597, 7
      %v3599 = vsub.s32 0, %v3598
      %v3600 = vrot.slane %v3595, %v3599
      %v3601 = vlaneseq
      %v3602 = vshrl.u32 %v3601, 7
      %v3603 = vsub.s32 1, %v3602
      %v3604 = vrot.slane %v3595, %v3603
      %v3607 = vmul.f32 %v3593, %v3600
      %v3608 = vmul.f32 %v3592, %v3604
      %3610 = vset.pattern.permute.xlu0 98
      %3611 = vperm.xlu0 %3610, %v3586
      %v3612 = vpop.permute.xlu0 %3611
      %v3615 = vunpack.c.l.s4 839922192
      %v3616 = vunpack.c.0.s8 %v3615
      %v3617 = vlaneseq
      %v3618 = vshrl.u32 %v3617, 7
      %v3619 = vsub.s32 %v3616, %v3618
      %v3620 = vrot.slane %v3612, %v3619
      %v3623 = vcombine.low %v3607, %v3608
      %v3625 = vmul.f32 %v3620, %v3623
      %v3626 = vadd.f32 %v3585, %v3625
      %v3627 = vld [vmem:[%s1] sm:$0xf]
      %3628 = vrot.lane.b32.xlu0 %v2159, 48
      %v3629 = vpop.permute.xlu0 %3628
      %3630 = vrot.lane.b32.xlu0 %v2192, 48
      %v3631 = vpop.permute.xlu0 %3630
      %v3632 = vsel %vm3591, %v3629, %v3631
      %v3633 = vsel %vm3591, %v3631, %v3629
      %v3634 = vmul.f32 %v3633, %v3600
      %v3635 = vmul.f32 %v3632, %v3604
      %3637 = vset.pattern.permute.xlu0 99
      %3638 = vperm.xlu0 %3637, %v3627
      %v3639 = vpop.permute.xlu0 %3638
      %v3642 = vunpack.c.l.s4 839922192
      %v3643 = vunpack.c.0.s8 %v3642
      %v3644 = vlaneseq
      %v3645 = vshrl.u32 %v3644, 7
      %v3646 = vsub.s32 %v3643, %v3645
      %v3647 = vrot.slane %v3639, %v3646
      %v3650 = vcombine.low %v3634, %v3635
      %v3652 = vmul.f32 %v3647, %v3650
      %v3653 = vadd.f32 %v3626, %v3652
      %v3654 = vld [vmem:[%s1] sm:$0xf]
      %3655 = vrot.lane.b32.xlu0 %v2135, 45
      %v3656 = vpop.permute.xlu0 %3655
      %3657 = vrot.lane.b32.xlu0 %v2162, 45
      %v3658 = vpop.permute.xlu0 %3657
      %vm3659 = vcmp.lt.s32.totalorder %v180, 45
      %v3660 = vsel %vm3659, %v3656, %v3658
      %v3661 = vsel %vm3659, %v3658, %v3656
      %s3662 = scalar_lea.vmem %s2, 34
      %v3663 = vld [vmem:[%s3662] ss:$8 sm:$0x3]
      %v3665 = vlaneseq
      %v3666 = vshrl.u32 %v3665, 7
      %v3667 = vsub.s32 0, %v3666
      %v3668 = vrot.slane %v3663, %v3667
      %v3669 = vlaneseq
      %v3670 = vshrl.u32 %v3669, 7
      %v3671 = vsub.s32 1, %v3670
      %v3672 = vrot.slane %v3663, %v3671
      %v3675 = vmul.f32 %v3661, %v3668
      %v3676 = vmul.f32 %v3660, %v3672
      %3678 = vset.pattern.permute.xlu0 100
      %3679 = vperm.xlu0 %3678, %v3654
      %v3680 = vpop.permute.xlu0 %3679
      %v3683 = vunpack.c.l.s4 839922192
      %v3684 = vunpack.c.0.s8 %v3683
      %v3685 = vlaneseq
      %v3686 = vshrl.u32 %v3685, 7
      %v3687 = vsub.s32 %v3684, %v3686
      %v3688 = vrot.slane %v3680, %v3687
      %v3691 = vcombine.low %v3675, %v3676
      %v3693 = vmul.f32 %v3688, %v3691
      %v3694 = vadd.f32 %v3653, %v3693
      %v3695 = vld [vmem:[%s1] sm:$0xf]
      %3696 = vrot.lane.b32.xlu0 %v2159, 45
      %v3697 = vpop.permute.xlu0 %3696
      %3698 = vrot.lane.b32.xlu0 %v2192, 45
      %v3699 = vpop.permute.xlu0 %3698
      %v3700 = vsel %vm3659, %v3697, %v3699
      %v3701 = vsel %vm3659, %v3699, %v3697
      %v3702 = vmul.f32 %v3701, %v3668
      %v3703 = vmul.f32 %v3700, %v3672
      %3705 = vset.pattern.permute.xlu0 101
      %3706 = vperm.xlu0 %3705, %v3695
      %v3707 = vpop.permute.xlu0 %3706
      %v3710 = vunpack.c.l.s4 839922192
      %v3711 = vunpack.c.0.s8 %v3710
      %v3712 = vlaneseq
      %v3713 = vshrl.u32 %v3712, 7
      %v3714 = vsub.s32 %v3711, %v3713
      %v3715 = vrot.slane %v3707, %v3714
      %v3718 = vcombine.low %v3702, %v3703
      %v3720 = vmul.f32 %v3715, %v3718
      %v3721 = vadd.f32 %v3694, %v3720
      %v3722 = vld [vmem:[%s1] sm:$0xf]
      %3723 = vrot.lane.b32.xlu0 %v2135, 3
      %v3724 = vpop.permute.xlu0 %3723
      %3725 = vrot.lane.b32.xlu0 %v2162, 3
      %v3726 = vpop.permute.xlu0 %3725
      %vm3727 = vcmp.lt.s32.totalorder %v180, 3
      %v3728 = vsel %vm3727, %v3724, %v3726
      %v3729 = vsel %vm3727, %v3726, %v3724
      %s3730 = scalar_lea.vmem %s2, 35
      %v3731 = vld [vmem:[%s3730] ss:$8 sm:$0x3]
      %v3733 = vlaneseq
      %v3734 = vshrl.u32 %v3733, 7
      %v3735 = vsub.s32 0, %v3734
      %v3736 = vrot.slane %v3731, %v3735
      %v3737 = vlaneseq
      %v3738 = vshrl.u32 %v3737, 7
      %v3739 = vsub.s32 1, %v3738
      %v3740 = vrot.slane %v3731, %v3739
      %v3743 = vmul.f32 %v3729, %v3736
      %v3744 = vmul.f32 %v3728, %v3740
      %3746 = vset.pattern.permute.xlu0 102
      %3747 = vperm.xlu0 %3746, %v3722
      %v3748 = vpop.permute.xlu0 %3747
      %v3751 = vunpack.c.l.s4 839922192
      %v3752 = vunpack.c.0.s8 %v3751
      %v3753 = vlaneseq
      %v3754 = vshrl.u32 %v3753, 7
      %v3755 = vsub.s32 %v3752, %v3754
      %v3756 = vrot.slane %v3748, %v3755
      %v3759 = vcombine.low %v3743, %v3744
      %v3761 = vmul.f32 %v3756, %v3759
      %v3762 = vadd.f32 %v3721, %v3761
      %v3763 = vld [vmem:[%s1] sm:$0xf]
      %3764 = vrot.lane.b32.xlu0 %v2159, 3
      %v3765 = vpop.permute.xlu0 %3764
      %3766 = vrot.lane.b32.xlu0 %v2192, 3
      %v3767 = vpop.permute.xlu0 %3766
      %v3768 = vsel %vm3727, %v3765, %v3767
      %v3769 = vsel %vm3727, %v3767, %v3765
      %v3770 = vmul.f32 %v3769, %v3736
      %v3771 = vmul.f32 %v3768, %v3740
      %3773 = vset.pattern.permute.xlu0 103
      %3774 = vperm.xlu0 %3773, %v3763
      %v3775 = vpop.permute.xlu0 %3774
      %v3778 = vunpack.c.l.s4 839922192
      %v3779 = vunpack.c.0.s8 %v3778
      %v3780 = vlaneseq
      %v3781 = vshrl.u32 %v3780, 7
      %v3782 = vsub.s32 %v3779, %v3781
      %v3783 = vrot.slane %v3775, %v3782
      %v3786 = vcombine.low %v3770, %v3771
      %v3788 = vmul.f32 %v3783, %v3786
      %v3789 = vadd.f32 %v3762, %v3788
      %v3790 = vld [vmem:[%s1] sm:$0xf]
      %3792 = vset.pattern.permute.xlu0 104
      %3793 = vperm.xlu0 %3792, %v3790
      %v3794 = vpop.permute.xlu0 %3793
      %v3797 = vunpack.c.l.s4 839922192
      %v3798 = vunpack.c.0.s8 %v3797
      %v3799 = vlaneseq
      %v3800 = vshrl.u32 %v3799, 7
      %v3801 = vsub.s32 %v3798, %v3800
      %v3802 = vrot.slane %v3794, %v3801
      %v3803 = vmul.f32 %v3802, %v2135
      %v3804 = vadd.f32 %v3789, %v3803
      %3805 = vset.pattern.permute.xlu0 105
      %3806 = vperm.xlu0 %3805, %v3790
      %v3807 = vpop.permute.xlu0 %3806
      %v3810 = vunpack.c.l.s4 839922192
      %v3811 = vunpack.c.0.s8 %v3810
      %v3812 = vlaneseq
      %v3813 = vshrl.u32 %v3812, 7
      %v3814 = vsub.s32 %v3811, %v3813
      %v3815 = vrot.slane %v3807, %v3814
      %v3816 = vmul.f32 %v3815, %v2159
      %v3817 = vadd.f32 %v3804, %v3816
      %3818 = vrot.lane.b32.xlu0 %v2135, 125
      %v3819 = vpop.permute.xlu0 %3818
      %3820 = vrot.lane.b32.xlu0 %v2162, 125
      %v3821 = vpop.permute.xlu0 %3820
      %vm3822 = vcmp.lt.s32.totalorder %v180, 125
      %v3823 = vsel %vm3822, %v3819, %v3821
      %v3824 = vsel %vm3822, %v3821, %v3819
      %s3825 = scalar_lea.vmem %s2, 36
      %v3826 = vld [vmem:[%s3825] ss:$8 sm:$0x3]
      %v3828 = vlaneseq
      %v3829 = vshrl.u32 %v3828, 7
      %v3830 = vsub.s32 0, %v3829
      %v3831 = vrot.slane %v3826, %v3830
      %v3832 = vlaneseq
      %v3833 = vshrl.u32 %v3832, 7
      %v3834 = vsub.s32 1, %v3833
      %v3835 = vrot.slane %v3826, %v3834
      %v3838 = vmul.f32 %v3823, %v3831
      %v3839 = vmul.f32 %v3824, %v3835
      %3840 = vset.pattern.permute.xlu0 106
      %3841 = vperm.xlu0 %3840, %v3790
      %v3842 = vpop.permute.xlu0 %3841
      %v3845 = vunpack.c.l.s4 839922192
      %v3846 = vunpack.c.0.s8 %v3845
      %v3847 = vlaneseq
      %v3848 = vshrl.u32 %v3847, 7
      %v3849 = vsub.s32 %v3846, %v3848
      %v3850 = vrot.slane %v3842, %v3849
      %v3853 = vcombine.low %v3838, %v3839
      %v3855 = vmul.f32 %v3850, %v3853
      %v3856 = vadd.f32 %v3817, %v3855
      %v3857 = vld [vmem:[%s1] sm:$0xf]
      %3858 = vrot.lane.b32.xlu0 %v2159, 125
      %v3859 = vpop.permute.xlu0 %3858
      %3860 = vrot.lane.b32.xlu0 %v2192, 125
      %v3861 = vpop.permute.xlu0 %3860
      %v3862 = vsel %vm3822, %v3859, %v3861
      %v3863 = vsel %vm3822, %v3861, %v3859
      %v3864 = vmul.f32 %v3862, %v3831
      %v3865 = vmul.f32 %v3863, %v3835
      %3867 = vset.pattern.permute.xlu0 107
      %3868 = vperm.xlu0 %3867, %v3857
      %v3869 = vpop.permute.xlu0 %3868
      %v3872 = vunpack.c.l.s4 839922192
      %v3873 = vunpack.c.0.s8 %v3872
      %v3874 = vlaneseq
      %v3875 = vshrl.u32 %v3874, 7
      %v3876 = vsub.s32 %v3873, %v3875
      %v3877 = vrot.slane %v3869, %v3876
      %v3880 = vcombine.low %v3864, %v3865
      %v3882 = vmul.f32 %v3877, %v3880
      %v3883 = vadd.f32 %v3856, %v3882
      %v3884 = vld [vmem:[%s1] sm:$0xf]
      %3885 = vrot.lane.b32.xlu0 %v2135, 83
      %v3886 = vpop.permute.xlu0 %3885
      %3887 = vrot.lane.b32.xlu0 %v2162, 83
      %v3888 = vpop.permute.xlu0 %3887
      %vm3889 = vcmp.lt.s32.totalorder %v180, 83
      %v3890 = vsel %vm3889, %v3886, %v3888
      %v3891 = vsel %vm3889, %v3888, %v3886
      %s3892 = scalar_lea.vmem %s2, 37
      %v3893 = vld [vmem:[%s3892] ss:$8 sm:$0x3]
      %v3895 = vlaneseq
      %v3896 = vshrl.u32 %v3895, 7
      %v3897 = vsub.s32 0, %v3896
      %v3898 = vrot.slane %v3893, %v3897
      %v3899 = vlaneseq
      %v3900 = vshrl.u32 %v3899, 7
      %v3901 = vsub.s32 1, %v3900
      %v3902 = vrot.slane %v3893, %v3901
      %v3905 = vmul.f32 %v3890, %v3898
      %v3906 = vmul.f32 %v3891, %v3902
      %3908 = vset.pattern.permute.xlu0 108
      %3909 = vperm.xlu0 %3908, %v3884
      %v3910 = vpop.permute.xlu0 %3909
      %v3913 = vunpack.c.l.s4 839922192
      %v3914 = vunpack.c.0.s8 %v3913
      %v3915 = vlaneseq
      %v3916 = vshrl.u32 %v3915, 7
      %v3917 = vsub.s32 %v3914, %v3916
      %v3918 = vrot.slane %v3910, %v3917
      %v3921 = vcombine.low %v3905, %v3906
      %v3923 = vmul.f32 %v3918, %v3921
      %v3924 = vadd.f32 %v3883, %v3923
      %v3925 = vld [vmem:[%s1] sm:$0xf]
      %3926 = vrot.lane.b32.xlu0 %v2159, 83
      %v3927 = vpop.permute.xlu0 %3926
      %3928 = vrot.lane.b32.xlu0 %v2192, 83
      %v3929 = vpop.permute.xlu0 %3928
      %v3930 = vsel %vm3889, %v3927, %v3929
      %v3931 = vsel %vm3889, %v3929, %v3927
      %v3932 = vmul.f32 %v3930, %v3898
      %v3933 = vmul.f32 %v3931, %v3902
      %3935 = vset.pattern.permute.xlu0 109
      %3936 = vperm.xlu0 %3935, %v3925
      %v3937 = vpop.permute.xlu0 %3936
      %v3940 = vunpack.c.l.s4 839922192
      %v3941 = vunpack.c.0.s8 %v3940
      %v3942 = vlaneseq
      %v3943 = vshrl.u32 %v3942, 7
      %v3944 = vsub.s32 %v3941, %v3943
      %v3945 = vrot.slane %v3937, %v3944
      %v3948 = vcombine.low %v3932, %v3933
      %v3950 = vmul.f32 %v3945, %v3948
      %v3951 = vadd.f32 %v3924, %v3950
      %v3952 = vld [vmem:[%s1] sm:$0xf]
      %3953 = vrot.lane.b32.xlu0 %v2135, 80
      %v3954 = vpop.permute.xlu0 %3953
      %3955 = vrot.lane.b32.xlu0 %v2162, 80
      %v3956 = vpop.permute.xlu0 %3955
      %vm3957 = vcmp.lt.s32.totalorder %v180, 80
      %v3958 = vsel %vm3957, %v3954, %v3956
      %v3959 = vsel %vm3957, %v3956, %v3954
      %s3960 = scalar_lea.vmem %s2, 38
      %v3961 = vld [vmem:[%s3960] ss:$8 sm:$0x3]
      %v3963 = vlaneseq
      %v3964 = vshrl.u32 %v3963, 7
      %v3965 = vsub.s32 0, %v3964
      %v3966 = vrot.slane %v3961, %v3965
      %v3967 = vlaneseq
      %v3968 = vshrl.u32 %v3967, 7
      %v3969 = vsub.s32 1, %v3968
      %v3970 = vrot.slane %v3961, %v3969
      %v3973 = vmul.f32 %v3958, %v3966
      %v3974 = vmul.f32 %v3959, %v3970
      %3976 = vset.pattern.permute.xlu0 110
      %3977 = vperm.xlu0 %3976, %v3952
      %v3978 = vpop.permute.xlu0 %3977
      %v3981 = vunpack.c.l.s4 839922192
      %v3982 = vunpack.c.0.s8 %v3981
      %v3983 = vlaneseq
      %v3984 = vshrl.u32 %v3983, 7
      %v3985 = vsub.s32 %v3982, %v3984
      %v3986 = vrot.slane %v3978, %v3985
      %v3989 = vcombine.low %v3973, %v3974
      %v3991 = vmul.f32 %v3986, %v3989
      %v3992 = vadd.f32 %v3951, %v3991
      %v3993 = vld [vmem:[%s1] sm:$0xf]
      %3994 = vrot.lane.b32.xlu0 %v2159, 80
      %v3995 = vpop.permute.xlu0 %3994
      %3996 = vrot.lane.b32.xlu0 %v2192, 80
      %v3997 = vpop.permute.xlu0 %3996
      %v3998 = vsel %vm3957, %v3995, %v3997
      %v3999 = vsel %vm3957, %v3997, %v3995
      %v4000 = vmul.f32 %v3998, %v3966
      %v4001 = vmul.f32 %v3999, %v3970
      %4003 = vset.pattern.permute.xlu0 111
      %4004 = vperm.xlu0 %4003, %v3993
      %v4005 = vpop.permute.xlu0 %4004
      %v4008 = vunpack.c.l.s4 839922192
      %v4009 = vunpack.c.0.s8 %v4008
      %v4010 = vlaneseq
      %v4011 = vshrl.u32 %v4010, 7
      %v4012 = vsub.s32 %v4009, %v4011
      %v4013 = vrot.slane %v4005, %v4012
      %v4016 = vcombine.low %v4000, %v4001
      %v4018 = vmul.f32 %v4013, %v4016
      %v4019 = vadd.f32 %v3992, %v4018
      %v4020 = vld [vmem:[%s1] sm:$0xf]
      %4021 = vrot.lane.b32.xlu0 %v2135, 77
      %v4022 = vpop.permute.xlu0 %4021
      %4023 = vrot.lane.b32.xlu0 %v2162, 77
      %v4024 = vpop.permute.xlu0 %4023
      %vm4025 = vcmp.lt.s32.totalorder %v180, 77
      %v4026 = vsel %vm4025, %v4022, %v4024
      %v4027 = vsel %vm4025, %v4024, %v4022
      %s4028 = scalar_lea.vmem %s2, 39
      %v4029 = vld [vmem:[%s4028] ss:$8 sm:$0x3]
      %v4031 = vlaneseq
      %v4032 = vshrl.u32 %v4031, 7
      %v4033 = vsub.s32 0, %v4032
      %v4034 = vrot.slane %v4029, %v4033
      %v4035 = vlaneseq
      %v4036 = vshrl.u32 %v4035, 7
      %v4037 = vsub.s32 1, %v4036
      %v4038 = vrot.slane %v4029, %v4037
      %v4041 = vmul.f32 %v4026, %v4034
      %v4042 = vmul.f32 %v4027, %v4038
      %4044 = vset.pattern.permute.xlu0 112
      %4045 = vperm.xlu0 %4044, %v4020
      %v4046 = vpop.permute.xlu0 %4045
      %v4049 = vunpack.c.l.s4 839922192
      %v4050 = vunpack.c.0.s8 %v4049
      %v4051 = vlaneseq
      %v4052 = vshrl.u32 %v4051, 7
      %v4053 = vsub.s32 %v4050, %v4052
      %v4054 = vrot.slane %v4046, %v4053
      %v4057 = vcombine.low %v4041, %v4042
      %v4059 = vmul.f32 %v4054, %v4057
      %v4060 = vadd.f32 %v4019, %v4059
      %v4061 = vld [vmem:[%s1] sm:$0xf]
      %4062 = vrot.lane.b32.xlu0 %v2159, 77
      %v4063 = vpop.permute.xlu0 %4062
      %4064 = vrot.lane.b32.xlu0 %v2192, 77
      %v4065 = vpop.permute.xlu0 %4064
      %v4066 = vsel %vm4025, %v4063, %v4065
      %v4067 = vsel %vm4025, %v4065, %v4063
      %v4068 = vmul.f32 %v4066, %v4034
      %v4069 = vmul.f32 %v4067, %v4038
      %4071 = vset.pattern.permute.xlu0 113
      %4072 = vperm.xlu0 %4071, %v4061
      %v4073 = vpop.permute.xlu0 %4072
      %v4076 = vunpack.c.l.s4 839922192
      %v4077 = vunpack.c.0.s8 %v4076
      %v4078 = vlaneseq
      %v4079 = vshrl.u32 %v4078, 7
      %v4080 = vsub.s32 %v4077, %v4079
      %v4081 = vrot.slane %v4073, %v4080
      %v4084 = vcombine.low %v4068, %v4069
      %v4086 = vmul.f32 %v4081, %v4084
      %v4087 = vadd.f32 %v4060, %v4086
      %v4088 = vld [vmem:[%s1] sm:$0xf]
      %4090 = vset.pattern.permute.xlu0 114
      %4091 = vperm.xlu0 %4090, %v4088
      %v4092 = vpop.permute.xlu0 %4091
      %v4095 = vunpack.c.l.s4 839922192
      %v4096 = vunpack.c.0.s8 %v4095
      %v4097 = vlaneseq
      %v4098 = vshrl.u32 %v4097, 7
      %v4099 = vsub.s32 %v4096, %v4098
      %v4100 = vrot.slane %v4092, %v4099
      %v4101 = vadd.f32 %v4087, %v4100
      %v4102 = vld [vmem:[%s1 + $0x4] sm:$0xf]
      %4104 = vset.pattern.permute.xlu0 4
      %4105 = vperm.xlu0 %4104, %v4102
      %v4106 = vpop.permute.xlu0 %4105
      %v4109 = vunpack.c.l.s4 839922192
      %v4110 = vunpack.c.0.s8 %v4109
      %v4111 = vlaneseq
      %v4112 = vshrl.u32 %v4111, 7
      %v4113 = vsub.s32 %v4110, %v4112
      %v4114 = vrot.slane %v4106, %v4113
      %v4116 = vlaneseq
      %v4117 = vshrl.u32 %v4116, 7
      %v4118 = vsub.s32 0, %v4117
      %v4119 = vrot.slane %v4101, %v4118
      %v4120 = vlaneseq
      %v4121 = vshrl.u32 %v4120, 7
      %v4122 = vsub.s32 4, %v4121
      %v4123 = vrot.slane %v4101, %v4122
      %v4126 = vlaneseq
      %v4127 = vshrl.u32 %v4126, 7
      %v4128 = vsub.s32 0, %v4127
      %v4129 = vrot.slane %v4119, %v4128
      %v4130 = vlaneseq
      %v4131 = vshrl.u32 %v4130, 7
      %v4132 = vsub.s32 0, %v4131
      %v4133 = vrot.slane %v4123, %v4132
      %v4136 = vcombine.low %v4129, %v4133
      %v4138 = vmul.f32 %v4114, %v4136
      %v4139 = vadd.f32 %v3517, %v4138
      %v4140 = vld [vmem:[%s1 + $0x4] sm:$0xf]
      %4142 = vset.pattern.permute.xlu0 5
      %4143 = vperm.xlu0 %4142, %v4140
      %v4144 = vpop.permute.xlu0 %4143
      %v4147 = vunpack.c.l.s4 839922192
      %v4148 = vunpack.c.0.s8 %v4147
      %v4149 = vlaneseq
      %v4150 = vshrl.u32 %v4149, 7
      %v4151 = vsub.s32 %v4148, %v4150
      %v4152 = vrot.slane %v4144, %v4151
      %v4153 = vlaneseq
      %v4154 = vshrl.u32 %v4153, 7
      %v4155 = vsub.s32 1, %v4154
      %v4156 = vrot.slane %v4101, %v4155
      %v4157 = vlaneseq
      %v4158 = vshrl.u32 %v4157, 7
      %v4159 = vsub.s32 5, %v4158
      %v4160 = vrot.slane %v4101, %v4159
      %v4163 = vlaneseq
      %v4164 = vshrl.u32 %v4163, 7
      %v4165 = vsub.s32 1, %v4164
      %v4166 = vrot.slane %v4156, %v4165
      %v4167 = vlaneseq
      %v4168 = vshrl.u32 %v4167, 7
      %v4169 = vsub.s32 1, %v4168
      %v4170 = vrot.slane %v4160, %v4169
      %v4173 = vcombine.low %v4166, %v4170
      %v4175 = vmul.f32 %v4152, %v4173
      %v4176 = vadd.f32 %v4139, %v4175
      %v4177 = vld [vmem:[%s1 + $0x4] sm:$0xf]
      %4179 = vset.pattern.permute.xlu0 6
      %4180 = vperm.xlu0 %4179, %v4177
      %v4181 = vpop.permute.xlu0 %4180
      %v4184 = vunpack.c.l.s4 839922192
      %v4185 = vunpack.c.0.s8 %v4184
      %v4186 = vlaneseq
      %v4187 = vshrl.u32 %v4186, 7
      %v4188 = vsub.s32 %v4185, %v4187
      %v4189 = vrot.slane %v4181, %v4188
      %v4190 = vlaneseq
      %v4191 = vshrl.u32 %v4190, 7
      %v4192 = vsub.s32 2, %v4191
      %v4193 = vrot.slane %v4101, %v4192
      %v4194 = vlaneseq
      %v4195 = vshrl.u32 %v4194, 7
      %v4196 = vsub.s32 6, %v4195
      %v4197 = vrot.slane %v4101, %v4196
      %v4200 = vlaneseq
      %v4201 = vshrl.u32 %v4200, 7
      %v4202 = vsub.s32 2, %v4201
      %v4203 = vrot.slane %v4193, %v4202
      %v4204 = vlaneseq
      %v4205 = vshrl.u32 %v4204, 7
      %v4206 = vsub.s32 2, %v4205
      %v4207 = vrot.slane %v4197, %v4206
      %v4210 = vcombine.low %v4203, %v4207
      %v4212 = vmul.f32 %v4189, %v4210
      %v4213 = vadd.f32 %v4176, %v4212
      %v4214 = vld [vmem:[%s1 + $0x4] sm:$0xf]
      %4216 = vset.pattern.permute.xlu0 7
      %4217 = vperm.xlu0 %4216, %v4214
      %v4218 = vpop.permute.xlu0 %4217
      %v4221 = vunpack.c.l.s4 839922192
      %v4222 = vunpack.c.0.s8 %v4221
      %v4223 = vlaneseq
      %v4224 = vshrl.u32 %v4223, 7
      %v4225 = vsub.s32 %v4222, %v4224
      %v4226 = vrot.slane %v4218, %v4225
      %v4227 = vlaneseq
      %v4228 = vshrl.u32 %v4227, 7
      %v4229 = vsub.s32 3, %v4228
      %v4230 = vrot.slane %v4101, %v4229
      %v4231 = vlaneseq
      %v4232 = vshrl.u32 %v4231, 7
      %v4233 = vsub.s32 7, %v4232
      %v4234 = vrot.slane %v4101, %v4233
      %v4237 = vlaneseq
      %v4238 = vshrl.u32 %v4237, 7
      %v4239 = vsub.s32 3, %v4238
      %v4240 = vrot.slane %v4230, %v4239
      %v4241 = vlaneseq
      %v4242 = vshrl.u32 %v4241, 7
      %v4243 = vsub.s32 3, %v4242
      %v4244 = vrot.slane %v4234, %v4243
      %v4247 = vcombine.low %v4240, %v4244
      %v4249 = vmul.f32 %v4226, %v4247
      %v4250 = vadd.f32 %v4213, %v4249
      %v4251 = vld [vmem:[%s1] sm:$0xf]
      %4253 = vset.pattern.permute.xlu0 115
      %4254 = vperm.xlu0 %4253, %v4251
      %v4255 = vpop.permute.xlu0 %4254
      %v4258 = vunpack.c.l.s4 839922192
      %v4259 = vunpack.c.0.s8 %v4258
      %v4260 = vlaneseq
      %v4261 = vshrl.u32 %v4260, 7
      %v4262 = vsub.s32 %v4259, %v4261
      %v4263 = vrot.slane %v4255, %v4262
      %v4264 = vmul.f32 %v4263, %v729
      %v4265 = vadd.f32 %v4264, 0.0
      %v4266 = vld [vmem:[%s1] sm:$0xf]
      %4268 = vset.pattern.permute.xlu0 116
      %4269 = vperm.xlu0 %4268, %v4266
      %v4270 = vpop.permute.xlu0 %4269
      %v4273 = vunpack.c.l.s4 839922192
      %v4274 = vunpack.c.0.s8 %v4273
      %v4275 = vlaneseq
      %v4276 = vshrl.u32 %v4275, 7
      %v4277 = vsub.s32 %v4274, %v4276
      %v4278 = vrot.slane %v4270, %v4277
      %v4279 = vmul.f32 %v4278, %v766
      %v4280 = vadd.f32 %v4265, %v4279
      %v4281 = vld [vmem:[%s1] sm:$0xf]
      %4283 = vset.pattern.permute.xlu0 117
      %4284 = vperm.xlu0 %4283, %v4281
      %v4285 = vpop.permute.xlu0 %4284
      %v4288 = vunpack.c.l.s4 839922192
      %v4289 = vunpack.c.0.s8 %v4288
      %v4290 = vlaneseq
      %v4291 = vshrl.u32 %v4290, 7
      %v4292 = vsub.s32 %v4289, %v4291
      %v4293 = vrot.slane %v4285, %v4292
      %v4294 = vmul.f32 %v4293, %v803
      %v4295 = vadd.f32 %v4280, %v4294
      %v4296 = vld [vmem:[%s1] sm:$0xf]
      %4298 = vset.pattern.permute.xlu0 118
      %4299 = vperm.xlu0 %4298, %v4296
      %v4300 = vpop.permute.xlu0 %4299
      %v4303 = vunpack.c.l.s4 839922192
      %v4304 = vunpack.c.0.s8 %v4303
      %v4305 = vlaneseq
      %v4306 = vshrl.u32 %v4305, 7
      %v4307 = vsub.s32 %v4304, %v4306
      %v4308 = vrot.slane %v4300, %v4307
      %v4309 = vmul.f32 %v4308, %v840
      %v4310 = vadd.f32 %v4295, %v4309
      %v4311 = vld [vmem:[%s1] sm:$0xf]
      %4313 = vset.pattern.permute.xlu0 119
      %4314 = vperm.xlu0 %4313, %v4311
      %v4315 = vpop.permute.xlu0 %4314
      %v4318 = vunpack.c.l.s4 839922192
      %v4319 = vunpack.c.0.s8 %v4318
      %v4320 = vlaneseq
      %v4321 = vshrl.u32 %v4320, 7
      %v4322 = vsub.s32 %v4319, %v4321
      %v4323 = vrot.slane %v4315, %v4322
      %v4324 = vmul.f32 %v4323, %v2071
      %v4325 = vadd.f32 %v4310, %v4324
      %v4326 = vld [vmem:[%s1] sm:$0xf]
      %4328 = vset.pattern.permute.xlu0 120
      %4329 = vperm.xlu0 %4328, %v4326
      %v4330 = vpop.permute.xlu0 %4329
      %v4333 = vunpack.c.l.s4 839922192
      %v4334 = vunpack.c.0.s8 %v4333
      %v4335 = vlaneseq
      %v4336 = vshrl.u32 %v4335, 7
      %v4337 = vsub.s32 %v4334, %v4336
      %v4338 = vrot.slane %v4330, %v4337
      %v4339 = vmul.f32 %v4338, %v2095
      %v4340 = vadd.f32 %v4325, %v4339
      %v4341 = vld [vmem:[%s1] sm:$0xf]
      %4343 = vset.pattern.permute.xlu0 121
      %4344 = vperm.xlu0 %4343, %v4341
      %v4345 = vpop.permute.xlu0 %4344
      %v4348 = vunpack.c.l.s4 839922192
      %v4349 = vunpack.c.0.s8 %v4348
      %v4350 = vlaneseq
      %v4351 = vshrl.u32 %v4350, 7
      %v4352 = vsub.s32 %v4349, %v4351
      %v4353 = vrot.slane %v4345, %v4352
      %v4354 = vmul.f32 %v4353, %v2132
      %v4355 = vadd.f32 %v4340, %v4354
      %v4356 = vld [vmem:[%s1] sm:$0xf]
      %4358 = vset.pattern.permute.xlu0 122
      %4359 = vperm.xlu0 %4358, %v4356
      %v4360 = vpop.permute.xlu0 %4359
      %v4363 = vunpack.c.l.s4 839922192
      %v4364 = vunpack.c.0.s8 %v4363
      %v4365 = vlaneseq
      %v4366 = vshrl.u32 %v4365, 7
      %v4367 = vsub.s32 %v4364, %v4366
      %v4368 = vrot.slane %v4360, %v4367
      %v4369 = vmul.f32 %v4368, %v2156
      %v4370 = vadd.f32 %v4355, %v4369
      %v4371 = vld [vmem:[%s1] sm:$0xf]
      %4373 = vset.pattern.permute.xlu0 123
      %4374 = vperm.xlu0 %4373, %v4371
      %v4375 = vpop.permute.xlu0 %4374
      %v4378 = vunpack.c.l.s4 839922192
      %v4379 = vunpack.c.0.s8 %v4378
      %v4380 = vlaneseq
      %v4381 = vshrl.u32 %v4380, 7
      %v4382 = vsub.s32 %v4379, %v4381
      %v4383 = vrot.slane %v4375, %v4382
      %v4384 = vadd.f32 %v4370, %v4383
      %v4385 = vld [vmem:[%s1 + $0x4] sm:$0xf]
      %4387 = vset.pattern.permute.xlu0 8
      %4388 = vperm.xlu0 %4387, %v4385
      %v4389 = vpop.permute.xlu0 %4388
      %v4392 = vunpack.c.l.s4 839922192
      %v4393 = vunpack.c.0.s8 %v4392
      %v4394 = vlaneseq
      %v4395 = vshrl.u32 %v4394, 7
      %v4396 = vsub.s32 %v4393, %v4395
      %v4397 = vrot.slane %v4389, %v4396
      %v4399 = vlaneseq
      %v4400 = vshrl.u32 %v4399, 7
      %v4401 = vsub.s32 0, %v4400
      %v4402 = vrot.slane %v4384, %v4401
      %v4403 = vlaneseq
      %v4404 = vshrl.u32 %v4403, 7
      %v4405 = vsub.s32 4, %v4404
      %v4406 = vrot.slane %v4384, %v4405
      %v4409 = vlaneseq
      %v4410 = vshrl.u32 %v4409, 7
      %v4411 = vsub.s32 0, %v4410
      %v4412 = vrot.slane %v4402, %v4411
      %v4413 = vlaneseq
      %v4414 = vshrl.u32 %v4413, 7
      %v4415 = vsub.s32 0, %v4414
      %v4416 = vrot.slane %v4406, %v4415
      %v4419 = vcombine.low %v4412, %v4416
      %v4421 = vmul.f32 %v4397, %v4419
      %v4422 = vadd.f32 %v4250, %v4421
      %v4423 = vld [vmem:[%s1 + $0x4] sm:$0xf]
      %4425 = vset.pattern.permute.xlu0 9
      %4426 = vperm.xlu0 %4425, %v4423
      %v4427 = vpop.permute.xlu0 %4426
      %v4430 = vunpack.c.l.s4 839922192
      %v4431 = vunpack.c.0.s8 %v4430
      %v4432 = vlaneseq
      %v4433 = vshrl.u32 %v4432, 7
      %v4434 = vsub.s32 %v4431, %v4433
      %v4435 = vrot.slane %v4427, %v4434
      %v4436 = vlaneseq
      %v4437 = vshrl.u32 %v4436, 7
      %v4438 = vsub.s32 1, %v4437
      %v4439 = vrot.slane %v4384, %v4438
      %v4440 = vlaneseq
      %v4441 = vshrl.u32 %v4440, 7
      %v4442 = vsub.s32 5, %v4441
      %v4443 = vrot.slane %v4384, %v4442
      %v4446 = vlaneseq
      %v4447 = vshrl.u32 %v4446, 7
      %v4448 = vsub.s32 1, %v4447
      %v4449 = vrot.slane %v4439, %v4448
      %v4450 = vlaneseq
      %v4451 = vshrl.u32 %v4450, 7
      %v4452 = vsub.s32 1, %v4451
      %v4453 = vrot.slane %v4443, %v4452
      %v4456 = vcombine.low %v4449, %v4453
      %v4458 = vmul.f32 %v4435, %v4456
      %v4459 = vadd.f32 %v4422, %v4458
      %v4460 = vld [vmem:[%s1 + $0x4] sm:$0xf]
      %4462 = vset.pattern.permute.xlu0 10
      %4463 = vperm.xlu0 %4462, %v4460
      %v4464 = vpop.permute.xlu0 %4463
      %v4467 = vunpack.c.l.s4 839922192
      %v4468 = vunpack.c.0.s8 %v4467
      %v4469 = vlaneseq
      %v4470 = vshrl.u32 %v4469, 7
      %v4471 = vsub.s32 %v4468, %v4470
      %v4472 = vrot.slane %v4464, %v4471
      %v4473 = vlaneseq
      %v4474 = vshrl.u32 %v4473, 7
      %v4475 = vsub.s32 2, %v4474
      %v4476 = vrot.slane %v4384, %v4475
      %v4477 = vlaneseq
      %v4478 = vshrl.u32 %v4477, 7
      %v4479 = vsub.s32 6, %v4478
      %v4480 = vrot.slane %v4384, %v4479
      %v4483 = vlaneseq
      %v4484 = vshrl.u32 %v4483, 7
      %v4485 = vsub.s32 2, %v4484
      %v4486 = vrot.slane %v4476, %v4485
      %v4487 = vlaneseq
      %v4488 = vshrl.u32 %v4487, 7
      %v4489 = vsub.s32 2, %v4488
      %v4490 = vrot.slane %v4480, %v4489
      %v4493 = vcombine.low %v4486, %v4490
      %v4495 = vmul.f32 %v4472, %v4493
      %v4496 = vadd.f32 %v4459, %v4495
      %v4497 = vld [vmem:[%s1 + $0x4] sm:$0xf]
      %4499 = vset.pattern.permute.xlu0 11
      %4500 = vperm.xlu0 %4499, %v4497
      %v4501 = vpop.permute.xlu0 %4500
      %v4504 = vunpack.c.l.s4 839922192
      %v4505 = vunpack.c.0.s8 %v4504
      %v4506 = vlaneseq
      %v4507 = vshrl.u32 %v4506, 7
      %v4508 = vsub.s32 %v4505, %v4507
      %v4509 = vrot.slane %v4501, %v4508
      %v4510 = vlaneseq
      %v4511 = vshrl.u32 %v4510, 7
      %v4512 = vsub.s32 3, %v4511
      %v4513 = vrot.slane %v4384, %v4512
      %v4514 = vlaneseq
      %v4515 = vshrl.u32 %v4514, 7
      %v4516 = vsub.s32 7, %v4515
      %v4517 = vrot.slane %v4384, %v4516
      %v4520 = vlaneseq
      %v4521 = vshrl.u32 %v4520, 7
      %v4522 = vsub.s32 3, %v4521
      %v4523 = vrot.slane %v4513, %v4522
      %v4524 = vlaneseq
      %v4525 = vshrl.u32 %v4524, 7
      %v4526 = vsub.s32 3, %v4525
      %v4527 = vrot.slane %v4517, %v4526
      %v4530 = vcombine.low %v4523, %v4527
      %v4532 = vmul.f32 %v4509, %v4530
      %v4533 = vadd.f32 %v4496, %v4532
      %v4534 = vld [vmem:[%s1 + $0x4] sm:$0xf]
      %4536 = vset.pattern.permute.xlu0 12
      %4537 = vperm.xlu0 %4536, %v4534
      %v4538 = vpop.permute.xlu0 %4537
      %v4541 = vunpack.c.l.s4 839922192
      %v4542 = vunpack.c.0.s8 %v4541
      %v4543 = vlaneseq
      %v4544 = vshrl.u32 %v4543, 7
      %v4545 = vsub.s32 %v4542, %v4544
      %v4546 = vrot.slane %v4538, %v4545
      %v4547 = vmul.f32 %v4533, %v4546
      %4548 = vset.pattern.permute.xlu0 13
      %4549 = vperm.xlu0 %4548, %v4534
      %v4550 = vpop.permute.xlu0 %4549
      %v4553 = vunpack.c.l.s4 839922192
      %v4554 = vunpack.c.0.s8 %v4553
      %v4555 = vlaneseq
      %v4556 = vshrl.u32 %v4555, 7
      %v4557 = vsub.s32 %v4554, %v4556
      %v4558 = vrot.slane %v4550, %v4557
      %v4559 = vadd.f32 %v4547, %v4558
      %v4560 = vmax.f32 %v4559, 0.0
      %v4562 = vcombine.high %v4560, %v4560
      %vm4564 = vcmask 1043456
      %v4565 = vsel %vm4564, %v4560, 0.0
      %v4566 = vsel %vm4564, %v4562, 0.0
      %v4567 = vadd.f32 %v4565, %v4566
      %4568 = vadd.xlane.f32.xlu0 %v4567
      %v4569 = vpop.xlane.xlu0 %4568
      %v4570 = vrcp.pop 256.0
      %v4571 = vmul.f32 %v4569, %v4570
      %v4574 = vunpack.c.l.s4 839922192
      %v4575 = vunpack.c.0.s8 %v4574
      %v4576 = vlaneseq
      %v4577 = vshrl.u32 %v4576, 7
      %v4578 = vsub.s32 %v4575, %v4577
      %v4579 = vrot.slane %v4571, %v4578
      %v4581 = vsub.f32 %v4560, %v4579
      %v4582 = vmul.f32 %v4581, %v4581
      %v4584 = vcombine.high %v4582, %v4582
      %v4586 = vsel %vm4564, %v4582, 0.0
      %v4587 = vsel %vm4564, %v4584, 0.0
      %v4588 = vadd.f32 %v4586, %v4587
      %4589 = vadd.xlane.f32.xlu0 %v4588
      %v4590 = vpop.xlane.xlu0 %4589
      %v4591 = vmul.f32 %v4590, 0.003921569
      %v4592 = vadd.f32 %v4591, 0.0001
      %v4593 = vmul.f32 %v4592, 4.0
      %v4594 = vrcp.pop %v4593
      %v4595 = vmul.f32 1.0, %v4594
      %v4598 = vunpack.c.l.s4 839922192
      %v4599 = vunpack.c.0.s8 %v4598
      %v4600 = vlaneseq
      %v4601 = vshrl.u32 %v4600, 7
      %v4602 = vsub.s32 %v4599, %v4601
      %v4603 = vrot.slane %v4595, %v4602
      %v4605 = vmul.f32 %v4582, %v4603
      %v4606 = vadd.f32 %v4605, 0.5
      %v4607 = vxor.u32 %v4606, 2147483648
      %v4608 = vmul.f32 %v4607, 1.442695
      %v4609 = vpow.pop %v4608
      %v4610 = vadd.f32 %v4609, 1.0
      %v4611 = vrcp.pop %v4610
      %v4612 = vmul.f32 1.0, %v4611
      %v4613 = vmul.f32 %v4560, %v4612
      %v4614 = vadd.f32 %v4613, %v171
      %v4615 = vadd.f32 %v4614, %v2002
      %v4616 = vsel %vm4564, %v171, 0.0
      %v4617 = vsel %vm4564, %v173, 0.0
      %v4618 = vadd.f32 %v4616, %v4617
      %4619 = vadd.xlane.f32.xlu0 %v4618
      %v4620 = vpop.xlane.xlu0 %4619
      %v4621 = vmul.f32 %v4620, %v4570
      %v4624 = vunpack.c.l.s4 839922192
      %v4625 = vunpack.c.0.s8 %v4624
      %v4626 = vlaneseq
      %v4627 = vshrl.u32 %v4626, 7
      %v4628 = vsub.s32 %v4625, %v4627
      %v4629 = vrot.slane %v4621, %v4628
      %v4631 = vsub.f32 %v171, %v4629
      %v4632 = vmul.f32 %v4631, %v4631
      %v4634 = vcombine.high %v4632, %v4632
      %v4636 = vsel %vm4564, %v4632, 0.0
      %v4637 = vsel %vm4564, %v4634, 0.0
      %v4638 = vadd.f32 %v4636, %v4637
      %4639 = vadd.xlane.f32.xlu0 %v4638
      %v4640 = vpop.xlane.xlu0 %4639
      %v4641 = vmul.f32 %v4640, 0.003921569
      %v4642 = vadd.f32 %v4641, 0.0001
      %v4643 = vmul.f32 %v4642, 4.0
      %v4644 = vrcp.pop %v4643
      %v4645 = vmul.f32 1.0, %v4644
      %v4648 = vunpack.c.l.s4 839922192
      %v4649 = vunpack.c.0.s8 %v4648
      %v4650 = vlaneseq
      %v4651 = vshrl.u32 %v4650, 7
      %v4652 = vsub.s32 %v4649, %v4651
      %v4653 = vrot.slane %v4645, %v4652
      %v4655 = vmul.f32 %v4632, %v4653
      %v4656 = vadd.f32 %v4655, 0.5
      %v4657 = vxor.u32 %v4656, 2147483648
      %v4658 = vmul.f32 %v4657, 1.442695
      %v4659 = vpow.pop %v4658
      %v4660 = vadd.f32 %v4659, 1.0
      %v4661 = vrcp.pop %v4660
      %v4662 = vmul.f32 1.0, %v4661
      %v4663 = vmul.f32 %v171, %v4662
      %v4664 = vcombine.high %v2002, %v2002
      %v4666 = vsel %vm4564, %v2002, 0.0
      %v4667 = vsel %vm4564, %v4664, 0.0
      %v4668 = vadd.f32 %v4666, %v4667
      %4669 = vadd.xlane.f32.xlu0 %v4668
      %v4670 = vpop.xlane.xlu0 %4669
      %v4671 = vmul.f32 %v4670, %v4570
      %v4674 = vunpack.c.l.s4 839922192
      %v4675 = vunpack.c.0.s8 %v4674
      %v4676 = vlaneseq
      %v4677 = vshrl.u32 %v4676, 7
      %v4678 = vsub.s32 %v4675, %v4677
      %v4679 = vrot.slane %v4671, %v4678
      %v4681 = vsub.f32 %v2002, %v4679
      %v4682 = vmul.f32 %v4681, %v4681
      %v4684 = vcombine.high %v4682, %v4682
      %v4686 = vsel %vm4564, %v4682, 0.0
      %v4687 = vsel %vm4564, %v4684, 0.0
      %v4688 = vadd.f32 %v4686, %v4687
      %4689 = vadd.xlane.f32.xlu0 %v4688
      %v4690 = vpop.xlane.xlu0 %4689
      %v4691 = vmul.f32 %v4690, 0.003921569
      %v4692 = vadd.f32 %v4691, 0.0001
      %v4693 = vmul.f32 %v4692, 4.0
      %v4694 = vrcp.pop %v4693
      %v4695 = vmul.f32 1.0, %v4694
      %v4698 = vunpack.c.l.s4 839922192
      %v4699 = vunpack.c.0.s8 %v4698
      %v4700 = vlaneseq
      %v4701 = vshrl.u32 %v4700, 7
      %v4702 = vsub.s32 %v4699, %v4701
      %v4703 = vrot.slane %v4695, %v4702
      %v4705 = vmul.f32 %v4682, %v4703
      %v4706 = vadd.f32 %v4705, 0.5
      %v4707 = vxor.u32 %v4706, 2147483648
      %v4708 = vmul.f32 %v4707, 1.442695
      %v4709 = vpow.pop %v4708
      %v4710 = vadd.f32 %v4709, 1.0
      %v4711 = vrcp.pop %v4710
      %v4712 = vmul.f32 1.0, %v4711
      %v4713 = vmul.f32 %v2002, %v4712
      %v4714 = vadd.f32 %v4663, %v4713
      %v4715 = vmul.f32 %v4714, %v4560
      %v4716 = vadd.f32 %v4615, %v4715
      %v4718 = vcombine.high %v4716, %v4716
      %4720 = vrot.lane.b32.xlu0 %v4716, 17
      %v4721 = vpop.permute.xlu0 %4720
      %4722 = vrot.lane.b32.xlu0 %v4718, 17
      %v4723 = vpop.permute.xlu0 %4722
      %v4724 = vsel %vm181, %v4721, %v4723
      %v4725 = vsel %vm181, %v4723, %v4721
      %v4726 = vmul.f32 %v4725, %v189
      %v4727 = vmul.f32 %v4724, %v193
      %v4728 = vld [vmem:[%s1 + $0x4] sm:$0xf]
      %4730 = vset.pattern.permute.xlu0 14
      %4731 = vperm.xlu0 %4730, %v4728
      %v4732 = vpop.permute.xlu0 %4731
      %v4735 = vunpack.c.l.s4 839922192
      %v4736 = vunpack.c.0.s8 %v4735
      %v4737 = vlaneseq
      %v4738 = vshrl.u32 %v4737, 7
      %v4739 = vsub.s32 %v4736, %v4738
      %v4740 = vrot.slane %v4732, %v4739
      %v4741 = vlaneseq
      %v4742 = vshrl.u32 %v4741, 7
      %v4743 = vsub.s32 0, %v4742
      %v4744 = vrot.slane %v4726, %v4743
      %v4745 = vlaneseq
      %v4746 = vshrl.u32 %v4745, 7
      %v4747 = vsub.s32 0, %v4746
      %v4748 = vrot.slane %v4727, %v4747
      %v4751 = vcombine.low %v4744, %v4748
      %v4753 = vmul.f32 %v4740, %v4751
      %v4754 = vadd.f32 %v4753, 0.0
      %v4755 = vld [vmem:[%s1 + $0x4] sm:$0xf]
      %4757 = vset.pattern.permute.xlu0 15
      %4758 = vperm.xlu0 %4757, %v4755
      %v4759 = vpop.permute.xlu0 %4758
      %v4762 = vunpack.c.l.s4 839922192
      %v4763 = vunpack.c.0.s8 %v4762
      %v4764 = vlaneseq
      %v4765 = vshrl.u32 %v4764, 7
      %v4766 = vsub.s32 %v4763, %v4765
      %v4767 = vrot.slane %v4759, %v4766
      %v4768 = vlaneseq
      %v4769 = vshrl.u32 %v4768, 7
      %v4770 = vsub.s32 1, %v4769
      %v4771 = vrot.slane %v4726, %v4770
      %v4772 = vlaneseq
      %v4773 = vshrl.u32 %v4772, 7
      %v4774 = vsub.s32 1, %v4773
      %v4775 = vrot.slane %v4727, %v4774
      %v4778 = vcombine.low %v4771, %v4775
      %v4780 = vmul.f32 %v4767, %v4778
      %v4781 = vadd.f32 %v4754, %v4780
      %v4782 = vld [vmem:[%s1 + $0x4] sm:$0xf]
      %4784 = vset.pattern.permute.xlu0 16
      %4785 = vperm.xlu0 %4784, %v4782
      %v4786 = vpop.permute.xlu0 %4785
      %v4789 = vunpack.c.l.s4 839922192
      %v4790 = vunpack.c.0.s8 %v4789
      %v4791 = vlaneseq
      %v4792 = vshrl.u32 %v4791, 7
      %v4793 = vsub.s32 %v4790, %v4792
      %v4794 = vrot.slane %v4786, %v4793
      %v4795 = vlaneseq
      %v4796 = vshrl.u32 %v4795, 7
      %v4797 = vsub.s32 2, %v4796
      %v4798 = vrot.slane %v4726, %v4797
      %v4799 = vlaneseq
      %v4800 = vshrl.u32 %v4799, 7
      %v4801 = vsub.s32 2, %v4800
      %v4802 = vrot.slane %v4727, %v4801
      %v4805 = vcombine.low %v4798, %v4802
      %v4807 = vmul.f32 %v4794, %v4805
      %v4808 = vadd.f32 %v4781, %v4807
      %v4809 = vld [vmem:[%s1 + $0x4] sm:$0xf]
      %4811 = vset.pattern.permute.xlu0 17
      %4812 = vperm.xlu0 %4811, %v4809
      %v4813 = vpop.permute.xlu0 %4812
      %v4816 = vunpack.c.l.s4 839922192
      %v4817 = vunpack.c.0.s8 %v4816
      %v4818 = vlaneseq
      %v4819 = vshrl.u32 %v4818, 7
      %v4820 = vsub.s32 %v4817, %v4819
      %v4821 = vrot.slane %v4813, %v4820
      %v4822 = vlaneseq
      %v4823 = vshrl.u32 %v4822, 7
      %v4824 = vsub.s32 3, %v4823
      %v4825 = vrot.slane %v4726, %v4824
      %v4826 = vlaneseq
      %v4827 = vshrl.u32 %v4826, 7
      %v4828 = vsub.s32 3, %v4827
      %v4829 = vrot.slane %v4727, %v4828
      %v4832 = vcombine.low %v4825, %v4829
      %v4834 = vmul.f32 %v4821, %v4832
      %v4835 = vadd.f32 %v4808, %v4834
      %4836 = vrot.lane.b32.xlu0 %v4716, 16
      %v4837 = vpop.permute.xlu0 %4836
      %4838 = vrot.lane.b32.xlu0 %v4718, 16
      %v4839 = vpop.permute.xlu0 %4838
      %v4840 = vsel %vm310, %v4837, %v4839
      %v4841 = vsel %vm310, %v4839, %v4837
      %v4842 = vmul.f32 %v4841, %v319
      %v4843 = vmul.f32 %v4840, %v323
      %v4844 = vld [vmem:[%s1 + $0x4] sm:$0xf]
      %4846 = vset.pattern.permute.xlu0 18
      %4847 = vperm.xlu0 %4846, %v4844
      %v4848 = vpop.permute.xlu0 %4847
      %v4851 = vunpack.c.l.s4 839922192
      %v4852 = vunpack.c.0.s8 %v4851
      %v4853 = vlaneseq
      %v4854 = vshrl.u32 %v4853, 7
      %v4855 = vsub.s32 %v4852, %v4854
      %v4856 = vrot.slane %v4848, %v4855
      %v4857 = vlaneseq
      %v4858 = vshrl.u32 %v4857, 7
      %v4859 = vsub.s32 0, %v4858
      %v4860 = vrot.slane %v4842, %v4859
      %v4861 = vlaneseq
      %v4862 = vshrl.u32 %v4861, 7
      %v4863 = vsub.s32 0, %v4862
      %v4864 = vrot.slane %v4843, %v4863
      %v4867 = vcombine.low %v4860, %v4864
      %v4869 = vmul.f32 %v4856, %v4867
      %v4870 = vadd.f32 %v4835, %v4869
      %v4871 = vld [vmem:[%s1 + $0x4] sm:$0xf]
      %4873 = vset.pattern.permute.xlu0 19
      %4874 = vperm.xlu0 %4873, %v4871
      %v4875 = vpop.permute.xlu0 %4874
      %v4878 = vunpack.c.l.s4 839922192
      %v4879 = vunpack.c.0.s8 %v4878
      %v4880 = vlaneseq
      %v4881 = vshrl.u32 %v4880, 7
      %v4882 = vsub.s32 %v4879, %v4881
      %v4883 = vrot.slane %v4875, %v4882
      %v4884 = vlaneseq
      %v4885 = vshrl.u32 %v4884, 7
      %v4886 = vsub.s32 1, %v4885
      %v4887 = vrot.slane %v4842, %v4886
      %v4888 = vlaneseq
      %v4889 = vshrl.u32 %v4888, 7
      %v4890 = vsub.s32 1, %v4889
      %v4891 = vrot.slane %v4843, %v4890
      %v4894 = vcombine.low %v4887, %v4891
      %v4896 = vmul.f32 %v4883, %v4894
      %v4897 = vadd.f32 %v4870, %v4896
      %v4898 = vld [vmem:[%s1 + $0x4] sm:$0xf]
      %4900 = vset.pattern.permute.xlu0 20
      %4901 = vperm.xlu0 %4900, %v4898
      %v4902 = vpop.permute.xlu0 %4901
      %v4905 = vunpack.c.l.s4 839922192
      %v4906 = vunpack.c.0.s8 %v4905
      %v4907 = vlaneseq
      %v4908 = vshrl.u32 %v4907, 7
      %v4909 = vsub.s32 %v4906, %v4908
      %v4910 = vrot.slane %v4902, %v4909
      %v4911 = vlaneseq
      %v4912 = vshrl.u32 %v4911, 7
      %v4913 = vsub.s32 2, %v4912
      %v4914 = vrot.slane %v4842, %v4913
      %v4915 = vlaneseq
      %v4916 = vshrl.u32 %v4915, 7
      %v4917 = vsub.s32 2, %v4916
      %v4918 = vrot.slane %v4843, %v4917
      %v4921 = vcombine.low %v4914, %v4918
      %v4923 = vmul.f32 %v4910, %v4921
      %v4924 = vadd.f32 %v4897, %v4923
      %v4925 = vld [vmem:[%s1 + $0x4] sm:$0xf]
      %4927 = vset.pattern.permute.xlu0 21
      %4928 = vperm.xlu0 %4927, %v4925
      %v4929 = vpop.permute.xlu0 %4928
      %v4932 = vunpack.c.l.s4 839922192
      %v4933 = vunpack.c.0.s8 %v4932
      %v4934 = vlaneseq
      %v4935 = vshrl.u32 %v4934, 7
      %v4936 = vsub.s32 %v4933, %v4935
      %v4937 = vrot.slane %v4929, %v4936
      %v4938 = vlaneseq
      %v4939 = vshrl.u32 %v4938, 7
      %v4940 = vsub.s32 3, %v4939
      %v4941 = vrot.slane %v4842, %v4940
      %v4942 = vlaneseq
      %v4943 = vshrl.u32 %v4942, 7
      %v4944 = vsub.s32 3, %v4943
      %v4945 = vrot.slane %v4843, %v4944
      %v4948 = vcombine.low %v4941, %v4945
      %v4950 = vmul.f32 %v4937, %v4948
      %v4951 = vadd.f32 %v4924, %v4950
      %4952 = vrot.lane.b32.xlu0 %v4716, 15
      %v4953 = vpop.permute.xlu0 %4952
      %4954 = vrot.lane.b32.xlu0 %v4718, 15
      %v4955 = vpop.permute.xlu0 %4954
      %v4956 = vsel %vm440, %v4953, %v4955
      %v4957 = vsel %vm440, %v4955, %v4953
      %v4958 = vmul.f32 %v4957, %v449
      %v4959 = vmul.f32 %v4956, %v453
      %v4960 = vld [vmem:[%s1 + $0x4] sm:$0xf]
      %4962 = vset.pattern.permute.xlu0 22
      %4963 = vperm.xlu0 %4962, %v4960
      %v4964 = vpop.permute.xlu0 %4963
      %v4967 = vunpack.c.l.s4 839922192
      %v4968 = vunpack.c.0.s8 %v4967
      %v4969 = vlaneseq
      %v4970 = vshrl.u32 %v4969, 7
      %v4971 = vsub.s32 %v4968, %v4970
      %v4972 = vrot.slane %v4964, %v4971
      %v4973 = vlaneseq
      %v4974 = vshrl.u32 %v4973, 7
      %v4975 = vsub.s32 0, %v4974
      %v4976 = vrot.slane %v4958, %v4975
      %v4977 = vlaneseq
      %v4978 = vshrl.u32 %v4977, 7
      %v4979 = vsub.s32 0, %v4978
      %v4980 = vrot.slane %v4959, %v4979
      %v4983 = vcombine.low %v4976, %v4980
      %v4985 = vmul.f32 %v4972, %v4983
      %v4986 = vadd.f32 %v4951, %v4985
      %v4987 = vld [vmem:[%s1 + $0x4] sm:$0xf]
      %4989 = vset.pattern.permute.xlu0 23
      %4990 = vperm.xlu0 %4989, %v4987
      %v4991 = vpop.permute.xlu0 %4990
      %v4994 = vunpack.c.l.s4 839922192
      %v4995 = vunpack.c.0.s8 %v4994
      %v4996 = vlaneseq
      %v4997 = vshrl.u32 %v4996, 7
      %v4998 = vsub.s32 %v4995, %v4997
      %v4999 = vrot.slane %v4991, %v4998
      %v5000 = vlaneseq
      %v5001 = vshrl.u32 %v5000, 7
      %v5002 = vsub.s32 1, %v5001
      %v5003 = vrot.slane %v4958, %v5002
      %v5004 = vlaneseq
      %v5005 = vshrl.u32 %v5004, 7
      %v5006 = vsub.s32 1, %v5005
      %v5007 = vrot.slane %v4959, %v5006
      %v5010 = vcombine.low %v5003, %v5007
      %v5012 = vmul.f32 %v4999, %v5010
      %v5013 = vadd.f32 %v4986, %v5012
      %v5014 = vld [vmem:[%s1 + $0x4] sm:$0xf]
      %5016 = vset.pattern.permute.xlu0 24
      %5017 = vperm.xlu0 %5016, %v5014
      %v5018 = vpop.permute.xlu0 %5017
      %v5021 = vunpack.c.l.s4 839922192
      %v5022 = vunpack.c.0.s8 %v5021
      %v5023 = vlaneseq
      %v5024 = vshrl.u32 %v5023, 7
      %v5025 = vsub.s32 %v5022, %v5024
      %v5026 = vrot.slane %v5018, %v5025
      %v5027 = vlaneseq
      %v5028 = vshrl.u32 %v5027, 7
      %v5029 = vsub.s32 2, %v5028
      %v5030 = vrot.slane %v4958, %v5029
      %v5031 = vlaneseq
      %v5032 = vshrl.u32 %v5031, 7
      %v5033 = vsub.s32 2, %v5032
      %v5034 = vrot.slane %v4959, %v5033
      %v5037 = vcombine.low %v5030, %v5034
      %v5039 = vmul.f32 %v5026, %v5037
      %v5040 = vadd.f32 %v5013, %v5039
      %v5041 = vld [vmem:[%s1 + $0x4] sm:$0xf]
      %5043 = vset.pattern.permute.xlu0 25
      %5044 = vperm.xlu0 %5043, %v5041
      %v5045 = vpop.permute.xlu0 %5044
      %v5048 = vunpack.c.l.s4 839922192
      %v5049 = vunpack.c.0.s8 %v5048
      %v5050 = vlaneseq
      %v5051 = vshrl.u32 %v5050, 7
      %v5052 = vsub.s32 %v5049, %v5051
      %v5053 = vrot.slane %v5045, %v5052
      %v5054 = vlaneseq
      %v5055 = vshrl.u32 %v5054, 7
      %v5056 = vsub.s32 3, %v5055
      %v5057 = vrot.slane %v4958, %v5056
      %v5058 = vlaneseq
      %v5059 = vshrl.u32 %v5058, 7
      %v5060 = vsub.s32 3, %v5059
      %v5061 = vrot.slane %v4959, %v5060
      %v5064 = vcombine.low %v5057, %v5061
      %v5066 = vmul.f32 %v5053, %v5064
      %v5067 = vadd.f32 %v5040, %v5066
      %5068 = vrot.lane.b32.xlu0 %v4716, 1
      %v5069 = vpop.permute.xlu0 %5068
      %5070 = vrot.lane.b32.xlu0 %v4718, 1
      %v5071 = vpop.permute.xlu0 %5070
      %v5072 = vsel %vm570, %v5069, %v5071
      %v5073 = vsel %vm570, %v5071, %v5069
      %v5074 = vmul.f32 %v5073, %v579
      %v5075 = vmul.f32 %v5072, %v583
      %v5076 = vld [vmem:[%s1 + $0x4] sm:$0xf]
      %5078 = vset.pattern.permute.xlu0 26
      %5079 = vperm.xlu0 %5078, %v5076
      %v5080 = vpop.permute.xlu0 %5079
      %v5083 = vunpack.c.l.s4 839922192
      %v5084 = vunpack.c.0.s8 %v5083
      %v5085 = vlaneseq
      %v5086 = vshrl.u32 %v5085, 7
      %v5087 = vsub.s32 %v5084, %v5086
      %v5088 = vrot.slane %v5080, %v5087
      %v5089 = vlaneseq
      %v5090 = vshrl.u32 %v5089, 7
      %v5091 = vsub.s32 0, %v5090
      %v5092 = vrot.slane %v5074, %v5091
      %v5093 = vlaneseq
      %v5094 = vshrl.u32 %v5093, 7
      %v5095 = vsub.s32 0, %v5094
      %v5096 = vrot.slane %v5075, %v5095
      %v5099 = vcombine.low %v5092, %v5096
      %v5101 = vmul.f32 %v5088, %v5099
      %v5102 = vadd.f32 %v5067, %v5101
      %v5103 = vld [vmem:[%s1 + $0x4] sm:$0xf]
      %5105 = vset.pattern.permute.xlu0 27
      %5106 = vperm.xlu0 %5105, %v5103
      %v5107 = vpop.permute.xlu0 %5106
      %v5110 = vunpack.c.l.s4 839922192
      %v5111 = vunpack.c.0.s8 %v5110
      %v5112 = vlaneseq
      %v5113 = vshrl.u32 %v5112, 7
      %v5114 = vsub.s32 %v5111, %v5113
      %v5115 = vrot.slane %v5107, %v5114
      %v5116 = vlaneseq
      %v5117 = vshrl.u32 %v5116, 7
      %v5118 = vsub.s32 1, %v5117
      %v5119 = vrot.slane %v5074, %v5118
      %v5120 = vlaneseq
      %v5121 = vshrl.u32 %v5120, 7
      %v5122 = vsub.s32 1, %v5121
      %v5123 = vrot.slane %v5075, %v5122
      %v5126 = vcombine.low %v5119, %v5123
      %v5128 = vmul.f32 %v5115, %v5126
      %v5129 = vadd.f32 %v5102, %v5128
      %v5130 = vld [vmem:[%s1 + $0x4] sm:$0xf]
      %5132 = vset.pattern.permute.xlu0 28
      %5133 = vperm.xlu0 %5132, %v5130
      %v5134 = vpop.permute.xlu0 %5133
      %v5137 = vunpack.c.l.s4 839922192
      %v5138 = vunpack.c.0.s8 %v5137
      %v5139 = vlaneseq
      %v5140 = vshrl.u32 %v5139, 7
      %v5141 = vsub.s32 %v5138, %v5140
      %v5142 = vrot.slane %v5134, %v5141
      %v5143 = vlaneseq
      %v5144 = vshrl.u32 %v5143, 7
      %v5145 = vsub.s32 2, %v5144
      %v5146 = vrot.slane %v5074, %v5145
      %v5147 = vlaneseq
      %v5148 = vshrl.u32 %v5147, 7
      %v5149 = vsub.s32 2, %v5148
      %v5150 = vrot.slane %v5075, %v5149
      %v5153 = vcombine.low %v5146, %v5150
      %v5155 = vmul.f32 %v5142, %v5153
      %v5156 = vadd.f32 %v5129, %v5155
      %v5157 = vld [vmem:[%s1 + $0x4] sm:$0xf]
      %5159 = vset.pattern.permute.xlu0 29
      %5160 = vperm.xlu0 %5159, %v5157
      %v5161 = vpop.permute.xlu0 %5160
      %v5164 = vunpack.c.l.s4 839922192
      %v5165 = vunpack.c.0.s8 %v5164
      %v5166 = vlaneseq
      %v5167 = vshrl.u32 %v5166, 7
      %v5168 = vsub.s32 %v5165, %v5167
      %v5169 = vrot.slane %v5161, %v5168
      %v5170 = vlaneseq
      %v5171 = vshrl.u32 %v5170, 7
      %v5172 = vsub.s32 3, %v5171
      %v5173 = vrot.slane %v5074, %v5172
      %v5174 = vlaneseq
      %v5175 = vshrl.u32 %v5174, 7
      %v5176 = vsub.s32 3, %v5175
      %v5177 = vrot.slane %v5075, %v5176
      %v5180 = vcombine.low %v5173, %v5177
      %v5182 = vmul.f32 %v5169, %v5180
      %v5183 = vadd.f32 %v5156, %v5182
      %v5184 = vld [vmem:[%s1 + $0x4] sm:$0xf]
      %5186 = vset.pattern.permute.xlu0 30
      %5187 = vperm.xlu0 %5186, %v5184
      %v5188 = vpop.permute.xlu0 %5187
      %v5191 = vunpack.c.l.s4 839922192
      %v5192 = vunpack.c.0.s8 %v5191
      %v5193 = vlaneseq
      %v5194 = vshrl.u32 %v5193, 7
      %v5195 = vsub.s32 %v5192, %v5194
      %v5196 = vrot.slane %v5188, %v5195
      %v5197 = vlaneseq
      %v5198 = vshrl.u32 %v5197, 7
      %v5199 = vsub.s32 0, %v5198
      %v5200 = vrot.slane %v4716, %v5199
      %v5201 = vlaneseq
      %v5202 = vshrl.u32 %v5201, 7
      %v5203 = vsub.s32 4, %v5202
      %v5204 = vrot.slane %v4716, %v5203
      %v5207 = vlaneseq
      %v5208 = vshrl.u32 %v5207, 7
      %v5209 = vsub.s32 0, %v5208
      %v5210 = vrot.slane %v5200, %v5209
      %v5211 = vlaneseq
      %v5212 = vshrl.u32 %v5211, 7
      %v5213 = vsub.s32 0, %v5212
      %v5214 = vrot.slane %v5204, %v5213
      %v5217 = vcombine.low %v5210, %v5214
      %v5219 = vmul.f32 %v5196, %v5217
      %v5220 = vadd.f32 %v5183, %v5219
      %v5221 = vld [vmem:[%s1 + $0x4] sm:$0xf]
      %5223 = vset.pattern.permute.xlu0 31
      %5224 = vperm.xlu0 %5223, %v5221
      %v5225 = vpop.permute.xlu0 %5224
      %v5228 = vunpack.c.l.s4 839922192
      %v5229 = vunpack.c.0.s8 %v5228
      %v5230 = vlaneseq
      %v5231 = vshrl.u32 %v5230, 7
      %v5232 = vsub.s32 %v5229, %v5231
      %v5233 = vrot.slane %v5225, %v5232
      %v5234 = vlaneseq
      %v5235 = vshrl.u32 %v5234, 7
      %v5236 = vsub.s32 1, %v5235
      %v5237 = vrot.slane %v4716, %v5236
      %v5238 = vlaneseq
      %v5239 = vshrl.u32 %v5238, 7
      %v5240 = vsub.s32 5, %v5239
      %v5241 = vrot.slane %v4716, %v5240
      %v5244 = vlaneseq
      %v5245 = vshrl.u32 %v5244, 7
      %v5246 = vsub.s32 1, %v5245
      %v5247 = vrot.slane %v5237, %v5246
      %v5248 = vlaneseq
      %v5249 = vshrl.u32 %v5248, 7
      %v5250 = vsub.s32 1, %v5249
      %v5251 = vrot.slane %v5241, %v5250
      %v5254 = vcombine.low %v5247, %v5251
      %v5256 = vmul.f32 %v5233, %v5254
      %v5257 = vadd.f32 %v5220, %v5256
      %v5258 = vld [vmem:[%s1 + $0x4] sm:$0xf]
      %5260 = vset.pattern.permute.xlu0 32
      %5261 = vperm.xlu0 %5260, %v5258
      %v5262 = vpop.permute.xlu0 %5261
      %v5265 = vunpack.c.l.s4 839922192
      %v5266 = vunpack.c.0.s8 %v5265
      %v5267 = vlaneseq
      %v5268 = vshrl.u32 %v5267, 7
      %v5269 = vsub.s32 %v5266, %v5268
      %v5270 = vrot.slane %v5262, %v5269
      %v5271 = vlaneseq
      %v5272 = vshrl.u32 %v5271, 7
      %v5273 = vsub.s32 2, %v5272
      %v5274 = vrot.slane %v4716, %v5273
      %v5275 = vlaneseq
      %v5276 = vshrl.u32 %v5275, 7
      %v5277 = vsub.s32 6, %v5276
      %v5278 = vrot.slane %v4716, %v5277
      %v5281 = vlaneseq
      %v5282 = vshrl.u32 %v5281, 7
      %v5283 = vsub.s32 2, %v5282
      %v5284 = vrot.slane %v5274, %v5283
      %v5285 = vlaneseq
      %v5286 = vshrl.u32 %v5285, 7
      %v5287 = vsub.s32 2, %v5286
      %v5288 = vrot.slane %v5278, %v5287
      %v5291 = vcombine.low %v5284, %v5288
      %v5293 = vmul.f32 %v5270, %v5291
      %v5294 = vadd.f32 %v5257, %v5293
      %v5295 = vld [vmem:[%s1 + $0x4] sm:$0xf]
      %5297 = vset.pattern.permute.xlu0 33
      %5298 = vperm.xlu0 %5297, %v5295
      %v5299 = vpop.permute.xlu0 %5298
      %v5302 = vunpack.c.l.s4 839922192
      %v5303 = vunpack.c.0.s8 %v5302
      %v5304 = vlaneseq
      %v5305 = vshrl.u32 %v5304, 7
      %v5306 = vsub.s32 %v5303, %v5305
      %v5307 = vrot.slane %v5299, %v5306
      %v5308 = vlaneseq
      %v5309 = vshrl.u32 %v5308, 7
      %v5310 = vsub.s32 3, %v5309
      %v5311 = vrot.slane %v4716, %v5310
      %v5312 = vlaneseq
      %v5313 = vshrl.u32 %v5312, 7
      %v5314 = vsub.s32 7, %v5313
      %v5315 = vrot.slane %v4716, %v5314
      %v5318 = vlaneseq
      %v5319 = vshrl.u32 %v5318, 7
      %v5320 = vsub.s32 3, %v5319
      %v5321 = vrot.slane %v5311, %v5320
      %v5322 = vlaneseq
      %v5323 = vshrl.u32 %v5322, 7
      %v5324 = vsub.s32 3, %v5323
      %v5325 = vrot.slane %v5315, %v5324
      %v5328 = vcombine.low %v5321, %v5325
      %v5330 = vmul.f32 %v5307, %v5328
      %v5331 = vadd.f32 %v5294, %v5330
      %5332 = vrot.lane.b32.xlu0 %v4716, 127
      %v5333 = vpop.permute.xlu0 %5332
      %5334 = vrot.lane.b32.xlu0 %v4718, 127
      %v5335 = vpop.permute.xlu0 %5334
      %v5336 = vsel %vm848, %v5333, %v5335
      %v5337 = vsel %vm848, %v5335, %v5333
      %v5338 = vmul.f32 %v5336, %v857
      %v5339 = vmul.f32 %v5337, %v861
      %v5340 = vld [vmem:[%s1 + $0x4] sm:$0xf]
      %5342 = vset.pattern.permute.xlu0 34
      %5343 = vperm.xlu0 %5342, %v5340
      %v5344 = vpop.permute.xlu0 %5343
      %v5347 = vunpack.c.l.s4 839922192
      %v5348 = vunpack.c.0.s8 %v5347
      %v5349 = vlaneseq
      %v5350 = vshrl.u32 %v5349, 7
      %v5351 = vsub.s32 %v5348, %v5350
      %v5352 = vrot.slane %v5344, %v5351
      %v5353 = vlaneseq
      %v5354 = vshrl.u32 %v5353, 7
      %v5355 = vsub.s32 0, %v5354
      %v5356 = vrot.slane %v5338, %v5355
      %v5357 = vlaneseq
      %v5358 = vshrl.u32 %v5357, 7
      %v5359 = vsub.s32 0, %v5358
      %v5360 = vrot.slane %v5339, %v5359
      %v5363 = vcombine.low %v5356, %v5360
      %v5365 = vmul.f32 %v5352, %v5363
      %v5366 = vadd.f32 %v5331, %v5365
      %v5367 = vld [vmem:[%s1 + $0x4] sm:$0xf]
      %5369 = vset.pattern.permute.xlu0 35
      %5370 = vperm.xlu0 %5369, %v5367
      %v5371 = vpop.permute.xlu0 %5370
      %v5374 = vunpack.c.l.s4 839922192
      %v5375 = vunpack.c.0.s8 %v5374
      %v5376 = vlaneseq
      %v5377 = vshrl.u32 %v5376, 7
      %v5378 = vsub.s32 %v5375, %v5377
      %v5379 = vrot.slane %v5371, %v5378
      %v5380 = vlaneseq
      %v5381 = vshrl.u32 %v5380, 7
      %v5382 = vsub.s32 1, %v5381
      %v5383 = vrot.slane %v5338, %v5382
      %v5384 = vlaneseq
      %v5385 = vshrl.u32 %v5384, 7
      %v5386 = vsub.s32 1, %v5385
      %v5387 = vrot.slane %v5339, %v5386
      %v5390 = vcombine.low %v5383, %v5387
      %v5392 = vmul.f32 %v5379, %v5390
      %v5393 = vadd.f32 %v5366, %v5392
      %v5394 = vld [vmem:[%s1 + $0x4] sm:$0xf]
      %5396 = vset.pattern.permute.xlu0 36
      %5397 = vperm.xlu0 %5396, %v5394
      %v5398 = vpop.permute.xlu0 %5397
      %v5401 = vunpack.c.l.s4 839922192
      %v5402 = vunpack.c.0.s8 %v5401
      %v5403 = vlaneseq
      %v5404 = vshrl.u32 %v5403, 7
      %v5405 = vsub.s32 %v5402, %v5404
      %v5406 = vrot.slane %v5398, %v5405
      %v5407 = vlaneseq
      %v5408 = vshrl.u32 %v5407, 7
      %v5409 = vsub.s32 2, %v5408
      %v5410 = vrot.slane %v5338, %v5409
      %v5411 = vlaneseq
      %v5412 = vshrl.u32 %v5411, 7
      %v5413 = vsub.s32 2, %v5412
      %v5414 = vrot.slane %v5339, %v5413
      %v5417 = vcombine.low %v5410, %v5414
      %v5419 = vmul.f32 %v5406, %v5417
      %v5420 = vadd.f32 %v5393, %v5419
      %v5421 = vld [vmem:[%s1 + $0x4] sm:$0xf]
      %5423 = vset.pattern.permute.xlu0 37
      %5424 = vperm.xlu0 %5423, %v5421
      %v5425 = vpop.permute.xlu0 %5424
      %v5428 = vunpack.c.l.s4 839922192
      %v5429 = vunpack.c.0.s8 %v5428
      %v5430 = vlaneseq
      %v5431 = vshrl.u32 %v5430, 7
      %v5432 = vsub.s32 %v5429, %v5431
      %v5433 = vrot.slane %v5425, %v5432
      %v5434 = vlaneseq
      %v5435 = vshrl.u32 %v5434, 7
      %v5436 = vsub.s32 3, %v5435
      %v5437 = vrot.slane %v5338, %v5436
      %v5438 = vlaneseq
      %v5439 = vshrl.u32 %v5438, 7
      %v5440 = vsub.s32 3, %v5439
      %v5441 = vrot.slane %v5339, %v5440
      %v5444 = vcombine.low %v5437, %v5441
      %v5446 = vmul.f32 %v5433, %v5444
      %v5447 = vadd.f32 %v5420, %v5446
      %5448 = vrot.lane.b32.xlu0 %v4716, 113
      %v5449 = vpop.permute.xlu0 %5448
      %5450 = vrot.lane.b32.xlu0 %v4718, 113
      %v5451 = vpop.permute.xlu0 %5450
      %v5452 = vsel %vm978, %v5449, %v5451
      %v5453 = vsel %vm978, %v5451, %v5449
      %v5454 = vmul.f32 %v5452, %v987
      %v5455 = vmul.f32 %v5453, %v991
      %v5456 = vld [vmem:[%s1 + $0x4] sm:$0xf]
      %5458 = vset.pattern.permute.xlu0 38
      %5459 = vperm.xlu0 %5458, %v5456
      %v5460 = vpop.permute.xlu0 %5459
      %v5463 = vunpack.c.l.s4 839922192
      %v5464 = vunpack.c.0.s8 %v5463
      %v5465 = vlaneseq
      %v5466 = vshrl.u32 %v5465, 7
      %v5467 = vsub.s32 %v5464, %v5466
      %v5468 = vrot.slane %v5460, %v5467
      %v5469 = vlaneseq
      %v5470 = vshrl.u32 %v5469, 7
      %v5471 = vsub.s32 0, %v5470
      %v5472 = vrot.slane %v5454, %v5471
      %v5473 = vlaneseq
      %v5474 = vshrl.u32 %v5473, 7
      %v5475 = vsub.s32 0, %v5474
      %v5476 = vrot.slane %v5455, %v5475
      %v5479 = vcombine.low %v5472, %v5476
      %v5481 = vmul.f32 %v5468, %v5479
      %v5482 = vadd.f32 %v5447, %v5481
      %v5483 = vld [vmem:[%s1 + $0x4] sm:$0xf]
      %5485 = vset.pattern.permute.xlu0 39
      %5486 = vperm.xlu0 %5485, %v5483
      %v5487 = vpop.permute.xlu0 %5486
      %v5490 = vunpack.c.l.s4 839922192
      %v5491 = vunpack.c.0.s8 %v5490
      %v5492 = vlaneseq
      %v5493 = vshrl.u32 %v5492, 7
      %v5494 = vsub.s32 %v5491, %v5493
      %v5495 = vrot.slane %v5487, %v5494
      %v5496 = vlaneseq
      %v5497 = vshrl.u32 %v5496, 7
      %v5498 = vsub.s32 1, %v5497
      %v5499 = vrot.slane %v5454, %v5498
      %v5500 = vlaneseq
      %v5501 = vshrl.u32 %v5500, 7
      %v5502 = vsub.s32 1, %v5501
      %v5503 = vrot.slane %v5455, %v5502
      %v5506 = vcombine.low %v5499, %v5503
      %v5508 = vmul.f32 %v5495, %v5506
      %v5509 = vadd.f32 %v5482, %v5508
      %v5510 = vld [vmem:[%s1 + $0x4] sm:$0xf]
      %5512 = vset.pattern.permute.xlu0 40
      %5513 = vperm.xlu0 %5512, %v5510
      %v5514 = vpop.permute.xlu0 %5513
      %v5517 = vunpack.c.l.s4 839922192
      %v5518 = vunpack.c.0.s8 %v5517
      %v5519 = vlaneseq
      %v5520 = vshrl.u32 %v5519, 7
      %v5521 = vsub.s32 %v5518, %v5520
      %v5522 = vrot.slane %v5514, %v5521
      %v5523 = vlaneseq
      %v5524 = vshrl.u32 %v5523, 7
      %v5525 = vsub.s32 2, %v5524
      %v5526 = vrot.slane %v5454, %v5525
      %v5527 = vlaneseq
      %v5528 = vshrl.u32 %v5527, 7
      %v5529 = vsub.s32 2, %v5528
      %v5530 = vrot.slane %v5455, %v5529
      %v5533 = vcombine.low %v5526, %v5530
      %v5535 = vmul.f32 %v5522, %v5533
      %v5536 = vadd.f32 %v5509, %v5535
      %v5537 = vld [vmem:[%s1 + $0x4] sm:$0xf]
      %5539 = vset.pattern.permute.xlu0 41
      %5540 = vperm.xlu0 %5539, %v5537
      %v5541 = vpop.permute.xlu0 %5540
      %v5544 = vunpack.c.l.s4 839922192
      %v5545 = vunpack.c.0.s8 %v5544
      %v5546 = vlaneseq
      %v5547 = vshrl.u32 %v5546, 7
      %v5548 = vsub.s32 %v5545, %v5547
      %v5549 = vrot.slane %v5541, %v5548
      %v5550 = vlaneseq
      %v5551 = vshrl.u32 %v5550, 7
      %v5552 = vsub.s32 3, %v5551
      %v5553 = vrot.slane %v5454, %v5552
      %v5554 = vlaneseq
      %v5555 = vshrl.u32 %v5554, 7
      %v5556 = vsub.s32 3, %v5555
      %v5557 = vrot.slane %v5455, %v5556
      %v5560 = vcombine.low %v5553, %v5557
      %v5562 = vmul.f32 %v5549, %v5560
      %v5563 = vadd.f32 %v5536, %v5562
      %5564 = vrot.lane.b32.xlu0 %v4716, 112
      %v5565 = vpop.permute.xlu0 %5564
      %5566 = vrot.lane.b32.xlu0 %v4718, 112
      %v5567 = vpop.permute.xlu0 %5566
      %v5568 = vsel %vm1108, %v5565, %v5567
      %v5569 = vsel %vm1108, %v5567, %v5565
      %v5570 = vmul.f32 %v5568, %v1117
      %v5571 = vmul.f32 %v5569, %v1121
      %v5572 = vld [vmem:[%s1 + $0x4] sm:$0xf]
      %5574 = vset.pattern.permute.xlu0 42
      %5575 = vperm.xlu0 %5574, %v5572
      %v5576 = vpop.permute.xlu0 %5575
      %v5579 = vunpack.c.l.s4 839922192
      %v5580 = vunpack.c.0.s8 %v5579
      %v5581 = vlaneseq
      %v5582 = vshrl.u32 %v5581, 7
      %v5583 = vsub.s32 %v5580, %v5582
      %v5584 = vrot.slane %v5576, %v5583
      %v5585 = vlaneseq
      %v5586 = vshrl.u32 %v5585, 7
      %v5587 = vsub.s32 0, %v5586
      %v5588 = vrot.slane %v5570, %v5587
      %v5589 = vlaneseq
      %v5590 = vshrl.u32 %v5589, 7
      %v5591 = vsub.s32 0, %v5590
      %v5592 = vrot.slane %v5571, %v5591
      %v5595 = vcombine.low %v5588, %v5592
      %v5597 = vmul.f32 %v5584, %v5595
      %v5598 = vadd.f32 %v5563, %v5597
      %v5599 = vld [vmem:[%s1 + $0x4] sm:$0xf]
      %5601 = vset.pattern.permute.xlu0 43
      %5602 = vperm.xlu0 %5601, %v5599
      %v5603 = vpop.permute.xlu0 %5602
      %v5606 = vunpack.c.l.s4 839922192
      %v5607 = vunpack.c.0.s8 %v5606
      %v5608 = vlaneseq
      %v5609 = vshrl.u32 %v5608, 7
      %v5610 = vsub.s32 %v5607, %v5609
      %v5611 = vrot.slane %v5603, %v5610
      %v5612 = vlaneseq
      %v5613 = vshrl.u32 %v5612, 7
      %v5614 = vsub.s32 1, %v5613
      %v5615 = vrot.slane %v5570, %v5614
      %v5616 = vlaneseq
      %v5617 = vshrl.u32 %v5616, 7
      %v5618 = vsub.s32 1, %v5617
      %v5619 = vrot.slane %v5571, %v5618
      %v5622 = vcombine.low %v5615, %v5619
      %v5624 = vmul.f32 %v5611, %v5622
      %v5625 = vadd.f32 %v5598, %v5624
      %v5626 = vld [vmem:[%s1 + $0x4] sm:$0xf]
      %5628 = vset.pattern.permute.xlu0 44
      %5629 = vperm.xlu0 %5628, %v5626
      %v5630 = vpop.permute.xlu0 %5629
      %v5633 = vunpack.c.l.s4 839922192
      %v5634 = vunpack.c.0.s8 %v5633
      %v5635 = vlaneseq
      %v5636 = vshrl.u32 %v5635, 7
      %v5637 = vsub.s32 %v5634, %v5636
      %v5638 = vrot.slane %v5630, %v5637
      %v5639 = vlaneseq
      %v5640 = vshrl.u32 %v5639, 7
      %v5641 = vsub.s32 2, %v5640
      %v5642 = vrot.slane %v5570, %v5641
      %v5643 = vlaneseq
      %v5644 = vshrl.u32 %v5643, 7
      %v5645 = vsub.s32 2, %v5644
      %v5646 = vrot.slane %v5571, %v5645
      %v5649 = vcombine.low %v5642, %v5646
      %v5651 = vmul.f32 %v5638, %v5649
      %v5652 = vadd.f32 %v5625, %v5651
      %v5653 = vld [vmem:[%s1 + $0x4] sm:$0xf]
      %5655 = vset.pattern.permute.xlu0 45
      %5656 = vperm.xlu0 %5655, %v5653
      %v5657 = vpop.permute.xlu0 %5656
      %v5660 = vunpack.c.l.s4 839922192
      %v5661 = vunpack.c.0.s8 %v5660
      %v5662 = vlaneseq
      %v5663 = vshrl.u32 %v5662, 7
      %v5664 = vsub.s32 %v5661, %v5663
      %v5665 = vrot.slane %v5657, %v5664
      %v5666 = vlaneseq
      %v5667 = vshrl.u32 %v5666, 7
      %v5668 = vsub.s32 3, %v5667
      %v5669 = vrot.slane %v5570, %v5668
      %v5670 = vlaneseq
      %v5671 = vshrl.u32 %v5670, 7
      %v5672 = vsub.s32 3, %v5671
      %v5673 = vrot.slane %v5571, %v5672
      %v5676 = vcombine.low %v5669, %v5673
      %v5678 = vmul.f32 %v5665, %v5676
      %v5679 = vadd.f32 %v5652, %v5678
      %5680 = vrot.lane.b32.xlu0 %v4716, 111
      %v5681 = vpop.permute.xlu0 %5680
      %5682 = vrot.lane.b32.xlu0 %v4718, 111
      %v5683 = vpop.permute.xlu0 %5682
      %v5684 = vsel %vm1238, %v5681, %v5683
      %v5685 = vsel %vm1238, %v5683, %v5681
      %v5686 = vmul.f32 %v5684, %v1247
      %v5687 = vmul.f32 %v5685, %v1251
      %v5688 = vld [vmem:[%s1 + $0x4] sm:$0xf]
      %5690 = vset.pattern.permute.xlu0 46
      %5691 = vperm.xlu0 %5690, %v5688
      %v5692 = vpop.permute.xlu0 %5691
      %v5695 = vunpack.c.l.s4 839922192
      %v5696 = vunpack.c.0.s8 %v5695
      %v5697 = vlaneseq
      %v5698 = vshrl.u32 %v5697, 7
      %v5699 = vsub.s32 %v5696, %v5698
      %v5700 = vrot.slane %v5692, %v5699
      %v5701 = vlaneseq
      %v5702 = vshrl.u32 %v5701, 7
      %v5703 = vsub.s32 0, %v5702
      %v5704 = vrot.slane %v5686, %v5703
      %v5705 = vlaneseq
      %v5706 = vshrl.u32 %v5705, 7
      %v5707 = vsub.s32 0, %v5706
      %v5708 = vrot.slane %v5687, %v5707
      %v5711 = vcombine.low %v5704, %v5708
      %v5713 = vmul.f32 %v5700, %v5711
      %v5714 = vadd.f32 %v5679, %v5713
      %v5715 = vld [vmem:[%s1 + $0x4] sm:$0xf]
      %5717 = vset.pattern.permute.xlu0 47
      %5718 = vperm.xlu0 %5717, %v5715
      %v5719 = vpop.permute.xlu0 %5718
      %v5722 = vunpack.c.l.s4 839922192
      %v5723 = vunpack.c.0.s8 %v5722
      %v5724 = vlaneseq
      %v5725 = vshrl.u32 %v5724, 7
      %v5726 = vsub.s32 %v5723, %v5725
      %v5727 = vrot.slane %v5719, %v5726
      %v5728 = vlaneseq
      %v5729 = vshrl.u32 %v5728, 7
      %v5730 = vsub.s32 1, %v5729
      %v5731 = vrot.slane %v5686, %v5730
      %v5732 = vlaneseq
      %v5733 = vshrl.u32 %v5732, 7
      %v5734 = vsub.s32 1, %v5733
      %v5735 = vrot.slane %v5687, %v5734
      %v5738 = vcombine.low %v5731, %v5735
      %v5740 = vmul.f32 %v5727, %v5738
      %v5741 = vadd.f32 %v5714, %v5740
      %v5742 = vld [vmem:[%s1 + $0x4] sm:$0xf]
      %5744 = vset.pattern.permute.xlu0 48
      %5745 = vperm.xlu0 %5744, %v5742
      %v5746 = vpop.permute.xlu0 %5745
      %v5749 = vunpack.c.l.s4 839922192
      %v5750 = vunpack.c.0.s8 %v5749
      %v5751 = vlaneseq
      %v5752 = vshrl.u32 %v5751, 7
      %v5753 = vsub.s32 %v5750, %v5752
      %v5754 = vrot.slane %v5746, %v5753
      %v5755 = vlaneseq
      %v5756 = vshrl.u32 %v5755, 7
      %v5757 = vsub.s32 2, %v5756
      %v5758 = vrot.slane %v5686, %v5757
      %v5759 = vlaneseq
      %v5760 = vshrl.u32 %v5759, 7
      %v5761 = vsub.s32 2, %v5760
      %v5762 = vrot.slane %v5687, %v5761
      %v5765 = vcombine.low %v5758, %v5762
      %v5767 = vmul.f32 %v5754, %v5765
      %v5768 = vadd.f32 %v5741, %v5767
      %v5769 = vld [vmem:[%s1 + $0x4] sm:$0xf]
      %5771 = vset.pattern.permute.xlu0 49
      %5772 = vperm.xlu0 %5771, %v5769
      %v5773 = vpop.permute.xlu0 %5772
      %v5776 = vunpack.c.l.s4 839922192
      %v5777 = vunpack.c.0.s8 %v5776
      %v5778 = vlaneseq
      %v5779 = vshrl.u32 %v5778, 7
      %v5780 = vsub.s32 %v5777, %v5779
      %v5781 = vrot.slane %v5773, %v5780
      %v5782 = vlaneseq
      %v5783 = vshrl.u32 %v5782, 7
      %v5784 = vsub.s32 3, %v5783
      %v5785 = vrot.slane %v5686, %v5784
      %v5786 = vlaneseq
      %v5787 = vshrl.u32 %v5786, 7
      %v5788 = vsub.s32 3, %v5787
      %v5789 = vrot.slane %v5687, %v5788
      %v5792 = vcombine.low %v5785, %v5789
      %v5794 = vmul.f32 %v5781, %v5792
      %v5795 = vadd.f32 %v5768, %v5794
      %v5796 = vld [vmem:[%s1 + $0x4] sm:$0xf]
      %5798 = vset.pattern.permute.xlu0 50
      %5799 = vperm.xlu0 %5798, %v5796
      %v5800 = vpop.permute.xlu0 %5799
      %v5803 = vunpack.c.l.s4 839922192
      %v5804 = vunpack.c.0.s8 %v5803
      %v5805 = vlaneseq
      %v5806 = vshrl.u32 %v5805, 7
      %v5807 = vsub.s32 %v5804, %v5806
      %v5808 = vrot.slane %v5800, %v5807
      %v5809 = vmul.f32 %v5795, %v5808
      %5810 = vset.pattern.permute.xlu0 51
      %5811 = vperm.xlu0 %5810, %v5796
      %v5812 = vpop.permute.xlu0 %5811
      %v5815 = vunpack.c.l.s4 839922192
      %v5816 = vunpack.c.0.s8 %v5815
      %v5817 = vlaneseq
      %v5818 = vshrl.u32 %v5817, 7
      %v5819 = vsub.s32 %v5816, %v5818
      %v5820 = vrot.slane %v5812, %v5819
      %v5821 = vadd.f32 %v5809, %v5820
      %v5822 = vmax.f32 %v5821, 0.0
      %v5824 = vcombine.high %v5822, %v5822
      %v5826 = vsel %vm4564, %v5822, 0.0
      %v5827 = vsel %vm4564, %v5824, 0.0
      %v5828 = vadd.f32 %v5826, %v5827
      %5829 = vadd.xlane.f32.xlu0 %v5828
      %v5830 = vpop.xlane.xlu0 %5829
      %v5831 = vmul.f32 %v5830, %v4570
      %v5834 = vunpack.c.l.s4 839922192
      %v5835 = vunpack.c.0.s8 %v5834
      %v5836 = vlaneseq
      %v5837 = vshrl.u32 %v5836, 7
      %v5838 = vsub.s32 %v5835, %v5837
      %v5839 = vrot.slane %v5831, %v5838
      %v5841 = vsub.f32 %v5822, %v5839
      %v5842 = vmul.f32 %v5841, %v5841
      %v5844 = vcombine.high %v5842, %v5842
      %v5846 = vsel %vm4564, %v5842, 0.0
      %v5847 = vsel %vm4564, %v5844, 0.0
      %v5848 = vadd.f32 %v5846, %v5847
      %5849 = vadd.xlane.f32.xlu0 %v5848
      %v5850 = vpop.xlane.xlu0 %5849
      %v5851 = vmul.f32 %v5850, 0.003921569
      %v5852 = vadd.f32 %v5851, 0.0001
      %v5853 = vmul.f32 %v5852, 4.0
      %v5854 = vrcp.pop %v5853
      %v5855 = vmul.f32 1.0, %v5854
      %v5858 = vunpack.c.l.s4 839922192
      %v5859 = vunpack.c.0.s8 %v5858
      %v5860 = vlaneseq
      %v5861 = vshrl.u32 %v5860, 7
      %v5862 = vsub.s32 %v5859, %v5861
      %v5863 = vrot.slane %v5855, %v5862
      %v5865 = vmul.f32 %v5842, %v5863
      %v5866 = vadd.f32 %v5865, 0.5
      %v5867 = vxor.u32 %v5866, 2147483648
      %v5868 = vmul.f32 %v5867, 1.442695
      %v5869 = vpow.pop %v5868
      %v5870 = vadd.f32 %v5869, 1.0
      %v5871 = vrcp.pop %v5870
      %v5872 = vmul.f32 1.0, %v5871
      %v5873 = vmul.f32 %v5822, %v5872
      %5874 = vst [vmem:[%s170] sm:$0xff] %v5873
      %p5875 = scmp.lt.s32.totalorder %s14, 1
      %s5876 = scalar_select %p5875, %s14, 1
      %s5877 = smul.addr %s5876, 2
      %s5878 = smul.addr %s5877, 4
      %s5879 = scalar_lea.vmem %s3, %s5878
      // Predicated region
      $region33: #{fwd.1} parent=31 // pred_check
        %p5880 = pneg %p100
      $region34: #{fwd.1} parent=31 // pred_check_branch
        %5882 = sbr.rel (%p5880) target = $region36
      $region35: #{fwd.1} parent=31 // pred_region
        _
      $region36: #{fwd.1} parent=31 // pred_fallthru
        _
    $region32: #{fwd.1} parent=5 // pred_fallthru
      _
    %p5883 = scmp.le.s32.totalorder 2, %s9
    // Predicated region
    $region37: #{fwd.1} parent=5 // pred_check
      %p5884 = pneg %p5883
    $region38: #{fwd.1} parent=5 // pred_check_branch
      %5886 = sbr.rel (%p5884) target = $region40
    $region39: #{fwd.1} parent=5 // pred_region
      %s5887 = ssub.s32 %s9, 2
      // Predicated region
      $region41: #{fwd.1} parent=39 // pred_check
        %p5888 = pneg %p106
      $region42: #{fwd.1} parent=39 // pred_check_branch
        %5890 = sbr.rel (%p5888) target = $region44
      $region43: #{fwd.1} parent=39 // pred_region
        %p5891 = scmp.lt.s32.totalorder %s15, 1
        %s5892 = scalar_select %p5891, %s15, 1
        %s5893 = smul.addr %s5892, 2
        %s5894 = smul.addr %s5893, 4
        %s5895 = scalar_lea.vmem %s3, %s5894
      $region44: #{fwd.1} parent=39 // pred_fallthru
        _
    $region40: #{fwd.1} parent=5 // pred_fallthru
      _
  $region6: #{fwd.1} parent=0 // loop_footer
    %s13 = sadd.s32 1, %s9
  $region7: #{fwd.1} parent=0 // loop_footer_branch
    %8 = sbr.rel target = $region3
  $region8: #{fwd.1} parent=0 // loop_exit
    _

</llo_original>
